<compile_context>
chip_gen: v7x
topology: tpu7x:2x2x1
jax: 0.10.0
libtpu: 0.0.40
codegen_flags: <defaults>
</compile_context>

<pallas_src>
import numpy as np

import jax
import jax.numpy as jnp
from jax.experimental import pallas as pl
from jax.experimental.pallas import tpu as pltpu

EPS = 1e-5
HALO = 8   # zero-row halo/gap between stacked batch elements; >= max dilation (3), 8-aligned


# ----------------------------------------------------------------------------
# Constant-matrix builders (host-side parameter preprocessing, done once).
# ----------------------------------------------------------------------------
def _interp_matrix(L):
    """(2L, L) interpolation matrix for torch bilinear x2, align_corners=False."""
    U = np.zeros((2 * L, L), np.float32)
    for i in range(2 * L):
        src = max(0.5 * i - 0.25, 0.0)
        j0 = int(np.floor(src))
        lam = src - j0
        j1 = min(j0 + 1, L - 1)
        U[i, j0] += 1.0 - lam
        U[i, j1] += lam
    return U


def _stacked_interp_matrix(H, B_blk):
    """(L, B_blk*H) block-structured row-interp matrix.

    Element b of the batch block maps columns [b*H,(b+1)*H) onto rows
    [b*(2H+HALO), b*(2H+HALO)+2H); the HALO gap rows between elements are zero, so the
    single matmul produces the stacked+gapped activation layout directly.
    """
    up = _interp_matrix(H)
    H2 = 2 * H
    L = B_blk * H2 + (B_blk - 1) * HALO
    M = np.zeros((L, B_blk * H), np.float32)
    for b in range(B_blk):
        r = b * (H2 + HALO)
        M[r:r + H2, b * H:(b + 1) * H] = up
    return M


def _lane_conv_mats(w_hwio, W2, dil):
    """Fused lane matrix for a 3x3 conv (stride 1, zero padding == dilation).

    w_hwio: (3, 3, Cin, Cout).  Returns (3*W2*Cin, W2*Cout): the three per-ky banded lane
    matrices (horizontal zero padding folded into the bands) concatenated along K, matching
    the in-kernel lane-concat of the three row-shifted windows [-dil, 0, +dil].
    """
    w = np.asarray(w_hwio, np.float32)
    _, _, Cin, Cout = w.shape
    mats = np.zeros((3, W2 * Cin, W2 * Cout), np.float32)
    for ky in range(3):
        for kx in range(3):
            off = (kx - 1) * dil
            for v in range(W2):
                wcol = v + off
                if 0 <= wcol < W2:
                    mats[ky, wcol * Cin:(wcol + 1) * Cin,
                         v * Cout:(v + 1) * Cout] += w[ky, kx]
    return np.concatenate([mats[0], mats[1], mats[2]], axis=0)


# ----------------------------------------------------------------------------
# Pallas kernel: full Upsample_ forward for one batch block per grid step.
# ----------------------------------------------------------------------------
def _upsample_residual_kernel(
        x_ref,                      # (B_blk, H, W*Cin)        lane-dense input block
        up_hs_ref,                  # (L, B_blk*H)  bf16       stacked row-interp matrix
        bw_ref,                     # (W*Cin, 2W*Cin) bf16     column-interp (kron) matrix
        sa_ref, ta_ref,             # BN_a scale/shift, tiled to (1, 2W*Cin), f32
        m1_ref, b1_ref,             # conv1 fused lane mat (3*Li, Li) bf16, bias (1, Li) f32
        sb_ref, tb_ref,             # BN_b scale/shift (1, Li)
        m2_ref,                     # conv2 (dil 2) fused lane mat (3*Li, Lo) bf16
        sc_ref, tc2_ref,            # BN_c scale / shift-with-conv2-bias-folded (1, Lo)
        m3_ref,                     # conv3 (dil 3) fused lane mat (3*Lo, Lo) bf16
        ms_ref,                     # skip conv fused lane mat (BN_d folded) (3*Li, Lo) bf16
        bsum_ref,                   # folded final bias b3 + bs*sd + td   (1, Lo)
        out_ref,                    # (B_blk, 2H, 2W*Cout)
        s1, s2):                    # row-halo scratches (R, Li) / (R, Lo), f32
    f32, bf16 = jnp.float32, jnp.bfloat16
    B_blk, H, _ = x_ref.shape
    H2 = out_ref.shape[1]
    L = s1.shape[0] - 2 * HALO      # stacked interior rows = B_blk*H2 + (B_blk-1)*HALO

    # Zero the outer row halos (interior + gap rows are rewritten by every masked store).
    # Unconditional on purpose: gating on program_id(0)==0 breaks when the parallel axis is
    # split across two TensorCores (each core has its own scratch, only one sees id 0).
    s1[:HALO, :] = jnp.zeros((HALO, s1.shape[1]), s1.dtype)
    s1[s1.shape[0] - HALO:, :] = jnp.zeros((HALO, s1.shape[1]), s1.dtype)
    s2[:HALO, :] = jnp.zeros((HALO, s2.shape[1]), s2.dtype)
    s2[s2.shape[0] - HALO:, :] = jnp.zeros((HALO, s2.shape[1]), s2.dtype)

    # Row mask: 1 on batch-element rows, 0 on the HALO gap rows between stacked elements.
    rows = jax.lax.broadcasted_iota(jnp.int32, (L, 1), 0)
    mask = ((rows % (H2 + HALO)) < H2).astype(f32)

    def conv3(s_ref, act, m_ref, dil):
        """3x3 conv (stride 1, zero padding == dil) as ONE fused matmul.

        Stores the (gap-masked) activation into the halo scratch, lane-concatenates the
        three row-shifted windows (K = 3*Kin) and hits the MXU once with bf16 operands.
        """
        masked = act * mask
        s_ref[HALO:HALO + L, :] = masked
        win = jnp.concatenate(
            [s_ref[HALO - dil:HALO - dil + L, :],     # ky = 0  (input row h - dil)
             masked,                                  # ky = 1
             s_ref[HALO + dil:HALO + dil + L, :]],    # ky = 2  (input row h + dil)
            axis=1).astype(bf16)
        return jnp.dot(win, m_ref[...], preferred_element_type=f32)

    # Bilinear x2 upsample, reassociated and batch-stacked:
    #   tmp = x @ b_w          (W upsample, rows of all B_blk elements stacked)
    #   u   = up_hs @ tmp      (H upsample; block-structured -> gapped layout, zero gaps)
    x2 = x_ref[...].reshape(B_blk * H, x_ref.shape[2])
    tmp = jnp.dot(x2.astype(bf16), bw_ref[...], preferred_element_type=f32)
    u = jnp.dot(up_hs_ref[...], tmp.astype(bf16), preferred_element_type=f32)   # (L, Li)

    # updown = Conv3x3_p1( ReLU( BN_a(u) ) )
    a1 = jnp.maximum(u * sa_ref[...] + ta_ref[...], 0.0)
    updown = conv3(s1, a1, m1_ref, 1) + b1_ref[...]

    # skip = BN_d( Conv3x3_p1(updown) )   (BN_d + biases folded into ms / bsum on host)
    skip = conv3(s1, updown, ms_ref, 1)

    # conv_block: BN_b+ReLU -> 3x3 dil2 -> BN_c+ReLU -> 3x3 dil3 -> Dropout2d (identity, eval)
    t = jnp.maximum(updown * sb_ref[...] + tb_ref[...], 0.0)
    t = conv3(s1, t, m2_ref, 2)
    t = jnp.maximum(t * sc_ref[...] + tc2_ref[...], 0.0)   # conv2 bias folded into tc2
    t = conv3(s2, t, m3_ref, 3)

    res = (t + skip + bsum_ref[...]).astype(out_ref.dtype)
    # Unstack the gapped rows into per-element output blocks (aligned (H2, Lo) stores).
    for b in range(B_blk):
        off = b * (H2 + HALO)
        out_ref[b] = res[off:off + H2, :]


# ----------------------------------------------------------------------------
# Wrapper: parameter folding / tiling + pallas_call.
# ----------------------------------------------------------------------------
def _build_constants(params, H, W, Cin, Cout, B_blk):
    p = {k: np.asarray(v, np.float32) for k, v in params.items()}
    W2 = 2 * W

    def bn_scale_shift(name):
        s = p[f"{name}_g"] / np.sqrt(p[f"{name}_v"] + EPS)
        t = p[f"{name}_b"] - p[f"{name}_m"] * s
        return s.astype(np.float32), t.astype(np.float32)

    sa, ta = bn_scale_shift("bna")
    sb, tb = bn_scale_shift("bnb")
    sc, tc = bn_scale_shift("bnc")
    sd, td = bn_scale_shift("bnd")

    # Fold BN_d (eval) into the skip conv; fold conv2 bias into BN_c's shift; fold the final
    # conv3 / skip biases into a single bias.
    ws_f = p["ws"] * sd[None, None, None, :]
    tc2 = p["b2"] * sc + tc
    bsum = p["b3"] + p["bs"] * sd + td

    up_hs = _stacked_interp_matrix(H, B_blk)                          # (L, B_blk*H)
    up_w = _interp_matrix(W)                                          # (2W, W)
    b_w = np.kron(up_w.T, np.eye(Cin, dtype=np.float32))              # (W*Cin, 2W*Cin)

    m1 = _lane_conv_mats(p["w1"], W2, 1)
    m2 = _lane_conv_mats(p["w2"], W2, 2)
    m3 = _lane_conv_mats(p["w3"], W2, 3)
    ms = _lane_conv_mats(ws_f, W2, 1)

    tile = lambda v: np.tile(np.asarray(v, np.float32), W2)[None, :]  # (1, W2*C)

    bf = lambda a: jnp.asarray(a, jnp.bfloat16)   # MXU operands -> bf16 (single-pass MXU)
    f32a = lambda a: jnp.asarray(a, jnp.float32)  # elementwise constants stay f32 (v5e VPU)
    return [
        bf(up_hs), bf(b_w),
        f32a(tile(sa)), f32a(tile(ta)),
        bf(m1), f32a(tile(p["b1"])),
        f32a(tile(sb)), f32a(tile(tb)),
        bf(m2),
        f32a(tile(sc)), f32a(tile(tc2)),
        bf(m3),
        bf(ms),
        f32a(tile(bsum)),
    ]


def _pick_batch_block(N, H2, target_rows=256):
    """Largest divisor of N with B_blk*H2 <= target_rows (MXU M-dim on v6e/v7x)."""
    best = 1
    for b in range(1, N + 1):
        if N % b == 0 and b * H2 <= target_rows:
            best = b
    return best


def upsample_residual_conv(x_nhwc, params):
    """Upsample_ forward (eval mode).  x_nhwc: (N, H, W, Cin) -> (N, 2H, 2W, Cout)."""
    N, H, W, Cin = x_nhwc.shape
    Cout = np.asarray(params["w2"]).shape[-1]
    H2, W2 = 2 * H, 2 * W
    Lx, Li, Lo = W * Cin, W2 * Cin, W2 * Cout
    # Lane-dense layout assumption (otherwise masked partial stores -> perf cliff).
    assert Lx % 128 == 0 and Li % 128 == 0 and Lo % 128 == 0, (
        "W*Cin and 2W*C{in,out} must be multiples of 128 for the lane-dense layout")

    B_blk = _pick_batch_block(N, H2)
    L = B_blk * H2 + (B_blk - 1) * HALO        # stacked interior rows
    R = L + 2 * HALO                           # scratch rows incl. outer halos

    consts = _build_constants(params, H, W, Cin, Cout, B_blk)
    x_ld = x_nhwc.reshape(N, H, Lx)            # lane-dense input (free reshape)

    def run(single_buffer_consts):
        def whole_spec(a):
            nd = a.ndim
            idx = lambda n, _nd=nd: (0,) * _nd
            if single_buffer_consts:
                # Constant block index -> single buffer is enough; halves resident VMEM.
                return pl.BlockSpec(a.shape, idx, pipeline_mode=pl.Buffered(1))
            return pl.BlockSpec(a.shape, idx)

        in_specs = [pl.BlockSpec((B_blk, H, Lx), lambda n: (n, 0, 0))]
        in_specs += [whole_spec(a) for a in consts]
        out_spec = pl.BlockSpec((B_blk, H2, Lo), lambda n: (n, 0, 0))  # lane-dense store

        out = pl.pallas_call(
            _upsample_residual_kernel,
            out_shape=jax.ShapeDtypeStruct((N, H2, Lo), jnp.float32),
            grid_spec=pltpu.PrefetchScalarGridSpec(
                num_scalar_prefetch=0,
                grid=(N // B_blk,),
                in_specs=in_specs,
                out_specs=out_spec,
                scratch_shapes=[
                    pltpu.VMEM((R, Li), jnp.float32),
                    pltpu.VMEM((R, Lo), jnp.float32),
                ],
            ),
            compiler_params=pltpu.CompilerParams(
                dimension_semantics=("parallel",)),
        )(x_ld, *consts)
        return jax.block_until_ready(out)

    try:
        out_ld = run(True)
    except Exception:
        # This jax build rejected pl.Buffered(1); fall back to default double buffering.
        out_ld = run(False)

    return out_ld.reshape(N, H2, W2, Cout)


# ----------------------------------------------------------------------------
# Pure-JAX reference (eval-mode module, same semantics, f32).
# ----------------------------------------------------------------------------
def _upsample_ref_axis(x, axis):
    L = x.shape[axis]
    i = np.arange(2 * L)
    src = np.maximum(0.5 * i - 0.25, 0.0)
    j0 = np.floor(src).astype(np.int32)
    lam = (src - j0).astype(np.float32)
    j1 = np.minimum(j0 + 1, L - 1)
    x0 = jnp.take(x, j0, axis=axis)
    x1 = jnp.take(x, j1, axis=axis)
    shape = [1] * x.ndim
    shape[axis] = 2 * L
    lam = jnp.asarray(lam).reshape(shape)
    return x0 * (1.0 - lam) + x1 * lam


def reference(x, p):
    u = _upsample_ref_axis(_upsample_ref_axis(x, 1), 2)

    def bn(t, name):
        return ((t - p[f"{name}_m"]) * jax.lax.rsqrt(p[f"{name}_v"] + EPS)
                * p[f"{name}_g"] + p[f"{name}_b"])

    def conv(t, w, b, dil):
        y = jax.lax.conv_general_dilated(
            t, w, (1, 1), [(dil, dil), (dil, dil)], rhs_dilation=(dil, dil),
            dimension_numbers=("NHWC", "HWIO", "NHWC"),
            precision=jax.lax.Precision.HIGHEST)
        return y + b

    relu = lambda t: jnp.maximum(t, 0.0)
    a1 = relu(bn(u, "bna"))
    updown = conv(a1, p["w1"], p["b1"], 1)
    t = relu(bn(updown, "bnb"))
    t = conv(t, p["w2"], p["b2"], 2)
    t = relu(bn(t, "bnc"))
    t = conv(t, p["w3"], p["b3"], 3)            # Dropout2d(0.25): identity in eval mode
    skip = bn(conv(updown, p["ws"], p["bs"], 1), "bnd")
    return t + skip


# ----------------------------------------------------------------------------
if __name__ == "__main__":
    N, H, W = 2, 16, 16
    Cin, Cout = 8, 8          # Upsample_(input_dim=8, output_dim=8, stride=1, scale=2)

    key = jax.random.PRNGKey(0)
    ks = iter(jax.random.split(key, 40))
    nrm = lambda shape, s=0.1: s * jax.random.normal(next(ks), shape, jnp.float32)

    x = jax.random.normal(next(ks), (N, H, W, Cin), jnp.float32)   # NHWC (== NCHW [2,8,16,16])

    params = {}
    for name, c in (("bna", Cin), ("bnb", Cin), ("bnc", Cout), ("bnd", Cout)):
        params.update({
            f"{name}_g": 1.0 + nrm((c,)),
            f"{name}_b": nrm((c,)),
            f"{name}_m": nrm((c,)),
            f"{name}_v": 0.5 + jnp.abs(nrm((c,), 1.0)),
        })
    params["w1"] = nrm((3, 3, Cin, Cin));   params["b1"] = nrm((Cin,))
    params["w2"] = nrm((3, 3, Cin, Cout));  params["b2"] = nrm((Cout,))
    params["w3"] = nrm((3, 3, Cout, Cout)); params["b3"] = nrm((Cout,))
    params["ws"] = nrm((3, 3, Cin, Cout));  params["bs"] = nrm((Cout,))

    out = jax.block_until_ready(upsample_residual_conv(x, params))
    ref = jax.block_until_ready(reference(x, params))

    assert out.shape == (N, 2 * H, 2 * W, Cout)
    err = float(jnp.max(jnp.abs(out - ref)))
    # bf16 MXU operands against an f32 HIGHEST reference set the tolerance here.
    assert err < 3e-2, f"max abs err = {err}"

    print("KERNEL_OK")
</pallas_src>

<mosaic_0001>
module attributes {stable_mosaic.version = 11 : i64} {
  func.func @_upsample_residual_kernel(%arg0: i32, %arg1: memref<2x16x128xf32, #tpu.memory_space<vmem>>, %arg2: memref<72x32xbf16, #tpu.memory_space<vmem>>, %arg3: memref<128x256xbf16, #tpu.memory_space<vmem>>, %arg4: memref<1x256xf32, #tpu.memory_space<vmem>>, %arg5: memref<1x256xf32, #tpu.memory_space<vmem>>, %arg6: memref<768x256xbf16, #tpu.memory_space<vmem>>, %arg7: memref<1x256xf32, #tpu.memory_space<vmem>>, %arg8: memref<1x256xf32, #tpu.memory_space<vmem>>, %arg9: memref<1x256xf32, #tpu.memory_space<vmem>>, %arg10: memref<768x256xbf16, #tpu.memory_space<vmem>>, %arg11: memref<1x256xf32, #tpu.memory_space<vmem>>, %arg12: memref<1x256xf32, #tpu.memory_space<vmem>>, %arg13: memref<768x256xbf16, #tpu.memory_space<vmem>>, %arg14: memref<768x256xbf16, #tpu.memory_space<vmem>>, %arg15: memref<1x256xf32, #tpu.memory_space<vmem>>, %arg16: memref<2x32x256xf32, #tpu.memory_space<vmem>>, %arg17: memref<88x256xf32, #tpu.memory_space<vmem>>, %arg18: memref<88x256xf32, #tpu.memory_space<vmem>>) attributes {dimension_semantics = [#tpu.dimension_semantics<parallel>], iteration_bounds = array<i64: 1>, scalar_prefetch = 0 : i64, scratch_operands = 2 : i64, tpu.core_type = #tpu.core_type<tc>, window_params = [{transform_indices = @transform_0, window_bounds = array<i64: 2, 16, 128>}, {pipeline_mode = #tpu.pipeline_mode<synchronous>, transform_indices = @transform_1, window_bounds = array<i64: 72, 32>}, {pipeline_mode = #tpu.pipeline_mode<synchronous>, transform_indices = @transform_2, window_bounds = array<i64: 128, 256>}, {pipeline_mode = #tpu.pipeline_mode<synchronous>, transform_indices = @transform_3, window_bounds = array<i64: 1, 256>}, {pipeline_mode = #tpu.pipeline_mode<synchronous>, transform_indices = @transform_4, window_bounds = array<i64: 1, 256>}, {pipeline_mode = #tpu.pipeline_mode<synchronous>, transform_indices = @transform_5, window_bounds = array<i64: 768, 256>}, {pipeline_mode = #tpu.pipeline_mode<synchronous>, transform_indices = @transform_6, window_bounds = array<i64: 1, 256>}, {pipeline_mode = #tpu.pipeline_mode<synchronous>, transform_indices = @transform_7, window_bounds = array<i64: 1, 256>}, {pipeline_mode = #tpu.pipeline_mode<synchronous>, transform_indices = @transform_8, window_bounds = array<i64: 1, 256>}, {pipeline_mode = #tpu.pipeline_mode<synchronous>, transform_indices = @transform_9, window_bounds = array<i64: 768, 256>}, {pipeline_mode = #tpu.pipeline_mode<synchronous>, transform_indices = @transform_10, window_bounds = array<i64: 1, 256>}, {pipeline_mode = #tpu.pipeline_mode<synchronous>, transform_indices = @transform_11, window_bounds = array<i64: 1, 256>}, {pipeline_mode = #tpu.pipeline_mode<synchronous>, transform_indices = @transform_12, window_bounds = array<i64: 768, 256>}, {pipeline_mode = #tpu.pipeline_mode<synchronous>, transform_indices = @transform_13, window_bounds = array<i64: 768, 256>}, {pipeline_mode = #tpu.pipeline_mode<synchronous>, transform_indices = @transform_14, window_bounds = array<i64: 1, 256>}, {transform_indices = @transform_15, window_bounds = array<i64: 2, 32, 256>}]} {
    %cst = arith.constant 0.000000e+00 : f32
    %0 = vector.broadcast %cst : f32 to vector<8x256xf32>
    %c0 = arith.constant 0 : index
    %c0_0 = arith.constant 0 : index
    %1 = vector.load %arg17[%c0, %c0_0] : memref<88x256xf32, #tpu.memory_space<vmem>>, vector<8x256xf32>
    tpu.vector_store %arg17[%c0, %c0_0], %0 {strides = array<i32>} : memref<88x256xf32, #tpu.memory_space<vmem>>, vector<8x256xf32>,
    %cst_1 = arith.constant 0.000000e+00 : f32
    %2 = vector.broadcast %cst_1 : f32 to vector<8x256xf32>
    %c80 = arith.constant 80 : index
    %c0_2 = arith.constant 0 : index
    %3 = vector.load %arg17[%c80, %c0_2] : memref<88x256xf32, #tpu.memory_space<vmem>>, vector<8x256xf32>
    tpu.vector_store %arg17[%c80, %c0_2], %2 {strides = array<i32>} : memref<88x256xf32, #tpu.memory_space<vmem>>, vector<8x256xf32>,
    %cst_3 = arith.constant 0.000000e+00 : f32
    %4 = vector.broadcast %cst_3 : f32 to vector<8x256xf32>
    %c0_4 = arith.constant 0 : index
    %c0_5 = arith.constant 0 : index
    %5 = vector.load %arg18[%c0_4, %c0_5] : memref<88x256xf32, #tpu.memory_space<vmem>>, vector<8x256xf32>
    tpu.vector_store %arg18[%c0_4, %c0_5], %4 {strides = array<i32>} : memref<88x256xf32, #tpu.memory_space<vmem>>, vector<8x256xf32>,
    %cst_6 = arith.constant 0.000000e+00 : f32
    %6 = vector.broadcast %cst_6 : f32 to vector<8x256xf32>
    %c80_7 = arith.constant 80 : index
    %c0_8 = arith.constant 0 : index
    %7 = vector.load %arg18[%c80_7, %c0_8] : memref<88x256xf32, #tpu.memory_space<vmem>>, vector<8x256xf32>
    tpu.vector_store %arg18[%c80_7, %c0_8], %6 {strides = array<i32>} : memref<88x256xf32, #tpu.memory_space<vmem>>, vector<8x256xf32>,
    %8 = tpu.iota {dimensions = array<i32: 0>} : vector<72x1xi32>
    %c40_i32 = arith.constant 40 : i32
    %c0_i32 = arith.constant 0 : i32
    %9 = arith.cmpi eq, %c40_i32, %c0_i32 : i32
    %c1_i32 = arith.constant 1 : i32
    %10 = arith.select %9, %c1_i32, %c40_i32 : i32
    %11 = vector.broadcast %10 : i32 to vector<72x1xi32>
    %12 = arith.remsi %8, %11 : vector<72x1xi32>
    %c0_i32_9 = arith.constant 0 : i32
    %13 = vector.broadcast %c0_i32_9 : i32 to vector<72x1xi32>
    %14 = arith.cmpi ne, %12, %13 : vector<72x1xi32>
    %c0_i32_10 = arith.constant 0 : i32
    %15 = vector.broadcast %c0_i32_10 : i32 to vector<72x1xi32>
    %16 = arith.cmpi slt, %12, %15 : vector<72x1xi32>
    %c0_i32_11 = arith.constant 0 : i32
    %17 = arith.cmpi slt, %10, %c0_i32_11 : i32
    %18 = vector.broadcast %17 : i1 to vector<72x1xi1>
    %19 = vector.broadcast %18 : vector<72x1xi1> to vector<72x1xi1>
    %20 = arith.xori %16, %19 : vector<72x1xi1>
    %21 = arith.andi %20, %14 : vector<72x1xi1>
    %22 = vector.broadcast %10 : i32 to vector<72x1xi32>
    %23 = arith.addi %12, %22 : vector<72x1xi32>
    %24 = arith.select %21, %23, %12 : vector<72x1xi1>, vector<72x1xi32>
    %c32_i32 = arith.constant 32 : i32
    %25 = vector.broadcast %c32_i32 : i32 to vector<72x1xi32>
    %26 = arith.cmpi slt, %24, %25 : vector<72x1xi32>
    %27 = arith.extui %26 : vector<72x1xi1> to vector<72x1xi32>
    %28 = arith.sitofp %27 : vector<72x1xi32> to vector<72x1xf32>
    %c0_12 = arith.constant 0 : index
    %c0_13 = arith.constant 0 : index
    %c0_14 = arith.constant 0 : index
    %29 = vector.load %arg1[%c0_12, %c0_13, %c0_14] : memref<2x16x128xf32, #tpu.memory_space<vmem>>, vector<2x16x128xf32>
    %30 = vector.shape_cast %29 : vector<2x16x128xf32> to vector<32x128xf32>
    %31 = arith.truncf %30 : vector<32x128xf32> to vector<32x128xbf16>
    %c0_15 = arith.constant 0 : index
    %c0_16 = arith.constant 0 : index
    %32 = vector.load %arg3[%c0_15, %c0_16] : memref<128x256xbf16, #tpu.memory_space<vmem>>, vector<128x256xbf16>
    %cst_17 = arith.constant dense<0.000000e+00> : vector<32x256xf32>
    %33 = tpu.matmul %31, %32, %cst_17 {dimension_numbers = #tpu.dot_dimension_numbers<[1], [0], [0], [1], [0, 0, 1, 1], [], []>} : vector<32x128xbf16>, vector<128x256xbf16>, vector<32x256xf32> -> vector<32x256xf32>
    %c0_18 = arith.constant 0 : index
    %c0_19 = arith.constant 0 : index
    %34 = vector.load %arg2[%c0_18, %c0_19] : memref<72x32xbf16, #tpu.memory_space<vmem>>, vector<72x32xbf16>
    %35 = arith.truncf %33 : vector<32x256xf32> to vector<32x256xbf16>
    %cst_20 = arith.constant dense<0.000000e+00> : vector<72x256xf32>
    %36 = tpu.matmul %34, %35, %cst_20 {dimension_numbers = #tpu.dot_dimension_numbers<[1], [0], [0], [1], [0, 0, 1, 1], [], []>} : vector<72x32xbf16>, vector<32x256xbf16>, vector<72x256xf32> -> vector<72x256xf32>
    %c0_21 = arith.constant 0 : index
    %c0_22 = arith.constant 0 : index
    %37 = vector.load %arg4[%c0_21, %c0_22] : memref<1x256xf32, #tpu.memory_space<vmem>>, vector<1x256xf32>
    %38 = vector.broadcast %37 : vector<1x256xf32> to vector<72x256xf32>
    %39 = arith.mulf %36, %38 : vector<72x256xf32>
    %c0_23 = arith.constant 0 : index
    %c0_24 = arith.constant 0 : index
    %40 = vector.load %arg5[%c0_23, %c0_24] : memref<1x256xf32, #tpu.memory_space<vmem>>, vector<1x256xf32>
    %41 = vector.broadcast %40 : vector<1x256xf32> to vector<72x256xf32>
    %42 = arith.addf %39, %41 : vector<72x256xf32>
    %cst_25 = arith.constant 0.000000e+00 : f32
    %43 = vector.broadcast %cst_25 : f32 to vector<72x256xf32>
    %44 = arith.maximumf %42, %43 : vector<72x256xf32>
    %45 = vector.broadcast %28 : vector<72x1xf32> to vector<72x256xf32>
    %46 = arith.mulf %44, %45 : vector<72x256xf32>
    %c8 = arith.constant 8 : index
    %c0_26 = arith.constant 0 : index
    %47 = vector.load %arg17[%c8, %c0_26] : memref<88x256xf32, #tpu.memory_space<vmem>>, vector<72x256xf32>
    tpu.vector_store %arg17[%c8, %c0_26], %46 {strides = array<i32>} : memref<88x256xf32, #tpu.memory_space<vmem>>, vector<72x256xf32>,
    %c7 = arith.constant 7 : index
    %c0_27 = arith.constant 0 : index
    %48 = vector.load %arg17[%c7, %c0_27] : memref<88x256xf32, #tpu.memory_space<vmem>>, vector<72x256xf32>
    %c9 = arith.constant 9 : index
    %c0_28 = arith.constant 0 : index
    %49 = vector.load %arg17[%c9, %c0_28] : memref<88x256xf32, #tpu.memory_space<vmem>>, vector<72x256xf32>
    %50 = tpu.concatenate %48, %46, %49 in 1 : vector<72x256xf32>, vector<72x256xf32>, vector<72x256xf32> -> vector<72x768xf32>
    %51 = arith.truncf %50 : vector<72x768xf32> to vector<72x768xbf16>
    %c0_29 = arith.constant 0 : index
    %c0_30 = arith.constant 0 : index
    %52 = vector.load %arg6[%c0_29, %c0_30] : memref<768x256xbf16, #tpu.memory_space<vmem>>, vector<768x256xbf16>
    %cst_31 = arith.constant dense<0.000000e+00> : vector<72x256xf32>
    %53 = tpu.matmul %51, %52, %cst_31 {dimension_numbers = #tpu.dot_dimension_numbers<[1], [0], [0], [1], [0, 0, 1, 1], [], []>} : vector<72x768xbf16>, vector<768x256xbf16>, vector<72x256xf32> -> vector<72x256xf32>
    %c0_32 = arith.constant 0 : index
    %c0_33 = arith.constant 0 : index
    %54 = vector.load %arg7[%c0_32, %c0_33] : memref<1x256xf32, #tpu.memory_space<vmem>>, vector<1x256xf32>
    %55 = vector.broadcast %54 : vector<1x256xf32> to vector<72x256xf32>
    %56 = arith.addf %53, %55 : vector<72x256xf32>
    %57 = vector.broadcast %28 : vector<72x1xf32> to vector<72x256xf32>
    %58 = arith.mulf %56, %57 : vector<72x256xf32>
    %c8_34 = arith.constant 8 : index
    %c0_35 = arith.constant 0 : index
    %59 = vector.load %arg17[%c8_34, %c0_35] : memref<88x256xf32, #tpu.memory_space<vmem>>, vector<72x256xf32>
    tpu.vector_store %arg17[%c8_34, %c0_35], %58 {strides = array<i32>} : memref<88x256xf32, #tpu.memory_space<vmem>>, vector<72x256xf32>,
    %c7_36 = arith.constant 7 : index
    %c0_37 = arith.constant 0 : index
    %60 = vector.load %arg17[%c7_36, %c0_37] : memref<88x256xf32, #tpu.memory_space<vmem>>, vector<72x256xf32>
    %c9_38 = arith.constant 9 : index
    %c0_39 = arith.constant 0 : index
    %61 = vector.load %arg17[%c9_38, %c0_39] : memref<88x256xf32, #tpu.memory_space<vmem>>, vector<72x256xf32>
    %62 = tpu.concatenate %60, %58, %61 in 1 : vector<72x256xf32>, vector<72x256xf32>, vector<72x256xf32> -> vector<72x768xf32>
    %63 = arith.truncf %62 : vector<72x768xf32> to vector<72x768xbf16>
    %c0_40 = arith.constant 0 : index
    %c0_41 = arith.constant 0 : index
    %64 = vector.load %arg14[%c0_40, %c0_41] : memref<768x256xbf16, #tpu.memory_space<vmem>>, vector<768x256xbf16>
    %cst_42 = arith.constant dense<0.000000e+00> : vector<72x256xf32>
    %65 = tpu.matmul %63, %64, %cst_42 {dimension_numbers = #tpu.dot_dimension_numbers<[1], [0], [0], [1], [0, 0, 1, 1], [], []>} : vector<72x768xbf16>, vector<768x256xbf16>, vector<72x256xf32> -> vector<72x256xf32>
    %c0_43 = arith.constant 0 : index
    %c0_44 = arith.constant 0 : index
    %66 = vector.load %arg8[%c0_43, %c0_44] : memref<1x256xf32, #tpu.memory_space<vmem>>, vector<1x256xf32>
    %67 = vector.broadcast %66 : vector<1x256xf32> to vector<72x256xf32>
    %68 = arith.mulf %56, %67 : vector<72x256xf32>
    %c0_45 = arith.constant 0 : index
    %c0_46 = arith.constant 0 : index
    %69 = vector.load %arg9[%c0_45, %c0_46] : memref<1x256xf32, #tpu.memory_space<vmem>>, vector<1x256xf32>
    %70 = vector.broadcast %69 : vector<1x256xf32> to vector<72x256xf32>
    %71 = arith.addf %68, %70 : vector<72x256xf32>
    %cst_47 = arith.constant 0.000000e+00 : f32
    %72 = vector.broadcast %cst_47 : f32 to vector<72x256xf32>
    %73 = arith.maximumf %71, %72 : vector<72x256xf32>
    %74 = vector.broadcast %28 : vector<72x1xf32> to vector<72x256xf32>
    %75 = arith.mulf %73, %74 : vector<72x256xf32>
    %c8_48 = arith.constant 8 : index
    %c0_49 = arith.constant 0 : index
    %76 = vector.load %arg17[%c8_48, %c0_49] : memref<88x256xf32, #tpu.memory_space<vmem>>, vector<72x256xf32>
    tpu.vector_store %arg17[%c8_48, %c0_49], %75 {strides = array<i32>} : memref<88x256xf32, #tpu.memory_space<vmem>>, vector<72x256xf32>,
    %c6 = arith.constant 6 : index
    %c0_50 = arith.constant 0 : index
    %77 = vector.load %arg17[%c6, %c0_50] : memref<88x256xf32, #tpu.memory_space<vmem>>, vector<72x256xf32>
    %c10 = arith.constant 10 : index
    %c0_51 = arith.constant 0 : index
    %78 = vector.load %arg17[%c10, %c0_51] : memref<88x256xf32, #tpu.memory_space<vmem>>, vector<72x256xf32>
    %79 = tpu.concatenate %77, %75, %78 in 1 : vector<72x256xf32>, vector<72x256xf32>, vector<72x256xf32> -> vector<72x768xf32>
    %80 = arith.truncf %79 : vector<72x768xf32> to vector<72x768xbf16>
    %c0_52 = arith.constant 0 : index
    %c0_53 = arith.constant 0 : index
    %81 = vector.load %arg10[%c0_52, %c0_53] : memref<768x256xbf16, #tpu.memory_space<vmem>>, vector<768x256xbf16>
    %cst_54 = arith.constant dense<0.000000e+00> : vector<72x256xf32>
    %82 = tpu.matmul %80, %81, %cst_54 {dimension_numbers = #tpu.dot_dimension_numbers<[1], [0], [0], [1], [0, 0, 1, 1], [], []>} : vector<72x768xbf16>, vector<768x256xbf16>, vector<72x256xf32> -> vector<72x256xf32>
    %c0_55 = arith.constant 0 : index
    %c0_56 = arith.constant 0 : index
    %83 = vector.load %arg11[%c0_55, %c0_56] : memref<1x256xf32, #tpu.memory_space<vmem>>, vector<1x256xf32>
    %84 = vector.broadcast %83 : vector<1x256xf32> to vector<72x256xf32>
    %85 = arith.mulf %82, %84 : vector<72x256xf32>
    %c0_57 = arith.constant 0 : index
    %c0_58 = arith.constant 0 : index
    %86 = vector.load %arg12[%c0_57, %c0_58] : memref<1x256xf32, #tpu.memory_space<vmem>>, vector<1x256xf32>
    %87 = vector.broadcast %86 : vector<1x256xf32> to vector<72x256xf32>
    %88 = arith.addf %85, %87 : vector<72x256xf32>
    %cst_59 = arith.constant 0.000000e+00 : f32
    %89 = vector.broadcast %cst_59 : f32 to vector<72x256xf32>
    %90 = arith.maximumf %88, %89 : vector<72x256xf32>
    %91 = vector.broadcast %28 : vector<72x1xf32> to vector<72x256xf32>
    %92 = arith.mulf %90, %91 : vector<72x256xf32>
    %c8_60 = arith.constant 8 : index
    %c0_61 = arith.constant 0 : index
    %93 = vector.load %arg18[%c8_60, %c0_61] : memref<88x256xf32, #tpu.memory_space<vmem>>, vector<72x256xf32>
    tpu.vector_store %arg18[%c8_60, %c0_61], %92 {strides = array<i32>} : memref<88x256xf32, #tpu.memory_space<vmem>>, vector<72x256xf32>,
    %c5 = arith.constant 5 : index
    %c0_62 = arith.constant 0 : index
    %94 = vector.load %arg18[%c5, %c0_62] : memref<88x256xf32, #tpu.memory_space<vmem>>, vector<72x256xf32>
    %c11 = arith.constant 11 : index
    %c0_63 = arith.constant 0 : index
    %95 = vector.load %arg18[%c11, %c0_63] : memref<88x256xf32, #tpu.memory_space<vmem>>, vector<72x256xf32>
    %96 = tpu.concatenate %94, %92, %95 in 1 : vector<72x256xf32>, vector<72x256xf32>, vector<72x256xf32> -> vector<72x768xf32>
    %97 = arith.truncf %96 : vector<72x768xf32> to vector<72x768xbf16>
    %c0_64 = arith.constant 0 : index
    %c0_65 = arith.constant 0 : index
    %98 = vector.load %arg13[%c0_64, %c0_65] : memref<768x256xbf16, #tpu.memory_space<vmem>>, vector<768x256xbf16>
    %cst_66 = arith.constant dense<0.000000e+00> : vector<72x256xf32>
    %99 = tpu.matmul %97, %98, %cst_66 {dimension_numbers = #tpu.dot_dimension_numbers<[1], [0], [0], [1], [0, 0, 1, 1], [], []>} : vector<72x768xbf16>, vector<768x256xbf16>, vector<72x256xf32> -> vector<72x256xf32>
    %100 = arith.addf %99, %65 : vector<72x256xf32>
    %c0_67 = arith.constant 0 : index
    %c0_68 = arith.constant 0 : index
    %101 = vector.load %arg15[%c0_67, %c0_68] : memref<1x256xf32, #tpu.memory_space<vmem>>, vector<1x256xf32>
    %102 = vector.broadcast %101 : vector<1x256xf32> to vector<72x256xf32>
    %103 = arith.addf %100, %102 : vector<72x256xf32>
    %104 = vector.extract_strided_slice %103 {offsets = [0, 0], sizes = [32, 256], strides = [1, 1]} : vector<72x256xf32> to vector<32x256xf32>
    %c0_69 = arith.constant 0 : index
    %c0_70 = arith.constant 0 : index
    %c0_71 = arith.constant 0 : index
    %105 = vector.load %arg16[%c0_69, %c0_70, %c0_71] : memref<2x32x256xf32, #tpu.memory_space<vmem>>, vector<1x32x256xf32>
    %106 = vector.shape_cast %105 : vector<1x32x256xf32> to vector<32x256xf32>
    %107 = vector.shape_cast %104 : vector<32x256xf32> to vector<1x32x256xf32>
    tpu.vector_store %arg16[%c0_69, %c0_70, %c0_71], %107 {strides = array<i32>} : memref<2x32x256xf32, #tpu.memory_space<vmem>>, vector<1x32x256xf32>,
    %108 = vector.extract_strided_slice %103 {offsets = [40, 0], sizes = [32, 256], strides = [1, 1]} : vector<72x256xf32> to vector<32x256xf32>
    %c1 = arith.constant 1 : index
    %c0_72 = arith.constant 0 : index
    %c0_73 = arith.constant 0 : index
    %109 = vector.load %arg16[%c1, %c0_72, %c0_73] : memref<2x32x256xf32, #tpu.memory_space<vmem>>, vector<1x32x256xf32>
    %110 = vector.shape_cast %109 : vector<1x32x256xf32> to vector<32x256xf32>
    %111 = vector.shape_cast %108 : vector<32x256xf32> to vector<1x32x256xf32>
    tpu.vector_store %arg16[%c1, %c0_72, %c0_73], %111 {strides = array<i32>} : memref<2x32x256xf32, #tpu.memory_space<vmem>>, vector<1x32x256xf32>,
    return
  }
  func.func @transform_0(%arg0: i32) -> (i32, i32, i32) {
    %c0_i32 = arith.constant 0 : i32
    %c0_i32_0 = arith.constant 0 : i32
    %c0_i32_1 = arith.constant 0 : i32
    return %arg0, %c0_i32, %c0_i32_0 : i32, i32, i32
  }
  func.func @transform_1(%arg0: i32) -> (i32, i32) {
    %c0_i32 = arith.constant 0 : i32
    %c0_i32_0 = arith.constant 0 : i32
    %c0_i32_1 = arith.constant 0 : i32
    return %c0_i32, %c0_i32_0 : i32, i32
  }
  func.func @transform_2(%arg0: i32) -> (i32, i32) {
    %c0_i32 = arith.constant 0 : i32
    %c0_i32_0 = arith.constant 0 : i32
    %c0_i32_1 = arith.constant 0 : i32
    return %c0_i32, %c0_i32_0 : i32, i32
  }
  func.func @transform_3(%arg0: i32) -> (i32, i32) {
    %c0_i32 = arith.constant 0 : i32
    %c0_i32_0 = arith.constant 0 : i32
    %c0_i32_1 = arith.constant 0 : i32
    return %c0_i32, %c0_i32_0 : i32, i32
  }
  func.func @transform_4(%arg0: i32) -> (i32, i32) {
    %c0_i32 = arith.constant 0 : i32
    %c0_i32_0 = arith.constant 0 : i32
    %c0_i32_1 = arith.constant 0 : i32
    return %c0_i32, %c0_i32_0 : i32, i32
  }
  func.func @transform_5(%arg0: i32) -> (i32, i32) {
    %c0_i32 = arith.constant 0 : i32
    %c0_i32_0 = arith.constant 0 : i32
    %c0_i32_1 = arith.constant 0 : i32
    return %c0_i32, %c0_i32_0 : i32, i32
  }
  func.func @transform_6(%arg0: i32) -> (i32, i32) {
    %c0_i32 = arith.constant 0 : i32
    %c0_i32_0 = arith.constant 0 : i32
    %c0_i32_1 = arith.constant 0 : i32
    return %c0_i32, %c0_i32_0 : i32, i32
  }
  func.func @transform_7(%arg0: i32) -> (i32, i32) {
    %c0_i32 = arith.constant 0 : i32
    %c0_i32_0 = arith.constant 0 : i32
    %c0_i32_1 = arith.constant 0 : i32
    return %c0_i32, %c0_i32_0 : i32, i32
  }
  func.func @transform_8(%arg0: i32) -> (i32, i32) {
    %c0_i32 = arith.constant 0 : i32
    %c0_i32_0 = arith.constant 0 : i32
    %c0_i32_1 = arith.constant 0 : i32
    return %c0_i32, %c0_i32_0 : i32, i32
  }
  func.func @transform_9(%arg0: i32) -> (i32, i32) {
    %c0_i32 = arith.constant 0 : i32
    %c0_i32_0 = arith.constant 0 : i32
    %c0_i32_1 = arith.constant 0 : i32
    return %c0_i32, %c0_i32_0 : i32, i32
  }
  func.func @transform_10(%arg0: i32) -> (i32, i32) {
    %c0_i32 = arith.constant 0 : i32
    %c0_i32_0 = arith.constant 0 : i32
    %c0_i32_1 = arith.constant 0 : i32
    return %c0_i32, %c0_i32_0 : i32, i32
  }
  func.func @transform_11(%arg0: i32) -> (i32, i32) {
    %c0_i32 = arith.constant 0 : i32
    %c0_i32_0 = arith.constant 0 : i32
    %c0_i32_1 = arith.constant 0 : i32
    return %c0_i32, %c0_i32_0 : i32, i32
  }
  func.func @transform_12(%arg0: i32) -> (i32, i32) {
    %c0_i32 = arith.constant 0 : i32
    %c0_i32_0 = arith.constant 0 : i32
    %c0_i32_1 = arith.constant 0 : i32
    return %c0_i32, %c0_i32_0 : i32, i32
  }
  func.func @transform_13(%arg0: i32) -> (i32, i32) {
    %c0_i32 = arith.constant 0 : i32
    %c0_i32_0 = arith.constant 0 : i32
    %c0_i32_1 = arith.constant 0 : i32
    return %c0_i32, %c0_i32_0 : i32, i32
  }
  func.func @transform_14(%arg0: i32) -> (i32, i32) {
    %c0_i32 = arith.constant 0 : i32
    %c0_i32_0 = arith.constant 0 : i32
    %c0_i32_1 = arith.constant 0 : i32
    return %c0_i32, %c0_i32_0 : i32, i32
  }
  func.func @transform_15(%arg0: i32) -> (i32, i32, i32) {
    %c0_i32 = arith.constant 0 : i32
    %c0_i32_0 = arith.constant 0 : i32
    %c0_i32_1 = arith.constant 0 : i32
    return %arg0, %c0_i32, %c0_i32_0 : i32, i32, i32
  }
}

module attributes {stable_mosaic.version = 11 : i64} {
  func.func @_upsample_residual_kernel(%arg0: i32, %arg1: memref<2x16x128xf32, #tpu.memory_space<vmem>>, %arg2: memref<72x32xbf16, #tpu.memory_space<vmem>>, %arg3: memref<128x256xbf16, #tpu.memory_space<vmem>>, %arg4: memref<1x256xf32, #tpu.memory_space<vmem>>, %arg5: memref<1x256xf32, #tpu.memory_space<vmem>>, %arg6: memref<768x256xbf16, #tpu.memory_space<vmem>>, %arg7: memref<1x256xf32, #tpu.memory_space<vmem>>, %arg8: memref<1x256xf32, #tpu.memory_space<vmem>>, %arg9: memref<1x256xf32, #tpu.memory_space<vmem>>, %arg10: memref<768x256xbf16, #tpu.memory_space<vmem>>, %arg11: memref<1x256xf32, #tpu.memory_space<vmem>>, %arg12: memref<1x256xf32, #tpu.memory_space<vmem>>, %arg13: memref<768x256xbf16, #tpu.memory_space<vmem>>, %arg14: memref<768x256xbf16, #tpu.memory_space<vmem>>, %arg15: memref<1x256xf32, #tpu.memory_space<vmem>>, %arg16: memref<2x32x256xf32, #tpu.memory_space<vmem>>, %arg17: memref<88x256xf32, #tpu.memory_space<vmem>>, %arg18: memref<88x256xf32, #tpu.memory_space<vmem>>) attributes {dimension_semantics = [#tpu.dimension_semantics<parallel>], iteration_bounds = array<i64: 1>, scalar_prefetch = 0 : i64, scratch_operands = 2 : i64, tpu.core_type = #tpu.core_type<tc>, window_params = [{transform_indices = @transform_0, window_bounds = array<i64: 2, 16, 128>}, {pipeline_mode = #tpu.pipeline_mode<synchronous>, transform_indices = @transform_1, window_bounds = array<i64: 72, 32>}, {pipeline_mode = #tpu.pipeline_mode<synchronous>, transform_indices = @transform_2, window_bounds = array<i64: 128, 256>}, {pipeline_mode = #tpu.pipeline_mode<synchronous>, transform_indices = @transform_3, window_bounds = array<i64: 1, 256>}, {pipeline_mode = #tpu.pipeline_mode<synchronous>, transform_indices = @transform_4, window_bounds = array<i64: 1, 256>}, {pipeline_mode = #tpu.pipeline_mode<synchronous>, transform_indices = @transform_5, window_bounds = array<i64: 768, 256>}, {pipeline_mode = #tpu.pipeline_mode<synchronous>, transform_indices = @transform_6, window_bounds = array<i64: 1, 256>}, {pipeline_mode = #tpu.pipeline_mode<synchronous>, transform_indices = @transform_7, window_bounds = array<i64: 1, 256>}, {pipeline_mode = #tpu.pipeline_mode<synchronous>, transform_indices = @transform_8, window_bounds = array<i64: 1, 256>}, {pipeline_mode = #tpu.pipeline_mode<synchronous>, transform_indices = @transform_9, window_bounds = array<i64: 768, 256>}, {pipeline_mode = #tpu.pipeline_mode<synchronous>, transform_indices = @transform_10, window_bounds = array<i64: 1, 256>}, {pipeline_mode = #tpu.pipeline_mode<synchronous>, transform_indices = @transform_11, window_bounds = array<i64: 1, 256>}, {pipeline_mode = #tpu.pipeline_mode<synchronous>, transform_indices = @transform_12, window_bounds = array<i64: 768, 256>}, {pipeline_mode = #tpu.pipeline_mode<synchronous>, transform_indices = @transform_13, window_bounds = array<i64: 768, 256>}, {pipeline_mode = #tpu.pipeline_mode<synchronous>, transform_indices = @transform_14, window_bounds = array<i64: 1, 256>}, {transform_indices = @transform_15, window_bounds = array<i64: 2, 32, 256>}]} {
    %cst = arith.constant 0.000000e+00 : f32
    %0 = vector.broadcast %cst : f32 to vector<8x256xf32>
    %c0 = arith.constant 0 : index
    %c0_0 = arith.constant 0 : index
    %1 = vector.load %arg17[%c0, %c0_0] : memref<88x256xf32, #tpu.memory_space<vmem>>, vector<8x256xf32>
    tpu.vector_store %arg17[%c0, %c0_0], %0 {strides = array<i32>} : memref<88x256xf32, #tpu.memory_space<vmem>>, vector<8x256xf32>,
    %cst_1 = arith.constant 0.000000e+00 : f32
    %2 = vector.broadcast %cst_1 : f32 to vector<8x256xf32>
    %c80 = arith.constant 80 : index
    %c0_2 = arith.constant 0 : index
    %3 = vector.load %arg17[%c80, %c0_2] : memref<88x256xf32, #tpu.memory_space<vmem>>, vector<8x256xf32>
    tpu.vector_store %arg17[%c80, %c0_2], %2 {strides = array<i32>} : memref<88x256xf32, #tpu.memory_space<vmem>>, vector<8x256xf32>,
    %cst_3 = arith.constant 0.000000e+00 : f32
    %4 = vector.broadcast %cst_3 : f32 to vector<8x256xf32>
    %c0_4 = arith.constant 0 : index
    %c0_5 = arith.constant 0 : index
    %5 = vector.load %arg18[%c0_4, %c0_5] : memref<88x256xf32, #tpu.memory_space<vmem>>, vector<8x256xf32>
    tpu.vector_store %arg18[%c0_4, %c0_5], %4 {strides = array<i32>} : memref<88x256xf32, #tpu.memory_space<vmem>>, vector<8x256xf32>,
    %cst_6 = arith.constant 0.000000e+00 : f32
    %6 = vector.broadcast %cst_6 : f32 to vector<8x256xf32>
    %c80_7 = arith.constant 80 : index
    %c0_8 = arith.constant 0 : index
    %7 = vector.load %arg18[%c80_7, %c0_8] : memref<88x256xf32, #tpu.memory_space<vmem>>, vector<8x256xf32>
    tpu.vector_store %arg18[%c80_7, %c0_8], %6 {strides = array<i32>} : memref<88x256xf32, #tpu.memory_space<vmem>>, vector<8x256xf32>,
    %8 = tpu.iota {dimensions = array<i32: 0>} : vector<72x1xi32>
    %c40_i32 = arith.constant 40 : i32
    %c0_i32 = arith.constant 0 : i32
    %9 = arith.cmpi eq, %c40_i32, %c0_i32 : i32
    %c1_i32 = arith.constant 1 : i32
    %10 = arith.select %9, %c1_i32, %c40_i32 : i32
    %11 = vector.broadcast %10 : i32 to vector<72x1xi32>
    %12 = arith.remsi %8, %11 : vector<72x1xi32>
    %c0_i32_9 = arith.constant 0 : i32
    %13 = vector.broadcast %c0_i32_9 : i32 to vector<72x1xi32>
    %14 = arith.cmpi ne, %12, %13 : vector<72x1xi32>
    %c0_i32_10 = arith.constant 0 : i32
    %15 = vector.broadcast %c0_i32_10 : i32 to vector<72x1xi32>
    %16 = arith.cmpi slt, %12, %15 : vector<72x1xi32>
    %c0_i32_11 = arith.constant 0 : i32
    %17 = arith.cmpi slt, %10, %c0_i32_11 : i32
    %18 = vector.broadcast %17 : i1 to vector<72x1xi1>
    %19 = vector.broadcast %18 : vector<72x1xi1> to vector<72x1xi1>
    %20 = arith.xori %16, %19 : vector<72x1xi1>
    %21 = arith.andi %20, %14 : vector<72x1xi1>
    %22 = vector.broadcast %10 : i32 to vector<72x1xi32>
    %23 = arith.addi %12, %22 : vector<72x1xi32>
    %24 = arith.select %21, %23, %12 : vector<72x1xi1>, vector<72x1xi32>
    %c32_i32 = arith.constant 32 : i32
    %25 = vector.broadcast %c32_i32 : i32 to vector<72x1xi32>
    %26 = arith.cmpi slt, %24, %25 : vector<72x1xi32>
    %27 = arith.extui %26 : vector<72x1xi1> to vector<72x1xi32>
    %28 = arith.sitofp %27 : vector<72x1xi32> to vector<72x1xf32>
    %c0_12 = arith.constant 0 : index
    %c0_13 = arith.constant 0 : index
    %c0_14 = arith.constant 0 : index
    %29 = vector.load %arg1[%c0_12, %c0_13, %c0_14] : memref<2x16x128xf32, #tpu.memory_space<vmem>>, vector<2x16x128xf32>
    %30 = vector.shape_cast %29 : vector<2x16x128xf32> to vector<32x128xf32>
    %31 = arith.truncf %30 : vector<32x128xf32> to vector<32x128xbf16>
    %c0_15 = arith.constant 0 : index
    %c0_16 = arith.constant 0 : index
    %32 = vector.load %arg3[%c0_15, %c0_16] : memref<128x256xbf16, #tpu.memory_space<vmem>>, vector<128x256xbf16>
    %cst_17 = arith.constant dense<0.000000e+00> : vector<32x256xf32>
    %33 = tpu.matmul %31, %32, %cst_17 {dimension_numbers = #tpu.dot_dimension_numbers<[1], [0], [0], [1], [0, 0, 1, 1], [], []>} : vector<32x128xbf16>, vector<128x256xbf16>, vector<32x256xf32> -> vector<32x256xf32>
    %c0_18 = arith.constant 0 : index
    %c0_19 = arith.constant 0 : index
    %34 = vector.load %arg2[%c0_18, %c0_19] : memref<72x32xbf16, #tpu.memory_space<vmem>>, vector<72x32xbf16>
    %35 = arith.truncf %33 : vector<32x256xf32> to vector<32x256xbf16>
    %cst_20 = arith.constant dense<0.000000e+00> : vector<72x256xf32>
    %36 = tpu.matmul %34, %35, %cst_20 {dimension_numbers = #tpu.dot_dimension_numbers<[1], [0], [0], [1], [0, 0, 1, 1], [], []>} : vector<72x32xbf16>, vector<32x256xbf16>, vector<72x256xf32> -> vector<72x256xf32>
    %c0_21 = arith.constant 0 : index
    %c0_22 = arith.constant 0 : index
    %37 = vector.load %arg4[%c0_21, %c0_22] : memref<1x256xf32, #tpu.memory_space<vmem>>, vector<1x256xf32>
    %38 = vector.broadcast %37 : vector<1x256xf32> to vector<72x256xf32>
    %39 = arith.mulf %36, %38 : vector<72x256xf32>
    %c0_23 = arith.constant 0 : index
    %c0_24 = arith.constant 0 : index
    %40 = vector.load %arg5[%c0_23, %c0_24] : memref<1x256xf32, #tpu.memory_space<vmem>>, vector<1x256xf32>
    %41 = vector.broadcast %40 : vector<1x256xf32> to vector<72x256xf32>
    %42 = arith.addf %39, %41 : vector<72x256xf32>
    %cst_25 = arith.constant 0.000000e+00 : f32
    %43 = vector.broadcast %cst_25 : f32 to vector<72x256xf32>
    %44 = arith.maximumf %42, %43 : vector<72x256xf32>
    %45 = vector.broadcast %28 : vector<72x1xf32> to vector<72x256xf32>
    %46 = arith.mulf %44, %45 : vector<72x256xf32>
    %c8 = arith.constant 8 : index
    %c0_26 = arith.constant 0 : index
    %47 = vector.load %arg17[%c8, %c0_26] : memref<88x256xf32, #tpu.memory_space<vmem>>, vector<72x256xf32>
    tpu.vector_store %arg17[%c8, %c0_26], %46 {strides = array<i32>} : memref<88x256xf32, #tpu.memory_space<vmem>>, vector<72x256xf32>,
    %c7 = arith.constant 7 : index
    %c0_27 = arith.constant 0 : index
    %48 = vector.load %arg17[%c7, %c0_27] : memref<88x256xf32, #tpu.memory_space<vmem>>, vector<72x256xf32>
    %c9 = arith.constant 9 : index
    %c0_28 = arith.constant 0 : index
    %49 = vector.load %arg17[%c9, %c0_28] : memref<88x256xf32, #tpu.memory_space<vmem>>, vector<72x256xf32>
    %50 = tpu.concatenate %48, %46, %49 in 1 : vector<72x256xf32>, vector<72x256xf32>, vector<72x256xf32> -> vector<72x768xf32>
    %51 = arith.truncf %50 : vector<72x768xf32> to vector<72x768xbf16>
    %c0_29 = arith.constant 0 : index
    %c0_30 = arith.constant 0 : index
    %52 = vector.load %arg6[%c0_29, %c0_30] : memref<768x256xbf16, #tpu.memory_space<vmem>>, vector<768x256xbf16>
    %cst_31 = arith.constant dense<0.000000e+00> : vector<72x256xf32>
    %53 = tpu.matmul %51, %52, %cst_31 {dimension_numbers = #tpu.dot_dimension_numbers<[1], [0], [0], [1], [0, 0, 1, 1], [], []>} : vector<72x768xbf16>, vector<768x256xbf16>, vector<72x256xf32> -> vector<72x256xf32>
    %c0_32 = arith.constant 0 : index
    %c0_33 = arith.constant 0 : index
    %54 = vector.load %arg7[%c0_32, %c0_33] : memref<1x256xf32, #tpu.memory_space<vmem>>, vector<1x256xf32>
    %55 = vector.broadcast %54 : vector<1x256xf32> to vector<72x256xf32>
    %56 = arith.addf %53, %55 : vector<72x256xf32>
    %57 = vector.broadcast %28 : vector<72x1xf32> to vector<72x256xf32>
    %58 = arith.mulf %56, %57 : vector<72x256xf32>
    %c8_34 = arith.constant 8 : index
    %c0_35 = arith.constant 0 : index
    %59 = vector.load %arg17[%c8_34, %c0_35] : memref<88x256xf32, #tpu.memory_space<vmem>>, vector<72x256xf32>
    tpu.vector_store %arg17[%c8_34, %c0_35], %58 {strides = array<i32>} : memref<88x256xf32, #tpu.memory_space<vmem>>, vector<72x256xf32>,
    %c7_36 = arith.constant 7 : index
    %c0_37 = arith.constant 0 : index
    %60 = vector.load %arg17[%c7_36, %c0_37] : memref<88x256xf32, #tpu.memory_space<vmem>>, vector<72x256xf32>
    %c9_38 = arith.constant 9 : index
    %c0_39 = arith.constant 0 : index
    %61 = vector.load %arg17[%c9_38, %c0_39] : memref<88x256xf32, #tpu.memory_space<vmem>>, vector<72x256xf32>
    %62 = tpu.concatenate %60, %58, %61 in 1 : vector<72x256xf32>, vector<72x256xf32>, vector<72x256xf32> -> vector<72x768xf32>
    %63 = arith.truncf %62 : vector<72x768xf32> to vector<72x768xbf16>
    %c0_40 = arith.constant 0 : index
    %c0_41 = arith.constant 0 : index
    %64 = vector.load %arg14[%c0_40, %c0_41] : memref<768x256xbf16, #tpu.memory_space<vmem>>, vector<768x256xbf16>
    %cst_42 = arith.constant dense<0.000000e+00> : vector<72x256xf32>
    %65 = tpu.matmul %63, %64, %cst_42 {dimension_numbers = #tpu.dot_dimension_numbers<[1], [0], [0], [1], [0, 0, 1, 1], [], []>} : vector<72x768xbf16>, vector<768x256xbf16>, vector<72x256xf32> -> vector<72x256xf32>
    %c0_43 = arith.constant 0 : index
    %c0_44 = arith.constant 0 : index
    %66 = vector.load %arg8[%c0_43, %c0_44] : memref<1x256xf32, #tpu.memory_space<vmem>>, vector<1x256xf32>
    %67 = vector.broadcast %66 : vector<1x256xf32> to vector<72x256xf32>
    %68 = arith.mulf %56, %67 : vector<72x256xf32>
    %c0_45 = arith.constant 0 : index
    %c0_46 = arith.constant 0 : index
    %69 = vector.load %arg9[%c0_45, %c0_46] : memref<1x256xf32, #tpu.memory_space<vmem>>, vector<1x256xf32>
    %70 = vector.broadcast %69 : vector<1x256xf32> to vector<72x256xf32>
    %71 = arith.addf %68, %70 : vector<72x256xf32>
    %cst_47 = arith.constant 0.000000e+00 : f32
    %72 = vector.broadcast %cst_47 : f32 to vector<72x256xf32>
    %73 = arith.maximumf %71, %72 : vector<72x256xf32>
    %74 = vector.broadcast %28 : vector<72x1xf32> to vector<72x256xf32>
    %75 = arith.mulf %73, %74 : vector<72x256xf32>
    %c8_48 = arith.constant 8 : index
    %c0_49 = arith.constant 0 : index
    %76 = vector.load %arg17[%c8_48, %c0_49] : memref<88x256xf32, #tpu.memory_space<vmem>>, vector<72x256xf32>
    tpu.vector_store %arg17[%c8_48, %c0_49], %75 {strides = array<i32>} : memref<88x256xf32, #tpu.memory_space<vmem>>, vector<72x256xf32>,
    %c6 = arith.constant 6 : index
    %c0_50 = arith.constant 0 : index
    %77 = vector.load %arg17[%c6, %c0_50] : memref<88x256xf32, #tpu.memory_space<vmem>>, vector<72x256xf32>
    %c10 = arith.constant 10 : index
    %c0_51 = arith.constant 0 : index
    %78 = vector.load %arg17[%c10, %c0_51] : memref<88x256xf32, #tpu.memory_space<vmem>>, vector<72x256xf32>
    %79 = tpu.concatenate %77, %75, %78 in 1 : vector<72x256xf32>, vector<72x256xf32>, vector<72x256xf32> -> vector<72x768xf32>
    %80 = arith.truncf %79 : vector<72x768xf32> to vector<72x768xbf16>
    %c0_52 = arith.constant 0 : index
    %c0_53 = arith.constant 0 : index
    %81 = vector.load %arg10[%c0_52, %c0_53] : memref<768x256xbf16, #tpu.memory_space<vmem>>, vector<768x256xbf16>
    %cst_54 = arith.constant dense<0.000000e+00> : vector<72x256xf32>
    %82 = tpu.matmul %80, %81, %cst_54 {dimension_numbers = #tpu.dot_dimension_numbers<[1], [0], [0], [1], [0, 0, 1, 1], [], []>} : vector<72x768xbf16>, vector<768x256xbf16>, vector<72x256xf32> -> vector<72x256xf32>
    %c0_55 = arith.constant 0 : index
    %c0_56 = arith.constant 0 : index
    %83 = vector.load %arg11[%c0_55, %c0_56] : memref<1x256xf32, #tpu.memory_space<vmem>>, vector<1x256xf32>
    %84 = vector.broadcast %83 : vector<1x256xf32> to vector<72x256xf32>
    %85 = arith.mulf %82, %84 : vector<72x256xf32>
    %c0_57 = arith.constant 0 : index
    %c0_58 = arith.constant 0 : index
    %86 = vector.load %arg12[%c0_57, %c0_58] : memref<1x256xf32, #tpu.memory_space<vmem>>, vector<1x256xf32>
    %87 = vector.broadcast %86 : vector<1x256xf32> to vector<72x256xf32>
    %88 = arith.addf %85, %87 : vector<72x256xf32>
    %cst_59 = arith.constant 0.000000e+00 : f32
    %89 = vector.broadcast %cst_59 : f32 to vector<72x256xf32>
    %90 = arith.maximumf %88, %89 : vector<72x256xf32>
    %91 = vector.broadcast %28 : vector<72x1xf32> to vector<72x256xf32>
    %92 = arith.mulf %90, %91 : vector<72x256xf32>
    %c8_60 = arith.constant 8 : index
    %c0_61 = arith.constant 0 : index
    %93 = vector.load %arg18[%c8_60, %c0_61] : memref<88x256xf32, #tpu.memory_space<vmem>>, vector<72x256xf32>
    tpu.vector_store %arg18[%c8_60, %c0_61], %92 {strides = array<i32>} : memref<88x256xf32, #tpu.memory_space<vmem>>, vector<72x256xf32>,
    %c5 = arith.constant 5 : index
    %c0_62 = arith.constant 0 : index
    %94 = vector.load %arg18[%c5, %c0_62] : memref<88x256xf32, #tpu.memory_space<vmem>>, vector<72x256xf32>
    %c11 = arith.constant 11 : index
    %c0_63 = arith.constant 0 : index
    %95 = vector.load %arg18[%c11, %c0_63] : memref<88x256xf32, #tpu.memory_space<vmem>>, vector<72x256xf32>
    %96 = tpu.concatenate %94, %92, %95 in 1 : vector<72x256xf32>, vector<72x256xf32>, vector<72x256xf32> -> vector<72x768xf32>
    %97 = arith.truncf %96 : vector<72x768xf32> to vector<72x768xbf16>
    %c0_64 = arith.constant 0 : index
    %c0_65 = arith.constant 0 : index
    %98 = vector.load %arg13[%c0_64, %c0_65] : memref<768x256xbf16, #tpu.memory_space<vmem>>, vector<768x256xbf16>
    %cst_66 = arith.constant dense<0.000000e+00> : vector<72x256xf32>
    %99 = tpu.matmul %97, %98, %cst_66 {dimension_numbers = #tpu.dot_dimension_numbers<[1], [0], [0], [1], [0, 0, 1, 1], [], []>} : vector<72x768xbf16>, vector<768x256xbf16>, vector<72x256xf32> -> vector<72x256xf32>
    %100 = arith.addf %99, %65 : vector<72x256xf32>
    %c0_67 = arith.constant 0 : index
    %c0_68 = arith.constant 0 : index
    %101 = vector.load %arg15[%c0_67, %c0_68] : memref<1x256xf32, #tpu.memory_space<vmem>>, vector<1x256xf32>
    %102 = vector.broadcast %101 : vector<1x256xf32> to vector<72x256xf32>
    %103 = arith.addf %100, %102 : vector<72x256xf32>
    %104 = vector.extract_strided_slice %103 {offsets = [0, 0], sizes = [32, 256], strides = [1, 1]} : vector<72x256xf32> to vector<32x256xf32>
    %c0_69 = arith.constant 0 : index
    %c0_70 = arith.constant 0 : index
    %c0_71 = arith.constant 0 : index
    %105 = vector.load %arg16[%c0_69, %c0_70, %c0_71] : memref<2x32x256xf32, #tpu.memory_space<vmem>>, vector<1x32x256xf32>
    %106 = vector.shape_cast %105 : vector<1x32x256xf32> to vector<32x256xf32>
    %107 = vector.shape_cast %104 : vector<32x256xf32> to vector<1x32x256xf32>
    tpu.vector_store %arg16[%c0_69, %c0_70, %c0_71], %107 {strides = array<i32>} : memref<2x32x256xf32, #tpu.memory_space<vmem>>, vector<1x32x256xf32>,
    %108 = vector.extract_strided_slice %103 {offsets = [40, 0], sizes = [32, 256], strides = [1, 1]} : vector<72x256xf32> to vector<32x256xf32>
    %c1 = arith.constant 1 : index
    %c0_72 = arith.constant 0 : index
    %c0_73 = arith.constant 0 : index
    %109 = vector.load %arg16[%c1, %c0_72, %c0_73] : memref<2x32x256xf32, #tpu.memory_space<vmem>>, vector<1x32x256xf32>
    %110 = vector.shape_cast %109 : vector<1x32x256xf32> to vector<32x256xf32>
    %111 = vector.shape_cast %108 : vector<32x256xf32> to vector<1x32x256xf32>
    tpu.vector_store %arg16[%c1, %c0_72, %c0_73], %111 {strides = array<i32>} : memref<2x32x256xf32, #tpu.memory_space<vmem>>, vector<1x32x256xf32>,
    return
  }
  func.func @transform_0(%arg0: i32) -> (i32, i32, i32) {
    %c0_i32 = arith.constant 0 : i32
    %c0_i32_0 = arith.constant 0 : i32
    %c0_i32_1 = arith.constant 0 : i32
    return %arg0, %c0_i32, %c0_i32_0 : i32, i32, i32
  }
  func.func @transform_1(%arg0: i32) -> (i32, i32) {
    %c0_i32 = arith.constant 0 : i32
    %c0_i32_0 = arith.constant 0 : i32
    %c0_i32_1 = arith.constant 0 : i32
    return %c0_i32, %c0_i32_0 : i32, i32
  }
  func.func @transform_2(%arg0: i32) -> (i32, i32) {
    %c0_i32 = arith.constant 0 : i32
    %c0_i32_0 = arith.constant 0 : i32
    %c0_i32_1 = arith.constant 0 : i32
    return %c0_i32, %c0_i32_0 : i32, i32
  }
  func.func @transform_3(%arg0: i32) -> (i32, i32) {
    %c0_i32 = arith.constant 0 : i32
    %c0_i32_0 = arith.constant 0 : i32
    %c0_i32_1 = arith.constant 0 : i32
    return %c0_i32, %c0_i32_0 : i32, i32
  }
  func.func @transform_4(%arg0: i32) -> (i32, i32) {
    %c0_i32 = arith.constant 0 : i32
    %c0_i32_0 = arith.constant 0 : i32
    %c0_i32_1 = arith.constant 0 : i32
    return %c0_i32, %c0_i32_0 : i32, i32
  }
  func.func @transform_5(%arg0: i32) -> (i32, i32) {
    %c0_i32 = arith.constant 0 : i32
    %c0_i32_0 = arith.constant 0 : i32
    %c0_i32_1 = arith.constant 0 : i32
    return %c0_i32, %c0_i32_0 : i32, i32
  }
  func.func @transform_6(%arg0: i32) -> (i32, i32) {
    %c0_i32 = arith.constant 0 : i32
    %c0_i32_0 = arith.constant 0 : i32
    %c0_i32_1 = arith.constant 0 : i32
    return %c0_i32, %c0_i32_0 : i32, i32
  }
  func.func @transform_7(%arg0: i32) -> (i32, i32) {
    %c0_i32 = arith.constant 0 : i32
    %c0_i32_0 = arith.constant 0 : i32
    %c0_i32_1 = arith.constant 0 : i32
    return %c0_i32, %c0_i32_0 : i32, i32
  }
  func.func @transform_8(%arg0: i32) -> (i32, i32) {
    %c0_i32 = arith.constant 0 : i32
    %c0_i32_0 = arith.constant 0 : i32
    %c0_i32_1 = arith.constant 0 : i32
    return %c0_i32, %c0_i32_0 : i32, i32
  }
  func.func @transform_9(%arg0: i32) -> (i32, i32) {
    %c0_i32 = arith.constant 0 : i32
    %c0_i32_0 = arith.constant 0 : i32
    %c0_i32_1 = arith.constant 0 : i32
    return %c0_i32, %c0_i32_0 : i32, i32
  }
  func.func @transform_10(%arg0: i32) -> (i32, i32) {
    %c0_i32 = arith.constant 0 : i32
    %c0_i32_0 = arith.constant 0 : i32
    %c0_i32_1 = arith.constant 0 : i32
    return %c0_i32, %c0_i32_0 : i32, i32
  }
  func.func @transform_11(%arg0: i32) -> (i32, i32) {
    %c0_i32 = arith.constant 0 : i32
    %c0_i32_0 = arith.constant 0 : i32
    %c0_i32_1 = arith.constant 0 : i32
    return %c0_i32, %c0_i32_0 : i32, i32
  }
  func.func @transform_12(%arg0: i32) -> (i32, i32) {
    %c0_i32 = arith.constant 0 : i32
    %c0_i32_0 = arith.constant 0 : i32
    %c0_i32_1 = arith.constant 0 : i32
    return %c0_i32, %c0_i32_0 : i32, i32
  }
  func.func @transform_13(%arg0: i32) -> (i32, i32) {
    %c0_i32 = arith.constant 0 : i32
    %c0_i32_0 = arith.constant 0 : i32
    %c0_i32_1 = arith.constant 0 : i32
    return %c0_i32, %c0_i32_0 : i32, i32
  }
  func.func @transform_14(%arg0: i32) -> (i32, i32) {
    %c0_i32 = arith.constant 0 : i32
    %c0_i32_0 = arith.constant 0 : i32
    %c0_i32_1 = arith.constant 0 : i32
    return %c0_i32, %c0_i32_0 : i32, i32
  }
  func.func @transform_15(%arg0: i32) -> (i32, i32, i32) {
    %c0_i32 = arith.constant 0 : i32
    %c0_i32_0 = arith.constant 0 : i32
    %c0_i32_1 = arith.constant 0 : i32
    return %arg0, %c0_i32, %c0_i32_0 : i32, i32, i32
  }
}

</mosaic_0001>

<llo_original>
// kernel: tpu_custom_call.1
$region0: #{tpu_custom_call.1}
  #allocation0 [shape = 'u32[]', space=smem, size = 0x4, offset = 0x4, fixed_abs, tag = 'smem constant byte address 0x4 - core index']
  #allocation1 [shape = 'u32[144,128]{1,0:T(1,128)}', space=vmem, size = 0x12000, scoped, tag = 'internal scratch']
  #allocation2 [shape = 'f32[88,256]{1,0:T(8,128)}', space=vmem, size = 0x16000, scoped, tag = 'scratch operand']
  #allocation3 [shape = 'f32[88,256]{1,0:T(8,128)}', space=vmem, size = 0x16000, scoped, tag = 'scratch operand']
  %s0 = inlined_call_operand.vmem [shape: f32[2,16,128], index: 0, kind: input, shape index: {}]
  %s1 = inlined_call_operand.vmem [shape: bf16[72,32], index: 1, kind: input, shape index: {}]
  %s2 = inlined_call_operand.hbm [shape: bf16[128,256], index: 2, kind: input, shape index: {}]
  %s3 = inlined_call_operand.vmem [shape: f32[1,256], index: 3, kind: input, shape index: {}]
  %s4 = inlined_call_operand.vmem [shape: f32[1,256], index: 4, kind: input, shape index: {}]
  %s5 = inlined_call_operand.hbm [shape: bf16[768,256], index: 5, kind: input, shape index: {}]
  %s6 = inlined_call_operand.vmem [shape: f32[1,256], index: 6, kind: input, shape index: {}]
  %s7 = inlined_call_operand.vmem [shape: f32[1,256], index: 7, kind: input, shape index: {}]
  %s8 = inlined_call_operand.vmem [shape: f32[1,256], index: 8, kind: input, shape index: {}]
  %s9 = inlined_call_operand.hbm [shape: bf16[768,256], index: 9, kind: input, shape index: {}]
  %s10 = inlined_call_operand.vmem [shape: f32[1,256], index: 10, kind: input, shape index: {}]
  %s11 = inlined_call_operand.vmem [shape: f32[1,256], index: 11, kind: input, shape index: {}]
  %s12 = inlined_call_operand.hbm [shape: bf16[768,256], index: 12, kind: input, shape index: {}]
  %s13 = inlined_call_operand.hbm [shape: bf16[768,256], index: 13, kind: input, shape index: {}]
  %s14 = inlined_call_operand.vmem [shape: f32[1,256], index: 14, kind: input, shape index: {}]
  %s15 = inlined_call_operand.hbm [shape: f32[2,32,256], index: 15, kind: output, shape index: {}]
  %s16 = sld [smem:[#allocation0]]
  $region90: #{tpu_custom_call.1} parent=0
    _
  %s18 = ssub.s32 1, %s16
  %s19 = scalar_select 0, %s18, %s16
  $region1: #{tpu_custom_call.1} parent=0
    #allocation4 [shape = 'u8[65536]{0}', space=vmem, size = 0x10000, scoped, tag = 'input window, operand 2, single buffered']
    #allocation5 [shape = 's32[1]{0}', space=sflag, size = 0x4, scoped, tag = 'scoped memory for tpu_custom_call.1']
    #allocation6 [shape = 's32[1]{0}', space=sflag, size = 0x4, scoped, tag = 'scoped memory for tpu_custom_call.1']
    #allocation7 [shape = 'u8[393216]{0}', space=vmem, size = 0x60000, scoped, tag = 'input window, operand 5, single buffered']
    #allocation8 [shape = 's32[1]{0}', space=sflag, size = 0x4, scoped, tag = 'scoped memory for tpu_custom_call.1']
    #allocation9 [shape = 'u8[393216]{0}', space=vmem, size = 0x60000, scoped, tag = 'input window, operand 9, single buffered']
    #allocation10 [shape = 'u8[393216]{0}', space=vmem, size = 0x60000, scoped, tag = 'input window, operand 12, single buffered']
    #allocation11 [shape = 's32[1]{0}', space=sflag, size = 0x4, scoped, tag = 'scoped memory for tpu_custom_call.1']
    #allocation12 [shape = 'u8[393216]{0}', space=vmem, size = 0x60000, scoped, tag = 'input window, operand 13, single buffered']
    #allocation13 [shape = 'u8[65536]{0}', space=vmem, size = 0x10000, scoped, tag = 'output window, operand 0, single buffered']
    %20 = vsyncpa [#allocation5], 0
    %21 = vsyncpa [#allocation8], 0
    %22 = vsyncpa [#allocation11], 0
    %23 = vsyncpa [#allocation6], 0
    // Predicated region
    $region2: #{tpu_custom_call.1} parent=1 // pred_check
      _
    $region3: #{tpu_custom_call.1} parent=1 // pred_check_branch
      %25 = sbr.rel (0) target = $region5
    $region4: #{tpu_custom_call.1} parent=1 // pred_region
      _
    $region5: #{tpu_custom_call.1} parent=1 // pred_fallthru
      _
    // Predicated region
    $region6: #{tpu_custom_call.1} parent=1 // pred_check
      _
    $region7: #{tpu_custom_call.1} parent=1 // pred_check_branch
      %27 = sbr.rel (0) target = $region9
    $region8: #{tpu_custom_call.1} parent=1 // pred_region
      _
    $region9: #{tpu_custom_call.1} parent=1 // pred_fallthru
      _
    // Predicated region
    $region10: #{tpu_custom_call.1} parent=1 // pred_check
      _
    $region11: #{tpu_custom_call.1} parent=1 // pred_check_branch
      %29 = sbr.rel (0) target = $region13
    $region12: #{tpu_custom_call.1} parent=1 // pred_region
      %s31 = ssub.s32 2048, 2048
      %32 = vsyncadd [#allocation5], %s31
      %s33 = sshll.u32 [#allocation4], 4
      %s34 = int_to_ptr.vmem [resolvable:$true] %s33
      %39 = dma.hbm_to_vmem [thread:$0]  %s2, 2048, %s34, [#allocation5], 128, 128, 8
    $region13: #{tpu_custom_call.1} parent=1 // pred_fallthru
      _
    // Predicated region
    $region14: #{tpu_custom_call.1} parent=1 // pred_check
      _
    $region15: #{tpu_custom_call.1} parent=1 // pred_check_branch
      %41 = sbr.rel (0) target = $region17
    $region16: #{tpu_custom_call.1} parent=1 // pred_region
      _
    $region17: #{tpu_custom_call.1} parent=1 // pred_fallthru
      _
    // Predicated region
    $region18: #{tpu_custom_call.1} parent=1 // pred_check
      _
    $region19: #{tpu_custom_call.1} parent=1 // pred_check_branch
      %43 = sbr.rel (0) target = $region21
    $region20: #{tpu_custom_call.1} parent=1 // pred_region
      _
    $region21: #{tpu_custom_call.1} parent=1 // pred_fallthru
      _
    // Predicated region
    $region22: #{tpu_custom_call.1} parent=1 // pred_check
      _
    $region23: #{tpu_custom_call.1} parent=1 // pred_check_branch
      %45 = sbr.rel (0) target = $region25
    $region24: #{tpu_custom_call.1} parent=1 // pred_region
      %s47 = ssub.s32 12288, 12288
      %48 = vsyncadd [#allocation8], %s47
      %s49 = sshll.u32 [#allocation7], 4
      %s50 = int_to_ptr.vmem [resolvable:$true] %s49
      %55 = dma.hbm_to_vmem [thread:$0]  %s5, 12288, %s50, [#allocation8], 128, 128, 8
    $region25: #{tpu_custom_call.1} parent=1 // pred_fallthru
      _
    // Predicated region
    $region26: #{tpu_custom_call.1} parent=1 // pred_check
      _
    $region27: #{tpu_custom_call.1} parent=1 // pred_check_branch
      %57 = sbr.rel (0) target = $region29
    $region28: #{tpu_custom_call.1} parent=1 // pred_region
      _
    $region29: #{tpu_custom_call.1} parent=1 // pred_fallthru
      _
    // Predicated region
    $region30: #{tpu_custom_call.1} parent=1 // pred_check
      _
    $region31: #{tpu_custom_call.1} parent=1 // pred_check_branch
      %59 = sbr.rel (0) target = $region33
    $region32: #{tpu_custom_call.1} parent=1 // pred_region
      _
    $region33: #{tpu_custom_call.1} parent=1 // pred_fallthru
      _
    // Predicated region
    $region34: #{tpu_custom_call.1} parent=1 // pred_check
      _
    $region35: #{tpu_custom_call.1} parent=1 // pred_check_branch
      %61 = sbr.rel (0) target = $region37
    $region36: #{tpu_custom_call.1} parent=1 // pred_region
      _
    $region37: #{tpu_custom_call.1} parent=1 // pred_fallthru
      _
    // Predicated region
    $region38: #{tpu_custom_call.1} parent=1 // pred_check
      _
    $region39: #{tpu_custom_call.1} parent=1 // pred_check_branch
      %63 = sbr.rel (0) target = $region41
    $region40: #{tpu_custom_call.1} parent=1 // pred_region
      %s65 = ssub.s32 12288, 12288
      %66 = vsyncadd [#allocation8], %s65
      %s67 = sshll.u32 [#allocation9], 4
      %s68 = int_to_ptr.vmem [resolvable:$true] %s67
      %73 = dma.hbm_to_vmem [thread:$0]  %s9, 12288, %s68, [#allocation8], 128, 128, 8
    $region41: #{tpu_custom_call.1} parent=1 // pred_fallthru
      _
    // Predicated region
    $region42: #{tpu_custom_call.1} parent=1 // pred_check
      _
    $region43: #{tpu_custom_call.1} parent=1 // pred_check_branch
      %75 = sbr.rel (0) target = $region45
    $region44: #{tpu_custom_call.1} parent=1 // pred_region
      _
    $region45: #{tpu_custom_call.1} parent=1 // pred_fallthru
      _
    // Predicated region
    $region46: #{tpu_custom_call.1} parent=1 // pred_check
      _
    $region47: #{tpu_custom_call.1} parent=1 // pred_check_branch
      %77 = sbr.rel (0) target = $region49
    $region48: #{tpu_custom_call.1} parent=1 // pred_region
      _
    $region49: #{tpu_custom_call.1} parent=1 // pred_fallthru
      _
    // Predicated region
    $region50: #{tpu_custom_call.1} parent=1 // pred_check
      _
    $region51: #{tpu_custom_call.1} parent=1 // pred_check_branch
      %79 = sbr.rel (0) target = $region53
    $region52: #{tpu_custom_call.1} parent=1 // pred_region
      %s81 = ssub.s32 12288, 12288
      %82 = vsyncadd [#allocation11], %s81
      %s83 = sshll.u32 [#allocation10], 4
      %s84 = int_to_ptr.vmem [resolvable:$true] %s83
      %89 = dma.hbm_to_vmem [thread:$0]  %s12, 12288, %s84, [#allocation11], 128, 128, 8
    $region53: #{tpu_custom_call.1} parent=1 // pred_fallthru
      _
    // Predicated region
    $region54: #{tpu_custom_call.1} parent=1 // pred_check
      _
    $region55: #{tpu_custom_call.1} parent=1 // pred_check_branch
      %91 = sbr.rel (0) target = $region57
    $region56: #{tpu_custom_call.1} parent=1 // pred_region
      %s93 = ssub.s32 12288, 12288
      %94 = vsyncadd [#allocation11], %s93
      %s95 = sshll.u32 [#allocation12], 4
      %s96 = int_to_ptr.vmem [resolvable:$true] %s95
      %101 = dma.hbm_to_vmem [thread:$0]  %s13, 12288, %s96, [#allocation11], 128, 128, 8
    $region57: #{tpu_custom_call.1} parent=1 // pred_fallthru
      _
    // Predicated region
    $region58: #{tpu_custom_call.1} parent=1 // pred_check
      _
    $region59: #{tpu_custom_call.1} parent=1 // pred_check_branch
      %103 = sbr.rel (0) target = $region61
    $region60: #{tpu_custom_call.1} parent=1 // pred_region
      _
    $region61: #{tpu_custom_call.1} parent=1 // pred_fallthru
      _
    // Predicated region
    $region62: #{tpu_custom_call.1} parent=1 // pred_check
      _
    $region63: #{tpu_custom_call.1} parent=1 // pred_check_branch
      %105 = sbr.rel (0) target = $region65
    $region64: #{tpu_custom_call.1} parent=1 // pred_region
      %106 = dma.done [#allocation5], 2048
    $region65: #{tpu_custom_call.1} parent=1 // pred_fallthru
      _
    // Predicated region
    $region66: #{tpu_custom_call.1} parent=1 // pred_check
      _
    $region67: #{tpu_custom_call.1} parent=1 // pred_check_branch
      %108 = sbr.rel (0) target = $region69
    $region68: #{tpu_custom_call.1} parent=1 // pred_region
      %109 = dma.done [#allocation8], 12288
    $region69: #{tpu_custom_call.1} parent=1 // pred_fallthru
      _
    // Predicated region
    $region70: #{tpu_custom_call.1} parent=1 // pred_check
      _
    $region71: #{tpu_custom_call.1} parent=1 // pred_check_branch
      %111 = sbr.rel (0) target = $region73
    $region72: #{tpu_custom_call.1} parent=1 // pred_region
      %112 = dma.done [#allocation8], 12288
    $region73: #{tpu_custom_call.1} parent=1 // pred_fallthru
      _
    // Predicated region
    $region74: #{tpu_custom_call.1} parent=1 // pred_check
      _
    $region75: #{tpu_custom_call.1} parent=1 // pred_check_branch
      %114 = sbr.rel (0) target = $region77
    $region76: #{tpu_custom_call.1} parent=1 // pred_region
      %115 = dma.done [#allocation11], 12288
    $region77: #{tpu_custom_call.1} parent=1 // pred_fallthru
      _
    // Predicated region
    $region78: #{tpu_custom_call.1} parent=1 // pred_check
      _
    $region79: #{tpu_custom_call.1} parent=1 // pred_check_branch
      %117 = sbr.rel (0) target = $region81
    $region80: #{tpu_custom_call.1} parent=1 // pred_region
      %118 = dma.done [#allocation11], 12288
    $region81: #{tpu_custom_call.1} parent=1 // pred_fallthru
      _
    %120 = vst [vmem:[#allocation2] sm:$0xff] 0.0
    %121 = vst [vmem:[#allocation2 + $0x8] sm:$0xff] 0.0
    %122 = vst [vmem:[#allocation2 + $0xa0] sm:$0xff] 0.0
    %123 = vst [vmem:[#allocation2 + $0xa8] sm:$0xff] 0.0
    %124 = vst [vmem:[#allocation3] sm:$0xff] 0.0
    %125 = vst [vmem:[#allocation3 + $0x8] sm:$0xff] 0.0
    %126 = vst [vmem:[#allocation3 + $0xa0] sm:$0xff] 0.0
    %127 = vst [vmem:[#allocation3 + $0xa8] sm:$0xff] 0.0
    %v128 = vlaneseq
    %v129 = vshrl.u32 %v128, 7
    %v130 = vadd.s32 %v129, 8
    %v131 = vadd.s32 %v129, 16
    %v132 = vadd.s32 %v129, 24
    %v133 = vadd.s32 %v129, 32
    %v134 = vadd.s32 %v129, 40
    %v135 = vadd.s32 %v129, 48
    %v136 = vadd.s32 %v129, 56
    %v137 = vadd.s32 %v129, 64
    %vm138 = vcmp.lt.s32.totalorder %v129, 0
    %v139 = vsub.s32 0, %v129
    %v140 = vsel %vm138, %v139, %v129
    %v141 = vmul.u32.u64.compose %v140, 3435973837
    %v142 = vextract.low.u32 %v141
    %v143 = vextract.high.u32 %v141
    %v144 = vshrl.u32 %v143, 5
    %v145 = vmul.u32 %v144, 40
    %v146 = vsub.s32 %v140, %v145
    %v147 = vsub.s32 0, %v146
    %v148 = vsel %vm138, %v147, %v146
    %vm149 = vcmp.lt.s32.totalorder %v130, 0
    %v150 = vsub.s32 0, %v130
    %v151 = vsel %vm149, %v150, %v130
    %v152 = vmul.u32.u64.compose %v151, 3435973837
    %v153 = vextract.low.u32 %v152
    %v154 = vextract.high.u32 %v152
    %v155 = vshrl.u32 %v154, 5
    %v156 = vmul.u32 %v155, 40
    %v157 = vsub.s32 %v151, %v156
    %v158 = vsub.s32 0, %v157
    %v159 = vsel %vm149, %v158, %v157
    %vm160 = vcmp.lt.s32.totalorder %v131, 0
    %v161 = vsub.s32 0, %v131
    %v162 = vsel %vm160, %v161, %v131
    %v163 = vmul.u32.u64.compose %v162, 3435973837
    %v164 = vextract.low.u32 %v163
    %v165 = vextract.high.u32 %v163
    %v166 = vshrl.u32 %v165, 5
    %v167 = vmul.u32 %v166, 40
    %v168 = vsub.s32 %v162, %v167
    %v169 = vsub.s32 0, %v168
    %v170 = vsel %vm160, %v169, %v168
    %vm171 = vcmp.lt.s32.totalorder %v132, 0
    %v172 = vsub.s32 0, %v132
    %v173 = vsel %vm171, %v172, %v132
    %v174 = vmul.u32.u64.compose %v173, 3435973837
    %v175 = vextract.low.u32 %v174
    %v176 = vextract.high.u32 %v174
    %v177 = vshrl.u32 %v176, 5
    %v178 = vmul.u32 %v177, 40
    %v179 = vsub.s32 %v173, %v178
    %v180 = vsub.s32 0, %v179
    %v181 = vsel %vm171, %v180, %v179
    %vm182 = vcmp.lt.s32.totalorder %v133, 0
    %v183 = vsub.s32 0, %v133
    %v184 = vsel %vm182, %v183, %v133
    %v185 = vmul.u32.u64.compose %v184, 3435973837
    %v186 = vextract.low.u32 %v185
    %v187 = vextract.high.u32 %v185
    %v188 = vshrl.u32 %v187, 5
    %v189 = vmul.u32 %v188, 40
    %v190 = vsub.s32 %v184, %v189
    %v191 = vsub.s32 0, %v190
    %v192 = vsel %vm182, %v191, %v190
    %vm193 = vcmp.lt.s32.totalorder %v134, 0
    %v194 = vsub.s32 0, %v134
    %v195 = vsel %vm193, %v194, %v134
    %v196 = vmul.u32.u64.compose %v195, 3435973837
    %v197 = vextract.low.u32 %v196
    %v198 = vextract.high.u32 %v196
    %v199 = vshrl.u32 %v198, 5
    %v200 = vmul.u32 %v199, 40
    %v201 = vsub.s32 %v195, %v200
    %v202 = vsub.s32 0, %v201
    %v203 = vsel %vm193, %v202, %v201
    %vm204 = vcmp.lt.s32.totalorder %v135, 0
    %v205 = vsub.s32 0, %v135
    %v206 = vsel %vm204, %v205, %v135
    %v207 = vmul.u32.u64.compose %v206, 3435973837
    %v208 = vextract.low.u32 %v207
    %v209 = vextract.high.u32 %v207
    %v210 = vshrl.u32 %v209, 5
    %v211 = vmul.u32 %v210, 40
    %v212 = vsub.s32 %v206, %v211
    %v213 = vsub.s32 0, %v212
    %v214 = vsel %vm204, %v213, %v212
    %vm215 = vcmp.lt.s32.totalorder %v136, 0
    %v216 = vsub.s32 0, %v136
    %v217 = vsel %vm215, %v216, %v136
    %v218 = vmul.u32.u64.compose %v217, 3435973837
    %v219 = vextract.low.u32 %v218
    %v220 = vextract.high.u32 %v218
    %v221 = vshrl.u32 %v220, 5
    %v222 = vmul.u32 %v221, 40
    %v223 = vsub.s32 %v217, %v222
    %v224 = vsub.s32 0, %v223
    %v225 = vsel %vm215, %v224, %v223
    %vm226 = vcmp.lt.s32.totalorder %v137, 0
    %v227 = vsub.s32 0, %v137
    %v228 = vsel %vm226, %v227, %v137
    %v229 = vmul.u32.u64.compose %v228, 3435973837
    %v230 = vextract.low.u32 %v229
    %v231 = vextract.high.u32 %v229
    %v232 = vshrl.u32 %v231, 5
    %v233 = vmul.u32 %v232, 40
    %v234 = vsub.s32 %v228, %v233
    %v235 = vsub.s32 0, %v234
    %v236 = vsel %vm226, %v235, %v234
    %vm237 = vcmp.ne.s32.totalorder %v148, 0
    %vm238 = vcmp.ne.s32.totalorder %v159, 0
    %vm239 = vcmp.ne.s32.totalorder %v170, 0
    %vm240 = vcmp.ne.s32.totalorder %v181, 0
    %vm241 = vcmp.ne.s32.totalorder %v192, 0
    %vm242 = vcmp.ne.s32.totalorder %v203, 0
    %vm243 = vcmp.ne.s32.totalorder %v214, 0
    %vm244 = vcmp.ne.s32.totalorder %v225, 0
    %vm245 = vcmp.ne.s32.totalorder %v236, 0
    %vm246 = vcmp.lt.s32.totalorder %v148, 0
    %vm247 = vcmp.lt.s32.totalorder %v159, 0
    %vm248 = vcmp.lt.s32.totalorder %v170, 0
    %vm249 = vcmp.lt.s32.totalorder %v181, 0
    %vm250 = vcmp.lt.s32.totalorder %v192, 0
    %vm251 = vcmp.lt.s32.totalorder %v203, 0
    %vm252 = vcmp.lt.s32.totalorder %v214, 0
    %vm253 = vcmp.lt.s32.totalorder %v225, 0
    %vm254 = vcmp.lt.s32.totalorder %v236, 0
    %vm255 = vmand %vm246, %vm237
    %vm256 = vmand %vm247, %vm238
    %vm257 = vmand %vm248, %vm239
    %vm258 = vmand %vm249, %vm240
    %vm259 = vmand %vm250, %vm241
    %vm260 = vmand %vm251, %vm242
    %vm261 = vmand %vm252, %vm243
    %vm262 = vmand %vm253, %vm244
    %vm263 = vmand %vm254, %vm245
    %v264 = vadd.s32 %v148, 40
    %v265 = vadd.s32 %v159, 40
    %v266 = vadd.s32 %v170, 40
    %v267 = vadd.s32 %v181, 40
    %v268 = vadd.s32 %v192, 40
    %v269 = vadd.s32 %v203, 40
    %v270 = vadd.s32 %v214, 40
    %v271 = vadd.s32 %v225, 40
    %v272 = vadd.s32 %v236, 40
    %v273 = vsel %vm255, %v264, %v148
    %v274 = vsel %vm256, %v265, %v159
    %v275 = vsel %vm257, %v266, %v170
    %v276 = vsel %vm258, %v267, %v181
    %v277 = vsel %vm259, %v268, %v192
    %v278 = vsel %vm260, %v269, %v203
    %v279 = vsel %vm261, %v270, %v214
    %v280 = vsel %vm262, %v271, %v225
    %v281 = vsel %vm263, %v272, %v236
    %vm282 = vcmp.lt.s32.totalorder %v273, 32
    %vm283 = vcmp.lt.s32.totalorder %v274, 32
    %vm284 = vcmp.lt.s32.totalorder %v275, 32
    %vm285 = vcmp.lt.s32.totalorder %v276, 32
    %vm286 = vcmp.lt.s32.totalorder %v277, 32
    %vm287 = vcmp.lt.s32.totalorder %v278, 32
    %vm288 = vcmp.lt.s32.totalorder %v279, 32
    %vm289 = vcmp.lt.s32.totalorder %v280, 32
    %vm290 = vcmp.lt.s32.totalorder %v281, 32
    %v291 = vsel %vm282, 1, 0
    %v292 = vsel %vm283, 1, 0
    %v293 = vsel %vm284, 1, 0
    %v294 = vsel %vm285, 1, 0
    %v295 = vsel %vm286, 1, 0
    %v296 = vsel %vm287, 1, 0
    %v297 = vsel %vm288, 1, 0
    %v298 = vsel %vm289, 1, 0
    %v299 = vsel %vm290, 1, 0
    %v300 = vcvt.s32.f32 %v291
    %v301 = vcvt.s32.f32 %v292
    %v302 = vcvt.s32.f32 %v293
    %v303 = vcvt.s32.f32 %v294
    %v304 = vcvt.s32.f32 %v295
    %v305 = vcvt.s32.f32 %v296
    %v306 = vcvt.s32.f32 %v297
    %v307 = vcvt.s32.f32 %v298
    %v308 = vcvt.s32.f32 %v299
    %v309 = vld [vmem:[%s0] sm:$0xff]
    %v310 = vld [vmem:[%s0 + $0x8] sm:$0xff]
    %v311 = vld [vmem:[%s0 + $0x10] sm:$0xff]
    %v312 = vld [vmem:[%s0 + $0x18] sm:$0xff]
    %v313 = vpack.c.bf16 %v310, %v309
    %v314 = vpack.c.bf16 %v312, %v311
    %v315 = vld [vmem:[#allocation4] sm:$0xff]
    %v316 = vld [vmem:[#allocation4 + $0x8] sm:$0xff]
    %v317 = vld [vmem:[#allocation4 + $0x10] sm:$0xff]
    %v318 = vld [vmem:[#allocation4 + $0x18] sm:$0xff]
    %v319 = vld [vmem:[#allocation4 + $0x20] sm:$0xff]
    %v320 = vld [vmem:[#allocation4 + $0x28] sm:$0xff]
    %v321 = vld [vmem:[#allocation4 + $0x30] sm:$0xff]
    %v322 = vld [vmem:[#allocation4 + $0x38] sm:$0xff]
    %v323 = vld [vmem:[#allocation4 + $0x40] sm:$0xff]
    %v324 = vld [vmem:[#allocation4 + $0x48] sm:$0xff]
    %v325 = vld [vmem:[#allocation4 + $0x50] sm:$0xff]
    %v326 = vld [vmem:[#allocation4 + $0x58] sm:$0xff]
    %v327 = vld [vmem:[#allocation4 + $0x60] sm:$0xff]
    %v328 = vld [vmem:[#allocation4 + $0x68] sm:$0xff]
    %v329 = vld [vmem:[#allocation4 + $0x70] sm:$0xff]
    %v330 = vld [vmem:[#allocation4 + $0x78] sm:$0xff]
    %v347 = vunpack.c.l.b16 %v315
    %v348 = vunpack.c.h.b16 %v315
    %v349 = vunpack.c.l.b16 %v316
    %v350 = vunpack.c.h.b16 %v316
    %v351 = vunpack.c.l.b16 %v317
    %v352 = vunpack.c.h.b16 %v317
    %v353 = vunpack.c.l.b16 %v318
    %v354 = vunpack.c.h.b16 %v318
    %v355 = vunpack.c.l.b16 %v319
    %v356 = vunpack.c.h.b16 %v319
    %v357 = vunpack.c.l.b16 %v320
    %v358 = vunpack.c.h.b16 %v320
    %v359 = vunpack.c.l.b16 %v321
    %v360 = vunpack.c.h.b16 %v321
    %v361 = vunpack.c.l.b16 %v322
    %v362 = vunpack.c.h.b16 %v322
    %v363 = vunpack.c.l.b16 %v323
    %v364 = vunpack.c.h.b16 %v323
    %v365 = vunpack.c.l.b16 %v324
    %v366 = vunpack.c.h.b16 %v324
    %v367 = vunpack.c.l.b16 %v325
    %v368 = vunpack.c.h.b16 %v325
    %v369 = vunpack.c.l.b16 %v326
    %v370 = vunpack.c.h.b16 %v326
    %v371 = vunpack.c.l.b16 %v327
    %v372 = vunpack.c.h.b16 %v327
    %v373 = vunpack.c.l.b16 %v328
    %v374 = vunpack.c.h.b16 %v328
    %v375 = vunpack.c.l.b16 %v329
    %v376 = vunpack.c.h.b16 %v329
    %v377 = vunpack.c.l.b16 %v330
    %v378 = vunpack.c.h.b16 %v330
    %v379 = vpack.c.b16 %v349, %v347
    %v380 = vpack.c.b16 %v350, %v348
    %v381 = vpack.c.b16 %v353, %v351
    %v382 = vpack.c.b16 %v354, %v352
    %v383 = vpack.c.b16 %v357, %v355
    %v384 = vpack.c.b16 %v358, %v356
    %v385 = vpack.c.b16 %v361, %v359
    %v386 = vpack.c.b16 %v362, %v360
    %v387 = vpack.c.b16 %v365, %v363
    %v388 = vpack.c.b16 %v366, %v364
    %v389 = vpack.c.b16 %v369, %v367
    %v390 = vpack.c.b16 %v370, %v368
    %v391 = vpack.c.b16 %v373, %v371
    %v392 = vpack.c.b16 %v374, %v372
    %v393 = vpack.c.b16 %v377, %v375
    %v394 = vpack.c.b16 %v378, %v376
    %411 = vmatprep.subr.bf16.mxu0 %v380
    %412 = vmatpush1.bf16.msra.mxu0 %v379
    %413 = vmatprep.subr.bf16.mxu0 %v382
    %414 = vmatpush1.bf16.msra.mxu0 %v381
    %415 = vmatprep.subr.bf16.mxu0 %v384
    %416 = vmatpush1.bf16.msra.mxu0 %v383
    %417 = vmatprep.subr.bf16.mxu0 %v386
    %418 = vmatpush1.bf16.msra.mxu0 %v385
    %419 = vmatprep.subr.bf16.mxu0 %v388
    %420 = vmatpush1.bf16.msra.mxu0 %v387
    %421 = vmatprep.subr.bf16.mxu0 %v390
    %422 = vmatpush1.bf16.msra.mxu0 %v389
    %423 = vmatprep.subr.bf16.mxu0 %v392
    %424 = vmatpush1.bf16.msra.mxu0 %v391
    %425 = vmatprep.subr.bf16.mxu0 %v394
    %426 = vmatpush1.bf16.msra.mxu0 %v393
    %427 = vmatprep.subr.bf16.mxu0 0
    %428 = vmatpush1.bf16.msra.mxu0 0
    %429 = vmatprep.subr.bf16.mxu0 0
    %430 = vmatpush1.bf16.msra.mxu0 0
    %431 = vmatprep.subr.bf16.mxu0 0
    %432 = vmatpush1.bf16.msra.mxu0 0
    %433 = vmatprep.subr.bf16.mxu0 0
    %434 = vmatpush1.bf16.msra.mxu0 0
    %435 = vmatprep.subr.bf16.mxu0 0
    %436 = vmatpush1.bf16.msra.mxu0 0
    %437 = vmatprep.subr.bf16.mxu0 0
    %438 = vmatpush1.bf16.msra.mxu0 0
    %439 = vmatprep.subr.bf16.mxu0 0
    %440 = vmatpush1.bf16.msra.mxu0 0
    %441 = vmatprep.subr.bf16.mxu0 0
    %442 = vmatpush1.bf16.msra.mxu0 0
    %443 = vmatprep.mubr.bf16.mxu0 0
    %444 = vmatmul.mubr.bf16.gmra.mrb[0].mxu0 %v313
    %v445 = vpop.f32.mrb[0].mxu0
    %v446 = vadd.f32 0.0, %v445
    %v447 = vpop.f32.mrb[0].mxu0
    %v448 = vadd.f32 0.0, %v447
    %v449 = vpop.f32.mrb[0].mxu0
    %v450 = vadd.f32 0.0, %v449
    %v451 = vpop.f32.mrb[0].mxu0
    %v452 = vadd.f32 0.0, %v451
    %453 = vmatprep.mubr.bf16.mxu0 0
    %454 = vmatmul.mubr.bf16.gmra.mrb[0].mxu0 %v314
    %v455 = vpop.f32.mrb[0].mxu0
    %v456 = vadd.f32 0.0, %v455
    %v457 = vpop.f32.mrb[0].mxu0
    %v458 = vadd.f32 0.0, %v457
    %v459 = vpop.f32.mrb[0].mxu0
    %v460 = vadd.f32 0.0, %v459
    %v461 = vpop.f32.mrb[0].mxu0
    %v462 = vadd.f32 0.0, %v461
    %463 = vdwg.mxu0
    %v464 = vld [vmem:[%s1] sm:$0xf]
    %v465 = vld [vmem:[%s1 + $0x4] sm:$0xf]
    %v466 = vld [vmem:[%s1 + $0x8] sm:$0xf]
    %v467 = vld [vmem:[%s1 + $0xc] sm:$0xf]
    %v468 = vld [vmem:[%s1 + $0x10] sm:$0xf]
    %v469 = vld [vmem:[%s1 + $0x14] sm:$0xf]
    %v470 = vld [vmem:[%s1 + $0x18] sm:$0xf]
    %v471 = vld [vmem:[%s1 + $0x1c] sm:$0xf]
    %v472 = vld [vmem:[%s1 + $0x20] sm:$0xf]
    %v473 = vpack.c.bf16 %v450, %v446
    %v474 = vpack.c.bf16 %v452, %v448
    %v475 = vpack.c.bf16 %v460, %v456
    %v476 = vpack.c.bf16 %v462, %v458
    %v486 = vunpack.c.l.b16 %v464
    %v487 = vunpack.c.l.b16 %v465
    %v488 = vunpack.c.l.b16 %v466
    %v489 = vunpack.c.l.b16 %v467
    %v490 = vunpack.c.l.b16 %v468
    %v491 = vunpack.c.l.b16 %v469
    %v492 = vunpack.c.l.b16 %v470
    %v493 = vunpack.c.l.b16 %v471
    %v494 = vunpack.c.l.b16 %v472
    %v495 = vpack.c.b16 %v487, %v486
    %v496 = vpack.c.b16 %v489, %v488
    %v497 = vpack.c.b16 %v491, %v490
    %v498 = vpack.c.b16 %v493, %v492
    %v499 = vpack.c.b16 %v494, %v494
    %vm500 = vcmask 261120
    %v502 = vsel %vm500, %v495, 0
    %v505 = vsel %vm500, %v496, 0
    %v508 = vsel %vm500, %v497, 0
    %v511 = vsel %vm500, %v498, 0
    %v514 = vsel %vm500, %v499, 0
    %516 = vmatprep.subr.bf16.mxu0 %v474
    %517 = vmatpush1.bf16.msra.mxu0 %v473
    %518 = vmatprep.subr.bf16.mxu0 %v476
    %519 = vmatpush1.bf16.msra.mxu0 %v475
    %520 = vmatprep.subr.bf16.mxu0 0
    %521 = vmatpush1.bf16.msra.mxu0 0
    %522 = vmatprep.subr.bf16.mxu0 0
    %523 = vmatpush1.bf16.msra.mxu0 0
    %524 = vmatprep.subr.bf16.mxu0 0
    %525 = vmatpush1.bf16.msra.mxu0 0
    %526 = vmatprep.subr.bf16.mxu0 0
    %527 = vmatpush1.bf16.msra.mxu0 0
    %528 = vmatprep.subr.bf16.mxu0 0
    %529 = vmatpush1.bf16.msra.mxu0 0
    %530 = vmatprep.subr.bf16.mxu0 0
    %531 = vmatpush1.bf16.msra.mxu0 0
    %532 = vmatprep.subr.bf16.mxu0 0
    %533 = vmatpush1.bf16.msra.mxu0 0
    %534 = vmatprep.subr.bf16.mxu0 0
    %535 = vmatpush1.bf16.msra.mxu0 0
    %536 = vmatprep.subr.bf16.mxu0 0
    %537 = vmatpush1.bf16.msra.mxu0 0
    %538 = vmatprep.subr.bf16.mxu0 0
    %539 = vmatpush1.bf16.msra.mxu0 0
    %540 = vmatprep.subr.bf16.mxu0 0
    %541 = vmatpush1.bf16.msra.mxu0 0
    %542 = vmatprep.subr.bf16.mxu0 0
    %543 = vmatpush1.bf16.msra.mxu0 0
    %544 = vmatprep.subr.bf16.mxu0 0
    %545 = vmatpush1.bf16.msra.mxu0 0
    %546 = vmatprep.subr.bf16.mxu0 0
    %547 = vmatpush1.bf16.msra.mxu0 0
    %548 = vmatprep.mubr.bf16.mxu0 0
    %549 = vmatmul.mubr.bf16.gmra.mrb[0].mxu0 %v502
    %v550 = vpop.f32.mrb[0].mxu0
    %v551 = vadd.f32 0.0, %v550
    %v552 = vpop.f32.mrb[0].mxu0
    %v553 = vadd.f32 0.0, %v552
    %v554 = vpop.f32.mrb[0].mxu0
    %v555 = vadd.f32 0.0, %v554
    %v556 = vpop.f32.mrb[0].mxu0
    %v557 = vadd.f32 0.0, %v556
    %558 = vmatprep.mubr.bf16.mxu0 0
    %559 = vmatmul.mubr.bf16.gmra.mrb[0].mxu0 %v505
    %v560 = vpop.f32.mrb[0].mxu0
    %v561 = vadd.f32 0.0, %v560
    %v562 = vpop.f32.mrb[0].mxu0
    %v563 = vadd.f32 0.0, %v562
    %v564 = vpop.f32.mrb[0].mxu0
    %v565 = vadd.f32 0.0, %v564
    %v566 = vpop.f32.mrb[0].mxu0
    %v567 = vadd.f32 0.0, %v566
    %568 = vmatprep.mubr.bf16.mxu0 0
    %569 = vmatmul.mubr.bf16.gmra.mrb[0].mxu0 %v508
    %v570 = vpop.f32.mrb[0].mxu0
    %v571 = vadd.f32 0.0, %v570
    %v572 = vpop.f32.mrb[0].mxu0
    %v573 = vadd.f32 0.0, %v572
    %v574 = vpop.f32.mrb[0].mxu0
    %v575 = vadd.f32 0.0, %v574
    %v576 = vpop.f32.mrb[0].mxu0
    %v577 = vadd.f32 0.0, %v576
    %578 = vmatprep.mubr.bf16.mxu0 0
    %579 = vmatmul.mubr.bf16.gmra.mrb[0].mxu0 %v511
    %v580 = vpop.f32.mrb[0].mxu0
    %v581 = vadd.f32 0.0, %v580
    %v582 = vpop.f32.mrb[0].mxu0
    %v583 = vadd.f32 0.0, %v582
    %v584 = vpop.f32.mrb[0].mxu0
    %v585 = vadd.f32 0.0, %v584
    %v586 = vpop.f32.mrb[0].mxu0
    %v587 = vadd.f32 0.0, %v586
    %588 = vmatprep.mubr.bf16.mxu0 0
    %589 = vmatmul.mubr.bf16.gmra.mrb[0].mxu0 %v514
    %v590 = vpop.f32.mrb[0].mxu0
    %v591 = vadd.f32 0.0, %v590
    %v592 = vpop.f32.mrb[0].mxu0
    %v593 = vadd.f32 0.0, %v592
    %v594 = vpop.f32.mrb[0].mxu0
    %v595 = vpop.f32.mrb[0].mxu0
    %596 = vdwg.mxu0
    %v597 = vld [vmem:[%s3] sm:$0x3]
    %v599 = vlaneseq
    %v600 = vshrl.u32 %v599, 7
    %v601 = vsub.s32 0, %v600
    %v602 = vrot.slane %v597, %v601
    %v603 = vlaneseq
    %v604 = vshrl.u32 %v603, 7
    %v605 = vsub.s32 1, %v604
    %v606 = vrot.slane %v597, %v605
    %v609 = vmul.f32 %v551, %v602
    %v610 = vmul.f32 %v553, %v606
    %v611 = vmul.f32 %v555, %v602
    %v612 = vmul.f32 %v557, %v606
    %v613 = vmul.f32 %v561, %v602
    %v614 = vmul.f32 %v563, %v606
    %v615 = vmul.f32 %v565, %v602
    %v616 = vmul.f32 %v567, %v606
    %v617 = vmul.f32 %v571, %v602
    %v618 = vmul.f32 %v573, %v606
    %v619 = vmul.f32 %v575, %v602
    %v620 = vmul.f32 %v577, %v606
    %v621 = vmul.f32 %v581, %v602
    %v622 = vmul.f32 %v583, %v606
    %v623 = vmul.f32 %v585, %v602
    %v624 = vmul.f32 %v587, %v606
    %v625 = vmul.f32 %v591, %v602
    %v626 = vmul.f32 %v593, %v606
    %v627 = vld [vmem:[%s4] sm:$0x3]
    %v629 = vlaneseq
    %v630 = vshrl.u32 %v629, 7
    %v631 = vsub.s32 0, %v630
    %v632 = vrot.slane %v627, %v631
    %v633 = vlaneseq
    %v634 = vshrl.u32 %v633, 7
    %v635 = vsub.s32 1, %v634
    %v636 = vrot.slane %v627, %v635
    %v639 = vadd.f32 %v609, %v632
    %v640 = vadd.f32 %v610, %v636
    %v641 = vadd.f32 %v611, %v632
    %v642 = vadd.f32 %v612, %v636
    %v643 = vadd.f32 %v613, %v632
    %v644 = vadd.f32 %v614, %v636
    %v645 = vadd.f32 %v615, %v632
    %v646 = vadd.f32 %v616, %v636
    %v647 = vadd.f32 %v617, %v632
    %v648 = vadd.f32 %v618, %v636
    %v649 = vadd.f32 %v619, %v632
    %v650 = vadd.f32 %v620, %v636
    %v651 = vadd.f32 %v621, %v632
    %v652 = vadd.f32 %v622, %v636
    %v653 = vadd.f32 %v623, %v632
    %v654 = vadd.f32 %v624, %v636
    %v655 = vadd.f32 %v625, %v632
    %v656 = vadd.f32 %v626, %v636
    %v657 = vmax.f32 %v639, 0.0
    %v658 = vmax.f32 %v640, 0.0
    %v659 = vmax.f32 %v641, 0.0
    %v660 = vmax.f32 %v642, 0.0
    %v661 = vmax.f32 %v643, 0.0
    %v662 = vmax.f32 %v644, 0.0
    %v663 = vmax.f32 %v645, 0.0
    %v664 = vmax.f32 %v646, 0.0
    %v665 = vmax.f32 %v647, 0.0
    %v666 = vmax.f32 %v648, 0.0
    %v667 = vmax.f32 %v649, 0.0
    %v668 = vmax.f32 %v650, 0.0
    %v669 = vmax.f32 %v651, 0.0
    %v670 = vmax.f32 %v652, 0.0
    %v671 = vmax.f32 %v653, 0.0
    %v672 = vmax.f32 %v654, 0.0
    %v673 = vmax.f32 %v655, 0.0
    %v674 = vmax.f32 %v656, 0.0
    %v675 = vmul.f32 %v657, %v300
    %v676 = vmul.f32 %v658, %v300
    %v677 = vmul.f32 %v659, %v301
    %v678 = vmul.f32 %v660, %v301
    %v679 = vmul.f32 %v661, %v302
    %v680 = vmul.f32 %v662, %v302
    %v681 = vmul.f32 %v663, %v303
    %v682 = vmul.f32 %v664, %v303
    %v683 = vmul.f32 %v665, %v304
    %v684 = vmul.f32 %v666, %v304
    %v685 = vmul.f32 %v667, %v305
    %v686 = vmul.f32 %v668, %v305
    %v687 = vmul.f32 %v669, %v306
    %v688 = vmul.f32 %v670, %v306
    %v689 = vmul.f32 %v671, %v307
    %v690 = vmul.f32 %v672, %v307
    %v691 = vmul.f32 %v673, %v308
    %v692 = vmul.f32 %v674, %v308
    %693 = vst [vmem:[#allocation2 + $0x10] sm:$0xff] %v675
    %694 = vst [vmem:[#allocation2 + $0x18] sm:$0xff] %v676
    %695 = vst [vmem:[#allocation2 + $0x20] sm:$0xff] %v677
    %696 = vst [vmem:[#allocation2 + $0x28] sm:$0xff] %v678
    %697 = vst [vmem:[#allocation2 + $0x30] sm:$0xff] %v679
    %698 = vst [vmem:[#allocation2 + $0x38] sm:$0xff] %v680
    %699 = vst [vmem:[#allocation2 + $0x40] sm:$0xff] %v681
    %700 = vst [vmem:[#allocation2 + $0x48] sm:$0xff] %v682
    %701 = vst [vmem:[#allocation2 + $0x50] sm:$0xff] %v683
    %702 = vst [vmem:[#allocation2 + $0x58] sm:$0xff] %v684
    %703 = vst [vmem:[#allocation2 + $0x60] sm:$0xff] %v685
    %704 = vst [vmem:[#allocation2 + $0x68] sm:$0xff] %v686
    %705 = vst [vmem:[#allocation2 + $0x70] sm:$0xff] %v687
    %706 = vst [vmem:[#allocation2 + $0x78] sm:$0xff] %v688
    %707 = vst [vmem:[#allocation2 + $0x80] sm:$0xff] %v689
    %708 = vst [vmem:[#allocation2 + $0x88] sm:$0xff] %v690
    %709 = vst [vmem:[#allocation2 + $0x90] sm:$0xff] %v691
    %710 = vst [vmem:[#allocation2 + $0x98] sm:$0xff] %v692
    %v711 = vld [vmem:[#allocation2] sm:$0x80]
    %v712 = vld [vmem:[#allocation2 + $0x8] sm:$0x80]
    %v713 = vld [vmem:[#allocation2 + $0x10] sm:$0xff]
    %v714 = vld [vmem:[#allocation2 + $0x18] sm:$0xff]
    %v715 = vld [vmem:[#allocation2 + $0x20] sm:$0xff]
    %v716 = vld [vmem:[#allocation2 + $0x28] sm:$0xff]
    %v717 = vld [vmem:[#allocation2 + $0x30] sm:$0xff]
    %v718 = vld [vmem:[#allocation2 + $0x38] sm:$0xff]
    %v719 = vld [vmem:[#allocation2 + $0x40] sm:$0xff]
    %v720 = vld [vmem:[#allocation2 + $0x48] sm:$0xff]
    %v721 = vld [vmem:[#allocation2 + $0x50] sm:$0xff]
    %v722 = vld [vmem:[#allocation2 + $0x58] sm:$0xff]
    %v723 = vld [vmem:[#allocation2 + $0x60] sm:$0xff]
    %v724 = vld [vmem:[#allocation2 + $0x68] sm:$0xff]
    %v725 = vld [vmem:[#allocation2 + $0x70] sm:$0xff]
    %v726 = vld [vmem:[#allocation2 + $0x78] sm:$0xff]
    %v727 = vld [vmem:[#allocation2 + $0x80] sm:$0xff]
    %v728 = vld [vmem:[#allocation2 + $0x88] sm:$0xff]
    %v729 = vld [vmem:[#allocation2 + $0x90] sm:$0x7f]
    %v730 = vld [vmem:[#allocation2 + $0x98] sm:$0x7f]
    %v731 = vld [vmem:[#allocation2 + $0x10] sm:$0xfe]
    %v732 = vld [vmem:[#allocation2 + $0x18] sm:$0xfe]
    %v733 = vld [vmem:[#allocation2 + $0x20] sm:$0xff]
    %v734 = vld [vmem:[#allocation2 + $0x28] sm:$0xff]
    %v735 = vld [vmem:[#allocation2 + $0x30] sm:$0xff]
    %v736 = vld [vmem:[#allocation2 + $0x38] sm:$0xff]
    %v737 = vld [vmem:[#allocation2 + $0x40] sm:$0xff]
    %v738 = vld [vmem:[#allocation2 + $0x48] sm:$0xff]
    %v739 = vld [vmem:[#allocation2 + $0x50] sm:$0xff]
    %v740 = vld [vmem:[#allocation2 + $0x58] sm:$0xff]
    %v741 = vld [vmem:[#allocation2 + $0x60] sm:$0xff]
    %v742 = vld [vmem:[#allocation2 + $0x68] sm:$0xff]
    %v743 = vld [vmem:[#allocation2 + $0x70] sm:$0xff]
    %v744 = vld [vmem:[#allocation2 + $0x78] sm:$0xff]
    %v745 = vld [vmem:[#allocation2 + $0x80] sm:$0xff]
    %v746 = vld [vmem:[#allocation2 + $0x88] sm:$0xff]
    %v747 = vld [vmem:[#allocation2 + $0x90] sm:$0xff]
    %v748 = vld [vmem:[#allocation2 + $0x98] sm:$0xff]
    %v749 = vld [vmem:[#allocation2 + $0xa0] sm:$0x1]
    %v750 = vld [vmem:[#allocation2 + $0xa8] sm:$0x1]
    %vm769 = vcmask 1046528
    %v770 = vrot.slane %v675, 1
    %v771 = vrot.slane %v676, 1
    %v772 = vrot.slane %v677, 1
    %v773 = vsel %vm769, %v770, %v772
    %v774 = vrot.slane %v678, 1
    %v775 = vsel %vm769, %v771, %v774
    %v776 = vrot.slane %v679, 1
    %v777 = vsel %vm769, %v772, %v776
    %v778 = vrot.slane %v680, 1
    %v779 = vsel %vm769, %v774, %v778
    %v780 = vrot.slane %v681, 1
    %v781 = vsel %vm769, %v776, %v780
    %v782 = vrot.slane %v682, 1
    %v783 = vsel %vm769, %v778, %v782
    %v784 = vrot.slane %v683, 1
    %v785 = vsel %vm769, %v780, %v784
    %v786 = vrot.slane %v684, 1
    %v787 = vsel %vm769, %v782, %v786
    %v788 = vrot.slane %v685, 1
    %v789 = vsel %vm769, %v784, %v788
    %v790 = vrot.slane %v686, 1
    %v791 = vsel %vm769, %v786, %v790
    %v792 = vrot.slane %v687, 1
    %v793 = vsel %vm769, %v788, %v792
    %v794 = vrot.slane %v688, 1
    %v795 = vsel %vm769, %v790, %v794
    %v796 = vrot.slane %v689, 1
    %v797 = vsel %vm769, %v792, %v796
    %v798 = vrot.slane %v690, 1
    %v799 = vsel %vm769, %v794, %v798
    %v800 = vrot.slane %v691, 1
    %v801 = vsel %vm769, %v796, %v800
    %v802 = vrot.slane %v692, 1
    %v803 = vsel %vm769, %v798, %v802
    %vm844 = vcmask 1045504
    %v845 = vrot.slane %v731, 2
    %v846 = vrot.slane %v732, 2
    %v847 = vrot.slane %v733, 2
    %v848 = vsel %vm844, %v845, %v847
    %v849 = vrot.slane %v734, 2
    %v850 = vsel %vm844, %v846, %v849
    %v851 = vrot.slane %v735, 2
    %v852 = vsel %vm844, %v847, %v851
    %v853 = vrot.slane %v736, 2
    %v854 = vsel %vm844, %v849, %v853
    %v855 = vrot.slane %v737, 2
    %v856 = vsel %vm844, %v851, %v855
    %v857 = vrot.slane %v738, 2
    %v858 = vsel %vm844, %v853, %v857
    %v859 = vrot.slane %v739, 2
    %v860 = vsel %vm844, %v855, %v859
    %v861 = vrot.slane %v740, 2
    %v862 = vsel %vm844, %v857, %v861
    %v863 = vrot.slane %v741, 2
    %v864 = vsel %vm844, %v859, %v863
    %v865 = vrot.slane %v742, 2
    %v866 = vsel %vm844, %v861, %v865
    %v867 = vrot.slane %v743, 2
    %v868 = vsel %vm844, %v863, %v867
    %v869 = vrot.slane %v744, 2
    %v870 = vsel %vm844, %v865, %v869
    %v871 = vrot.slane %v745, 2
    %v872 = vsel %vm844, %v867, %v871
    %v873 = vrot.slane %v746, 2
    %v874 = vsel %vm844, %v869, %v873
    %v875 = vrot.slane %v747, 2
    %v876 = vsel %vm844, %v871, %v875
    %v877 = vrot.slane %v748, 2
    %v878 = vsel %vm844, %v873, %v877
    %v879 = vrot.slane %v749, 2
    %v880 = vsel %vm844, %v875, %v879
    %v881 = vrot.slane %v750, 2
    %v882 = vsel %vm844, %v877, %v881
    %v903 = vpack.c.bf16 %v713, %v711
    %v904 = vpack.c.bf16 %v714, %v712
    %v905 = vpack.c.bf16 %v773, %v770
    %v906 = vpack.c.bf16 %v775, %v771
    %v907 = vpack.c.bf16 %v848, %v845
    %v908 = vpack.c.bf16 %v850, %v846
    %v909 = vpack.c.bf16 %v717, %v715
    %v910 = vpack.c.bf16 %v718, %v716
    %v911 = vpack.c.bf16 %v781, %v777
    %v912 = vpack.c.bf16 %v783, %v779
    %v913 = vpack.c.bf16 %v856, %v852
    %v914 = vpack.c.bf16 %v858, %v854
    %v915 = vpack.c.bf16 %v721, %v719
    %v916 = vpack.c.bf16 %v722, %v720
    %v917 = vpack.c.bf16 %v789, %v785
    %v918 = vpack.c.bf16 %v791, %v787
    %v919 = vpack.c.bf16 %v864, %v860
    %v920 = vpack.c.bf16 %v866, %v862
    %v921 = vpack.c.bf16 %v725, %v723
    %v922 = vpack.c.bf16 %v726, %v724
    %v923 = vpack.c.bf16 %v797, %v793
    %v924 = vpack.c.bf16 %v799, %v795
    %v925 = vpack.c.bf16 %v872, %v868
    %v926 = vpack.c.bf16 %v874, %v870
    %v927 = vpack.c.bf16 %v729, %v727
    %v928 = vpack.c.bf16 %v730, %v728
    %v929 = vpack.c.bf16 %v800, %v801
    %v930 = vpack.c.bf16 %v802, %v803
    %v931 = vpack.c.bf16 %v880, %v876
    %v932 = vpack.c.bf16 %v882, %v878
    %v933 = vld [vmem:[#allocation7] sm:$0xff]
    %v934 = vld [vmem:[#allocation7 + $0x8] sm:$0xff]
    %v935 = vld [vmem:[#allocation7 + $0x10] sm:$0xff]
    %v936 = vld [vmem:[#allocation7 + $0x18] sm:$0xff]
    %v937 = vld [vmem:[#allocation7 + $0x20] sm:$0xff]
    %v938 = vld [vmem:[#allocation7 + $0x28] sm:$0xff]
    %v939 = vld [vmem:[#allocation7 + $0x30] sm:$0xff]
    %v940 = vld [vmem:[#allocation7 + $0x38] sm:$0xff]
    %v941 = vld [vmem:[#allocation7 + $0x40] sm:$0xff]
    %v942 = vld [vmem:[#allocation7 + $0x48] sm:$0xff]
    %v943 = vld [vmem:[#allocation7 + $0x50] sm:$0xff]
    %v944 = vld [vmem:[#allocation7 + $0x58] sm:$0xff]
    %v945 = vld [vmem:[#allocation7 + $0x60] sm:$0xff]
    %v946 = vld [vmem:[#allocation7 + $0x68] sm:$0xff]
    %v947 = vld [vmem:[#allocation7 + $0x70] sm:$0xff]
    %v948 = vld [vmem:[#allocation7 + $0x78] sm:$0xff]
    %v949 = vld [vmem:[#allocation7 + $0x80] sm:$0xff]
    %v950 = vld [vmem:[#allocation7 + $0x88] sm:$0xff]
    %v951 = vld [vmem:[#allocation7 + $0x90] sm:$0xff]
    %v952 = vld [vmem:[#allocation7 + $0x98] sm:$0xff]
    %v953 = vld [vmem:[#allocation7 + $0xa0] sm:$0xff]
    %v954 = vld [vmem:[#allocation7 + $0xa8] sm:$0xff]
    %v955 = vld [vmem:[#allocation7 + $0xb0] sm:$0xff]
    %v956 = vld [vmem:[#allocation7 + $0xb8] sm:$0xff]
    %v957 = vld [vmem:[#allocation7 + $0xc0] sm:$0xff]
    %v958 = vld [vmem:[#allocation7 + $0xc8] sm:$0xff]
    %v959 = vld [vmem:[#allocation7 + $0xd0] sm:$0xff]
    %v960 = vld [vmem:[#allocation7 + $0xd8] sm:$0xff]
    %v961 = vld [vmem:[#allocation7 + $0xe0] sm:$0xff]
    %v962 = vld [vmem:[#allocation7 + $0xe8] sm:$0xff]
    %v963 = vld [vmem:[#allocation7 + $0xf0] sm:$0xff]
    %v964 = vld [vmem:[#allocation7 + $0xf8] sm:$0xff]
    %v965 = vld [vmem:[#allocation7 + $0x100] sm:$0xff]
    %v966 = vld [vmem:[#allocation7 + $0x108] sm:$0xff]
    %v967 = vld [vmem:[#allocation7 + $0x110] sm:$0xff]
    %v968 = vld [vmem:[#allocation7 + $0x118] sm:$0xff]
    %v969 = vld [vmem:[#allocation7 + $0x120] sm:$0xff]
    %v970 = vld [vmem:[#allocation7 + $0x128] sm:$0xff]
    %v971 = vld [vmem:[#allocation7 + $0x130] sm:$0xff]
    %v972 = vld [vmem:[#allocation7 + $0x138] sm:$0xff]
    %v973 = vld [vmem:[#allocation7 + $0x140] sm:$0xff]
    %v974 = vld [vmem:[#allocation7 + $0x148] sm:$0xff]
    %v975 = vld [vmem:[#allocation7 + $0x150] sm:$0xff]
    %v976 = vld [vmem:[#allocation7 + $0x158] sm:$0xff]
    %v977 = vld [vmem:[#allocation7 + $0x160] sm:$0xff]
    %v978 = vld [vmem:[#allocation7 + $0x168] sm:$0xff]
    %v979 = vld [vmem:[#allocation7 + $0x170] sm:$0xff]
    %v980 = vld [vmem:[#allocation7 + $0x178] sm:$0xff]
    %v981 = vld [vmem:[#allocation7 + $0x180] sm:$0xff]
    %v982 = vld [vmem:[#allocation7 + $0x188] sm:$0xff]
    %v983 = vld [vmem:[#allocation7 + $0x190] sm:$0xff]
    %v984 = vld [vmem:[#allocation7 + $0x198] sm:$0xff]
    %v985 = vld [vmem:[#allocation7 + $0x1a0] sm:$0xff]
    %v986 = vld [vmem:[#allocation7 + $0x1a8] sm:$0xff]
    %v987 = vld [vmem:[#allocation7 + $0x1b0] sm:$0xff]
    %v988 = vld [vmem:[#allocation7 + $0x1b8] sm:$0xff]
    %v989 = vld [vmem:[#allocation7 + $0x1c0] sm:$0xff]
    %v990 = vld [vmem:[#allocation7 + $0x1c8] sm:$0xff]
    %v991 = vld [vmem:[#allocation7 + $0x1d0] sm:$0xff]
    %v992 = vld [vmem:[#allocation7 + $0x1d8] sm:$0xff]
    %v993 = vld [vmem:[#allocation7 + $0x1e0] sm:$0xff]
    %v994 = vld [vmem:[#allocation7 + $0x1e8] sm:$0xff]
    %v995 = vld [vmem:[#allocation7 + $0x1f0] sm:$0xff]
    %v996 = vld [vmem:[#allocation7 + $0x1f8] sm:$0xff]
    %v997 = vld [vmem:[#allocation7 + $0x200] sm:$0xff]
    %v998 = vld [vmem:[#allocation7 + $0x208] sm:$0xff]
    %v999 = vld [vmem:[#allocation7 + $0x210] sm:$0xff]
    %v1000 = vld [vmem:[#allocation7 + $0x218] sm:$0xff]
    %v1001 = vld [vmem:[#allocation7 + $0x220] sm:$0xff]
    %v1002 = vld [vmem:[#allocation7 + $0x228] sm:$0xff]
    %v1003 = vld [vmem:[#allocation7 + $0x230] sm:$0xff]
    %v1004 = vld [vmem:[#allocation7 + $0x238] sm:$0xff]
    %v1005 = vld [vmem:[#allocation7 + $0x240] sm:$0xff]
    %v1006 = vld [vmem:[#allocation7 + $0x248] sm:$0xff]
    %v1007 = vld [vmem:[#allocation7 + $0x250] sm:$0xff]
    %v1008 = vld [vmem:[#allocation7 + $0x258] sm:$0xff]
    %v1009 = vld [vmem:[#allocation7 + $0x260] sm:$0xff]
    %v1010 = vld [vmem:[#allocation7 + $0x268] sm:$0xff]
    %v1011 = vld [vmem:[#allocation7 + $0x270] sm:$0xff]
    %v1012 = vld [vmem:[#allocation7 + $0x278] sm:$0xff]
    %v1013 = vld [vmem:[#allocation7 + $0x280] sm:$0xff]
    %v1014 = vld [vmem:[#allocation7 + $0x288] sm:$0xff]
    %v1015 = vld [vmem:[#allocation7 + $0x290] sm:$0xff]
    %v1016 = vld [vmem:[#allocation7 + $0x298] sm:$0xff]
    %v1017 = vld [vmem:[#allocation7 + $0x2a0] sm:$0xff]
    %v1018 = vld [vmem:[#allocation7 + $0x2a8] sm:$0xff]
    %v1019 = vld [vmem:[#allocation7 + $0x2b0] sm:$0xff]
    %v1020 = vld [vmem:[#allocation7 + $0x2b8] sm:$0xff]
    %v1021 = vld [vmem:[#allocation7 + $0x2c0] sm:$0xff]
    %v1022 = vld [vmem:[#allocation7 + $0x2c8] sm:$0xff]
    %v1023 = vld [vmem:[#allocation7 + $0x2d0] sm:$0xff]
    %v1024 = vld [vmem:[#allocation7 + $0x2d8] sm:$0xff]
    %v1025 = vld [vmem:[#allocation7 + $0x2e0] sm:$0xff]
    %v1026 = vld [vmem:[#allocation7 + $0x2e8] sm:$0xff]
    %v1027 = vld [vmem:[#allocation7 + $0x2f0] sm:$0xff]
    %v1028 = vld [vmem:[#allocation7 + $0x2f8] sm:$0xff]
    %v1029 = vld [vmem:[%s6] sm:$0x3]
    %v1031 = vlaneseq
    %v1032 = vshrl.u32 %v1031, 7
    %v1033 = vsub.s32 0, %v1032
    %v1034 = vrot.slane %v1029, %v1033
    %v1035 = vlaneseq
    %v1036 = vshrl.u32 %v1035, 7
    %v1037 = vsub.s32 1, %v1036
    %v1038 = vrot.slane %v1029, %v1037
    %vm1041 = vsmask.f32 4352
    %v1043 = vshrl.u32 %v903, 16
    %v1045 = vrot.slane %v1043, 3
    %v1046 = vshll.u32 %v903, 16
    %v1048 = vrot.slane %v1046, 4
    %v1049 = vor.u32 %v1045, %v1048
    %v1051 = vshrl.u32 %v909, 16
    %v1053 = vrot.slane %v1051, 3
    %v1054 = vshll.u32 %v909, 16
    %v1056 = vrot.slane %v1054, 4
    %v1057 = vor.u32 %v1053, %v1056
    %v1058 = vsel %vm1041, %v1049, %v1057
    %v1060 = vshrl.u32 %v904, 16
    %v1062 = vrot.slane %v1060, 3
    %v1063 = vshll.u32 %v904, 16
    %v1065 = vrot.slane %v1063, 4
    %v1066 = vor.u32 %v1062, %v1065
    %v1068 = vshrl.u32 %v910, 16
    %v1070 = vrot.slane %v1068, 3
    %v1071 = vshll.u32 %v910, 16
    %v1073 = vrot.slane %v1071, 4
    %v1074 = vor.u32 %v1070, %v1073
    %v1075 = vsel %vm1041, %v1066, %v1074
    %v1077 = vshrl.u32 %v905, 16
    %v1079 = vrot.slane %v1077, 3
    %v1080 = vshll.u32 %v905, 16
    %v1082 = vrot.slane %v1080, 4
    %v1083 = vor.u32 %v1079, %v1082
    %v1085 = vshrl.u32 %v911, 16
    %v1087 = vrot.slane %v1085, 3
    %v1088 = vshll.u32 %v911, 16
    %v1090 = vrot.slane %v1088, 4
    %v1091 = vor.u32 %v1087, %v1090
    %v1092 = vsel %vm1041, %v1083, %v1091
    %v1094 = vshrl.u32 %v906, 16
    %v1096 = vrot.slane %v1094, 3
    %v1097 = vshll.u32 %v906, 16
    %v1099 = vrot.slane %v1097, 4
    %v1100 = vor.u32 %v1096, %v1099
    %v1102 = vshrl.u32 %v912, 16
    %v1104 = vrot.slane %v1102, 3
    %v1105 = vshll.u32 %v912, 16
    %v1107 = vrot.slane %v1105, 4
    %v1108 = vor.u32 %v1104, %v1107
    %v1109 = vsel %vm1041, %v1100, %v1108
    %v1111 = vshrl.u32 %v907, 16
    %v1113 = vrot.slane %v1111, 3
    %v1114 = vshll.u32 %v907, 16
    %v1116 = vrot.slane %v1114, 4
    %v1117 = vor.u32 %v1113, %v1116
    %v1119 = vshrl.u32 %v913, 16
    %v1121 = vrot.slane %v1119, 3
    %v1122 = vshll.u32 %v913, 16
    %v1124 = vrot.slane %v1122, 4
    %v1125 = vor.u32 %v1121, %v1124
    %v1126 = vsel %vm1041, %v1117, %v1125
    %v1128 = vshrl.u32 %v908, 16
    %v1130 = vrot.slane %v1128, 3
    %v1131 = vshll.u32 %v908, 16
    %v1133 = vrot.slane %v1131, 4
    %v1134 = vor.u32 %v1130, %v1133
    %v1136 = vshrl.u32 %v914, 16
    %v1138 = vrot.slane %v1136, 3
    %v1139 = vshll.u32 %v914, 16
    %v1141 = vrot.slane %v1139, 4
    %v1142 = vor.u32 %v1138, %v1141
    %v1143 = vsel %vm1041, %v1134, %v1142
    %v1145 = vshrl.u32 %v915, 16
    %v1147 = vrot.slane %v1145, 3
    %v1148 = vshll.u32 %v915, 16
    %v1150 = vrot.slane %v1148, 4
    %v1151 = vor.u32 %v1147, %v1150
    %v1152 = vsel %vm1041, %v1057, %v1151
    %v1154 = vshrl.u32 %v916, 16
    %v1156 = vrot.slane %v1154, 3
    %v1157 = vshll.u32 %v916, 16
    %v1159 = vrot.slane %v1157, 4
    %v1160 = vor.u32 %v1156, %v1159
    %v1161 = vsel %vm1041, %v1074, %v1160
    %v1163 = vshrl.u32 %v917, 16
    %v1165 = vrot.slane %v1163, 3
    %v1166 = vshll.u32 %v917, 16
    %v1168 = vrot.slane %v1166, 4
    %v1169 = vor.u32 %v1165, %v1168
    %v1170 = vsel %vm1041, %v1091, %v1169
    %v1172 = vshrl.u32 %v918, 16
    %v1174 = vrot.slane %v1172, 3
    %v1175 = vshll.u32 %v918, 16
    %v1177 = vrot.slane %v1175, 4
    %v1178 = vor.u32 %v1174, %v1177
    %v1179 = vsel %vm1041, %v1108, %v1178
    %v1181 = vshrl.u32 %v919, 16
    %v1183 = vrot.slane %v1181, 3
    %v1184 = vshll.u32 %v919, 16
    %v1186 = vrot.slane %v1184, 4
    %v1187 = vor.u32 %v1183, %v1186
    %v1188 = vsel %vm1041, %v1125, %v1187
    %v1190 = vshrl.u32 %v920, 16
    %v1192 = vrot.slane %v1190, 3
    %v1193 = vshll.u32 %v920, 16
    %v1195 = vrot.slane %v1193, 4
    %v1196 = vor.u32 %v1192, %v1195
    %v1197 = vsel %vm1041, %v1142, %v1196
    %v1199 = vshrl.u32 %v921, 16
    %v1201 = vrot.slane %v1199, 3
    %v1202 = vshll.u32 %v921, 16
    %v1204 = vrot.slane %v1202, 4
    %v1205 = vor.u32 %v1201, %v1204
    %v1206 = vsel %vm1041, %v1151, %v1205
    %v1208 = vshrl.u32 %v922, 16
    %v1210 = vrot.slane %v1208, 3
    %v1211 = vshll.u32 %v922, 16
    %v1213 = vrot.slane %v1211, 4
    %v1214 = vor.u32 %v1210, %v1213
    %v1215 = vsel %vm1041, %v1160, %v1214
    %v1217 = vshrl.u32 %v923, 16
    %v1219 = vrot.slane %v1217, 3
    %v1220 = vshll.u32 %v923, 16
    %v1222 = vrot.slane %v1220, 4
    %v1223 = vor.u32 %v1219, %v1222
    %v1224 = vsel %vm1041, %v1169, %v1223
    %v1226 = vshrl.u32 %v924, 16
    %v1228 = vrot.slane %v1226, 3
    %v1229 = vshll.u32 %v924, 16
    %v1231 = vrot.slane %v1229, 4
    %v1232 = vor.u32 %v1228, %v1231
    %v1233 = vsel %vm1041, %v1178, %v1232
    %v1235 = vshrl.u32 %v925, 16
    %v1237 = vrot.slane %v1235, 3
    %v1238 = vshll.u32 %v925, 16
    %v1240 = vrot.slane %v1238, 4
    %v1241 = vor.u32 %v1237, %v1240
    %v1242 = vsel %vm1041, %v1187, %v1241
    %v1244 = vshrl.u32 %v926, 16
    %v1246 = vrot.slane %v1244, 3
    %v1247 = vshll.u32 %v926, 16
    %v1249 = vrot.slane %v1247, 4
    %v1250 = vor.u32 %v1246, %v1249
    %v1251 = vsel %vm1041, %v1196, %v1250
    %v1253 = vshrl.u32 %v927, 16
    %v1255 = vrot.slane %v1253, 3
    %v1256 = vshll.u32 %v927, 16
    %v1258 = vrot.slane %v1256, 4
    %v1259 = vor.u32 %v1255, %v1258
    %v1260 = vsel %vm1041, %v1205, %v1259
    %v1262 = vshrl.u32 %v928, 16
    %v1264 = vrot.slane %v1262, 3
    %v1265 = vshll.u32 %v928, 16
    %v1267 = vrot.slane %v1265, 4
    %v1268 = vor.u32 %v1264, %v1267
    %v1269 = vsel %vm1041, %v1214, %v1268
    %v1271 = vshrl.u32 %v929, 16
    %v1273 = vrot.slane %v1271, 3
    %v1274 = vshll.u32 %v929, 16
    %v1276 = vrot.slane %v1274, 4
    %v1277 = vor.u32 %v1273, %v1276
    %v1278 = vsel %vm1041, %v1223, %v1277
    %v1280 = vshrl.u32 %v930, 16
    %v1282 = vrot.slane %v1280, 3
    %v1283 = vshll.u32 %v930, 16
    %v1285 = vrot.slane %v1283, 4
    %v1286 = vor.u32 %v1282, %v1285
    %v1287 = vsel %vm1041, %v1232, %v1286
    %v1289 = vshrl.u32 %v931, 16
    %v1291 = vrot.slane %v1289, 3
    %v1292 = vshll.u32 %v931, 16
    %v1294 = vrot.slane %v1292, 4
    %v1295 = vor.u32 %v1291, %v1294
    %v1296 = vsel %vm1041, %v1241, %v1295
    %v1298 = vshrl.u32 %v932, 16
    %v1300 = vrot.slane %v1298, 3
    %v1301 = vshll.u32 %v932, 16
    %v1303 = vrot.slane %v1301, 4
    %v1304 = vor.u32 %v1300, %v1303
    %v1305 = vsel %vm1041, %v1250, %v1304
    %v1432 = vunpack.c.l.b16 %v933
    %v1433 = vunpack.c.h.b16 %v933
    %v1434 = vunpack.c.l.b16 %v934
    %v1435 = vunpack.c.h.b16 %v934
    %v1436 = vunpack.c.l.b16 %v935
    %v1437 = vunpack.c.h.b16 %v935
    %v1438 = vunpack.c.l.b16 %v936
    %v1439 = vunpack.c.h.b16 %v936
    %v1440 = vunpack.c.l.b16 %v937
    %v1441 = vunpack.c.h.b16 %v937
    %v1442 = vunpack.c.l.b16 %v938
    %v1443 = vunpack.c.h.b16 %v938
    %v1444 = vunpack.c.l.b16 %v939
    %v1445 = vunpack.c.h.b16 %v939
    %v1446 = vunpack.c.l.b16 %v940
    %v1447 = vunpack.c.h.b16 %v940
    %v1448 = vunpack.c.l.b16 %v941
    %v1449 = vunpack.c.h.b16 %v941
    %v1450 = vunpack.c.l.b16 %v942
    %v1451 = vunpack.c.h.b16 %v942
    %v1452 = vunpack.c.l.b16 %v943
    %v1453 = vunpack.c.h.b16 %v943
    %v1454 = vunpack.c.l.b16 %v944
    %v1455 = vunpack.c.h.b16 %v944
    %v1456 = vunpack.c.l.b16 %v945
    %v1457 = vunpack.c.h.b16 %v945
    %v1458 = vunpack.c.l.b16 %v946
    %v1459 = vunpack.c.h.b16 %v946
    %v1460 = vunpack.c.l.b16 %v947
    %v1461 = vunpack.c.h.b16 %v947
    %v1462 = vunpack.c.l.b16 %v948
    %v1463 = vunpack.c.h.b16 %v948
    %v1464 = vunpack.c.l.b16 %v949
    %v1465 = vunpack.c.h.b16 %v949
    %v1466 = vunpack.c.l.b16 %v950
    %v1467 = vunpack.c.h.b16 %v950
    %v1468 = vunpack.c.l.b16 %v951
    %v1469 = vunpack.c.h.b16 %v951
    %v1470 = vunpack.c.l.b16 %v952
    %v1471 = vunpack.c.h.b16 %v952
    %v1472 = vunpack.c.l.b16 %v953
    %v1473 = vunpack.c.h.b16 %v953
    %v1474 = vunpack.c.l.b16 %v954
    %v1475 = vunpack.c.h.b16 %v954
    %v1476 = vunpack.c.l.b16 %v955
    %v1477 = vunpack.c.h.b16 %v955
    %v1478 = vunpack.c.l.b16 %v956
    %v1479 = vunpack.c.h.b16 %v956
    %v1480 = vunpack.c.l.b16 %v957
    %v1481 = vunpack.c.h.b16 %v957
    %v1482 = vunpack.c.l.b16 %v958
    %v1483 = vunpack.c.h.b16 %v958
    %v1484 = vunpack.c.l.b16 %v959
    %v1485 = vunpack.c.h.b16 %v959
    %v1486 = vunpack.c.l.b16 %v960
    %v1487 = vunpack.c.h.b16 %v960
    %v1488 = vunpack.c.l.b16 %v961
    %v1489 = vunpack.c.h.b16 %v961
    %v1490 = vunpack.c.l.b16 %v962
    %v1491 = vunpack.c.h.b16 %v962
    %v1492 = vunpack.c.l.b16 %v963
    %v1493 = vunpack.c.h.b16 %v963
    %v1494 = vunpack.c.l.b16 %v964
    %v1495 = vunpack.c.h.b16 %v964
    %v1496 = vunpack.c.l.b16 %v965
    %v1497 = vunpack.c.h.b16 %v965
    %v1498 = vunpack.c.l.b16 %v966
    %v1499 = vunpack.c.h.b16 %v966
    %v1500 = vunpack.c.l.b16 %v967
    %v1501 = vunpack.c.h.b16 %v967
    %v1502 = vunpack.c.l.b16 %v968
    %v1503 = vunpack.c.h.b16 %v968
    %v1504 = vunpack.c.l.b16 %v969
    %v1505 = vunpack.c.h.b16 %v969
    %v1506 = vunpack.c.l.b16 %v970
    %v1507 = vunpack.c.h.b16 %v970
    %v1508 = vunpack.c.l.b16 %v971
    %v1509 = vunpack.c.h.b16 %v971
    %v1510 = vunpack.c.l.b16 %v972
    %v1511 = vunpack.c.h.b16 %v972
    %v1512 = vunpack.c.l.b16 %v973
    %v1513 = vunpack.c.h.b16 %v973
    %v1514 = vunpack.c.l.b16 %v974
    %v1515 = vunpack.c.h.b16 %v974
    %v1516 = vunpack.c.l.b16 %v975
    %v1517 = vunpack.c.h.b16 %v975
    %v1518 = vunpack.c.l.b16 %v976
    %v1519 = vunpack.c.h.b16 %v976
    %v1520 = vunpack.c.l.b16 %v977
    %v1521 = vunpack.c.h.b16 %v977
    %v1522 = vunpack.c.l.b16 %v978
    %v1523 = vunpack.c.h.b16 %v978
    %v1524 = vunpack.c.l.b16 %v979
    %v1525 = vunpack.c.h.b16 %v979
    %v1526 = vunpack.c.l.b16 %v980
    %v1527 = vunpack.c.h.b16 %v980
    %v1528 = vunpack.c.l.b16 %v981
    %v1529 = vunpack.c.h.b16 %v981
    %v1530 = vunpack.c.l.b16 %v982
    %v1531 = vunpack.c.h.b16 %v982
    %v1532 = vunpack.c.l.b16 %v983
    %v1533 = vunpack.c.h.b16 %v983
    %v1534 = vunpack.c.l.b16 %v984
    %v1535 = vunpack.c.h.b16 %v984
    %v1536 = vunpack.c.l.b16 %v985
    %v1537 = vunpack.c.h.b16 %v985
    %v1538 = vunpack.c.l.b16 %v986
    %v1539 = vunpack.c.h.b16 %v986
    %v1540 = vunpack.c.l.b16 %v987
    %v1541 = vunpack.c.h.b16 %v987
    %v1542 = vunpack.c.l.b16 %v988
    %v1543 = vunpack.c.h.b16 %v988
    %v1544 = vunpack.c.l.b16 %v989
    %v1545 = vunpack.c.h.b16 %v989
    %v1546 = vunpack.c.l.b16 %v990
    %v1547 = vunpack.c.h.b16 %v990
    %v1548 = vunpack.c.l.b16 %v991
    %v1549 = vunpack.c.h.b16 %v991
    %v1550 = vunpack.c.l.b16 %v992
    %v1551 = vunpack.c.h.b16 %v992
    %v1552 = vunpack.c.l.b16 %v993
    %v1553 = vunpack.c.h.b16 %v993
    %v1554 = vunpack.c.l.b16 %v994
    %v1555 = vunpack.c.h.b16 %v994
    %v1556 = vunpack.c.l.b16 %v995
    %v1557 = vunpack.c.h.b16 %v995
    %v1558 = vunpack.c.l.b16 %v996
    %v1559 = vunpack.c.h.b16 %v996
    %v1560 = vunpack.c.l.b16 %v997
    %v1561 = vunpack.c.h.b16 %v997
    %v1562 = vunpack.c.l.b16 %v998
    %v1563 = vunpack.c.h.b16 %v998
    %v1564 = vunpack.c.l.b16 %v999
    %v1565 = vunpack.c.h.b16 %v999
    %v1566 = vunpack.c.l.b16 %v1000
    %v1567 = vunpack.c.h.b16 %v1000
    %v1568 = vunpack.c.l.b16 %v1001
    %v1569 = vunpack.c.h.b16 %v1001
    %v1570 = vunpack.c.l.b16 %v1002
    %v1571 = vunpack.c.h.b16 %v1002
    %v1572 = vunpack.c.l.b16 %v1003
    %v1573 = vunpack.c.h.b16 %v1003
    %v1574 = vunpack.c.l.b16 %v1004
    %v1575 = vunpack.c.h.b16 %v1004
    %v1576 = vunpack.c.l.b16 %v1005
    %v1577 = vunpack.c.h.b16 %v1005
    %v1578 = vunpack.c.l.b16 %v1006
    %v1579 = vunpack.c.h.b16 %v1006
    %v1580 = vunpack.c.l.b16 %v1007
    %v1581 = vunpack.c.h.b16 %v1007
    %v1582 = vunpack.c.l.b16 %v1008
    %v1583 = vunpack.c.h.b16 %v1008
    %v1584 = vunpack.c.l.b16 %v1009
    %v1585 = vunpack.c.h.b16 %v1009
    %v1586 = vunpack.c.l.b16 %v1010
    %v1587 = vunpack.c.h.b16 %v1010
    %v1588 = vunpack.c.l.b16 %v1011
    %v1589 = vunpack.c.h.b16 %v1011
    %v1590 = vunpack.c.l.b16 %v1012
    %v1591 = vunpack.c.h.b16 %v1012
    %v1592 = vunpack.c.l.b16 %v1013
    %v1593 = vunpack.c.h.b16 %v1013
    %v1594 = vunpack.c.l.b16 %v1014
    %v1595 = vunpack.c.h.b16 %v1014
    %v1596 = vunpack.c.l.b16 %v1015
    %v1597 = vunpack.c.h.b16 %v1015
    %v1598 = vunpack.c.l.b16 %v1016
    %v1599 = vunpack.c.h.b16 %v1016
    %v1600 = vunpack.c.l.b16 %v1017
    %v1601 = vunpack.c.h.b16 %v1017
    %v1602 = vunpack.c.l.b16 %v1018
    %v1603 = vunpack.c.h.b16 %v1018
    %v1604 = vunpack.c.l.b16 %v1019
    %v1605 = vunpack.c.h.b16 %v1019
    %v1606 = vunpack.c.l.b16 %v1020
    %v1607 = vunpack.c.h.b16 %v1020
    %v1608 = vunpack.c.l.b16 %v1021
    %v1609 = vunpack.c.h.b16 %v1021
    %v1610 = vunpack.c.l.b16 %v1022
    %v1611 = vunpack.c.h.b16 %v1022
    %v1612 = vunpack.c.l.b16 %v1023
    %v1613 = vunpack.c.h.b16 %v1023
    %v1614 = vunpack.c.l.b16 %v1024
    %v1615 = vunpack.c.h.b16 %v1024
    %v1616 = vunpack.c.l.b16 %v1025
    %v1617 = vunpack.c.h.b16 %v1025
    %v1618 = vunpack.c.l.b16 %v1026
    %v1619 = vunpack.c.h.b16 %v1026
    %v1620 = vunpack.c.l.b16 %v1027
    %v1621 = vunpack.c.h.b16 %v1027
    %v1622 = vunpack.c.l.b16 %v1028
    %v1623 = vunpack.c.h.b16 %v1028
    %v1624 = vpack.c.b16 %v1434, %v1432
    %v1625 = vpack.c.b16 %v1435, %v1433
    %v1626 = vpack.c.b16 %v1438, %v1436
    %v1627 = vpack.c.b16 %v1439, %v1437
    %v1628 = vpack.c.b16 %v1442, %v1440
    %v1629 = vpack.c.b16 %v1443, %v1441
    %v1630 = vpack.c.b16 %v1446, %v1444
    %v1631 = vpack.c.b16 %v1447, %v1445
    %v1632 = vpack.c.b16 %v1450, %v1448
    %v1633 = vpack.c.b16 %v1451, %v1449
    %v1634 = vpack.c.b16 %v1454, %v1452
    %v1635 = vpack.c.b16 %v1455, %v1453
    %v1636 = vpack.c.b16 %v1458, %v1456
    %v1637 = vpack.c.b16 %v1459, %v1457
    %v1638 = vpack.c.b16 %v1462, %v1460
    %v1639 = vpack.c.b16 %v1463, %v1461
    %v1640 = vpack.c.b16 %v1466, %v1464
    %v1641 = vpack.c.b16 %v1467, %v1465
    %v1642 = vpack.c.b16 %v1470, %v1468
    %v1643 = vpack.c.b16 %v1471, %v1469
    %v1644 = vpack.c.b16 %v1474, %v1472
    %v1645 = vpack.c.b16 %v1475, %v1473
    %v1646 = vpack.c.b16 %v1478, %v1476
    %v1647 = vpack.c.b16 %v1479, %v1477
    %v1648 = vpack.c.b16 %v1482, %v1480
    %v1649 = vpack.c.b16 %v1483, %v1481
    %v1650 = vpack.c.b16 %v1486, %v1484
    %v1651 = vpack.c.b16 %v1487, %v1485
    %v1652 = vpack.c.b16 %v1490, %v1488
    %v1653 = vpack.c.b16 %v1491, %v1489
    %v1654 = vpack.c.b16 %v1494, %v1492
    %v1655 = vpack.c.b16 %v1495, %v1493
    %v1656 = vpack.c.b16 %v1498, %v1496
    %v1657 = vpack.c.b16 %v1499, %v1497
    %v1658 = vpack.c.b16 %v1502, %v1500
    %v1659 = vpack.c.b16 %v1503, %v1501
    %v1660 = vpack.c.b16 %v1506, %v1504
    %v1661 = vpack.c.b16 %v1507, %v1505
    %v1662 = vpack.c.b16 %v1510, %v1508
    %v1663 = vpack.c.b16 %v1511, %v1509
    %v1664 = vpack.c.b16 %v1514, %v1512
    %v1665 = vpack.c.b16 %v1515, %v1513
    %v1666 = vpack.c.b16 %v1518, %v1516
    %v1667 = vpack.c.b16 %v1519, %v1517
    %v1668 = vpack.c.b16 %v1522, %v1520
    %v1669 = vpack.c.b16 %v1523, %v1521
    %v1670 = vpack.c.b16 %v1526, %v1524
    %v1671 = vpack.c.b16 %v1527, %v1525
    %v1672 = vpack.c.b16 %v1530, %v1528
    %v1673 = vpack.c.b16 %v1531, %v1529
    %v1674 = vpack.c.b16 %v1534, %v1532
    %v1675 = vpack.c.b16 %v1535, %v1533
    %v1676 = vpack.c.b16 %v1538, %v1536
    %v1677 = vpack.c.b16 %v1539, %v1537
    %v1678 = vpack.c.b16 %v1542, %v1540
    %v1679 = vpack.c.b16 %v1543, %v1541
    %v1680 = vpack.c.b16 %v1546, %v1544
    %v1681 = vpack.c.b16 %v1547, %v1545
    %v1682 = vpack.c.b16 %v1550, %v1548
    %v1683 = vpack.c.b16 %v1551, %v1549
    %v1684 = vpack.c.b16 %v1554, %v1552
    %v1685 = vpack.c.b16 %v1555, %v1553
    %v1686 = vpack.c.b16 %v1558, %v1556
    %v1687 = vpack.c.b16 %v1559, %v1557
    %v1688 = vpack.c.b16 %v1562, %v1560
    %v1689 = vpack.c.b16 %v1563, %v1561
    %v1690 = vpack.c.b16 %v1566, %v1564
    %v1691 = vpack.c.b16 %v1567, %v1565
    %v1692 = vpack.c.b16 %v1570, %v1568
    %v1693 = vpack.c.b16 %v1571, %v1569
    %v1694 = vpack.c.b16 %v1574, %v1572
    %v1695 = vpack.c.b16 %v1575, %v1573
    %v1696 = vpack.c.b16 %v1578, %v1576
    %v1697 = vpack.c.b16 %v1579, %v1577
    %v1698 = vpack.c.b16 %v1582, %v1580
    %v1699 = vpack.c.b16 %v1583, %v1581
    %v1700 = vpack.c.b16 %v1586, %v1584
    %v1701 = vpack.c.b16 %v1587, %v1585
    %v1702 = vpack.c.b16 %v1590, %v1588
    %v1703 = vpack.c.b16 %v1591, %v1589
    %v1704 = vpack.c.b16 %v1594, %v1592
    %v1705 = vpack.c.b16 %v1595, %v1593
    %v1706 = vpack.c.b16 %v1598, %v1596
    %v1707 = vpack.c.b16 %v1599, %v1597
    %v1708 = vpack.c.b16 %v1602, %v1600
    %v1709 = vpack.c.b16 %v1603, %v1601
    %v1710 = vpack.c.b16 %v1606, %v1604
    %v1711 = vpack.c.b16 %v1607, %v1605
    %v1712 = vpack.c.b16 %v1610, %v1608
    %v1713 = vpack.c.b16 %v1611, %v1609
    %v1714 = vpack.c.b16 %v1614, %v1612
    %v1715 = vpack.c.b16 %v1615, %v1613
    %v1716 = vpack.c.b16 %v1618, %v1616
    %v1717 = vpack.c.b16 %v1619, %v1617
    %v1718 = vpack.c.b16 %v1622, %v1620
    %v1719 = vpack.c.b16 %v1623, %v1621
    %1816 = vmatprep.subr.bf16.mxu0 %v1625
    %1817 = vmatpush1.bf16.msra.mxu0 %v1624
    %1818 = vmatprep.subr.bf16.mxu0 %v1627
    %1819 = vmatpush1.bf16.msra.mxu0 %v1626
    %1820 = vmatprep.subr.bf16.mxu0 %v1629
    %1821 = vmatpush1.bf16.msra.mxu0 %v1628
    %1822 = vmatprep.subr.bf16.mxu0 %v1631
    %1823 = vmatpush1.bf16.msra.mxu0 %v1630
    %1824 = vmatprep.subr.bf16.mxu0 %v1633
    %1825 = vmatpush1.bf16.msra.mxu0 %v1632
    %1826 = vmatprep.subr.bf16.mxu0 %v1635
    %1827 = vmatpush1.bf16.msra.mxu0 %v1634
    %1828 = vmatprep.subr.bf16.mxu0 %v1637
    %1829 = vmatpush1.bf16.msra.mxu0 %v1636
    %1830 = vmatprep.subr.bf16.mxu0 %v1639
    %1831 = vmatpush1.bf16.msra.mxu0 %v1638
    %1832 = vmatprep.subr.bf16.mxu0 %v1641
    %1833 = vmatpush1.bf16.msra.mxu0 %v1640
    %1834 = vmatprep.subr.bf16.mxu0 %v1643
    %1835 = vmatpush1.bf16.msra.mxu0 %v1642
    %1836 = vmatprep.subr.bf16.mxu0 %v1645
    %1837 = vmatpush1.bf16.msra.mxu0 %v1644
    %1838 = vmatprep.subr.bf16.mxu0 %v1647
    %1839 = vmatpush1.bf16.msra.mxu0 %v1646
    %1840 = vmatprep.subr.bf16.mxu0 %v1649
    %1841 = vmatpush1.bf16.msra.mxu0 %v1648
    %1842 = vmatprep.subr.bf16.mxu0 %v1651
    %1843 = vmatpush1.bf16.msra.mxu0 %v1650
    %1844 = vmatprep.subr.bf16.mxu0 %v1653
    %1845 = vmatpush1.bf16.msra.mxu0 %v1652
    %1846 = vmatprep.subr.bf16.mxu0 %v1655
    %1847 = vmatpush1.bf16.msra.mxu0 %v1654
    %1848 = vmatprep.mubr.bf16.mxu0 %v1075
    %1849 = vmatmul.mubr.bf16.gmra.mrb[0].mxu0 %v1058
    %v1850 = vpop.f32.mrb[0].mxu0
    %v1851 = vadd.f32 %v1034, %v1850
    %v1852 = vpop.f32.mrb[0].mxu0
    %v1853 = vadd.f32 %v1038, %v1852
    %v1854 = vpop.f32.mrb[0].mxu0
    %v1855 = vadd.f32 %v1034, %v1854
    %v1856 = vpop.f32.mrb[0].mxu0
    %v1857 = vadd.f32 %v1038, %v1856
    %1858 = vmatprep.mubr.bf16.mxu0 %v1161
    %1859 = vmatmul.mubr.bf16.gmra.mrb[0].mxu0 %v1152
    %v1860 = vpop.f32.mrb[0].mxu0
    %v1861 = vadd.f32 %v1034, %v1860
    %v1862 = vpop.f32.mrb[0].mxu0
    %v1863 = vadd.f32 %v1038, %v1862
    %v1864 = vpop.f32.mrb[0].mxu0
    %v1865 = vadd.f32 %v1034, %v1864
    %v1866 = vpop.f32.mrb[0].mxu0
    %v1867 = vadd.f32 %v1038, %v1866
    %1868 = vmatprep.mubr.bf16.mxu0 %v1215
    %1869 = vmatmul.mubr.bf16.gmra.mrb[0].mxu0 %v1206
    %v1870 = vpop.f32.mrb[0].mxu0
    %v1871 = vadd.f32 %v1034, %v1870
    %v1872 = vpop.f32.mrb[0].mxu0
    %v1873 = vadd.f32 %v1038, %v1872
    %v1874 = vpop.f32.mrb[0].mxu0
    %v1875 = vadd.f32 %v1034, %v1874
    %v1876 = vpop.f32.mrb[0].mxu0
    %v1877 = vadd.f32 %v1038, %v1876
    %1878 = vmatprep.mubr.bf16.mxu0 %v1269
    %1879 = vmatmul.mubr.bf16.gmra.mrb[0].mxu0 %v1260
    %v1880 = vpop.f32.mrb[0].mxu0
    %v1881 = vadd.f32 %v1034, %v1880
    %v1882 = vpop.f32.mrb[0].mxu0
    %v1883 = vadd.f32 %v1038, %v1882
    %v1884 = vpop.f32.mrb[0].mxu0
    %v1885 = vadd.f32 %v1034, %v1884
    %v1886 = vpop.f32.mrb[0].mxu0
    %v1887 = vadd.f32 %v1038, %v1886
    %1888 = vmatprep.mubr.bf16.mxu0 %v1268
    %1889 = vmatmul.mubr.bf16.gmra.mrb[0].mxu0 %v1259
    %v1890 = vpop.f32.mrb[0].mxu0
    %v1891 = vadd.f32 %v1034, %v1890
    %v1892 = vpop.f32.mrb[0].mxu0
    %v1893 = vadd.f32 %v1038, %v1892
    %v1894 = vpop.f32.mrb[0].mxu0
    %v1895 = vpop.f32.mrb[0].mxu0
    %1896 = vdwg.mxu0
    %1897 = vmatprep.subr.bf16.mxu0 %v1657
    %1898 = vmatpush1.bf16.msra.mxu0 %v1656
    %1899 = vmatprep.subr.bf16.mxu0 %v1659
    %1900 = vmatpush1.bf16.msra.mxu0 %v1658
    %1901 = vmatprep.subr.bf16.mxu0 %v1661
    %1902 = vmatpush1.bf16.msra.mxu0 %v1660
    %1903 = vmatprep.subr.bf16.mxu0 %v1663
    %1904 = vmatpush1.bf16.msra.mxu0 %v1662
    %1905 = vmatprep.subr.bf16.mxu0 %v1665
    %1906 = vmatpush1.bf16.msra.mxu0 %v1664
    %1907 = vmatprep.subr.bf16.mxu0 %v1667
    %1908 = vmatpush1.bf16.msra.mxu0 %v1666
    %1909 = vmatprep.subr.bf16.mxu0 %v1669
    %1910 = vmatpush1.bf16.msra.mxu0 %v1668
    %1911 = vmatprep.subr.bf16.mxu0 %v1671
    %1912 = vmatpush1.bf16.msra.mxu0 %v1670
    %1913 = vmatprep.subr.bf16.mxu0 %v1673
    %1914 = vmatpush1.bf16.msra.mxu0 %v1672
    %1915 = vmatprep.subr.bf16.mxu0 %v1675
    %1916 = vmatpush1.bf16.msra.mxu0 %v1674
    %1917 = vmatprep.subr.bf16.mxu0 %v1677
    %1918 = vmatpush1.bf16.msra.mxu0 %v1676
    %1919 = vmatprep.subr.bf16.mxu0 %v1679
    %1920 = vmatpush1.bf16.msra.mxu0 %v1678
    %1921 = vmatprep.subr.bf16.mxu0 %v1681
    %1922 = vmatpush1.bf16.msra.mxu0 %v1680
    %1923 = vmatprep.subr.bf16.mxu0 %v1683
    %1924 = vmatpush1.bf16.msra.mxu0 %v1682
    %1925 = vmatprep.subr.bf16.mxu0 %v1685
    %1926 = vmatpush1.bf16.msra.mxu0 %v1684
    %1927 = vmatprep.subr.bf16.mxu0 %v1687
    %1928 = vmatpush1.bf16.msra.mxu0 %v1686
    %1929 = vmatprep.mubr.bf16.mxu0 %v1109
    %1930 = vmatmul.mubr.bf16.gmra.mrb[0].mxu0 %v1092
    %v1931 = vpop.f32.mrb[0].mxu0
    %v1932 = vadd.f32 %v1851, %v1931
    %v1933 = vpop.f32.mrb[0].mxu0
    %v1934 = vadd.f32 %v1853, %v1933
    %v1935 = vpop.f32.mrb[0].mxu0
    %v1936 = vadd.f32 %v1855, %v1935
    %v1937 = vpop.f32.mrb[0].mxu0
    %v1938 = vadd.f32 %v1857, %v1937
    %1939 = vmatprep.mubr.bf16.mxu0 %v1179
    %1940 = vmatmul.mubr.bf16.gmra.mrb[0].mxu0 %v1170
    %v1941 = vpop.f32.mrb[0].mxu0
    %v1942 = vadd.f32 %v1861, %v1941
    %v1943 = vpop.f32.mrb[0].mxu0
    %v1944 = vadd.f32 %v1863, %v1943
    %v1945 = vpop.f32.mrb[0].mxu0
    %v1946 = vadd.f32 %v1865, %v1945
    %v1947 = vpop.f32.mrb[0].mxu0
    %v1948 = vadd.f32 %v1867, %v1947
    %1949 = vmatprep.mubr.bf16.mxu0 %v1233
    %1950 = vmatmul.mubr.bf16.gmra.mrb[0].mxu0 %v1224
    %v1951 = vpop.f32.mrb[0].mxu0
    %v1952 = vadd.f32 %v1871, %v1951
    %v1953 = vpop.f32.mrb[0].mxu0
    %v1954 = vadd.f32 %v1873, %v1953
    %v1955 = vpop.f32.mrb[0].mxu0
    %v1956 = vadd.f32 %v1875, %v1955
    %v1957 = vpop.f32.mrb[0].mxu0
    %v1958 = vadd.f32 %v1877, %v1957
    %1959 = vmatprep.mubr.bf16.mxu0 %v1287
    %1960 = vmatmul.mubr.bf16.gmra.mrb[0].mxu0 %v1278
    %v1961 = vpop.f32.mrb[0].mxu0
    %v1962 = vadd.f32 %v1881, %v1961
    %v1963 = vpop.f32.mrb[0].mxu0
    %v1964 = vadd.f32 %v1883, %v1963
    %v1965 = vpop.f32.mrb[0].mxu0
    %v1966 = vadd.f32 %v1885, %v1965
    %v1967 = vpop.f32.mrb[0].mxu0
    %v1968 = vadd.f32 %v1887, %v1967
    %1969 = vmatprep.mubr.bf16.mxu0 %v1286
    %1970 = vmatmul.mubr.bf16.gmra.mrb[0].mxu0 %v1277
    %v1971 = vpop.f32.mrb[0].mxu0
    %v1972 = vadd.f32 %v1891, %v1971
    %v1973 = vpop.f32.mrb[0].mxu0
    %v1974 = vadd.f32 %v1893, %v1973
    %v1975 = vpop.f32.mrb[0].mxu0
    %v1976 = vpop.f32.mrb[0].mxu0
    %1977 = vdwg.mxu0
    %1978 = vmatprep.subr.bf16.mxu0 %v1689
    %1979 = vmatpush1.bf16.msra.mxu0 %v1688
    %1980 = vmatprep.subr.bf16.mxu0 %v1691
    %1981 = vmatpush1.bf16.msra.mxu0 %v1690
    %1982 = vmatprep.subr.bf16.mxu0 %v1693
    %1983 = vmatpush1.bf16.msra.mxu0 %v1692
    %1984 = vmatprep.subr.bf16.mxu0 %v1695
    %1985 = vmatpush1.bf16.msra.mxu0 %v1694
    %1986 = vmatprep.subr.bf16.mxu0 %v1697
    %1987 = vmatpush1.bf16.msra.mxu0 %v1696
    %1988 = vmatprep.subr.bf16.mxu0 %v1699
    %1989 = vmatpush1.bf16.msra.mxu0 %v1698
    %1990 = vmatprep.subr.bf16.mxu0 %v1701
    %1991 = vmatpush1.bf16.msra.mxu0 %v1700
    %1992 = vmatprep.subr.bf16.mxu0 %v1703
    %1993 = vmatpush1.bf16.msra.mxu0 %v1702
    %1994 = vmatprep.subr.bf16.mxu0 %v1705
    %1995 = vmatpush1.bf16.msra.mxu0 %v1704
    %1996 = vmatprep.subr.bf16.mxu0 %v1707
    %1997 = vmatpush1.bf16.msra.mxu0 %v1706
    %1998 = vmatprep.subr.bf16.mxu0 %v1709
    %1999 = vmatpush1.bf16.msra.mxu0 %v1708
    %2000 = vmatprep.subr.bf16.mxu0 %v1711
    %2001 = vmatpush1.bf16.msra.mxu0 %v1710
    %2002 = vmatprep.subr.bf16.mxu0 %v1713
    %2003 = vmatpush1.bf16.msra.mxu0 %v1712
    %2004 = vmatprep.subr.bf16.mxu0 %v1715
    %2005 = vmatpush1.bf16.msra.mxu0 %v1714
    %2006 = vmatprep.subr.bf16.mxu0 %v1717
    %2007 = vmatpush1.bf16.msra.mxu0 %v1716
    %2008 = vmatprep.subr.bf16.mxu0 %v1719
    %2009 = vmatpush1.bf16.msra.mxu0 %v1718
    %2010 = vmatprep.mubr.bf16.mxu0 %v1143
    %2011 = vmatmul.mubr.bf16.gmra.mrb[0].mxu0 %v1126
    %v2012 = vpop.f32.mrb[0].mxu0
    %v2013 = vadd.f32 %v1932, %v2012
    %v2014 = vpop.f32.mrb[0].mxu0
    %v2015 = vadd.f32 %v1934, %v2014
    %v2016 = vpop.f32.mrb[0].mxu0
    %v2017 = vadd.f32 %v1936, %v2016
    %v2018 = vpop.f32.mrb[0].mxu0
    %v2019 = vadd.f32 %v1938, %v2018
    %2020 = vmatprep.mubr.bf16.mxu0 %v1197
    %2021 = vmatmul.mubr.bf16.gmra.mrb[0].mxu0 %v1188
    %v2022 = vpop.f32.mrb[0].mxu0
    %v2023 = vadd.f32 %v1942, %v2022
    %v2024 = vpop.f32.mrb[0].mxu0
    %v2025 = vadd.f32 %v1944, %v2024
    %v2026 = vpop.f32.mrb[0].mxu0
    %v2027 = vadd.f32 %v1946, %v2026
    %v2028 = vpop.f32.mrb[0].mxu0
    %v2029 = vadd.f32 %v1948, %v2028
    %2030 = vmatprep.mubr.bf16.mxu0 %v1251
    %2031 = vmatmul.mubr.bf16.gmra.mrb[0].mxu0 %v1242
    %v2032 = vpop.f32.mrb[0].mxu0
    %v2033 = vadd.f32 %v1952, %v2032
    %v2034 = vpop.f32.mrb[0].mxu0
    %v2035 = vadd.f32 %v1954, %v2034
    %v2036 = vpop.f32.mrb[0].mxu0
    %v2037 = vadd.f32 %v1956, %v2036
    %v2038 = vpop.f32.mrb[0].mxu0
    %v2039 = vadd.f32 %v1958, %v2038
    %2040 = vmatprep.mubr.bf16.mxu0 %v1305
    %2041 = vmatmul.mubr.bf16.gmra.mrb[0].mxu0 %v1296
    %v2042 = vpop.f32.mrb[0].mxu0
    %v2043 = vadd.f32 %v1962, %v2042
    %v2044 = vpop.f32.mrb[0].mxu0
    %v2045 = vadd.f32 %v1964, %v2044
    %v2046 = vpop.f32.mrb[0].mxu0
    %v2047 = vadd.f32 %v1966, %v2046
    %v2048 = vpop.f32.mrb[0].mxu0
    %v2049 = vadd.f32 %v1968, %v2048
    %2050 = vmatprep.mubr.bf16.mxu0 %v1304
    %2051 = vmatmul.mubr.bf16.gmra.mrb[0].mxu0 %v1295
    %v2052 = vpop.f32.mrb[0].mxu0
    %v2053 = vadd.f32 %v1972, %v2052
    %v2054 = vpop.f32.mrb[0].mxu0
    %v2055 = vadd.f32 %v1974, %v2054
    %v2056 = vpop.f32.mrb[0].mxu0
    %v2057 = vpop.f32.mrb[0].mxu0
    %2058 = vdwg.mxu0
    %v2059 = vmul.f32 %v2013, %v300
    %v2060 = vmul.f32 %v2015, %v300
    %v2061 = vmul.f32 %v2017, %v301
    %v2062 = vmul.f32 %v2019, %v301
    %v2063 = vmul.f32 %v2023, %v302
    %v2064 = vmul.f32 %v2025, %v302
    %v2065 = vmul.f32 %v2027, %v303
    %v2066 = vmul.f32 %v2029, %v303
    %v2067 = vmul.f32 %v2033, %v304
    %v2068 = vmul.f32 %v2035, %v304
    %v2069 = vmul.f32 %v2037, %v305
    %v2070 = vmul.f32 %v2039, %v305
    %v2071 = vmul.f32 %v2043, %v306
    %v2072 = vmul.f32 %v2045, %v306
    %v2073 = vmul.f32 %v2047, %v307
    %v2074 = vmul.f32 %v2049, %v307
    %v2075 = vmul.f32 %v2053, %v308
    %v2076 = vmul.f32 %v2055, %v308
    %2077 = vst [vmem:[#allocation2 + $0x10] sm:$0xff] %v2059
    %2078 = vst [vmem:[#allocation2 + $0x18] sm:$0xff] %v2060
    %2079 = vst [vmem:[#allocation2 + $0x20] sm:$0xff] %v2061
    %2080 = vst [vmem:[#allocation2 + $0x28] sm:$0xff] %v2062
    %2081 = vst [vmem:[#allocation2 + $0x30] sm:$0xff] %v2063
    %2082 = vst [vmem:[#allocation2 + $0x38] sm:$0xff] %v2064
    %2083 = vst [vmem:[#allocation2 + $0x40] sm:$0xff] %v2065
    %2084 = vst [vmem:[#allocation2 + $0x48] sm:$0xff] %v2066
    %2085 = vst [vmem:[#allocation2 + $0x50] sm:$0xff] %v2067
    %2086 = vst [vmem:[#allocation2 + $0x58] sm:$0xff] %v2068
    %2087 = vst [vmem:[#allocation2 + $0x60] sm:$0xff] %v2069
    %2088 = vst [vmem:[#allocation2 + $0x68] sm:$0xff] %v2070
    %2089 = vst [vmem:[#allocation2 + $0x70] sm:$0xff] %v2071
    %2090 = vst [vmem:[#allocation2 + $0x78] sm:$0xff] %v2072
    %2091 = vst [vmem:[#allocation2 + $0x80] sm:$0xff] %v2073
    %2092 = vst [vmem:[#allocation2 + $0x88] sm:$0xff] %v2074
    %2093 = vst [vmem:[#allocation2 + $0x90] sm:$0xff] %v2075
    %2094 = vst [vmem:[#allocation2 + $0x98] sm:$0xff] %v2076
    %v2095 = vld [vmem:[#allocation2] sm:$0x80]
    %v2096 = vld [vmem:[#allocation2 + $0x8] sm:$0x80]
    %v2097 = vld [vmem:[#allocation2 + $0x10] sm:$0xff]
    %v2098 = vld [vmem:[#allocation2 + $0x18] sm:$0xff]
    %v2099 = vld [vmem:[#allocation2 + $0x20] sm:$0xff]
    %v2100 = vld [vmem:[#allocation2 + $0x28] sm:$0xff]
    %v2101 = vld [vmem:[#allocation2 + $0x30] sm:$0xff]
    %v2102 = vld [vmem:[#allocation2 + $0x38] sm:$0xff]
    %v2103 = vld [vmem:[#allocation2 + $0x40] sm:$0xff]
    %v2104 = vld [vmem:[#allocation2 + $0x48] sm:$0xff]
    %v2105 = vld [vmem:[#allocation2 + $0x50] sm:$0xff]
    %v2106 = vld [vmem:[#allocation2 + $0x58] sm:$0xff]
    %v2107 = vld [vmem:[#allocation2 + $0x60] sm:$0xff]
    %v2108 = vld [vmem:[#allocation2 + $0x68] sm:$0xff]
    %v2109 = vld [vmem:[#allocation2 + $0x70] sm:$0xff]
    %v2110 = vld [vmem:[#allocation2 + $0x78] sm:$0xff]
    %v2111 = vld [vmem:[#allocation2 + $0x80] sm:$0xff]
    %v2112 = vld [vmem:[#allocation2 + $0x88] sm:$0xff]
    %v2113 = vld [vmem:[#allocation2 + $0x90] sm:$0x7f]
    %v2114 = vld [vmem:[#allocation2 + $0x98] sm:$0x7f]
    %v2115 = vld [vmem:[#allocation2 + $0x10] sm:$0xfe]
    %v2116 = vld [vmem:[#allocation2 + $0x18] sm:$0xfe]
    %v2117 = vld [vmem:[#allocation2 + $0x20] sm:$0xff]
    %v2118 = vld [vmem:[#allocation2 + $0x28] sm:$0xff]
    %v2119 = vld [vmem:[#allocation2 + $0x30] sm:$0xff]
    %v2120 = vld [vmem:[#allocation2 + $0x38] sm:$0xff]
    %v2121 = vld [vmem:[#allocation2 + $0x40] sm:$0xff]
    %v2122 = vld [vmem:[#allocation2 + $0x48] sm:$0xff]
    %v2123 = vld [vmem:[#allocation2 + $0x50] sm:$0xff]
    %v2124 = vld [vmem:[#allocation2 + $0x58] sm:$0xff]
    %v2125 = vld [vmem:[#allocation2 + $0x60] sm:$0xff]
    %v2126 = vld [vmem:[#allocation2 + $0x68] sm:$0xff]
    %v2127 = vld [vmem:[#allocation2 + $0x70] sm:$0xff]
    %v2128 = vld [vmem:[#allocation2 + $0x78] sm:$0xff]
    %v2129 = vld [vmem:[#allocation2 + $0x80] sm:$0xff]
    %v2130 = vld [vmem:[#allocation2 + $0x88] sm:$0xff]
    %v2131 = vld [vmem:[#allocation2 + $0x90] sm:$0xff]
    %v2132 = vld [vmem:[#allocation2 + $0x98] sm:$0xff]
    %v2133 = vld [vmem:[#allocation2 + $0xa0] sm:$0x1]
    %v2134 = vld [vmem:[#allocation2 + $0xa8] sm:$0x1]
    %v2153 = vrot.slane %v2059, 1
    %v2154 = vrot.slane %v2060, 1
    %v2155 = vrot.slane %v2061, 1
    %v2156 = vsel %vm769, %v2153, %v2155
    %v2157 = vrot.slane %v2062, 1
    %v2158 = vsel %vm769, %v2154, %v2157
    %v2159 = vrot.slane %v2063, 1
    %v2160 = vsel %vm769, %v2155, %v2159
    %v2161 = vrot.slane %v2064, 1
    %v2162 = vsel %vm769, %v2157, %v2161
    %v2163 = vrot.slane %v2065, 1
    %v2164 = vsel %vm769, %v2159, %v2163
    %v2165 = vrot.slane %v2066, 1
    %v2166 = vsel %vm769, %v2161, %v2165
    %v2167 = vrot.slane %v2067, 1
    %v2168 = vsel %vm769, %v2163, %v2167
    %v2169 = vrot.slane %v2068, 1
    %v2170 = vsel %vm769, %v2165, %v2169
    %v2171 = vrot.slane %v2069, 1
    %v2172 = vsel %vm769, %v2167, %v2171
    %v2173 = vrot.slane %v2070, 1
    %v2174 = vsel %vm769, %v2169, %v2173
    %v2175 = vrot.slane %v2071, 1
    %v2176 = vsel %vm769, %v2171, %v2175
    %v2177 = vrot.slane %v2072, 1
    %v2178 = vsel %vm769, %v2173, %v2177
    %v2179 = vrot.slane %v2073, 1
    %v2180 = vsel %vm769, %v2175, %v2179
    %v2181 = vrot.slane %v2074, 1
    %v2182 = vsel %vm769, %v2177, %v2181
    %v2183 = vrot.slane %v2075, 1
    %v2184 = vsel %vm769, %v2179, %v2183
    %v2185 = vrot.slane %v2076, 1
    %v2186 = vsel %vm769, %v2181, %v2185
    %v2227 = vrot.slane %v2115, 2
    %v2228 = vrot.slane %v2116, 2
    %v2229 = vrot.slane %v2117, 2
    %v2230 = vsel %vm844, %v2227, %v2229
    %v2231 = vrot.slane %v2118, 2
    %v2232 = vsel %vm844, %v2228, %v2231
    %v2233 = vrot.slane %v2119, 2
    %v2234 = vsel %vm844, %v2229, %v2233
    %v2235 = vrot.slane %v2120, 2
    %v2236 = vsel %vm844, %v2231, %v2235
    %v2237 = vrot.slane %v2121, 2
    %v2238 = vsel %vm844, %v2233, %v2237
    %v2239 = vrot.slane %v2122, 2
    %v2240 = vsel %vm844, %v2235, %v2239
    %v2241 = vrot.slane %v2123, 2
    %v2242 = vsel %vm844, %v2237, %v2241
    %v2243 = vrot.slane %v2124, 2
    %v2244 = vsel %vm844, %v2239, %v2243
    %v2245 = vrot.slane %v2125, 2
    %v2246 = vsel %vm844, %v2241, %v2245
    %v2247 = vrot.slane %v2126, 2
    %v2248 = vsel %vm844, %v2243, %v2247
    %v2249 = vrot.slane %v2127, 2
    %v2250 = vsel %vm844, %v2245, %v2249
    %v2251 = vrot.slane %v2128, 2
    %v2252 = vsel %vm844, %v2247, %v2251
    %v2253 = vrot.slane %v2129, 2
    %v2254 = vsel %vm844, %v2249, %v2253
    %v2255 = vrot.slane %v2130, 2
    %v2256 = vsel %vm844, %v2251, %v2255
    %v2257 = vrot.slane %v2131, 2
    %v2258 = vsel %vm844, %v2253, %v2257
    %v2259 = vrot.slane %v2132, 2
    %v2260 = vsel %vm844, %v2255, %v2259
    %v2261 = vrot.slane %v2133, 2
    %v2262 = vsel %vm844, %v2257, %v2261
    %v2263 = vrot.slane %v2134, 2
    %v2264 = vsel %vm844, %v2259, %v2263
    %v2285 = vpack.c.bf16 %v2097, %v2095
    %v2286 = vpack.c.bf16 %v2098, %v2096
    %v2287 = vpack.c.bf16 %v2156, %v2153
    %v2288 = vpack.c.bf16 %v2158, %v2154
    %v2289 = vpack.c.bf16 %v2230, %v2227
    %v2290 = vpack.c.bf16 %v2232, %v2228
    %v2291 = vpack.c.bf16 %v2101, %v2099
    %v2292 = vpack.c.bf16 %v2102, %v2100
    %v2293 = vpack.c.bf16 %v2164, %v2160
    %v2294 = vpack.c.bf16 %v2166, %v2162
    %v2295 = vpack.c.bf16 %v2238, %v2234
    %v2296 = vpack.c.bf16 %v2240, %v2236
    %v2297 = vpack.c.bf16 %v2105, %v2103
    %v2298 = vpack.c.bf16 %v2106, %v2104
    %v2299 = vpack.c.bf16 %v2172, %v2168
    %v2300 = vpack.c.bf16 %v2174, %v2170
    %v2301 = vpack.c.bf16 %v2246, %v2242
    %v2302 = vpack.c.bf16 %v2248, %v2244
    %v2303 = vpack.c.bf16 %v2109, %v2107
    %v2304 = vpack.c.bf16 %v2110, %v2108
    %v2305 = vpack.c.bf16 %v2180, %v2176
    %v2306 = vpack.c.bf16 %v2182, %v2178
    %v2307 = vpack.c.bf16 %v2254, %v2250
    %v2308 = vpack.c.bf16 %v2256, %v2252
    %v2309 = vpack.c.bf16 %v2113, %v2111
    %v2310 = vpack.c.bf16 %v2114, %v2112
    %v2311 = vpack.c.bf16 %v2183, %v2184
    %v2312 = vpack.c.bf16 %v2185, %v2186
    %v2313 = vpack.c.bf16 %v2262, %v2258
    %v2314 = vpack.c.bf16 %v2264, %v2260
    %v2315 = vld [vmem:[#allocation12] sm:$0xff]
    %v2316 = vld [vmem:[#allocation12 + $0x8] sm:$0xff]
    %v2317 = vld [vmem:[#allocation12 + $0x10] sm:$0xff]
    %v2318 = vld [vmem:[#allocation12 + $0x18] sm:$0xff]
    %v2319 = vld [vmem:[#allocation12 + $0x20] sm:$0xff]
    %v2320 = vld [vmem:[#allocation12 + $0x28] sm:$0xff]
    %v2321 = vld [vmem:[#allocation12 + $0x30] sm:$0xff]
    %v2322 = vld [vmem:[#allocation12 + $0x38] sm:$0xff]
    %v2323 = vld [vmem:[#allocation12 + $0x40] sm:$0xff]
    %v2324 = vld [vmem:[#allocation12 + $0x48] sm:$0xff]
    %v2325 = vld [vmem:[#allocation12 + $0x50] sm:$0xff]
    %v2326 = vld [vmem:[#allocation12 + $0x58] sm:$0xff]
    %v2327 = vld [vmem:[#allocation12 + $0x60] sm:$0xff]
    %v2328 = vld [vmem:[#allocation12 + $0x68] sm:$0xff]
    %v2329 = vld [vmem:[#allocation12 + $0x70] sm:$0xff]
    %v2330 = vld [vmem:[#allocation12 + $0x78] sm:$0xff]
    %v2331 = vld [vmem:[#allocation12 + $0x80] sm:$0xff]
    %v2332 = vld [vmem:[#allocation12 + $0x88] sm:$0xff]
    %v2333 = vld [vmem:[#allocation12 + $0x90] sm:$0xff]
    %v2334 = vld [vmem:[#allocation12 + $0x98] sm:$0xff]
    %v2335 = vld [vmem:[#allocation12 + $0xa0] sm:$0xff]
    %v2336 = vld [vmem:[#allocation12 + $0xa8] sm:$0xff]
    %v2337 = vld [vmem:[#allocation12 + $0xb0] sm:$0xff]
    %v2338 = vld [vmem:[#allocation12 + $0xb8] sm:$0xff]
    %v2339 = vld [vmem:[#allocation12 + $0xc0] sm:$0xff]
    %v2340 = vld [vmem:[#allocation12 + $0xc8] sm:$0xff]
    %v2341 = vld [vmem:[#allocation12 + $0xd0] sm:$0xff]
    %v2342 = vld [vmem:[#allocation12 + $0xd8] sm:$0xff]
    %v2343 = vld [vmem:[#allocation12 + $0xe0] sm:$0xff]
    %v2344 = vld [vmem:[#allocation12 + $0xe8] sm:$0xff]
    %v2345 = vld [vmem:[#allocation12 + $0xf0] sm:$0xff]
    %v2346 = vld [vmem:[#allocation12 + $0xf8] sm:$0xff]
    %v2347 = vld [vmem:[#allocation12 + $0x100] sm:$0xff]
    %v2348 = vld [vmem:[#allocation12 + $0x108] sm:$0xff]
    %v2349 = vld [vmem:[#allocation12 + $0x110] sm:$0xff]
    %v2350 = vld [vmem:[#allocation12 + $0x118] sm:$0xff]
    %v2351 = vld [vmem:[#allocation12 + $0x120] sm:$0xff]
    %v2352 = vld [vmem:[#allocation12 + $0x128] sm:$0xff]
    %v2353 = vld [vmem:[#allocation12 + $0x130] sm:$0xff]
    %v2354 = vld [vmem:[#allocation12 + $0x138] sm:$0xff]
    %v2355 = vld [vmem:[#allocation12 + $0x140] sm:$0xff]
    %v2356 = vld [vmem:[#allocation12 + $0x148] sm:$0xff]
    %v2357 = vld [vmem:[#allocation12 + $0x150] sm:$0xff]
    %v2358 = vld [vmem:[#allocation12 + $0x158] sm:$0xff]
    %v2359 = vld [vmem:[#allocation12 + $0x160] sm:$0xff]
    %v2360 = vld [vmem:[#allocation12 + $0x168] sm:$0xff]
    %v2361 = vld [vmem:[#allocation12 + $0x170] sm:$0xff]
    %v2362 = vld [vmem:[#allocation12 + $0x178] sm:$0xff]
    %v2363 = vld [vmem:[#allocation12 + $0x180] sm:$0xff]
    %v2364 = vld [vmem:[#allocation12 + $0x188] sm:$0xff]
    %v2365 = vld [vmem:[#allocation12 + $0x190] sm:$0xff]
    %v2366 = vld [vmem:[#allocation12 + $0x198] sm:$0xff]
    %v2367 = vld [vmem:[#allocation12 + $0x1a0] sm:$0xff]
    %v2368 = vld [vmem:[#allocation12 + $0x1a8] sm:$0xff]
    %v2369 = vld [vmem:[#allocation12 + $0x1b0] sm:$0xff]
    %v2370 = vld [vmem:[#allocation12 + $0x1b8] sm:$0xff]
    %v2371 = vld [vmem:[#allocation12 + $0x1c0] sm:$0xff]
    %v2372 = vld [vmem:[#allocation12 + $0x1c8] sm:$0xff]
    %v2373 = vld [vmem:[#allocation12 + $0x1d0] sm:$0xff]
    %v2374 = vld [vmem:[#allocation12 + $0x1d8] sm:$0xff]
    %v2375 = vld [vmem:[#allocation12 + $0x1e0] sm:$0xff]
    %v2376 = vld [vmem:[#allocation12 + $0x1e8] sm:$0xff]
    %v2377 = vld [vmem:[#allocation12 + $0x1f0] sm:$0xff]
    %v2378 = vld [vmem:[#allocation12 + $0x1f8] sm:$0xff]
    %v2379 = vld [vmem:[#allocation12 + $0x200] sm:$0xff]
    %v2380 = vld [vmem:[#allocation12 + $0x208] sm:$0xff]
    %v2381 = vld [vmem:[#allocation12 + $0x210] sm:$0xff]
    %v2382 = vld [vmem:[#allocation12 + $0x218] sm:$0xff]
    %v2383 = vld [vmem:[#allocation12 + $0x220] sm:$0xff]
    %v2384 = vld [vmem:[#allocation12 + $0x228] sm:$0xff]
    %v2385 = vld [vmem:[#allocation12 + $0x230] sm:$0xff]
    %v2386 = vld [vmem:[#allocation12 + $0x238] sm:$0xff]
    %v2387 = vld [vmem:[#allocation12 + $0x240] sm:$0xff]
    %v2388 = vld [vmem:[#allocation12 + $0x248] sm:$0xff]
    %v2389 = vld [vmem:[#allocation12 + $0x250] sm:$0xff]
    %v2390 = vld [vmem:[#allocation12 + $0x258] sm:$0xff]
    %v2391 = vld [vmem:[#allocation12 + $0x260] sm:$0xff]
    %v2392 = vld [vmem:[#allocation12 + $0x268] sm:$0xff]
    %v2393 = vld [vmem:[#allocation12 + $0x270] sm:$0xff]
    %v2394 = vld [vmem:[#allocation12 + $0x278] sm:$0xff]
    %v2395 = vld [vmem:[#allocation12 + $0x280] sm:$0xff]
    %v2396 = vld [vmem:[#allocation12 + $0x288] sm:$0xff]
    %v2397 = vld [vmem:[#allocation12 + $0x290] sm:$0xff]
    %v2398 = vld [vmem:[#allocation12 + $0x298] sm:$0xff]
    %v2399 = vld [vmem:[#allocation12 + $0x2a0] sm:$0xff]
    %v2400 = vld [vmem:[#allocation12 + $0x2a8] sm:$0xff]
    %v2401 = vld [vmem:[#allocation12 + $0x2b0] sm:$0xff]
    %v2402 = vld [vmem:[#allocation12 + $0x2b8] sm:$0xff]
    %v2403 = vld [vmem:[#allocation12 + $0x2c0] sm:$0xff]
    %v2404 = vld [vmem:[#allocation12 + $0x2c8] sm:$0xff]
    %v2405 = vld [vmem:[#allocation12 + $0x2d0] sm:$0xff]
    %v2406 = vld [vmem:[#allocation12 + $0x2d8] sm:$0xff]
    %v2407 = vld [vmem:[#allocation12 + $0x2e0] sm:$0xff]
    %v2408 = vld [vmem:[#allocation12 + $0x2e8] sm:$0xff]
    %v2409 = vld [vmem:[#allocation12 + $0x2f0] sm:$0xff]
    %v2410 = vld [vmem:[#allocation12 + $0x2f8] sm:$0xff]
    %v2412 = vshrl.u32 %v2285, 16
    %v2414 = vrot.slane %v2412, 3
    %v2415 = vshll.u32 %v2285, 16
    %v2417 = vrot.slane %v2415, 4
    %v2418 = vor.u32 %v2414, %v2417
    %v2420 = vshrl.u32 %v2291, 16
    %v2422 = vrot.slane %v2420, 3
    %v2423 = vshll.u32 %v2291, 16
    %v2425 = vrot.slane %v2423, 4
    %v2426 = vor.u32 %v2422, %v2425
    %v2427 = vsel %vm1041, %v2418, %v2426
    %v2429 = vshrl.u32 %v2286, 16
    %v2431 = vrot.slane %v2429, 3
    %v2432 = vshll.u32 %v2286, 16
    %v2434 = vrot.slane %v2432, 4
    %v2435 = vor.u32 %v2431, %v2434
    %v2437 = vshrl.u32 %v2292, 16
    %v2439 = vrot.slane %v2437, 3
    %v2440 = vshll.u32 %v2292, 16
    %v2442 = vrot.slane %v2440, 4
    %v2443 = vor.u32 %v2439, %v2442
    %v2444 = vsel %vm1041, %v2435, %v2443
    %v2446 = vshrl.u32 %v2287, 16
    %v2448 = vrot.slane %v2446, 3
    %v2449 = vshll.u32 %v2287, 16
    %v2451 = vrot.slane %v2449, 4
    %v2452 = vor.u32 %v2448, %v2451
    %v2454 = vshrl.u32 %v2293, 16
    %v2456 = vrot.slane %v2454, 3
    %v2457 = vshll.u32 %v2293, 16
    %v2459 = vrot.slane %v2457, 4
    %v2460 = vor.u32 %v2456, %v2459
    %v2461 = vsel %vm1041, %v2452, %v2460
    %v2463 = vshrl.u32 %v2288, 16
    %v2465 = vrot.slane %v2463, 3
    %v2466 = vshll.u32 %v2288, 16
    %v2468 = vrot.slane %v2466, 4
    %v2469 = vor.u32 %v2465, %v2468
    %v2471 = vshrl.u32 %v2294, 16
    %v2473 = vrot.slane %v2471, 3
    %v2474 = vshll.u32 %v2294, 16
    %v2476 = vrot.slane %v2474, 4
    %v2477 = vor.u32 %v2473, %v2476
    %v2478 = vsel %vm1041, %v2469, %v2477
    %v2480 = vshrl.u32 %v2289, 16
    %v2482 = vrot.slane %v2480, 3
    %v2483 = vshll.u32 %v2289, 16
    %v2485 = vrot.slane %v2483, 4
    %v2486 = vor.u32 %v2482, %v2485
    %v2488 = vshrl.u32 %v2295, 16
    %v2490 = vrot.slane %v2488, 3
    %v2491 = vshll.u32 %v2295, 16
    %v2493 = vrot.slane %v2491, 4
    %v2494 = vor.u32 %v2490, %v2493
    %v2495 = vsel %vm1041, %v2486, %v2494
    %v2497 = vshrl.u32 %v2290, 16
    %v2499 = vrot.slane %v2497, 3
    %v2500 = vshll.u32 %v2290, 16
    %v2502 = vrot.slane %v2500, 4
    %v2503 = vor.u32 %v2499, %v2502
    %v2505 = vshrl.u32 %v2296, 16
    %v2507 = vrot.slane %v2505, 3
    %v2508 = vshll.u32 %v2296, 16
    %v2510 = vrot.slane %v2508, 4
    %v2511 = vor.u32 %v2507, %v2510
    %v2512 = vsel %vm1041, %v2503, %v2511
    %v2514 = vshrl.u32 %v2297, 16
    %v2516 = vrot.slane %v2514, 3
    %v2517 = vshll.u32 %v2297, 16
    %v2519 = vrot.slane %v2517, 4
    %v2520 = vor.u32 %v2516, %v2519
    %v2521 = vsel %vm1041, %v2426, %v2520
    %v2523 = vshrl.u32 %v2298, 16
    %v2525 = vrot.slane %v2523, 3
    %v2526 = vshll.u32 %v2298, 16
    %v2528 = vrot.slane %v2526, 4
    %v2529 = vor.u32 %v2525, %v2528
    %v2530 = vsel %vm1041, %v2443, %v2529
    %v2532 = vshrl.u32 %v2299, 16
    %v2534 = vrot.slane %v2532, 3
    %v2535 = vshll.u32 %v2299, 16
    %v2537 = vrot.slane %v2535, 4
    %v2538 = vor.u32 %v2534, %v2537
    %v2539 = vsel %vm1041, %v2460, %v2538
    %v2541 = vshrl.u32 %v2300, 16
    %v2543 = vrot.slane %v2541, 3
    %v2544 = vshll.u32 %v2300, 16
    %v2546 = vrot.slane %v2544, 4
    %v2547 = vor.u32 %v2543, %v2546
    %v2548 = vsel %vm1041, %v2477, %v2547
    %v2550 = vshrl.u32 %v2301, 16
    %v2552 = vrot.slane %v2550, 3
    %v2553 = vshll.u32 %v2301, 16
    %v2555 = vrot.slane %v2553, 4
    %v2556 = vor.u32 %v2552, %v2555
    %v2557 = vsel %vm1041, %v2494, %v2556
    %v2559 = vshrl.u32 %v2302, 16
    %v2561 = vrot.slane %v2559, 3
    %v2562 = vshll.u32 %v2302, 16
    %v2564 = vrot.slane %v2562, 4
    %v2565 = vor.u32 %v2561, %v2564
    %v2566 = vsel %vm1041, %v2511, %v2565
    %v2568 = vshrl.u32 %v2303, 16
    %v2570 = vrot.slane %v2568, 3
    %v2571 = vshll.u32 %v2303, 16
    %v2573 = vrot.slane %v2571, 4
    %v2574 = vor.u32 %v2570, %v2573
    %v2575 = vsel %vm1041, %v2520, %v2574
    %v2577 = vshrl.u32 %v2304, 16
    %v2579 = vrot.slane %v2577, 3
    %v2580 = vshll.u32 %v2304, 16
    %v2582 = vrot.slane %v2580, 4
    %v2583 = vor.u32 %v2579, %v2582
    %v2584 = vsel %vm1041, %v2529, %v2583
    %v2586 = vshrl.u32 %v2305, 16
    %v2588 = vrot.slane %v2586, 3
    %v2589 = vshll.u32 %v2305, 16
    %v2591 = vrot.slane %v2589, 4
    %v2592 = vor.u32 %v2588, %v2591
    %v2593 = vsel %vm1041, %v2538, %v2592
    %v2595 = vshrl.u32 %v2306, 16
    %v2597 = vrot.slane %v2595, 3
    %v2598 = vshll.u32 %v2306, 16
    %v2600 = vrot.slane %v2598, 4
    %v2601 = vor.u32 %v2597, %v2600
    %v2602 = vsel %vm1041, %v2547, %v2601
    %v2604 = vshrl.u32 %v2307, 16
    %v2606 = vrot.slane %v2604, 3
    %v2607 = vshll.u32 %v2307, 16
    %v2609 = vrot.slane %v2607, 4
    %v2610 = vor.u32 %v2606, %v2609
    %v2611 = vsel %vm1041, %v2556, %v2610
    %v2613 = vshrl.u32 %v2308, 16
    %v2615 = vrot.slane %v2613, 3
    %v2616 = vshll.u32 %v2308, 16
    %v2618 = vrot.slane %v2616, 4
    %v2619 = vor.u32 %v2615, %v2618
    %v2620 = vsel %vm1041, %v2565, %v2619
    %v2622 = vshrl.u32 %v2309, 16
    %v2624 = vrot.slane %v2622, 3
    %v2625 = vshll.u32 %v2309, 16
    %v2627 = vrot.slane %v2625, 4
    %v2628 = vor.u32 %v2624, %v2627
    %v2629 = vsel %vm1041, %v2574, %v2628
    %v2631 = vshrl.u32 %v2310, 16
    %v2633 = vrot.slane %v2631, 3
    %v2634 = vshll.u32 %v2310, 16
    %v2636 = vrot.slane %v2634, 4
    %v2637 = vor.u32 %v2633, %v2636
    %v2638 = vsel %vm1041, %v2583, %v2637
    %v2640 = vshrl.u32 %v2311, 16
    %v2642 = vrot.slane %v2640, 3
    %v2643 = vshll.u32 %v2311, 16
    %v2645 = vrot.slane %v2643, 4
    %v2646 = vor.u32 %v2642, %v2645
    %v2647 = vsel %vm1041, %v2592, %v2646
    %v2649 = vshrl.u32 %v2312, 16
    %v2651 = vrot.slane %v2649, 3
    %v2652 = vshll.u32 %v2312, 16
    %v2654 = vrot.slane %v2652, 4
    %v2655 = vor.u32 %v2651, %v2654
    %v2656 = vsel %vm1041, %v2601, %v2655
    %v2658 = vshrl.u32 %v2313, 16
    %v2660 = vrot.slane %v2658, 3
    %v2661 = vshll.u32 %v2313, 16
    %v2663 = vrot.slane %v2661, 4
    %v2664 = vor.u32 %v2660, %v2663
    %v2665 = vsel %vm1041, %v2610, %v2664
    %v2667 = vshrl.u32 %v2314, 16
    %v2669 = vrot.slane %v2667, 3
    %v2670 = vshll.u32 %v2314, 16
    %v2672 = vrot.slane %v2670, 4
    %v2673 = vor.u32 %v2669, %v2672
    %v2674 = vsel %vm1041, %v2619, %v2673
    %v2801 = vunpack.c.l.b16 %v2315
    %v2802 = vunpack.c.h.b16 %v2315
    %v2803 = vunpack.c.l.b16 %v2316
    %v2804 = vunpack.c.h.b16 %v2316
    %v2805 = vunpack.c.l.b16 %v2317
    %v2806 = vunpack.c.h.b16 %v2317
    %v2807 = vunpack.c.l.b16 %v2318
    %v2808 = vunpack.c.h.b16 %v2318
    %v2809 = vunpack.c.l.b16 %v2319
    %v2810 = vunpack.c.h.b16 %v2319
    %v2811 = vunpack.c.l.b16 %v2320
    %v2812 = vunpack.c.h.b16 %v2320
    %v2813 = vunpack.c.l.b16 %v2321
    %v2814 = vunpack.c.h.b16 %v2321
    %v2815 = vunpack.c.l.b16 %v2322
    %v2816 = vunpack.c.h.b16 %v2322
    %v2817 = vunpack.c.l.b16 %v2323
    %v2818 = vunpack.c.h.b16 %v2323
    %v2819 = vunpack.c.l.b16 %v2324
    %v2820 = vunpack.c.h.b16 %v2324
    %v2821 = vunpack.c.l.b16 %v2325
    %v2822 = vunpack.c.h.b16 %v2325
    %v2823 = vunpack.c.l.b16 %v2326
    %v2824 = vunpack.c.h.b16 %v2326
    %v2825 = vunpack.c.l.b16 %v2327
    %v2826 = vunpack.c.h.b16 %v2327
    %v2827 = vunpack.c.l.b16 %v2328
    %v2828 = vunpack.c.h.b16 %v2328
    %v2829 = vunpack.c.l.b16 %v2329
    %v2830 = vunpack.c.h.b16 %v2329
    %v2831 = vunpack.c.l.b16 %v2330
    %v2832 = vunpack.c.h.b16 %v2330
    %v2833 = vunpack.c.l.b16 %v2331
    %v2834 = vunpack.c.h.b16 %v2331
    %v2835 = vunpack.c.l.b16 %v2332
    %v2836 = vunpack.c.h.b16 %v2332
    %v2837 = vunpack.c.l.b16 %v2333
    %v2838 = vunpack.c.h.b16 %v2333
    %v2839 = vunpack.c.l.b16 %v2334
    %v2840 = vunpack.c.h.b16 %v2334
    %v2841 = vunpack.c.l.b16 %v2335
    %v2842 = vunpack.c.h.b16 %v2335
    %v2843 = vunpack.c.l.b16 %v2336
    %v2844 = vunpack.c.h.b16 %v2336
    %v2845 = vunpack.c.l.b16 %v2337
    %v2846 = vunpack.c.h.b16 %v2337
    %v2847 = vunpack.c.l.b16 %v2338
    %v2848 = vunpack.c.h.b16 %v2338
    %v2849 = vunpack.c.l.b16 %v2339
    %v2850 = vunpack.c.h.b16 %v2339
    %v2851 = vunpack.c.l.b16 %v2340
    %v2852 = vunpack.c.h.b16 %v2340
    %v2853 = vunpack.c.l.b16 %v2341
    %v2854 = vunpack.c.h.b16 %v2341
    %v2855 = vunpack.c.l.b16 %v2342
    %v2856 = vunpack.c.h.b16 %v2342
    %v2857 = vunpack.c.l.b16 %v2343
    %v2858 = vunpack.c.h.b16 %v2343
    %v2859 = vunpack.c.l.b16 %v2344
    %v2860 = vunpack.c.h.b16 %v2344
    %v2861 = vunpack.c.l.b16 %v2345
    %v2862 = vunpack.c.h.b16 %v2345
    %v2863 = vunpack.c.l.b16 %v2346
    %v2864 = vunpack.c.h.b16 %v2346
    %v2865 = vunpack.c.l.b16 %v2347
    %v2866 = vunpack.c.h.b16 %v2347
    %v2867 = vunpack.c.l.b16 %v2348
    %v2868 = vunpack.c.h.b16 %v2348
    %v2869 = vunpack.c.l.b16 %v2349
    %v2870 = vunpack.c.h.b16 %v2349
    %v2871 = vunpack.c.l.b16 %v2350
    %v2872 = vunpack.c.h.b16 %v2350
    %v2873 = vunpack.c.l.b16 %v2351
    %v2874 = vunpack.c.h.b16 %v2351
    %v2875 = vunpack.c.l.b16 %v2352
    %v2876 = vunpack.c.h.b16 %v2352
    %v2877 = vunpack.c.l.b16 %v2353
    %v2878 = vunpack.c.h.b16 %v2353
    %v2879 = vunpack.c.l.b16 %v2354
    %v2880 = vunpack.c.h.b16 %v2354
    %v2881 = vunpack.c.l.b16 %v2355
    %v2882 = vunpack.c.h.b16 %v2355
    %v2883 = vunpack.c.l.b16 %v2356
    %v2884 = vunpack.c.h.b16 %v2356
    %v2885 = vunpack.c.l.b16 %v2357
    %v2886 = vunpack.c.h.b16 %v2357
    %v2887 = vunpack.c.l.b16 %v2358
    %v2888 = vunpack.c.h.b16 %v2358
    %v2889 = vunpack.c.l.b16 %v2359
    %v2890 = vunpack.c.h.b16 %v2359
    %v2891 = vunpack.c.l.b16 %v2360
    %v2892 = vunpack.c.h.b16 %v2360
    %v2893 = vunpack.c.l.b16 %v2361
    %v2894 = vunpack.c.h.b16 %v2361
    %v2895 = vunpack.c.l.b16 %v2362
    %v2896 = vunpack.c.h.b16 %v2362
    %v2897 = vunpack.c.l.b16 %v2363
    %v2898 = vunpack.c.h.b16 %v2363
    %v2899 = vunpack.c.l.b16 %v2364
    %v2900 = vunpack.c.h.b16 %v2364
    %v2901 = vunpack.c.l.b16 %v2365
    %v2902 = vunpack.c.h.b16 %v2365
    %v2903 = vunpack.c.l.b16 %v2366
    %v2904 = vunpack.c.h.b16 %v2366
    %v2905 = vunpack.c.l.b16 %v2367
    %v2906 = vunpack.c.h.b16 %v2367
    %v2907 = vunpack.c.l.b16 %v2368
    %v2908 = vunpack.c.h.b16 %v2368
    %v2909 = vunpack.c.l.b16 %v2369
    %v2910 = vunpack.c.h.b16 %v2369
    %v2911 = vunpack.c.l.b16 %v2370
    %v2912 = vunpack.c.h.b16 %v2370
    %v2913 = vunpack.c.l.b16 %v2371
    %v2914 = vunpack.c.h.b16 %v2371
    %v2915 = vunpack.c.l.b16 %v2372
    %v2916 = vunpack.c.h.b16 %v2372
    %v2917 = vunpack.c.l.b16 %v2373
    %v2918 = vunpack.c.h.b16 %v2373
    %v2919 = vunpack.c.l.b16 %v2374
    %v2920 = vunpack.c.h.b16 %v2374
    %v2921 = vunpack.c.l.b16 %v2375
    %v2922 = vunpack.c.h.b16 %v2375
    %v2923 = vunpack.c.l.b16 %v2376
    %v2924 = vunpack.c.h.b16 %v2376
    %v2925 = vunpack.c.l.b16 %v2377
    %v2926 = vunpack.c.h.b16 %v2377
    %v2927 = vunpack.c.l.b16 %v2378
    %v2928 = vunpack.c.h.b16 %v2378
    %v2929 = vunpack.c.l.b16 %v2379
    %v2930 = vunpack.c.h.b16 %v2379
    %v2931 = vunpack.c.l.b16 %v2380
    %v2932 = vunpack.c.h.b16 %v2380
    %v2933 = vunpack.c.l.b16 %v2381
    %v2934 = vunpack.c.h.b16 %v2381
    %v2935 = vunpack.c.l.b16 %v2382
    %v2936 = vunpack.c.h.b16 %v2382
    %v2937 = vunpack.c.l.b16 %v2383
    %v2938 = vunpack.c.h.b16 %v2383
    %v2939 = vunpack.c.l.b16 %v2384
    %v2940 = vunpack.c.h.b16 %v2384
    %v2941 = vunpack.c.l.b16 %v2385
    %v2942 = vunpack.c.h.b16 %v2385
    %v2943 = vunpack.c.l.b16 %v2386
    %v2944 = vunpack.c.h.b16 %v2386
    %v2945 = vunpack.c.l.b16 %v2387
    %v2946 = vunpack.c.h.b16 %v2387
    %v2947 = vunpack.c.l.b16 %v2388
    %v2948 = vunpack.c.h.b16 %v2388
    %v2949 = vunpack.c.l.b16 %v2389
    %v2950 = vunpack.c.h.b16 %v2389
    %v2951 = vunpack.c.l.b16 %v2390
    %v2952 = vunpack.c.h.b16 %v2390
    %v2953 = vunpack.c.l.b16 %v2391
    %v2954 = vunpack.c.h.b16 %v2391
    %v2955 = vunpack.c.l.b16 %v2392
    %v2956 = vunpack.c.h.b16 %v2392
    %v2957 = vunpack.c.l.b16 %v2393
    %v2958 = vunpack.c.h.b16 %v2393
    %v2959 = vunpack.c.l.b16 %v2394
    %v2960 = vunpack.c.h.b16 %v2394
    %v2961 = vunpack.c.l.b16 %v2395
    %v2962 = vunpack.c.h.b16 %v2395
    %v2963 = vunpack.c.l.b16 %v2396
    %v2964 = vunpack.c.h.b16 %v2396
    %v2965 = vunpack.c.l.b16 %v2397
    %v2966 = vunpack.c.h.b16 %v2397
    %v2967 = vunpack.c.l.b16 %v2398
    %v2968 = vunpack.c.h.b16 %v2398
    %v2969 = vunpack.c.l.b16 %v2399
    %v2970 = vunpack.c.h.b16 %v2399
    %v2971 = vunpack.c.l.b16 %v2400
    %v2972 = vunpack.c.h.b16 %v2400
    %v2973 = vunpack.c.l.b16 %v2401
    %v2974 = vunpack.c.h.b16 %v2401
    %v2975 = vunpack.c.l.b16 %v2402
    %v2976 = vunpack.c.h.b16 %v2402
    %v2977 = vunpack.c.l.b16 %v2403
    %v2978 = vunpack.c.h.b16 %v2403
    %v2979 = vunpack.c.l.b16 %v2404
    %v2980 = vunpack.c.h.b16 %v2404
    %v2981 = vunpack.c.l.b16 %v2405
    %v2982 = vunpack.c.h.b16 %v2405
    %v2983 = vunpack.c.l.b16 %v2406
    %v2984 = vunpack.c.h.b16 %v2406
    %v2985 = vunpack.c.l.b16 %v2407
    %v2986 = vunpack.c.h.b16 %v2407
    %v2987 = vunpack.c.l.b16 %v2408
    %v2988 = vunpack.c.h.b16 %v2408
    %v2989 = vunpack.c.l.b16 %v2409
    %v2990 = vunpack.c.h.b16 %v2409
    %v2991 = vunpack.c.l.b16 %v2410
    %v2992 = vunpack.c.h.b16 %v2410
    %v2993 = vpack.c.b16 %v2803, %v2801
    %v2994 = vpack.c.b16 %v2804, %v2802
    %v2995 = vpack.c.b16 %v2807, %v2805
    %v2996 = vpack.c.b16 %v2808, %v2806
    %v2997 = vpack.c.b16 %v2811, %v2809
    %v2998 = vpack.c.b16 %v2812, %v2810
    %v2999 = vpack.c.b16 %v2815, %v2813
    %v3000 = vpack.c.b16 %v2816, %v2814
    %v3001 = vpack.c.b16 %v2819, %v2817
    %v3002 = vpack.c.b16 %v2820, %v2818
    %v3003 = vpack.c.b16 %v2823, %v2821
    %v3004 = vpack.c.b16 %v2824, %v2822
    %v3005 = vpack.c.b16 %v2827, %v2825
    %v3006 = vpack.c.b16 %v2828, %v2826
    %v3007 = vpack.c.b16 %v2831, %v2829
    %v3008 = vpack.c.b16 %v2832, %v2830
    %v3009 = vpack.c.b16 %v2835, %v2833
    %v3010 = vpack.c.b16 %v2836, %v2834
    %v3011 = vpack.c.b16 %v2839, %v2837
    %v3012 = vpack.c.b16 %v2840, %v2838
    %v3013 = vpack.c.b16 %v2843, %v2841
    %v3014 = vpack.c.b16 %v2844, %v2842
    %v3015 = vpack.c.b16 %v2847, %v2845
    %v3016 = vpack.c.b16 %v2848, %v2846
    %v3017 = vpack.c.b16 %v2851, %v2849
    %v3018 = vpack.c.b16 %v2852, %v2850
    %v3019 = vpack.c.b16 %v2855, %v2853
    %v3020 = vpack.c.b16 %v2856, %v2854
    %v3021 = vpack.c.b16 %v2859, %v2857
    %v3022 = vpack.c.b16 %v2860, %v2858
    %v3023 = vpack.c.b16 %v2863, %v2861
    %v3024 = vpack.c.b16 %v2864, %v2862
    %v3025 = vpack.c.b16 %v2867, %v2865
    %v3026 = vpack.c.b16 %v2868, %v2866
    %v3027 = vpack.c.b16 %v2871, %v2869
    %v3028 = vpack.c.b16 %v2872, %v2870
    %v3029 = vpack.c.b16 %v2875, %v2873
    %v3030 = vpack.c.b16 %v2876, %v2874
    %v3031 = vpack.c.b16 %v2879, %v2877
    %v3032 = vpack.c.b16 %v2880, %v2878
    %v3033 = vpack.c.b16 %v2883, %v2881
    %v3034 = vpack.c.b16 %v2884, %v2882
    %v3035 = vpack.c.b16 %v2887, %v2885
    %v3036 = vpack.c.b16 %v2888, %v2886
    %v3037 = vpack.c.b16 %v2891, %v2889
    %v3038 = vpack.c.b16 %v2892, %v2890
    %v3039 = vpack.c.b16 %v2895, %v2893
    %v3040 = vpack.c.b16 %v2896, %v2894
    %v3041 = vpack.c.b16 %v2899, %v2897
    %v3042 = vpack.c.b16 %v2900, %v2898
    %v3043 = vpack.c.b16 %v2903, %v2901
    %v3044 = vpack.c.b16 %v2904, %v2902
    %v3045 = vpack.c.b16 %v2907, %v2905
    %v3046 = vpack.c.b16 %v2908, %v2906
    %v3047 = vpack.c.b16 %v2911, %v2909
    %v3048 = vpack.c.b16 %v2912, %v2910
    %v3049 = vpack.c.b16 %v2915, %v2913
    %v3050 = vpack.c.b16 %v2916, %v2914
    %v3051 = vpack.c.b16 %v2919, %v2917
    %v3052 = vpack.c.b16 %v2920, %v2918
    %v3053 = vpack.c.b16 %v2923, %v2921
    %v3054 = vpack.c.b16 %v2924, %v2922
    %v3055 = vpack.c.b16 %v2927, %v2925
    %v3056 = vpack.c.b16 %v2928, %v2926
    %v3057 = vpack.c.b16 %v2931, %v2929
    %v3058 = vpack.c.b16 %v2932, %v2930
    %v3059 = vpack.c.b16 %v2935, %v2933
    %v3060 = vpack.c.b16 %v2936, %v2934
    %v3061 = vpack.c.b16 %v2939, %v2937
    %v3062 = vpack.c.b16 %v2940, %v2938
    %v3063 = vpack.c.b16 %v2943, %v2941
    %v3064 = vpack.c.b16 %v2944, %v2942
    %v3065 = vpack.c.b16 %v2947, %v2945
    %v3066 = vpack.c.b16 %v2948, %v2946
    %v3067 = vpack.c.b16 %v2951, %v2949
    %v3068 = vpack.c.b16 %v2952, %v2950
    %v3069 = vpack.c.b16 %v2955, %v2953
    %v3070 = vpack.c.b16 %v2956, %v2954
    %v3071 = vpack.c.b16 %v2959, %v2957
    %v3072 = vpack.c.b16 %v2960, %v2958
    %v3073 = vpack.c.b16 %v2963, %v2961
    %v3074 = vpack.c.b16 %v2964, %v2962
    %v3075 = vpack.c.b16 %v2967, %v2965
    %v3076 = vpack.c.b16 %v2968, %v2966
    %v3077 = vpack.c.b16 %v2971, %v2969
    %v3078 = vpack.c.b16 %v2972, %v2970
    %v3079 = vpack.c.b16 %v2975, %v2973
    %v3080 = vpack.c.b16 %v2976, %v2974
    %v3081 = vpack.c.b16 %v2979, %v2977
    %v3082 = vpack.c.b16 %v2980, %v2978
    %v3083 = vpack.c.b16 %v2983, %v2981
    %v3084 = vpack.c.b16 %v2984, %v2982
    %v3085 = vpack.c.b16 %v2987, %v2985
    %v3086 = vpack.c.b16 %v2988, %v2986
    %v3087 = vpack.c.b16 %v2991, %v2989
    %v3088 = vpack.c.b16 %v2992, %v2990
    %3185 = vmatprep.subr.bf16.mxu0 %v2994
    %3186 = vmatpush1.bf16.msra.mxu0 %v2993
    %3187 = vmatprep.subr.bf16.mxu0 %v2996
    %3188 = vmatpush1.bf16.msra.mxu0 %v2995
    %3189 = vmatprep.subr.bf16.mxu0 %v2998
    %3190 = vmatpush1.bf16.msra.mxu0 %v2997
    %3191 = vmatprep.subr.bf16.mxu0 %v3000
    %3192 = vmatpush1.bf16.msra.mxu0 %v2999
    %3193 = vmatprep.subr.bf16.mxu0 %v3002
    %3194 = vmatpush1.bf16.msra.mxu0 %v3001
    %3195 = vmatprep.subr.bf16.mxu0 %v3004
    %3196 = vmatpush1.bf16.msra.mxu0 %v3003
    %3197 = vmatprep.subr.bf16.mxu0 %v3006
    %3198 = vmatpush1.bf16.msra.mxu0 %v3005
    %3199 = vmatprep.subr.bf16.mxu0 %v3008
    %3200 = vmatpush1.bf16.msra.mxu0 %v3007
    %3201 = vmatprep.subr.bf16.mxu0 %v3010
    %3202 = vmatpush1.bf16.msra.mxu0 %v3009
    %3203 = vmatprep.subr.bf16.mxu0 %v3012
    %3204 = vmatpush1.bf16.msra.mxu0 %v3011
    %3205 = vmatprep.subr.bf16.mxu0 %v3014
    %3206 = vmatpush1.bf16.msra.mxu0 %v3013
    %3207 = vmatprep.subr.bf16.mxu0 %v3016
    %3208 = vmatpush1.bf16.msra.mxu0 %v3015
    %3209 = vmatprep.subr.bf16.mxu0 %v3018
    %3210 = vmatpush1.bf16.msra.mxu0 %v3017
    %3211 = vmatprep.subr.bf16.mxu0 %v3020
    %3212 = vmatpush1.bf16.msra.mxu0 %v3019
    %3213 = vmatprep.subr.bf16.mxu0 %v3022
    %3214 = vmatpush1.bf16.msra.mxu0 %v3021
    %3215 = vmatprep.subr.bf16.mxu0 %v3024
    %3216 = vmatpush1.bf16.msra.mxu0 %v3023
    %3217 = vmatprep.mubr.bf16.mxu0 %v2444
    %3218 = vmatmul.mubr.bf16.gmra.mrb[0].mxu0 %v2427
    %v3219 = vpop.f32.mrb[0].mxu0
    %v3220 = vadd.f32 0.0, %v3219
    %v3221 = vpop.f32.mrb[0].mxu0
    %v3222 = vadd.f32 0.0, %v3221
    %v3223 = vpop.f32.mrb[0].mxu0
    %v3224 = vadd.f32 0.0, %v3223
    %v3225 = vpop.f32.mrb[0].mxu0
    %v3226 = vadd.f32 0.0, %v3225
    %3227 = vmatprep.mubr.bf16.mxu0 %v2530
    %3228 = vmatmul.mubr.bf16.gmra.mrb[0].mxu0 %v2521
    %v3229 = vpop.f32.mrb[0].mxu0
    %v3230 = vadd.f32 0.0, %v3229
    %v3231 = vpop.f32.mrb[0].mxu0
    %v3232 = vadd.f32 0.0, %v3231
    %v3233 = vpop.f32.mrb[0].mxu0
    %v3234 = vadd.f32 0.0, %v3233
    %v3235 = vpop.f32.mrb[0].mxu0
    %v3236 = vadd.f32 0.0, %v3235
    %3237 = vmatprep.mubr.bf16.mxu0 %v2584
    %3238 = vmatmul.mubr.bf16.gmra.mrb[0].mxu0 %v2575
    %v3239 = vpop.f32.mrb[0].mxu0
    %v3240 = vpop.f32.mrb[0].mxu0
    %v3241 = vpop.f32.mrb[0].mxu0
    %v3242 = vadd.f32 0.0, %v3241
    %v3243 = vpop.f32.mrb[0].mxu0
    %v3244 = vadd.f32 0.0, %v3243
    %3245 = vmatprep.mubr.bf16.mxu0 %v2638
    %3246 = vmatmul.mubr.bf16.gmra.mrb[0].mxu0 %v2629
    %v3247 = vpop.f32.mrb[0].mxu0
    %v3248 = vadd.f32 0.0, %v3247
    %v3249 = vpop.f32.mrb[0].mxu0
    %v3250 = vadd.f32 0.0, %v3249
    %v3251 = vpop.f32.mrb[0].mxu0
    %v3252 = vadd.f32 0.0, %v3251
    %v3253 = vpop.f32.mrb[0].mxu0
    %v3254 = vadd.f32 0.0, %v3253
    %3255 = vmatprep.mubr.bf16.mxu0 %v2637
    %3256 = vmatmul.mubr.bf16.gmra.mrb[0].mxu0 %v2628
    %v3257 = vpop.f32.mrb[0].mxu0
    %v3258 = vadd.f32 0.0, %v3257
    %v3259 = vpop.f32.mrb[0].mxu0
    %v3260 = vadd.f32 0.0, %v3259
    %v3261 = vpop.f32.mrb[0].mxu0
    %v3262 = vpop.f32.mrb[0].mxu0
    %3263 = vdwg.mxu0
    %3264 = vmatprep.subr.bf16.mxu0 %v3026
    %3265 = vmatpush1.bf16.msra.mxu0 %v3025
    %3266 = vmatprep.subr.bf16.mxu0 %v3028
    %3267 = vmatpush1.bf16.msra.mxu0 %v3027
    %3268 = vmatprep.subr.bf16.mxu0 %v3030
    %3269 = vmatpush1.bf16.msra.mxu0 %v3029
    %3270 = vmatprep.subr.bf16.mxu0 %v3032
    %3271 = vmatpush1.bf16.msra.mxu0 %v3031
    %3272 = vmatprep.subr.bf16.mxu0 %v3034
    %3273 = vmatpush1.bf16.msra.mxu0 %v3033
    %3274 = vmatprep.subr.bf16.mxu0 %v3036
    %3275 = vmatpush1.bf16.msra.mxu0 %v3035
    %3276 = vmatprep.subr.bf16.mxu0 %v3038
    %3277 = vmatpush1.bf16.msra.mxu0 %v3037
    %3278 = vmatprep.subr.bf16.mxu0 %v3040
    %3279 = vmatpush1.bf16.msra.mxu0 %v3039
    %3280 = vmatprep.subr.bf16.mxu0 %v3042
    %3281 = vmatpush1.bf16.msra.mxu0 %v3041
    %3282 = vmatprep.subr.bf16.mxu0 %v3044
    %3283 = vmatpush1.bf16.msra.mxu0 %v3043
    %3284 = vmatprep.subr.bf16.mxu0 %v3046
    %3285 = vmatpush1.bf16.msra.mxu0 %v3045
    %3286 = vmatprep.subr.bf16.mxu0 %v3048
    %3287 = vmatpush1.bf16.msra.mxu0 %v3047
    %3288 = vmatprep.subr.bf16.mxu0 %v3050
    %3289 = vmatpush1.bf16.msra.mxu0 %v3049
    %3290 = vmatprep.subr.bf16.mxu0 %v3052
    %3291 = vmatpush1.bf16.msra.mxu0 %v3051
    %3292 = vmatprep.subr.bf16.mxu0 %v3054
    %3293 = vmatpush1.bf16.msra.mxu0 %v3053
    %3294 = vmatprep.subr.bf16.mxu0 %v3056
    %3295 = vmatpush1.bf16.msra.mxu0 %v3055
    %3296 = vmatprep.mubr.bf16.mxu0 %v2478
    %3297 = vmatmul.mubr.bf16.gmra.mrb[0].mxu0 %v2461
    %v3298 = vpop.f32.mrb[0].mxu0
    %v3299 = vadd.f32 %v3220, %v3298
    %v3300 = vpop.f32.mrb[0].mxu0
    %v3301 = vadd.f32 %v3222, %v3300
    %v3302 = vpop.f32.mrb[0].mxu0
    %v3303 = vadd.f32 %v3224, %v3302
    %v3304 = vpop.f32.mrb[0].mxu0
    %v3305 = vadd.f32 %v3226, %v3304
    %3306 = vmatprep.mubr.bf16.mxu0 %v2548
    %3307 = vmatmul.mubr.bf16.gmra.mrb[0].mxu0 %v2539
    %v3308 = vpop.f32.mrb[0].mxu0
    %v3309 = vadd.f32 %v3230, %v3308
    %v3310 = vpop.f32.mrb[0].mxu0
    %v3311 = vadd.f32 %v3232, %v3310
    %v3312 = vpop.f32.mrb[0].mxu0
    %v3313 = vadd.f32 %v3234, %v3312
    %v3314 = vpop.f32.mrb[0].mxu0
    %v3315 = vadd.f32 %v3236, %v3314
    %3316 = vmatprep.mubr.bf16.mxu0 %v2602
    %3317 = vmatmul.mubr.bf16.gmra.mrb[0].mxu0 %v2593
    %v3318 = vpop.f32.mrb[0].mxu0
    %v3319 = vpop.f32.mrb[0].mxu0
    %v3320 = vpop.f32.mrb[0].mxu0
    %v3321 = vadd.f32 %v3242, %v3320
    %v3322 = vpop.f32.mrb[0].mxu0
    %v3323 = vadd.f32 %v3244, %v3322
    %3324 = vmatprep.mubr.bf16.mxu0 %v2656
    %3325 = vmatmul.mubr.bf16.gmra.mrb[0].mxu0 %v2647
    %v3326 = vpop.f32.mrb[0].mxu0
    %v3327 = vadd.f32 %v3248, %v3326
    %v3328 = vpop.f32.mrb[0].mxu0
    %v3329 = vadd.f32 %v3250, %v3328
    %v3330 = vpop.f32.mrb[0].mxu0
    %v3331 = vadd.f32 %v3252, %v3330
    %v3332 = vpop.f32.mrb[0].mxu0
    %v3333 = vadd.f32 %v3254, %v3332
    %3334 = vmatprep.mubr.bf16.mxu0 %v2655
    %3335 = vmatmul.mubr.bf16.gmra.mrb[0].mxu0 %v2646
    %v3336 = vpop.f32.mrb[0].mxu0
    %v3337 = vadd.f32 %v3258, %v3336
    %v3338 = vpop.f32.mrb[0].mxu0
    %v3339 = vadd.f32 %v3260, %v3338
    %v3340 = vpop.f32.mrb[0].mxu0
    %v3341 = vpop.f32.mrb[0].mxu0
    %3342 = vdwg.mxu0
    %3343 = vmatprep.subr.bf16.mxu0 %v3058
    %3344 = vmatpush1.bf16.msra.mxu0 %v3057
    %3345 = vmatprep.subr.bf16.mxu0 %v3060
    %3346 = vmatpush1.bf16.msra.mxu0 %v3059
    %3347 = vmatprep.subr.bf16.mxu0 %v3062
    %3348 = vmatpush1.bf16.msra.mxu0 %v3061
    %3349 = vmatprep.subr.bf16.mxu0 %v3064
    %3350 = vmatpush1.bf16.msra.mxu0 %v3063
    %3351 = vmatprep.subr.bf16.mxu0 %v3066
    %3352 = vmatpush1.bf16.msra.mxu0 %v3065
    %3353 = vmatprep.subr.bf16.mxu0 %v3068
    %3354 = vmatpush1.bf16.msra.mxu0 %v3067
    %3355 = vmatprep.subr.bf16.mxu0 %v3070
    %3356 = vmatpush1.bf16.msra.mxu0 %v3069
    %3357 = vmatprep.subr.bf16.mxu0 %v3072
    %3358 = vmatpush1.bf16.msra.mxu0 %v3071
    %3359 = vmatprep.subr.bf16.mxu0 %v3074
    %3360 = vmatpush1.bf16.msra.mxu0 %v3073
    %3361 = vmatprep.subr.bf16.mxu0 %v3076
    %3362 = vmatpush1.bf16.msra.mxu0 %v3075
    %3363 = vmatprep.subr.bf16.mxu0 %v3078
    %3364 = vmatpush1.bf16.msra.mxu0 %v3077
    %3365 = vmatprep.subr.bf16.mxu0 %v3080
    %3366 = vmatpush1.bf16.msra.mxu0 %v3079
    %3367 = vmatprep.subr.bf16.mxu0 %v3082
    %3368 = vmatpush1.bf16.msra.mxu0 %v3081
    %3369 = vmatprep.subr.bf16.mxu0 %v3084
    %3370 = vmatpush1.bf16.msra.mxu0 %v3083
    %3371 = vmatprep.subr.bf16.mxu0 %v3086
    %3372 = vmatpush1.bf16.msra.mxu0 %v3085
    %3373 = vmatprep.subr.bf16.mxu0 %v3088
    %3374 = vmatpush1.bf16.msra.mxu0 %v3087
    %3375 = vmatprep.mubr.bf16.mxu0 %v2512
    %3376 = vmatmul.mubr.bf16.gmra.mrb[0].mxu0 %v2495
    %v3377 = vpop.f32.mrb[0].mxu0
    %v3378 = vadd.f32 %v3299, %v3377
    %v3379 = vpop.f32.mrb[0].mxu0
    %v3380 = vadd.f32 %v3301, %v3379
    %v3381 = vpop.f32.mrb[0].mxu0
    %v3382 = vadd.f32 %v3303, %v3381
    %v3383 = vpop.f32.mrb[0].mxu0
    %v3384 = vadd.f32 %v3305, %v3383
    %3385 = vmatprep.mubr.bf16.mxu0 %v2566
    %3386 = vmatmul.mubr.bf16.gmra.mrb[0].mxu0 %v2557
    %v3387 = vpop.f32.mrb[0].mxu0
    %v3388 = vadd.f32 %v3309, %v3387
    %v3389 = vpop.f32.mrb[0].mxu0
    %v3390 = vadd.f32 %v3311, %v3389
    %v3391 = vpop.f32.mrb[0].mxu0
    %v3392 = vadd.f32 %v3313, %v3391
    %v3393 = vpop.f32.mrb[0].mxu0
    %v3394 = vadd.f32 %v3315, %v3393
    %3395 = vmatprep.mubr.bf16.mxu0 %v2620
    %3396 = vmatmul.mubr.bf16.gmra.mrb[0].mxu0 %v2611
    %v3397 = vpop.f32.mrb[0].mxu0
    %v3398 = vpop.f32.mrb[0].mxu0
    %v3399 = vpop.f32.mrb[0].mxu0
    %v3400 = vadd.f32 %v3321, %v3399
    %v3401 = vpop.f32.mrb[0].mxu0
    %v3402 = vadd.f32 %v3323, %v3401
    %3403 = vmatprep.mubr.bf16.mxu0 %v2674
    %3404 = vmatmul.mubr.bf16.gmra.mrb[0].mxu0 %v2665
    %v3405 = vpop.f32.mrb[0].mxu0
    %v3406 = vadd.f32 %v3327, %v3405
    %v3407 = vpop.f32.mrb[0].mxu0
    %v3408 = vadd.f32 %v3329, %v3407
    %v3409 = vpop.f32.mrb[0].mxu0
    %v3410 = vadd.f32 %v3331, %v3409
    %v3411 = vpop.f32.mrb[0].mxu0
    %v3412 = vadd.f32 %v3333, %v3411
    %3413 = vmatprep.mubr.bf16.mxu0 %v2673
    %3414 = vmatmul.mubr.bf16.gmra.mrb[0].mxu0 %v2664
    %v3415 = vpop.f32.mrb[0].mxu0
    %v3416 = vadd.f32 %v3337, %v3415
    %v3417 = vpop.f32.mrb[0].mxu0
    %v3418 = vadd.f32 %v3339, %v3417
    %v3419 = vpop.f32.mrb[0].mxu0
    %v3420 = vpop.f32.mrb[0].mxu0
    %3421 = vdwg.mxu0
    %v3422 = vld [vmem:[%s7] sm:$0x3]
    %v3424 = vlaneseq
    %v3425 = vshrl.u32 %v3424, 7
    %v3426 = vsub.s32 0, %v3425
    %v3427 = vrot.slane %v3422, %v3426
    %v3428 = vlaneseq
    %v3429 = vshrl.u32 %v3428, 7
    %v3430 = vsub.s32 1, %v3429
    %v3431 = vrot.slane %v3422, %v3430
    %v3434 = vmul.f32 %v2013, %v3427
    %v3435 = vmul.f32 %v2015, %v3431
    %v3436 = vmul.f32 %v2017, %v3427
    %v3437 = vmul.f32 %v2019, %v3431
    %v3438 = vmul.f32 %v2023, %v3427
    %v3439 = vmul.f32 %v2025, %v3431
    %v3440 = vmul.f32 %v2027, %v3427
    %v3441 = vmul.f32 %v2029, %v3431
    %v3442 = vmul.f32 %v2033, %v3427
    %v3443 = vmul.f32 %v2035, %v3431
    %v3444 = vmul.f32 %v2037, %v3427
    %v3445 = vmul.f32 %v2039, %v3431
    %v3446 = vmul.f32 %v2043, %v3427
    %v3447 = vmul.f32 %v2045, %v3431
    %v3448 = vmul.f32 %v2047, %v3427
    %v3449 = vmul.f32 %v2049, %v3431
    %v3450 = vmul.f32 %v2053, %v3427
    %v3451 = vmul.f32 %v2055, %v3431
    %v3452 = vld [vmem:[%s8] sm:$0x3]
    %v3454 = vlaneseq
    %v3455 = vshrl.u32 %v3454, 7
    %v3456 = vsub.s32 0, %v3455
    %v3457 = vrot.slane %v3452, %v3456
    %v3458 = vlaneseq
    %v3459 = vshrl.u32 %v3458, 7
    %v3460 = vsub.s32 1, %v3459
    %v3461 = vrot.slane %v3452, %v3460
    %v3464 = vadd.f32 %v3434, %v3457
    %v3465 = vadd.f32 %v3435, %v3461
    %v3466 = vadd.f32 %v3436, %v3457
    %v3467 = vadd.f32 %v3437, %v3461
    %v3468 = vadd.f32 %v3438, %v3457
    %v3469 = vadd.f32 %v3439, %v3461
    %v3470 = vadd.f32 %v3440, %v3457
    %v3471 = vadd.f32 %v3441, %v3461
    %v3472 = vadd.f32 %v3442, %v3457
    %v3473 = vadd.f32 %v3443, %v3461
    %v3474 = vadd.f32 %v3444, %v3457
    %v3475 = vadd.f32 %v3445, %v3461
    %v3476 = vadd.f32 %v3446, %v3457
    %v3477 = vadd.f32 %v3447, %v3461
    %v3478 = vadd.f32 %v3448, %v3457
    %v3479 = vadd.f32 %v3449, %v3461
    %v3480 = vadd.f32 %v3450, %v3457
    %v3481 = vadd.f32 %v3451, %v3461
    %v3482 = vmax.f32 %v3464, 0.0
    %v3483 = vmax.f32 %v3465, 0.0
    %v3484 = vmax.f32 %v3466, 0.0
    %v3485 = vmax.f32 %v3467, 0.0
    %v3486 = vmax.f32 %v3468, 0.0
    %v3487 = vmax.f32 %v3469, 0.0
    %v3488 = vmax.f32 %v3470, 0.0
    %v3489 = vmax.f32 %v3471, 0.0
    %v3490 = vmax.f32 %v3472, 0.0
    %v3491 = vmax.f32 %v3473, 0.0
    %v3492 = vmax.f32 %v3474, 0.0
    %v3493 = vmax.f32 %v3475, 0.0
    %v3494 = vmax.f32 %v3476, 0.0
    %v3495 = vmax.f32 %v3477, 0.0
    %v3496 = vmax.f32 %v3478, 0.0
    %v3497 = vmax.f32 %v3479, 0.0
    %v3498 = vmax.f32 %v3480, 0.0
    %v3499 = vmax.f32 %v3481, 0.0
    %v3500 = vmul.f32 %v3482, %v300
    %v3501 = vmul.f32 %v3483, %v300
    %v3502 = vmul.f32 %v3484, %v301
    %v3503 = vmul.f32 %v3485, %v301
    %v3504 = vmul.f32 %v3486, %v302
    %v3505 = vmul.f32 %v3487, %v302
    %v3506 = vmul.f32 %v3488, %v303
    %v3507 = vmul.f32 %v3489, %v303
    %v3508 = vmul.f32 %v3490, %v304
    %v3509 = vmul.f32 %v3491, %v304
    %v3510 = vmul.f32 %v3492, %v305
    %v3511 = vmul.f32 %v3493, %v305
    %v3512 = vmul.f32 %v3494, %v306
    %v3513 = vmul.f32 %v3495, %v306
    %v3514 = vmul.f32 %v3496, %v307
    %v3515 = vmul.f32 %v3497, %v307
    %v3516 = vmul.f32 %v3498, %v308
    %v3517 = vmul.f32 %v3499, %v308
    %3518 = vst [vmem:[#allocation2 + $0x10] sm:$0xff] %v3500
    %3519 = vst [vmem:[#allocation2 + $0x18] sm:$0xff] %v3501
    %3520 = vst [vmem:[#allocation2 + $0x20] sm:$0xff] %v3502
    %3521 = vst [vmem:[#allocation2 + $0x28] sm:$0xff] %v3503
    %3522 = vst [vmem:[#allocation2 + $0x30] sm:$0xff] %v3504
    %3523 = vst [vmem:[#allocation2 + $0x38] sm:$0xff] %v3505
    %3524 = vst [vmem:[#allocation2 + $0x40] sm:$0xff] %v3506
    %3525 = vst [vmem:[#allocation2 + $0x48] sm:$0xff] %v3507
    %3526 = vst [vmem:[#allocation2 + $0x50] sm:$0xff] %v3508
    %3527 = vst [vmem:[#allocation2 + $0x58] sm:$0xff] %v3509
    %3528 = vst [vmem:[#allocation2 + $0x60] sm:$0xff] %v3510
    %3529 = vst [vmem:[#allocation2 + $0x68] sm:$0xff] %v3511
    %3530 = vst [vmem:[#allocation2 + $0x70] sm:$0xff] %v3512
    %3531 = vst [vmem:[#allocation2 + $0x78] sm:$0xff] %v3513
    %3532 = vst [vmem:[#allocation2 + $0x80] sm:$0xff] %v3514
    %3533 = vst [vmem:[#allocation2 + $0x88] sm:$0xff] %v3515
    %3534 = vst [vmem:[#allocation2 + $0x90] sm:$0xff] %v3516
    %3535 = vst [vmem:[#allocation2 + $0x98] sm:$0xff] %v3517
    %v3536 = vld [vmem:[#allocation2] sm:$0xc0]
    %v3537 = vld [vmem:[#allocation2 + $0x8] sm:$0xc0]
    %v3538 = vld [vmem:[#allocation2 + $0x10] sm:$0xff]
    %v3539 = vld [vmem:[#allocation2 + $0x18] sm:$0xff]
    %v3540 = vld [vmem:[#allocation2 + $0x20] sm:$0xff]
    %v3541 = vld [vmem:[#allocation2 + $0x28] sm:$0xff]
    %v3542 = vld [vmem:[#allocation2 + $0x30] sm:$0xff]
    %v3543 = vld [vmem:[#allocation2 + $0x38] sm:$0xff]
    %v3544 = vld [vmem:[#allocation2 + $0x40] sm:$0xff]
    %v3545 = vld [vmem:[#allocation2 + $0x48] sm:$0xff]
    %v3546 = vld [vmem:[#allocation2 + $0x50] sm:$0xff]
    %v3547 = vld [vmem:[#allocation2 + $0x58] sm:$0xff]
    %v3548 = vld [vmem:[#allocation2 + $0x60] sm:$0xff]
    %v3549 = vld [vmem:[#allocation2 + $0x68] sm:$0xff]
    %v3550 = vld [vmem:[#allocation2 + $0x70] sm:$0xff]
    %v3551 = vld [vmem:[#allocation2 + $0x78] sm:$0xff]
    %v3552 = vld [vmem:[#allocation2 + $0x80] sm:$0xff]
    %v3553 = vld [vmem:[#allocation2 + $0x88] sm:$0xff]
    %v3554 = vld [vmem:[#allocation2 + $0x90] sm:$0x3f]
    %v3555 = vld [vmem:[#allocation2 + $0x98] sm:$0x3f]
    %v3556 = vld [vmem:[#allocation2 + $0x10] sm:$0xfc]
    %v3557 = vld [vmem:[#allocation2 + $0x18] sm:$0xfc]
    %v3558 = vld [vmem:[#allocation2 + $0x20] sm:$0xff]
    %v3559 = vld [vmem:[#allocation2 + $0x28] sm:$0xff]
    %v3560 = vld [vmem:[#allocation2 + $0x30] sm:$0xff]
    %v3561 = vld [vmem:[#allocation2 + $0x38] sm:$0xff]
    %v3562 = vld [vmem:[#allocation2 + $0x40] sm:$0xff]
    %v3563 = vld [vmem:[#allocation2 + $0x48] sm:$0xff]
    %v3564 = vld [vmem:[#allocation2 + $0x50] sm:$0xff]
    %v3565 = vld [vmem:[#allocation2 + $0x58] sm:$0xff]
    %v3566 = vld [vmem:[#allocation2 + $0x60] sm:$0xff]
    %v3567 = vld [vmem:[#allocation2 + $0x68] sm:$0xff]
    %v3568 = vld [vmem:[#allocation2 + $0x70] sm:$0xff]
    %v3569 = vld [vmem:[#allocation2 + $0x78] sm:$0xff]
    %v3570 = vld [vmem:[#allocation2 + $0x80] sm:$0xff]
    %v3571 = vld [vmem:[#allocation2 + $0x88] sm:$0xff]
    %v3572 = vld [vmem:[#allocation2 + $0x90] sm:$0xff]
    %v3573 = vld [vmem:[#allocation2 + $0x98] sm:$0xff]
    %v3574 = vld [vmem:[#allocation2 + $0xa0] sm:$0x3]
    %v3575 = vld [vmem:[#allocation2 + $0xa8] sm:$0x3]
    %v3594 = vrot.slane %v3500, 2
    %v3595 = vrot.slane %v3501, 2
    %v3596 = vrot.slane %v3502, 2
    %v3597 = vsel %vm844, %v3594, %v3596
    %v3598 = vrot.slane %v3503, 2
    %v3599 = vsel %vm844, %v3595, %v3598
    %v3600 = vrot.slane %v3504, 2
    %v3601 = vsel %vm844, %v3596, %v3600
    %v3602 = vrot.slane %v3505, 2
    %v3603 = vsel %vm844, %v3598, %v3602
    %v3604 = vrot.slane %v3506, 2
    %v3605 = vsel %vm844, %v3600, %v3604
    %v3606 = vrot.slane %v3507, 2
    %v3607 = vsel %vm844, %v3602, %v3606
    %v3608 = vrot.slane %v3508, 2
    %v3609 = vsel %vm844, %v3604, %v3608
    %v3610 = vrot.slane %v3509, 2
    %v3611 = vsel %vm844, %v3606, %v3610
    %v3612 = vrot.slane %v3510, 2
    %v3613 = vsel %vm844, %v3608, %v3612
    %v3614 = vrot.slane %v3511, 2
    %v3615 = vsel %vm844, %v3610, %v3614
    %v3616 = vrot.slane %v3512, 2
    %v3617 = vsel %vm844, %v3612, %v3616
    %v3618 = vrot.slane %v3513, 2
    %v3619 = vsel %vm844, %v3614, %v3618
    %v3620 = vrot.slane %v3514, 2
    %v3621 = vsel %vm844, %v3616, %v3620
    %v3622 = vrot.slane %v3515, 2
    %v3623 = vsel %vm844, %v3618, %v3622
    %v3624 = vrot.slane %v3516, 2
    %v3625 = vsel %vm844, %v3620, %v3624
    %v3626 = vrot.slane %v3517, 2
    %v3627 = vsel %vm844, %v3622, %v3626
    %vm3668 = vcmask 1043456
    %v3669 = vrot.slane %v3556, 4
    %v3670 = vrot.slane %v3557, 4
    %v3671 = vrot.slane %v3558, 4
    %v3672 = vsel %vm3668, %v3669, %v3671
    %v3673 = vrot.slane %v3559, 4
    %v3674 = vsel %vm3668, %v3670, %v3673
    %v3675 = vrot.slane %v3560, 4
    %v3676 = vsel %vm3668, %v3671, %v3675
    %v3677 = vrot.slane %v3561, 4
    %v3678 = vsel %vm3668, %v3673, %v3677
    %v3679 = vrot.slane %v3562, 4
    %v3680 = vsel %vm3668, %v3675, %v3679
    %v3681 = vrot.slane %v3563, 4
    %v3682 = vsel %vm3668, %v3677, %v3681
    %v3683 = vrot.slane %v3564, 4
    %v3684 = vsel %vm3668, %v3679, %v3683
    %v3685 = vrot.slane %v3565, 4
    %v3686 = vsel %vm3668, %v3681, %v3685
    %v3687 = vrot.slane %v3566, 4
    %v3688 = vsel %vm3668, %v3683, %v3687
    %v3689 = vrot.slane %v3567, 4
    %v3690 = vsel %vm3668, %v3685, %v3689
    %v3691 = vrot.slane %v3568, 4
    %v3692 = vsel %vm3668, %v3687, %v3691
    %v3693 = vrot.slane %v3569, 4
    %v3694 = vsel %vm3668, %v3689, %v3693
    %v3695 = vrot.slane %v3570, 4
    %v3696 = vsel %vm3668, %v3691, %v3695
    %v3697 = vrot.slane %v3571, 4
    %v3698 = vsel %vm3668, %v3693, %v3697
    %v3699 = vrot.slane %v3572, 4
    %v3700 = vsel %vm3668, %v3695, %v3699
    %v3701 = vrot.slane %v3573, 4
    %v3702 = vsel %vm3668, %v3697, %v3701
    %v3703 = vrot.slane %v3574, 4
    %v3704 = vsel %vm3668, %v3699, %v3703
    %v3705 = vrot.slane %v3575, 4
    %v3706 = vsel %vm3668, %v3701, %v3705
    %v3727 = vpack.c.bf16 %v3538, %v3536
    %v3728 = vpack.c.bf16 %v3539, %v3537
    %v3729 = vpack.c.bf16 %v3597, %v3594
    %v3730 = vpack.c.bf16 %v3599, %v3595
    %v3731 = vpack.c.bf16 %v3672, %v3669
    %v3732 = vpack.c.bf16 %v3674, %v3670
    %v3733 = vpack.c.bf16 %v3542, %v3540
    %v3734 = vpack.c.bf16 %v3543, %v3541
    %v3735 = vpack.c.bf16 %v3605, %v3601
    %v3736 = vpack.c.bf16 %v3607, %v3603
    %v3737 = vpack.c.bf16 %v3680, %v3676
    %v3738 = vpack.c.bf16 %v3682, %v3678
    %v3739 = vpack.c.bf16 %v3546, %v3544
    %v3740 = vpack.c.bf16 %v3547, %v3545
    %v3741 = vpack.c.bf16 %v3613, %v3609
    %v3742 = vpack.c.bf16 %v3615, %v3611
    %v3743 = vpack.c.bf16 %v3688, %v3684
    %v3744 = vpack.c.bf16 %v3690, %v3686
    %v3745 = vpack.c.bf16 %v3550, %v3548
    %v3746 = vpack.c.bf16 %v3551, %v3549
    %v3747 = vpack.c.bf16 %v3621, %v3617
    %v3748 = vpack.c.bf16 %v3623, %v3619
    %v3749 = vpack.c.bf16 %v3696, %v3692
    %v3750 = vpack.c.bf16 %v3698, %v3694
    %v3751 = vpack.c.bf16 %v3554, %v3552
    %v3752 = vpack.c.bf16 %v3555, %v3553
    %v3753 = vpack.c.bf16 %v3624, %v3625
    %v3754 = vpack.c.bf16 %v3626, %v3627
    %v3755 = vpack.c.bf16 %v3704, %v3700
    %v3756 = vpack.c.bf16 %v3706, %v3702
    %v3757 = vld [vmem:[#allocation9] sm:$0xff]
    %v3758 = vld [vmem:[#allocation9 + $0x8] sm:$0xff]
    %v3759 = vld [vmem:[#allocation9 + $0x10] sm:$0xff]
    %v3760 = vld [vmem:[#allocation9 + $0x18] sm:$0xff]
    %v3761 = vld [vmem:[#allocation9 + $0x20] sm:$0xff]
    %v3762 = vld [vmem:[#allocation9 + $0x28] sm:$0xff]
    %v3763 = vld [vmem:[#allocation9 + $0x30] sm:$0xff]
    %v3764 = vld [vmem:[#allocation9 + $0x38] sm:$0xff]
    %v3765 = vld [vmem:[#allocation9 + $0x40] sm:$0xff]
    %v3766 = vld [vmem:[#allocation9 + $0x48] sm:$0xff]
    %v3767 = vld [vmem:[#allocation9 + $0x50] sm:$0xff]
    %v3768 = vld [vmem:[#allocation9 + $0x58] sm:$0xff]
    %v3769 = vld [vmem:[#allocation9 + $0x60] sm:$0xff]
    %v3770 = vld [vmem:[#allocation9 + $0x68] sm:$0xff]
    %v3771 = vld [vmem:[#allocation9 + $0x70] sm:$0xff]
    %v3772 = vld [vmem:[#allocation9 + $0x78] sm:$0xff]
    %v3773 = vld [vmem:[#allocation9 + $0x80] sm:$0xff]
    %v3774 = vld [vmem:[#allocation9 + $0x88] sm:$0xff]
    %v3775 = vld [vmem:[#allocation9 + $0x90] sm:$0xff]
    %v3776 = vld [vmem:[#allocation9 + $0x98] sm:$0xff]
    %v3777 = vld [vmem:[#allocation9 + $0xa0] sm:$0xff]
    %v3778 = vld [vmem:[#allocation9 + $0xa8] sm:$0xff]
    %v3779 = vld [vmem:[#allocation9 + $0xb0] sm:$0xff]
    %v3780 = vld [vmem:[#allocation9 + $0xb8] sm:$0xff]
    %v3781 = vld [vmem:[#allocation9 + $0xc0] sm:$0xff]
    %v3782 = vld [vmem:[#allocation9 + $0xc8] sm:$0xff]
    %v3783 = vld [vmem:[#allocation9 + $0xd0] sm:$0xff]
    %v3784 = vld [vmem:[#allocation9 + $0xd8] sm:$0xff]
    %v3785 = vld [vmem:[#allocation9 + $0xe0] sm:$0xff]
    %v3786 = vld [vmem:[#allocation9 + $0xe8] sm:$0xff]
    %v3787 = vld [vmem:[#allocation9 + $0xf0] sm:$0xff]
    %v3788 = vld [vmem:[#allocation9 + $0xf8] sm:$0xff]
    %v3789 = vld [vmem:[#allocation9 + $0x100] sm:$0xff]
    %v3790 = vld [vmem:[#allocation9 + $0x108] sm:$0xff]
    %v3791 = vld [vmem:[#allocation9 + $0x110] sm:$0xff]
    %v3792 = vld [vmem:[#allocation9 + $0x118] sm:$0xff]
    %v3793 = vld [vmem:[#allocation9 + $0x120] sm:$0xff]
    %v3794 = vld [vmem:[#allocation9 + $0x128] sm:$0xff]
    %v3795 = vld [vmem:[#allocation9 + $0x130] sm:$0xff]
    %v3796 = vld [vmem:[#allocation9 + $0x138] sm:$0xff]
    %v3797 = vld [vmem:[#allocation9 + $0x140] sm:$0xff]
    %v3798 = vld [vmem:[#allocation9 + $0x148] sm:$0xff]
    %v3799 = vld [vmem:[#allocation9 + $0x150] sm:$0xff]
    %v3800 = vld [vmem:[#allocation9 + $0x158] sm:$0xff]
    %v3801 = vld [vmem:[#allocation9 + $0x160] sm:$0xff]
    %v3802 = vld [vmem:[#allocation9 + $0x168] sm:$0xff]
    %v3803 = vld [vmem:[#allocation9 + $0x170] sm:$0xff]
    %v3804 = vld [vmem:[#allocation9 + $0x178] sm:$0xff]
    %v3805 = vld [vmem:[#allocation9 + $0x180] sm:$0xff]
    %v3806 = vld [vmem:[#allocation9 + $0x188] sm:$0xff]
    %v3807 = vld [vmem:[#allocation9 + $0x190] sm:$0xff]
    %v3808 = vld [vmem:[#allocation9 + $0x198] sm:$0xff]
    %v3809 = vld [vmem:[#allocation9 + $0x1a0] sm:$0xff]
    %v3810 = vld [vmem:[#allocation9 + $0x1a8] sm:$0xff]
    %v3811 = vld [vmem:[#allocation9 + $0x1b0] sm:$0xff]
    %v3812 = vld [vmem:[#allocation9 + $0x1b8] sm:$0xff]
    %v3813 = vld [vmem:[#allocation9 + $0x1c0] sm:$0xff]
    %v3814 = vld [vmem:[#allocation9 + $0x1c8] sm:$0xff]
    %v3815 = vld [vmem:[#allocation9 + $0x1d0] sm:$0xff]
    %v3816 = vld [vmem:[#allocation9 + $0x1d8] sm:$0xff]
    %v3817 = vld [vmem:[#allocation9 + $0x1e0] sm:$0xff]
    %v3818 = vld [vmem:[#allocation9 + $0x1e8] sm:$0xff]
    %v3819 = vld [vmem:[#allocation9 + $0x1f0] sm:$0xff]
    %v3820 = vld [vmem:[#allocation9 + $0x1f8] sm:$0xff]
    %v3821 = vld [vmem:[#allocation9 + $0x200] sm:$0xff]
    %v3822 = vld [vmem:[#allocation9 + $0x208] sm:$0xff]
    %v3823 = vld [vmem:[#allocation9 + $0x210] sm:$0xff]
    %v3824 = vld [vmem:[#allocation9 + $0x218] sm:$0xff]
    %v3825 = vld [vmem:[#allocation9 + $0x220] sm:$0xff]
    %v3826 = vld [vmem:[#allocation9 + $0x228] sm:$0xff]
    %v3827 = vld [vmem:[#allocation9 + $0x230] sm:$0xff]
    %v3828 = vld [vmem:[#allocation9 + $0x238] sm:$0xff]
    %v3829 = vld [vmem:[#allocation9 + $0x240] sm:$0xff]
    %v3830 = vld [vmem:[#allocation9 + $0x248] sm:$0xff]
    %v3831 = vld [vmem:[#allocation9 + $0x250] sm:$0xff]
    %v3832 = vld [vmem:[#allocation9 + $0x258] sm:$0xff]
    %v3833 = vld [vmem:[#allocation9 + $0x260] sm:$0xff]
    %v3834 = vld [vmem:[#allocation9 + $0x268] sm:$0xff]
    %v3835 = vld [vmem:[#allocation9 + $0x270] sm:$0xff]
    %v3836 = vld [vmem:[#allocation9 + $0x278] sm:$0xff]
    %v3837 = vld [vmem:[#allocation9 + $0x280] sm:$0xff]
    %v3838 = vld [vmem:[#allocation9 + $0x288] sm:$0xff]
    %v3839 = vld [vmem:[#allocation9 + $0x290] sm:$0xff]
    %v3840 = vld [vmem:[#allocation9 + $0x298] sm:$0xff]
    %v3841 = vld [vmem:[#allocation9 + $0x2a0] sm:$0xff]
    %v3842 = vld [vmem:[#allocation9 + $0x2a8] sm:$0xff]
    %v3843 = vld [vmem:[#allocation9 + $0x2b0] sm:$0xff]
    %v3844 = vld [vmem:[#allocation9 + $0x2b8] sm:$0xff]
    %v3845 = vld [vmem:[#allocation9 + $0x2c0] sm:$0xff]
    %v3846 = vld [vmem:[#allocation9 + $0x2c8] sm:$0xff]
    %v3847 = vld [vmem:[#allocation9 + $0x2d0] sm:$0xff]
    %v3848 = vld [vmem:[#allocation9 + $0x2d8] sm:$0xff]
    %v3849 = vld [vmem:[#allocation9 + $0x2e0] sm:$0xff]
    %v3850 = vld [vmem:[#allocation9 + $0x2e8] sm:$0xff]
    %v3851 = vld [vmem:[#allocation9 + $0x2f0] sm:$0xff]
    %v3852 = vld [vmem:[#allocation9 + $0x2f8] sm:$0xff]
    %vm3883 = vcmask 1044480
    %v3884 = vrot.slane %v3727, 3
    %v3885 = vrot.slane %v3733, 3
    %v3886 = vsel %vm3883, %v3884, %v3885
    %v3887 = vrot.slane %v3728, 3
    %v3888 = vrot.slane %v3734, 3
    %v3889 = vsel %vm3883, %v3887, %v3888
    %v3890 = vrot.slane %v3729, 3
    %v3891 = vrot.slane %v3735, 3
    %v3892 = vsel %vm3883, %v3890, %v3891
    %v3893 = vrot.slane %v3730, 3
    %v3894 = vrot.slane %v3736, 3
    %v3895 = vsel %vm3883, %v3893, %v3894
    %v3896 = vrot.slane %v3731, 3
    %v3897 = vrot.slane %v3737, 3
    %v3898 = vsel %vm3883, %v3896, %v3897
    %v3899 = vrot.slane %v3732, 3
    %v3900 = vrot.slane %v3738, 3
    %v3901 = vsel %vm3883, %v3899, %v3900
    %v3902 = vrot.slane %v3739, 3
    %v3903 = vsel %vm3883, %v3885, %v3902
    %v3904 = vrot.slane %v3740, 3
    %v3905 = vsel %vm3883, %v3888, %v3904
    %v3906 = vrot.slane %v3741, 3
    %v3907 = vsel %vm3883, %v3891, %v3906
    %v3908 = vrot.slane %v3742, 3
    %v3909 = vsel %vm3883, %v3894, %v3908
    %v3910 = vrot.slane %v3743, 3
    %v3911 = vsel %vm3883, %v3897, %v3910
    %v3912 = vrot.slane %v3744, 3
    %v3913 = vsel %vm3883, %v3900, %v3912
    %v3914 = vrot.slane %v3745, 3
    %v3915 = vsel %vm3883, %v3902, %v3914
    %v3916 = vrot.slane %v3746, 3
    %v3917 = vsel %vm3883, %v3904, %v3916
    %v3918 = vrot.slane %v3747, 3
    %v3919 = vsel %vm3883, %v3906, %v3918
    %v3920 = vrot.slane %v3748, 3
    %v3921 = vsel %vm3883, %v3908, %v3920
    %v3922 = vrot.slane %v3749, 3
    %v3923 = vsel %vm3883, %v3910, %v3922
    %v3924 = vrot.slane %v3750, 3
    %v3925 = vsel %vm3883, %v3912, %v3924
    %v3926 = vrot.slane %v3751, 3
    %v3927 = vsel %vm3883, %v3914, %v3926
    %v3928 = vrot.slane %v3752, 3
    %v3929 = vsel %vm3883, %v3916, %v3928
    %v3930 = vrot.slane %v3753, 3
    %v3931 = vsel %vm3883, %v3918, %v3930
    %v3932 = vrot.slane %v3754, 3
    %v3933 = vsel %vm3883, %v3920, %v3932
    %v3934 = vrot.slane %v3755, 3
    %v3935 = vsel %vm3883, %v3922, %v3934
    %v3936 = vrot.slane %v3756, 3
    %v3937 = vsel %vm3883, %v3924, %v3936
    %v4064 = vunpack.c.l.b16 %v3757
    %v4065 = vunpack.c.h.b16 %v3757
    %v4066 = vunpack.c.l.b16 %v3758
    %v4067 = vunpack.c.h.b16 %v3758
    %v4068 = vunpack.c.l.b16 %v3759
    %v4069 = vunpack.c.h.b16 %v3759
    %v4070 = vunpack.c.l.b16 %v3760
    %v4071 = vunpack.c.h.b16 %v3760
    %v4072 = vunpack.c.l.b16 %v3761
    %v4073 = vunpack.c.h.b16 %v3761
    %v4074 = vunpack.c.l.b16 %v3762
    %v4075 = vunpack.c.h.b16 %v3762
    %v4076 = vunpack.c.l.b16 %v3763
    %v4077 = vunpack.c.h.b16 %v3763
    %v4078 = vunpack.c.l.b16 %v3764
    %v4079 = vunpack.c.h.b16 %v3764
    %v4080 = vunpack.c.l.b16 %v3765
    %v4081 = vunpack.c.h.b16 %v3765
    %v4082 = vunpack.c.l.b16 %v3766
    %v4083 = vunpack.c.h.b16 %v3766
    %v4084 = vunpack.c.l.b16 %v3767
    %v4085 = vunpack.c.h.b16 %v3767
    %v4086 = vunpack.c.l.b16 %v3768
    %v4087 = vunpack.c.h.b16 %v3768
    %v4088 = vunpack.c.l.b16 %v3769
    %v4089 = vunpack.c.h.b16 %v3769
    %v4090 = vunpack.c.l.b16 %v3770
    %v4091 = vunpack.c.h.b16 %v3770
    %v4092 = vunpack.c.l.b16 %v3771
    %v4093 = vunpack.c.h.b16 %v3771
    %v4094 = vunpack.c.l.b16 %v3772
    %v4095 = vunpack.c.h.b16 %v3772
    %v4096 = vunpack.c.l.b16 %v3773
    %v4097 = vunpack.c.h.b16 %v3773
    %v4098 = vunpack.c.l.b16 %v3774
    %v4099 = vunpack.c.h.b16 %v3774
    %v4100 = vunpack.c.l.b16 %v3775
    %v4101 = vunpack.c.h.b16 %v3775
    %v4102 = vunpack.c.l.b16 %v3776
    %v4103 = vunpack.c.h.b16 %v3776
    %v4104 = vunpack.c.l.b16 %v3777
    %v4105 = vunpack.c.h.b16 %v3777
    %v4106 = vunpack.c.l.b16 %v3778
    %v4107 = vunpack.c.h.b16 %v3778
    %v4108 = vunpack.c.l.b16 %v3779
    %v4109 = vunpack.c.h.b16 %v3779
    %v4110 = vunpack.c.l.b16 %v3780
    %v4111 = vunpack.c.h.b16 %v3780
    %v4112 = vunpack.c.l.b16 %v3781
    %v4113 = vunpack.c.h.b16 %v3781
    %v4114 = vunpack.c.l.b16 %v3782
    %v4115 = vunpack.c.h.b16 %v3782
    %v4116 = vunpack.c.l.b16 %v3783
    %v4117 = vunpack.c.h.b16 %v3783
    %v4118 = vunpack.c.l.b16 %v3784
    %v4119 = vunpack.c.h.b16 %v3784
    %v4120 = vunpack.c.l.b16 %v3785
    %v4121 = vunpack.c.h.b16 %v3785
    %v4122 = vunpack.c.l.b16 %v3786
    %v4123 = vunpack.c.h.b16 %v3786
    %v4124 = vunpack.c.l.b16 %v3787
    %v4125 = vunpack.c.h.b16 %v3787
    %v4126 = vunpack.c.l.b16 %v3788
    %v4127 = vunpack.c.h.b16 %v3788
    %v4128 = vunpack.c.l.b16 %v3789
    %v4129 = vunpack.c.h.b16 %v3789
    %v4130 = vunpack.c.l.b16 %v3790
    %v4131 = vunpack.c.h.b16 %v3790
    %v4132 = vunpack.c.l.b16 %v3791
    %v4133 = vunpack.c.h.b16 %v3791
    %v4134 = vunpack.c.l.b16 %v3792
    %v4135 = vunpack.c.h.b16 %v3792
    %v4136 = vunpack.c.l.b16 %v3793
    %v4137 = vunpack.c.h.b16 %v3793
    %v4138 = vunpack.c.l.b16 %v3794
    %v4139 = vunpack.c.h.b16 %v3794
    %v4140 = vunpack.c.l.b16 %v3795
    %v4141 = vunpack.c.h.b16 %v3795
    %v4142 = vunpack.c.l.b16 %v3796
    %v4143 = vunpack.c.h.b16 %v3796
    %v4144 = vunpack.c.l.b16 %v3797
    %v4145 = vunpack.c.h.b16 %v3797
    %v4146 = vunpack.c.l.b16 %v3798
    %v4147 = vunpack.c.h.b16 %v3798
    %v4148 = vunpack.c.l.b16 %v3799
    %v4149 = vunpack.c.h.b16 %v3799
    %v4150 = vunpack.c.l.b16 %v3800
    %v4151 = vunpack.c.h.b16 %v3800
    %v4152 = vunpack.c.l.b16 %v3801
    %v4153 = vunpack.c.h.b16 %v3801
    %v4154 = vunpack.c.l.b16 %v3802
    %v4155 = vunpack.c.h.b16 %v3802
    %v4156 = vunpack.c.l.b16 %v3803
    %v4157 = vunpack.c.h.b16 %v3803
    %v4158 = vunpack.c.l.b16 %v3804
    %v4159 = vunpack.c.h.b16 %v3804
    %v4160 = vunpack.c.l.b16 %v3805
    %v4161 = vunpack.c.h.b16 %v3805
    %v4162 = vunpack.c.l.b16 %v3806
    %v4163 = vunpack.c.h.b16 %v3806
    %v4164 = vunpack.c.l.b16 %v3807
    %v4165 = vunpack.c.h.b16 %v3807
    %v4166 = vunpack.c.l.b16 %v3808
    %v4167 = vunpack.c.h.b16 %v3808
    %v4168 = vunpack.c.l.b16 %v3809
    %v4169 = vunpack.c.h.b16 %v3809
    %v4170 = vunpack.c.l.b16 %v3810
    %v4171 = vunpack.c.h.b16 %v3810
    %v4172 = vunpack.c.l.b16 %v3811
    %v4173 = vunpack.c.h.b16 %v3811
    %v4174 = vunpack.c.l.b16 %v3812
    %v4175 = vunpack.c.h.b16 %v3812
    %v4176 = vunpack.c.l.b16 %v3813
    %v4177 = vunpack.c.h.b16 %v3813
    %v4178 = vunpack.c.l.b16 %v3814
    %v4179 = vunpack.c.h.b16 %v3814
    %v4180 = vunpack.c.l.b16 %v3815
    %v4181 = vunpack.c.h.b16 %v3815
    %v4182 = vunpack.c.l.b16 %v3816
    %v4183 = vunpack.c.h.b16 %v3816
    %v4184 = vunpack.c.l.b16 %v3817
    %v4185 = vunpack.c.h.b16 %v3817
    %v4186 = vunpack.c.l.b16 %v3818
    %v4187 = vunpack.c.h.b16 %v3818
    %v4188 = vunpack.c.l.b16 %v3819
    %v4189 = vunpack.c.h.b16 %v3819
    %v4190 = vunpack.c.l.b16 %v3820
    %v4191 = vunpack.c.h.b16 %v3820
    %v4192 = vunpack.c.l.b16 %v3821
    %v4193 = vunpack.c.h.b16 %v3821
    %v4194 = vunpack.c.l.b16 %v3822
    %v4195 = vunpack.c.h.b16 %v3822
    %v4196 = vunpack.c.l.b16 %v3823
    %v4197 = vunpack.c.h.b16 %v3823
    %v4198 = vunpack.c.l.b16 %v3824
    %v4199 = vunpack.c.h.b16 %v3824
    %v4200 = vunpack.c.l.b16 %v3825
    %v4201 = vunpack.c.h.b16 %v3825
    %v4202 = vunpack.c.l.b16 %v3826
    %v4203 = vunpack.c.h.b16 %v3826
    %v4204 = vunpack.c.l.b16 %v3827
    %v4205 = vunpack.c.h.b16 %v3827
    %v4206 = vunpack.c.l.b16 %v3828
    %v4207 = vunpack.c.h.b16 %v3828
    %v4208 = vunpack.c.l.b16 %v3829
    %v4209 = vunpack.c.h.b16 %v3829
    %v4210 = vunpack.c.l.b16 %v3830
    %v4211 = vunpack.c.h.b16 %v3830
    %v4212 = vunpack.c.l.b16 %v3831
    %v4213 = vunpack.c.h.b16 %v3831
    %v4214 = vunpack.c.l.b16 %v3832
    %v4215 = vunpack.c.h.b16 %v3832
    %v4216 = vunpack.c.l.b16 %v3833
    %v4217 = vunpack.c.h.b16 %v3833
    %v4218 = vunpack.c.l.b16 %v3834
    %v4219 = vunpack.c.h.b16 %v3834
    %v4220 = vunpack.c.l.b16 %v3835
    %v4221 = vunpack.c.h.b16 %v3835
    %v4222 = vunpack.c.l.b16 %v3836
    %v4223 = vunpack.c.h.b16 %v3836
    %v4224 = vunpack.c.l.b16 %v3837
    %v4225 = vunpack.c.h.b16 %v3837
    %v4226 = vunpack.c.l.b16 %v3838
    %v4227 = vunpack.c.h.b16 %v3838
    %v4228 = vunpack.c.l.b16 %v3839
    %v4229 = vunpack.c.h.b16 %v3839
    %v4230 = vunpack.c.l.b16 %v3840
    %v4231 = vunpack.c.h.b16 %v3840
    %v4232 = vunpack.c.l.b16 %v3841
    %v4233 = vunpack.c.h.b16 %v3841
    %v4234 = vunpack.c.l.b16 %v3842
    %v4235 = vunpack.c.h.b16 %v3842
    %v4236 = vunpack.c.l.b16 %v3843
    %v4237 = vunpack.c.h.b16 %v3843
    %v4238 = vunpack.c.l.b16 %v3844
    %v4239 = vunpack.c.h.b16 %v3844
    %v4240 = vunpack.c.l.b16 %v3845
    %v4241 = vunpack.c.h.b16 %v3845
    %v4242 = vunpack.c.l.b16 %v3846
    %v4243 = vunpack.c.h.b16 %v3846
    %v4244 = vunpack.c.l.b16 %v3847
    %v4245 = vunpack.c.h.b16 %v3847
    %v4246 = vunpack.c.l.b16 %v3848
    %v4247 = vunpack.c.h.b16 %v3848
    %v4248 = vunpack.c.l.b16 %v3849
    %v4249 = vunpack.c.h.b16 %v3849
    %v4250 = vunpack.c.l.b16 %v3850
    %v4251 = vunpack.c.h.b16 %v3850
    %v4252 = vunpack.c.l.b16 %v3851
    %v4253 = vunpack.c.h.b16 %v3851
    %v4254 = vunpack.c.l.b16 %v3852
    %v4255 = vunpack.c.h.b16 %v3852
    %v4256 = vpack.c.b16 %v4066, %v4064
    %v4257 = vpack.c.b16 %v4067, %v4065
    %v4258 = vpack.c.b16 %v4070, %v4068
    %v4259 = vpack.c.b16 %v4071, %v4069
    %v4260 = vpack.c.b16 %v4074, %v4072
    %v4261 = vpack.c.b16 %v4075, %v4073
    %v4262 = vpack.c.b16 %v4078, %v4076
    %v4263 = vpack.c.b16 %v4079, %v4077
    %v4264 = vpack.c.b16 %v4082, %v4080
    %v4265 = vpack.c.b16 %v4083, %v4081
    %v4266 = vpack.c.b16 %v4086, %v4084
    %v4267 = vpack.c.b16 %v4087, %v4085
    %v4268 = vpack.c.b16 %v4090, %v4088
    %v4269 = vpack.c.b16 %v4091, %v4089
    %v4270 = vpack.c.b16 %v4094, %v4092
    %v4271 = vpack.c.b16 %v4095, %v4093
    %v4272 = vpack.c.b16 %v4098, %v4096
    %v4273 = vpack.c.b16 %v4099, %v4097
    %v4274 = vpack.c.b16 %v4102, %v4100
    %v4275 = vpack.c.b16 %v4103, %v4101
    %v4276 = vpack.c.b16 %v4106, %v4104
    %v4277 = vpack.c.b16 %v4107, %v4105
    %v4278 = vpack.c.b16 %v4110, %v4108
    %v4279 = vpack.c.b16 %v4111, %v4109
    %v4280 = vpack.c.b16 %v4114, %v4112
    %v4281 = vpack.c.b16 %v4115, %v4113
    %v4282 = vpack.c.b16 %v4118, %v4116
    %v4283 = vpack.c.b16 %v4119, %v4117
    %v4284 = vpack.c.b16 %v4122, %v4120
    %v4285 = vpack.c.b16 %v4123, %v4121
    %v4286 = vpack.c.b16 %v4126, %v4124
    %v4287 = vpack.c.b16 %v4127, %v4125
    %v4288 = vpack.c.b16 %v4130, %v4128
    %v4289 = vpack.c.b16 %v4131, %v4129
    %v4290 = vpack.c.b16 %v4134, %v4132
    %v4291 = vpack.c.b16 %v4135, %v4133
    %v4292 = vpack.c.b16 %v4138, %v4136
    %v4293 = vpack.c.b16 %v4139, %v4137
    %v4294 = vpack.c.b16 %v4142, %v4140
    %v4295 = vpack.c.b16 %v4143, %v4141
    %v4296 = vpack.c.b16 %v4146, %v4144
    %v4297 = vpack.c.b16 %v4147, %v4145
    %v4298 = vpack.c.b16 %v4150, %v4148
    %v4299 = vpack.c.b16 %v4151, %v4149
    %v4300 = vpack.c.b16 %v4154, %v4152
    %v4301 = vpack.c.b16 %v4155, %v4153
    %v4302 = vpack.c.b16 %v4158, %v4156
    %v4303 = vpack.c.b16 %v4159, %v4157
    %v4304 = vpack.c.b16 %v4162, %v4160
    %v4305 = vpack.c.b16 %v4163, %v4161
    %v4306 = vpack.c.b16 %v4166, %v4164
    %v4307 = vpack.c.b16 %v4167, %v4165
    %v4308 = vpack.c.b16 %v4170, %v4168
    %v4309 = vpack.c.b16 %v4171, %v4169
    %v4310 = vpack.c.b16 %v4174, %v4172
    %v4311 = vpack.c.b16 %v4175, %v4173
    %v4312 = vpack.c.b16 %v4178, %v4176
    %v4313 = vpack.c.b16 %v4179, %v4177
    %v4314 = vpack.c.b16 %v4182, %v4180
    %v4315 = vpack.c.b16 %v4183, %v4181
    %v4316 = vpack.c.b16 %v4186, %v4184
    %v4317 = vpack.c.b16 %v4187, %v4185
    %v4318 = vpack.c.b16 %v4190, %v4188
    %v4319 = vpack.c.b16 %v4191, %v4189
    %v4320 = vpack.c.b16 %v4194, %v4192
    %v4321 = vpack.c.b16 %v4195, %v4193
    %v4322 = vpack.c.b16 %v4198, %v4196
    %v4323 = vpack.c.b16 %v4199, %v4197
    %v4324 = vpack.c.b16 %v4202, %v4200
    %v4325 = vpack.c.b16 %v4203, %v4201
    %v4326 = vpack.c.b16 %v4206, %v4204
    %v4327 = vpack.c.b16 %v4207, %v4205
    %v4328 = vpack.c.b16 %v4210, %v4208
    %v4329 = vpack.c.b16 %v4211, %v4209
    %v4330 = vpack.c.b16 %v4214, %v4212
    %v4331 = vpack.c.b16 %v4215, %v4213
    %v4332 = vpack.c.b16 %v4218, %v4216
    %v4333 = vpack.c.b16 %v4219, %v4217
    %v4334 = vpack.c.b16 %v4222, %v4220
    %v4335 = vpack.c.b16 %v4223, %v4221
    %v4336 = vpack.c.b16 %v4226, %v4224
    %v4337 = vpack.c.b16 %v4227, %v4225
    %v4338 = vpack.c.b16 %v4230, %v4228
    %v4339 = vpack.c.b16 %v4231, %v4229
    %v4340 = vpack.c.b16 %v4234, %v4232
    %v4341 = vpack.c.b16 %v4235, %v4233
    %v4342 = vpack.c.b16 %v4238, %v4236
    %v4343 = vpack.c.b16 %v4239, %v4237
    %v4344 = vpack.c.b16 %v4242, %v4240
    %v4345 = vpack.c.b16 %v4243, %v4241
    %v4346 = vpack.c.b16 %v4246, %v4244
    %v4347 = vpack.c.b16 %v4247, %v4245
    %v4348 = vpack.c.b16 %v4250, %v4248
    %v4349 = vpack.c.b16 %v4251, %v4249
    %v4350 = vpack.c.b16 %v4254, %v4252
    %v4351 = vpack.c.b16 %v4255, %v4253
    %4448 = vmatprep.subr.bf16.mxu0 %v4257
    %4449 = vmatpush1.bf16.msra.mxu0 %v4256
    %4450 = vmatprep.subr.bf16.mxu0 %v4259
    %4451 = vmatpush1.bf16.msra.mxu0 %v4258
    %4452 = vmatprep.subr.bf16.mxu0 %v4261
    %4453 = vmatpush1.bf16.msra.mxu0 %v4260
    %4454 = vmatprep.subr.bf16.mxu0 %v4263
    %4455 = vmatpush1.bf16.msra.mxu0 %v4262
    %4456 = vmatprep.subr.bf16.mxu0 %v4265
    %4457 = vmatpush1.bf16.msra.mxu0 %v4264
    %4458 = vmatprep.subr.bf16.mxu0 %v4267
    %4459 = vmatpush1.bf16.msra.mxu0 %v4266
    %4460 = vmatprep.subr.bf16.mxu0 %v4269
    %4461 = vmatpush1.bf16.msra.mxu0 %v4268
    %4462 = vmatprep.subr.bf16.mxu0 %v4271
    %4463 = vmatpush1.bf16.msra.mxu0 %v4270
    %4464 = vmatprep.subr.bf16.mxu0 %v4273
    %4465 = vmatpush1.bf16.msra.mxu0 %v4272
    %4466 = vmatprep.subr.bf16.mxu0 %v4275
    %4467 = vmatpush1.bf16.msra.mxu0 %v4274
    %4468 = vmatprep.subr.bf16.mxu0 %v4277
    %4469 = vmatpush1.bf16.msra.mxu0 %v4276
    %4470 = vmatprep.subr.bf16.mxu0 %v4279
    %4471 = vmatpush1.bf16.msra.mxu0 %v4278
    %4472 = vmatprep.subr.bf16.mxu0 %v4281
    %4473 = vmatpush1.bf16.msra.mxu0 %v4280
    %4474 = vmatprep.subr.bf16.mxu0 %v4283
    %4475 = vmatpush1.bf16.msra.mxu0 %v4282
    %4476 = vmatprep.subr.bf16.mxu0 %v4285
    %4477 = vmatpush1.bf16.msra.mxu0 %v4284
    %4478 = vmatprep.subr.bf16.mxu0 %v4287
    %4479 = vmatpush1.bf16.msra.mxu0 %v4286
    %4480 = vmatprep.mubr.bf16.mxu0 %v3889
    %4481 = vmatmul.mubr.bf16.gmra.mrb[0].mxu0 %v3886
    %v4482 = vpop.f32.mrb[0].mxu0
    %v4483 = vadd.f32 0.0, %v4482
    %v4484 = vpop.f32.mrb[0].mxu0
    %v4485 = vadd.f32 0.0, %v4484
    %v4486 = vpop.f32.mrb[0].mxu0
    %v4487 = vadd.f32 0.0, %v4486
    %v4488 = vpop.f32.mrb[0].mxu0
    %v4489 = vadd.f32 0.0, %v4488
    %4490 = vmatprep.mubr.bf16.mxu0 %v3905
    %4491 = vmatmul.mubr.bf16.gmra.mrb[0].mxu0 %v3903
    %v4492 = vpop.f32.mrb[0].mxu0
    %v4493 = vadd.f32 0.0, %v4492
    %v4494 = vpop.f32.mrb[0].mxu0
    %v4495 = vadd.f32 0.0, %v4494
    %v4496 = vpop.f32.mrb[0].mxu0
    %v4497 = vadd.f32 0.0, %v4496
    %v4498 = vpop.f32.mrb[0].mxu0
    %v4499 = vadd.f32 0.0, %v4498
    %4500 = vmatprep.mubr.bf16.mxu0 %v3917
    %4501 = vmatmul.mubr.bf16.gmra.mrb[0].mxu0 %v3915
    %v4502 = vpop.f32.mrb[0].mxu0
    %v4503 = vadd.f32 0.0, %v4502
    %v4504 = vpop.f32.mrb[0].mxu0
    %v4505 = vadd.f32 0.0, %v4504
    %v4506 = vpop.f32.mrb[0].mxu0
    %v4507 = vadd.f32 0.0, %v4506
    %v4508 = vpop.f32.mrb[0].mxu0
    %v4509 = vadd.f32 0.0, %v4508
    %4510 = vmatprep.mubr.bf16.mxu0 %v3929
    %4511 = vmatmul.mubr.bf16.gmra.mrb[0].mxu0 %v3927
    %v4512 = vpop.f32.mrb[0].mxu0
    %v4513 = vadd.f32 0.0, %v4512
    %v4514 = vpop.f32.mrb[0].mxu0
    %v4515 = vadd.f32 0.0, %v4514
    %v4516 = vpop.f32.mrb[0].mxu0
    %v4517 = vadd.f32 0.0, %v4516
    %v4518 = vpop.f32.mrb[0].mxu0
    %v4519 = vadd.f32 0.0, %v4518
    %4520 = vmatprep.mubr.bf16.mxu0 %v3928
    %4521 = vmatmul.mubr.bf16.gmra.mrb[0].mxu0 %v3926
    %v4522 = vpop.f32.mrb[0].mxu0
    %v4523 = vadd.f32 0.0, %v4522
    %v4524 = vpop.f32.mrb[0].mxu0
    %v4525 = vadd.f32 0.0, %v4524
    %v4526 = vpop.f32.mrb[0].mxu0
    %v4527 = vpop.f32.mrb[0].mxu0
    %4528 = vdwg.mxu0
    %4529 = vmatprep.subr.bf16.mxu0 %v4289
    %4530 = vmatpush1.bf16.msra.mxu0 %v4288
    %4531 = vmatprep.subr.bf16.mxu0 %v4291
    %4532 = vmatpush1.bf16.msra.mxu0 %v4290
    %4533 = vmatprep.subr.bf16.mxu0 %v4293
    %4534 = vmatpush1.bf16.msra.mxu0 %v4292
    %4535 = vmatprep.subr.bf16.mxu0 %v4295
    %4536 = vmatpush1.bf16.msra.mxu0 %v4294
    %4537 = vmatprep.subr.bf16.mxu0 %v4297
    %4538 = vmatpush1.bf16.msra.mxu0 %v4296
    %4539 = vmatprep.subr.bf16.mxu0 %v4299
    %4540 = vmatpush1.bf16.msra.mxu0 %v4298
    %4541 = vmatprep.subr.bf16.mxu0 %v4301
    %4542 = vmatpush1.bf16.msra.mxu0 %v4300
    %4543 = vmatprep.subr.bf16.mxu0 %v4303
    %4544 = vmatpush1.bf16.msra.mxu0 %v4302
    %4545 = vmatprep.subr.bf16.mxu0 %v4305
    %4546 = vmatpush1.bf16.msra.mxu0 %v4304
    %4547 = vmatprep.subr.bf16.mxu0 %v4307
    %4548 = vmatpush1.bf16.msra.mxu0 %v4306
    %4549 = vmatprep.subr.bf16.mxu0 %v4309
    %4550 = vmatpush1.bf16.msra.mxu0 %v4308
    %4551 = vmatprep.subr.bf16.mxu0 %v4311
    %4552 = vmatpush1.bf16.msra.mxu0 %v4310
    %4553 = vmatprep.subr.bf16.mxu0 %v4313
    %4554 = vmatpush1.bf16.msra.mxu0 %v4312
    %4555 = vmatprep.subr.bf16.mxu0 %v4315
    %4556 = vmatpush1.bf16.msra.mxu0 %v4314
    %4557 = vmatprep.subr.bf16.mxu0 %v4317
    %4558 = vmatpush1.bf16.msra.mxu0 %v4316
    %4559 = vmatprep.subr.bf16.mxu0 %v4319
    %4560 = vmatpush1.bf16.msra.mxu0 %v4318
    %4561 = vmatprep.mubr.bf16.mxu0 %v3895
    %4562 = vmatmul.mubr.bf16.gmra.mrb[0].mxu0 %v3892
    %v4563 = vpop.f32.mrb[0].mxu0
    %v4564 = vadd.f32 %v4483, %v4563
    %v4565 = vpop.f32.mrb[0].mxu0
    %v4566 = vadd.f32 %v4485, %v4565
    %v4567 = vpop.f32.mrb[0].mxu0
    %v4568 = vadd.f32 %v4487, %v4567
    %v4569 = vpop.f32.mrb[0].mxu0
    %v4570 = vadd.f32 %v4489, %v4569
    %4571 = vmatprep.mubr.bf16.mxu0 %v3909
    %4572 = vmatmul.mubr.bf16.gmra.mrb[0].mxu0 %v3907
    %v4573 = vpop.f32.mrb[0].mxu0
    %v4574 = vadd.f32 %v4493, %v4573
    %v4575 = vpop.f32.mrb[0].mxu0
    %v4576 = vadd.f32 %v4495, %v4575
    %v4577 = vpop.f32.mrb[0].mxu0
    %v4578 = vadd.f32 %v4497, %v4577
    %v4579 = vpop.f32.mrb[0].mxu0
    %v4580 = vadd.f32 %v4499, %v4579
    %4581 = vmatprep.mubr.bf16.mxu0 %v3921
    %4582 = vmatmul.mubr.bf16.gmra.mrb[0].mxu0 %v3919
    %v4583 = vpop.f32.mrb[0].mxu0
    %v4584 = vadd.f32 %v4503, %v4583
    %v4585 = vpop.f32.mrb[0].mxu0
    %v4586 = vadd.f32 %v4505, %v4585
    %v4587 = vpop.f32.mrb[0].mxu0
    %v4588 = vadd.f32 %v4507, %v4587
    %v4589 = vpop.f32.mrb[0].mxu0
    %v4590 = vadd.f32 %v4509, %v4589
    %4591 = vmatprep.mubr.bf16.mxu0 %v3933
    %4592 = vmatmul.mubr.bf16.gmra.mrb[0].mxu0 %v3931
    %v4593 = vpop.f32.mrb[0].mxu0
    %v4594 = vadd.f32 %v4513, %v4593
    %v4595 = vpop.f32.mrb[0].mxu0
    %v4596 = vadd.f32 %v4515, %v4595
    %v4597 = vpop.f32.mrb[0].mxu0
    %v4598 = vadd.f32 %v4517, %v4597
    %v4599 = vpop.f32.mrb[0].mxu0
    %v4600 = vadd.f32 %v4519, %v4599
    %4601 = vmatprep.mubr.bf16.mxu0 %v3932
    %4602 = vmatmul.mubr.bf16.gmra.mrb[0].mxu0 %v3930
    %v4603 = vpop.f32.mrb[0].mxu0
    %v4604 = vadd.f32 %v4523, %v4603
    %v4605 = vpop.f32.mrb[0].mxu0
    %v4606 = vadd.f32 %v4525, %v4605
    %v4607 = vpop.f32.mrb[0].mxu0
    %v4608 = vpop.f32.mrb[0].mxu0
    %4609 = vdwg.mxu0
    %4610 = vmatprep.subr.bf16.mxu0 %v4321
    %4611 = vmatpush1.bf16.msra.mxu0 %v4320
    %4612 = vmatprep.subr.bf16.mxu0 %v4323
    %4613 = vmatpush1.bf16.msra.mxu0 %v4322
    %4614 = vmatprep.subr.bf16.mxu0 %v4325
    %4615 = vmatpush1.bf16.msra.mxu0 %v4324
    %4616 = vmatprep.subr.bf16.mxu0 %v4327
    %4617 = vmatpush1.bf16.msra.mxu0 %v4326
    %4618 = vmatprep.subr.bf16.mxu0 %v4329
    %4619 = vmatpush1.bf16.msra.mxu0 %v4328
    %4620 = vmatprep.subr.bf16.mxu0 %v4331
    %4621 = vmatpush1.bf16.msra.mxu0 %v4330
    %4622 = vmatprep.subr.bf16.mxu0 %v4333
    %4623 = vmatpush1.bf16.msra.mxu0 %v4332
    %4624 = vmatprep.subr.bf16.mxu0 %v4335
    %4625 = vmatpush1.bf16.msra.mxu0 %v4334
    %4626 = vmatprep.subr.bf16.mxu0 %v4337
    %4627 = vmatpush1.bf16.msra.mxu0 %v4336
    %4628 = vmatprep.subr.bf16.mxu0 %v4339
    %4629 = vmatpush1.bf16.msra.mxu0 %v4338
    %4630 = vmatprep.subr.bf16.mxu0 %v4341
    %4631 = vmatpush1.bf16.msra.mxu0 %v4340
    %4632 = vmatprep.subr.bf16.mxu0 %v4343
    %4633 = vmatpush1.bf16.msra.mxu0 %v4342
    %4634 = vmatprep.subr.bf16.mxu0 %v4345
    %4635 = vmatpush1.bf16.msra.mxu0 %v4344
    %4636 = vmatprep.subr.bf16.mxu0 %v4347
    %4637 = vmatpush1.bf16.msra.mxu0 %v4346
    %4638 = vmatprep.subr.bf16.mxu0 %v4349
    %4639 = vmatpush1.bf16.msra.mxu0 %v4348
    %4640 = vmatprep.subr.bf16.mxu0 %v4351
    %4641 = vmatpush1.bf16.msra.mxu0 %v4350
    %4642 = vmatprep.mubr.bf16.mxu0 %v3901
    %4643 = vmatmul.mubr.bf16.gmra.mrb[0].mxu0 %v3898
    %v4644 = vpop.f32.mrb[0].mxu0
    %v4645 = vadd.f32 %v4564, %v4644
    %v4646 = vpop.f32.mrb[0].mxu0
    %v4647 = vadd.f32 %v4566, %v4646
    %v4648 = vpop.f32.mrb[0].mxu0
    %v4649 = vadd.f32 %v4568, %v4648
    %v4650 = vpop.f32.mrb[0].mxu0
    %v4651 = vadd.f32 %v4570, %v4650
    %4652 = vmatprep.mubr.bf16.mxu0 %v3913
    %4653 = vmatmul.mubr.bf16.gmra.mrb[0].mxu0 %v3911
    %v4654 = vpop.f32.mrb[0].mxu0
    %v4655 = vadd.f32 %v4574, %v4654
    %v4656 = vpop.f32.mrb[0].mxu0
    %v4657 = vadd.f32 %v4576, %v4656
    %v4658 = vpop.f32.mrb[0].mxu0
    %v4659 = vadd.f32 %v4578, %v4658
    %v4660 = vpop.f32.mrb[0].mxu0
    %v4661 = vadd.f32 %v4580, %v4660
    %4662 = vmatprep.mubr.bf16.mxu0 %v3925
    %4663 = vmatmul.mubr.bf16.gmra.mrb[0].mxu0 %v3923
    %v4664 = vpop.f32.mrb[0].mxu0
    %v4665 = vadd.f32 %v4584, %v4664
    %v4666 = vpop.f32.mrb[0].mxu0
    %v4667 = vadd.f32 %v4586, %v4666
    %v4668 = vpop.f32.mrb[0].mxu0
    %v4669 = vadd.f32 %v4588, %v4668
    %v4670 = vpop.f32.mrb[0].mxu0
    %v4671 = vadd.f32 %v4590, %v4670
    %4672 = vmatprep.mubr.bf16.mxu0 %v3937
    %4673 = vmatmul.mubr.bf16.gmra.mrb[0].mxu0 %v3935
    %v4674 = vpop.f32.mrb[0].mxu0
    %v4675 = vadd.f32 %v4594, %v4674
    %v4676 = vpop.f32.mrb[0].mxu0
    %v4677 = vadd.f32 %v4596, %v4676
    %v4678 = vpop.f32.mrb[0].mxu0
    %v4679 = vadd.f32 %v4598, %v4678
    %v4680 = vpop.f32.mrb[0].mxu0
    %v4681 = vadd.f32 %v4600, %v4680
    %4682 = vmatprep.mubr.bf16.mxu0 %v3936
    %4683 = vmatmul.mubr.bf16.gmra.mrb[0].mxu0 %v3934
    %v4684 = vpop.f32.mrb[0].mxu0
    %v4685 = vadd.f32 %v4604, %v4684
    %v4686 = vpop.f32.mrb[0].mxu0
    %v4687 = vadd.f32 %v4606, %v4686
    %v4688 = vpop.f32.mrb[0].mxu0
    %v4689 = vpop.f32.mrb[0].mxu0
    %4690 = vdwg.mxu0
    %v4691 = vld [vmem:[%s10] sm:$0x3]
    %v4693 = vlaneseq
    %v4694 = vshrl.u32 %v4693, 7
    %v4695 = vsub.s32 0, %v4694
    %v4696 = vrot.slane %v4691, %v4695
    %v4697 = vlaneseq
    %v4698 = vshrl.u32 %v4697, 7
    %v4699 = vsub.s32 1, %v4698
    %v4700 = vrot.slane %v4691, %v4699
    %v4703 = vmul.f32 %v4645, %v4696
    %v4704 = vmul.f32 %v4647, %v4700
    %v4705 = vmul.f32 %v4649, %v4696
    %v4706 = vmul.f32 %v4651, %v4700
    %v4707 = vmul.f32 %v4655, %v4696
    %v4708 = vmul.f32 %v4657, %v4700
    %v4709 = vmul.f32 %v4659, %v4696
    %v4710 = vmul.f32 %v4661, %v4700
    %v4711 = vmul.f32 %v4665, %v4696
    %v4712 = vmul.f32 %v4667, %v4700
    %v4713 = vmul.f32 %v4669, %v4696
    %v4714 = vmul.f32 %v4671, %v4700
    %v4715 = vmul.f32 %v4675, %v4696
    %v4716 = vmul.f32 %v4677, %v4700
    %v4717 = vmul.f32 %v4679, %v4696
    %v4718 = vmul.f32 %v4681, %v4700
    %v4719 = vmul.f32 %v4685, %v4696
    %v4720 = vmul.f32 %v4687, %v4700
    %v4721 = vld [vmem:[%s11] sm:$0x3]
    %v4723 = vlaneseq
    %v4724 = vshrl.u32 %v4723, 7
    %v4725 = vsub.s32 0, %v4724
    %v4726 = vrot.slane %v4721, %v4725
    %v4727 = vlaneseq
    %v4728 = vshrl.u32 %v4727, 7
    %v4729 = vsub.s32 1, %v4728
    %v4730 = vrot.slane %v4721, %v4729
    %v4733 = vadd.f32 %v4703, %v4726
    %v4734 = vadd.f32 %v4704, %v4730
    %v4735 = vadd.f32 %v4705, %v4726
    %v4736 = vadd.f32 %v4706, %v4730
    %v4737 = vadd.f32 %v4707, %v4726
    %v4738 = vadd.f32 %v4708, %v4730
    %v4739 = vadd.f32 %v4709, %v4726
    %v4740 = vadd.f32 %v4710, %v4730
    %v4741 = vadd.f32 %v4711, %v4726
    %v4742 = vadd.f32 %v4712, %v4730
    %v4743 = vadd.f32 %v4713, %v4726
    %v4744 = vadd.f32 %v4714, %v4730
    %v4745 = vadd.f32 %v4715, %v4726
    %v4746 = vadd.f32 %v4716, %v4730
    %v4747 = vadd.f32 %v4717, %v4726
    %v4748 = vadd.f32 %v4718, %v4730
    %v4749 = vadd.f32 %v4719, %v4726
    %v4750 = vadd.f32 %v4720, %v4730
    %v4751 = vmax.f32 %v4733, 0.0
    %v4752 = vmax.f32 %v4734, 0.0
    %v4753 = vmax.f32 %v4735, 0.0
    %v4754 = vmax.f32 %v4736, 0.0
    %v4755 = vmax.f32 %v4737, 0.0
    %v4756 = vmax.f32 %v4738, 0.0
    %v4757 = vmax.f32 %v4739, 0.0
    %v4758 = vmax.f32 %v4740, 0.0
    %v4759 = vmax.f32 %v4741, 0.0
    %v4760 = vmax.f32 %v4742, 0.0
    %v4761 = vmax.f32 %v4743, 0.0
    %v4762 = vmax.f32 %v4744, 0.0
    %v4763 = vmax.f32 %v4745, 0.0
    %v4764 = vmax.f32 %v4746, 0.0
    %v4765 = vmax.f32 %v4747, 0.0
    %v4766 = vmax.f32 %v4748, 0.0
    %v4767 = vmax.f32 %v4749, 0.0
    %v4768 = vmax.f32 %v4750, 0.0
    %v4769 = vmul.f32 %v4751, %v300
    %v4770 = vmul.f32 %v4752, %v300
    %v4771 = vmul.f32 %v4753, %v301
    %v4772 = vmul.f32 %v4754, %v301
    %v4773 = vmul.f32 %v4755, %v302
    %v4774 = vmul.f32 %v4756, %v302
    %v4775 = vmul.f32 %v4757, %v303
    %v4776 = vmul.f32 %v4758, %v303
    %v4777 = vmul.f32 %v4759, %v304
    %v4778 = vmul.f32 %v4760, %v304
    %v4779 = vmul.f32 %v4761, %v305
    %v4780 = vmul.f32 %v4762, %v305
    %v4781 = vmul.f32 %v4763, %v306
    %v4782 = vmul.f32 %v4764, %v306
    %v4783 = vmul.f32 %v4765, %v307
    %v4784 = vmul.f32 %v4766, %v307
    %v4785 = vmul.f32 %v4767, %v308
    %v4786 = vmul.f32 %v4768, %v308
    %4787 = vst [vmem:[#allocation3 + $0x10] sm:$0xff] %v4769
    %4788 = vst [vmem:[#allocation3 + $0x18] sm:$0xff] %v4770
    %4789 = vst [vmem:[#allocation3 + $0x20] sm:$0xff] %v4771
    %4790 = vst [vmem:[#allocation3 + $0x28] sm:$0xff] %v4772
    %4791 = vst [vmem:[#allocation3 + $0x30] sm:$0xff] %v4773
    %4792 = vst [vmem:[#allocation3 + $0x38] sm:$0xff] %v4774
    %4793 = vst [vmem:[#allocation3 + $0x40] sm:$0xff] %v4775
    %4794 = vst [vmem:[#allocation3 + $0x48] sm:$0xff] %v4776
    %4795 = vst [vmem:[#allocation3 + $0x50] sm:$0xff] %v4777
    %4796 = vst [vmem:[#allocation3 + $0x58] sm:$0xff] %v4778
    %4797 = vst [vmem:[#allocation3 + $0x60] sm:$0xff] %v4779
    %4798 = vst [vmem:[#allocation3 + $0x68] sm:$0xff] %v4780
    %4799 = vst [vmem:[#allocation3 + $0x70] sm:$0xff] %v4781
    %4800 = vst [vmem:[#allocation3 + $0x78] sm:$0xff] %v4782
    %4801 = vst [vmem:[#allocation3 + $0x80] sm:$0xff] %v4783
    %4802 = vst [vmem:[#allocation3 + $0x88] sm:$0xff] %v4784
    %4803 = vst [vmem:[#allocation3 + $0x90] sm:$0xff] %v4785
    %4804 = vst [vmem:[#allocation3 + $0x98] sm:$0xff] %v4786
    %v4805 = vld [vmem:[#allocation3] sm:$0xe0]
    %v4806 = vld [vmem:[#allocation3 + $0x8] sm:$0xe0]
    %v4807 = vld [vmem:[#allocation3 + $0x10] sm:$0xff]
    %v4808 = vld [vmem:[#allocation3 + $0x18] sm:$0xff]
    %v4809 = vld [vmem:[#allocation3 + $0x20] sm:$0xff]
    %v4810 = vld [vmem:[#allocation3 + $0x28] sm:$0xff]
    %v4811 = vld [vmem:[#allocation3 + $0x30] sm:$0xff]
    %v4812 = vld [vmem:[#allocation3 + $0x38] sm:$0xff]
    %v4813 = vld [vmem:[#allocation3 + $0x40] sm:$0xff]
    %v4814 = vld [vmem:[#allocation3 + $0x48] sm:$0xff]
    %v4815 = vld [vmem:[#allocation3 + $0x50] sm:$0xff]
    %v4816 = vld [vmem:[#allocation3 + $0x58] sm:$0xff]
    %v4817 = vld [vmem:[#allocation3 + $0x60] sm:$0xff]
    %v4818 = vld [vmem:[#allocation3 + $0x68] sm:$0xff]
    %v4819 = vld [vmem:[#allocation3 + $0x70] sm:$0xff]
    %v4820 = vld [vmem:[#allocation3 + $0x78] sm:$0xff]
    %v4821 = vld [vmem:[#allocation3 + $0x80] sm:$0xff]
    %v4822 = vld [vmem:[#allocation3 + $0x88] sm:$0xff]
    %v4823 = vld [vmem:[#allocation3 + $0x90] sm:$0x1f]
    %v4824 = vld [vmem:[#allocation3 + $0x98] sm:$0x1f]
    %v4825 = vld [vmem:[#allocation3 + $0x10] sm:$0xf8]
    %v4826 = vld [vmem:[#allocation3 + $0x18] sm:$0xf8]
    %v4827 = vld [vmem:[#allocation3 + $0x20] sm:$0xff]
    %v4828 = vld [vmem:[#allocation3 + $0x28] sm:$0xff]
    %v4829 = vld [vmem:[#allocation3 + $0x30] sm:$0xff]
    %v4830 = vld [vmem:[#allocation3 + $0x38] sm:$0xff]
    %v4831 = vld [vmem:[#allocation3 + $0x40] sm:$0xff]
    %v4832 = vld [vmem:[#allocation3 + $0x48] sm:$0xff]
    %v4833 = vld [vmem:[#allocation3 + $0x50] sm:$0xff]
    %v4834 = vld [vmem:[#allocation3 + $0x58] sm:$0xff]
    %v4835 = vld [vmem:[#allocation3 + $0x60] sm:$0xff]
    %v4836 = vld [vmem:[#allocation3 + $0x68] sm:$0xff]
    %v4837 = vld [vmem:[#allocation3 + $0x70] sm:$0xff]
    %v4838 = vld [vmem:[#allocation3 + $0x78] sm:$0xff]
    %v4839 = vld [vmem:[#allocation3 + $0x80] sm:$0xff]
    %v4840 = vld [vmem:[#allocation3 + $0x88] sm:$0xff]
    %v4841 = vld [vmem:[#allocation3 + $0x90] sm:$0xff]
    %v4842 = vld [vmem:[#allocation3 + $0x98] sm:$0xff]
    %v4843 = vld [vmem:[#allocation3 + $0xa0] sm:$0x7]
    %v4844 = vld [vmem:[#allocation3 + $0xa8] sm:$0x7]
    %vm4863 = vcmask 1044480
    %v4864 = vrot.slane %v4769, 3
    %v4865 = vrot.slane %v4770, 3
    %v4866 = vrot.slane %v4771, 3
    %v4867 = vsel %vm4863, %v4864, %v4866
    %v4868 = vrot.slane %v4772, 3
    %v4869 = vsel %vm4863, %v4865, %v4868
    %v4870 = vrot.slane %v4773, 3
    %v4871 = vsel %vm4863, %v4866, %v4870
    %v4872 = vrot.slane %v4774, 3
    %v4873 = vsel %vm4863, %v4868, %v4872
    %v4874 = vrot.slane %v4775, 3
    %v4875 = vsel %vm4863, %v4870, %v4874
    %v4876 = vrot.slane %v4776, 3
    %v4877 = vsel %vm4863, %v4872, %v4876
    %v4878 = vrot.slane %v4777, 3
    %v4879 = vsel %vm4863, %v4874, %v4878
    %v4880 = vrot.slane %v4778, 3
    %v4881 = vsel %vm4863, %v4876, %v4880
    %v4882 = vrot.slane %v4779, 3
    %v4883 = vsel %vm4863, %v4878, %v4882
    %v4884 = vrot.slane %v4780, 3
    %v4885 = vsel %vm4863, %v4880, %v4884
    %v4886 = vrot.slane %v4781, 3
    %v4887 = vsel %vm4863, %v4882, %v4886
    %v4888 = vrot.slane %v4782, 3
    %v4889 = vsel %vm4863, %v4884, %v4888
    %v4890 = vrot.slane %v4783, 3
    %v4891 = vsel %vm4863, %v4886, %v4890
    %v4892 = vrot.slane %v4784, 3
    %v4893 = vsel %vm4863, %v4888, %v4892
    %v4894 = vrot.slane %v4785, 3
    %v4895 = vsel %vm4863, %v4890, %v4894
    %v4896 = vrot.slane %v4786, 3
    %v4897 = vsel %vm4863, %v4892, %v4896
    %vm4938 = vcmask 1041408
    %v4939 = vrot.slane %v4825, 6
    %v4940 = vrot.slane %v4826, 6
    %v4941 = vrot.slane %v4827, 6
    %v4942 = vsel %vm4938, %v4939, %v4941
    %v4943 = vrot.slane %v4828, 6
    %v4944 = vsel %vm4938, %v4940, %v4943
    %v4945 = vrot.slane %v4829, 6
    %v4946 = vsel %vm4938, %v4941, %v4945
    %v4947 = vrot.slane %v4830, 6
    %v4948 = vsel %vm4938, %v4943, %v4947
    %v4949 = vrot.slane %v4831, 6
    %v4950 = vsel %vm4938, %v4945, %v4949
    %v4951 = vrot.slane %v4832, 6
    %v4952 = vsel %vm4938, %v4947, %v4951
    %v4953 = vrot.slane %v4833, 6
    %v4954 = vsel %vm4938, %v4949, %v4953
    %v4955 = vrot.slane %v4834, 6
    %v4956 = vsel %vm4938, %v4951, %v4955
    %v4957 = vrot.slane %v4835, 6
    %v4958 = vsel %vm4938, %v4953, %v4957
    %v4959 = vrot.slane %v4836, 6
    %v4960 = vsel %vm4938, %v4955, %v4959
    %v4961 = vrot.slane %v4837, 6
    %v4962 = vsel %vm4938, %v4957, %v4961
    %v4963 = vrot.slane %v4838, 6
    %v4964 = vsel %vm4938, %v4959, %v4963
    %v4965 = vrot.slane %v4839, 6
    %v4966 = vsel %vm4938, %v4961, %v4965
    %v4967 = vrot.slane %v4840, 6
    %v4968 = vsel %vm4938, %v4963, %v4967
    %v4969 = vrot.slane %v4841, 6
    %v4970 = vsel %vm4938, %v4965, %v4969
    %v4971 = vrot.slane %v4842, 6
    %v4972 = vsel %vm4938, %v4967, %v4971
    %v4973 = vrot.slane %v4843, 6
    %v4974 = vsel %vm4938, %v4969, %v4973
    %v4975 = vrot.slane %v4844, 6
    %v4976 = vsel %vm4938, %v4971, %v4975
    %v4997 = vpack.c.bf16 %v4807, %v4805
    %v4998 = vpack.c.bf16 %v4808, %v4806
    %v4999 = vpack.c.bf16 %v4867, %v4864
    %v5000 = vpack.c.bf16 %v4869, %v4865
    %v5001 = vpack.c.bf16 %v4942, %v4939
    %v5002 = vpack.c.bf16 %v4944, %v4940
    %v5003 = vpack.c.bf16 %v4811, %v4809
    %v5004 = vpack.c.bf16 %v4812, %v4810
    %v5005 = vpack.c.bf16 %v4875, %v4871
    %v5006 = vpack.c.bf16 %v4877, %v4873
    %v5007 = vpack.c.bf16 %v4950, %v4946
    %v5008 = vpack.c.bf16 %v4952, %v4948
    %v5009 = vpack.c.bf16 %v4815, %v4813
    %v5010 = vpack.c.bf16 %v4816, %v4814
    %v5011 = vpack.c.bf16 %v4883, %v4879
    %v5012 = vpack.c.bf16 %v4885, %v4881
    %v5013 = vpack.c.bf16 %v4958, %v4954
    %v5014 = vpack.c.bf16 %v4960, %v4956
    %v5015 = vpack.c.bf16 %v4819, %v4817
    %v5016 = vpack.c.bf16 %v4820, %v4818
    %v5017 = vpack.c.bf16 %v4891, %v4887
    %v5018 = vpack.c.bf16 %v4893, %v4889
    %v5019 = vpack.c.bf16 %v4966, %v4962
    %v5020 = vpack.c.bf16 %v4968, %v4964
    %v5021 = vpack.c.bf16 %v4823, %v4821
    %v5022 = vpack.c.bf16 %v4824, %v4822
    %v5023 = vpack.c.bf16 %v4894, %v4895
    %v5024 = vpack.c.bf16 %v4896, %v4897
    %v5025 = vpack.c.bf16 %v4974, %v4970
    %v5026 = vpack.c.bf16 %v4976, %v4972
    %v5027 = vld [vmem:[#allocation10] sm:$0xff]
    %v5028 = vld [vmem:[#allocation10 + $0x8] sm:$0xff]
    %v5029 = vld [vmem:[#allocation10 + $0x10] sm:$0xff]
    %v5030 = vld [vmem:[#allocation10 + $0x18] sm:$0xff]
    %v5031 = vld [vmem:[#allocation10 + $0x20] sm:$0xff]
    %v5032 = vld [vmem:[#allocation10 + $0x28] sm:$0xff]
    %v5033 = vld [vmem:[#allocation10 + $0x30] sm:$0xff]
    %v5034 = vld [vmem:[#allocation10 + $0x38] sm:$0xff]
    %v5035 = vld [vmem:[#allocation10 + $0x40] sm:$0xff]
    %v5036 = vld [vmem:[#allocation10 + $0x48] sm:$0xff]
    %v5037 = vld [vmem:[#allocation10 + $0x50] sm:$0xff]
    %v5038 = vld [vmem:[#allocation10 + $0x58] sm:$0xff]
    %v5039 = vld [vmem:[#allocation10 + $0x60] sm:$0xff]
    %v5040 = vld [vmem:[#allocation10 + $0x68] sm:$0xff]
    %v5041 = vld [vmem:[#allocation10 + $0x70] sm:$0xff]
    %v5042 = vld [vmem:[#allocation10 + $0x78] sm:$0xff]
    %v5043 = vld [vmem:[#allocation10 + $0x80] sm:$0xff]
    %v5044 = vld [vmem:[#allocation10 + $0x88] sm:$0xff]
    %v5045 = vld [vmem:[#allocation10 + $0x90] sm:$0xff]
    %v5046 = vld [vmem:[#allocation10 + $0x98] sm:$0xff]
    %v5047 = vld [vmem:[#allocation10 + $0xa0] sm:$0xff]
    %v5048 = vld [vmem:[#allocation10 + $0xa8] sm:$0xff]
    %v5049 = vld [vmem:[#allocation10 + $0xb0] sm:$0xff]
    %v5050 = vld [vmem:[#allocation10 + $0xb8] sm:$0xff]
    %v5051 = vld [vmem:[#allocation10 + $0xc0] sm:$0xff]
    %v5052 = vld [vmem:[#allocation10 + $0xc8] sm:$0xff]
    %v5053 = vld [vmem:[#allocation10 + $0xd0] sm:$0xff]
    %v5054 = vld [vmem:[#allocation10 + $0xd8] sm:$0xff]
    %v5055 = vld [vmem:[#allocation10 + $0xe0] sm:$0xff]
    %v5056 = vld [vmem:[#allocation10 + $0xe8] sm:$0xff]
    %v5057 = vld [vmem:[#allocation10 + $0xf0] sm:$0xff]
    %v5058 = vld [vmem:[#allocation10 + $0xf8] sm:$0xff]
    %v5059 = vld [vmem:[#allocation10 + $0x100] sm:$0xff]
    %v5060 = vld [vmem:[#allocation10 + $0x108] sm:$0xff]
    %v5061 = vld [vmem:[#allocation10 + $0x110] sm:$0xff]
    %v5062 = vld [vmem:[#allocation10 + $0x118] sm:$0xff]
    %v5063 = vld [vmem:[#allocation10 + $0x120] sm:$0xff]
    %v5064 = vld [vmem:[#allocation10 + $0x128] sm:$0xff]
    %v5065 = vld [vmem:[#allocation10 + $0x130] sm:$0xff]
    %v5066 = vld [vmem:[#allocation10 + $0x138] sm:$0xff]
    %v5067 = vld [vmem:[#allocation10 + $0x140] sm:$0xff]
    %v5068 = vld [vmem:[#allocation10 + $0x148] sm:$0xff]
    %v5069 = vld [vmem:[#allocation10 + $0x150] sm:$0xff]
    %v5070 = vld [vmem:[#allocation10 + $0x158] sm:$0xff]
    %v5071 = vld [vmem:[#allocation10 + $0x160] sm:$0xff]
    %v5072 = vld [vmem:[#allocation10 + $0x168] sm:$0xff]
    %v5073 = vld [vmem:[#allocation10 + $0x170] sm:$0xff]
    %v5074 = vld [vmem:[#allocation10 + $0x178] sm:$0xff]
    %v5075 = vld [vmem:[#allocation10 + $0x180] sm:$0xff]
    %v5076 = vld [vmem:[#allocation10 + $0x188] sm:$0xff]
    %v5077 = vld [vmem:[#allocation10 + $0x190] sm:$0xff]
    %v5078 = vld [vmem:[#allocation10 + $0x198] sm:$0xff]
    %v5079 = vld [vmem:[#allocation10 + $0x1a0] sm:$0xff]
    %v5080 = vld [vmem:[#allocation10 + $0x1a8] sm:$0xff]
    %v5081 = vld [vmem:[#allocation10 + $0x1b0] sm:$0xff]
    %v5082 = vld [vmem:[#allocation10 + $0x1b8] sm:$0xff]
    %v5083 = vld [vmem:[#allocation10 + $0x1c0] sm:$0xff]
    %v5084 = vld [vmem:[#allocation10 + $0x1c8] sm:$0xff]
    %v5085 = vld [vmem:[#allocation10 + $0x1d0] sm:$0xff]
    %v5086 = vld [vmem:[#allocation10 + $0x1d8] sm:$0xff]
    %v5087 = vld [vmem:[#allocation10 + $0x1e0] sm:$0xff]
    %v5088 = vld [vmem:[#allocation10 + $0x1e8] sm:$0xff]
    %v5089 = vld [vmem:[#allocation10 + $0x1f0] sm:$0xff]
    %v5090 = vld [vmem:[#allocation10 + $0x1f8] sm:$0xff]
    %v5091 = vld [vmem:[#allocation10 + $0x200] sm:$0xff]
    %v5092 = vld [vmem:[#allocation10 + $0x208] sm:$0xff]
    %v5093 = vld [vmem:[#allocation10 + $0x210] sm:$0xff]
    %v5094 = vld [vmem:[#allocation10 + $0x218] sm:$0xff]
    %v5095 = vld [vmem:[#allocation10 + $0x220] sm:$0xff]
    %v5096 = vld [vmem:[#allocation10 + $0x228] sm:$0xff]
    %v5097 = vld [vmem:[#allocation10 + $0x230] sm:$0xff]
    %v5098 = vld [vmem:[#allocation10 + $0x238] sm:$0xff]
    %v5099 = vld [vmem:[#allocation10 + $0x240] sm:$0xff]
    %v5100 = vld [vmem:[#allocation10 + $0x248] sm:$0xff]
    %v5101 = vld [vmem:[#allocation10 + $0x250] sm:$0xff]
    %v5102 = vld [vmem:[#allocation10 + $0x258] sm:$0xff]
    %v5103 = vld [vmem:[#allocation10 + $0x260] sm:$0xff]
    %v5104 = vld [vmem:[#allocation10 + $0x268] sm:$0xff]
    %v5105 = vld [vmem:[#allocation10 + $0x270] sm:$0xff]
    %v5106 = vld [vmem:[#allocation10 + $0x278] sm:$0xff]
    %v5107 = vld [vmem:[#allocation10 + $0x280] sm:$0xff]
    %v5108 = vld [vmem:[#allocation10 + $0x288] sm:$0xff]
    %v5109 = vld [vmem:[#allocation10 + $0x290] sm:$0xff]
    %v5110 = vld [vmem:[#allocation10 + $0x298] sm:$0xff]
    %v5111 = vld [vmem:[#allocation10 + $0x2a0] sm:$0xff]
    %v5112 = vld [vmem:[#allocation10 + $0x2a8] sm:$0xff]
    %v5113 = vld [vmem:[#allocation10 + $0x2b0] sm:$0xff]
    %v5114 = vld [vmem:[#allocation10 + $0x2b8] sm:$0xff]
    %v5115 = vld [vmem:[#allocation10 + $0x2c0] sm:$0xff]
    %v5116 = vld [vmem:[#allocation10 + $0x2c8] sm:$0xff]
    %v5117 = vld [vmem:[#allocation10 + $0x2d0] sm:$0xff]
    %v5118 = vld [vmem:[#allocation10 + $0x2d8] sm:$0xff]
    %v5119 = vld [vmem:[#allocation10 + $0x2e0] sm:$0xff]
    %v5120 = vld [vmem:[#allocation10 + $0x2e8] sm:$0xff]
    %v5121 = vld [vmem:[#allocation10 + $0x2f0] sm:$0xff]
    %v5122 = vld [vmem:[#allocation10 + $0x2f8] sm:$0xff]
    %vm5123 = vsmask.f32 5376
    %v5125 = vshrl.u32 %v4997, 16
    %v5127 = vrot.slane %v5125, 2
    %v5128 = vshll.u32 %v4997, 16
    %v5130 = vrot.slane %v5128, 3
    %v5131 = vor.u32 %v5127, %v5130
    %v5133 = vshrl.u32 %v5003, 16
    %v5135 = vrot.slane %v5133, 2
    %v5136 = vshll.u32 %v5003, 16
    %v5138 = vrot.slane %v5136, 3
    %v5139 = vor.u32 %v5135, %v5138
    %v5140 = vsel %vm5123, %v5131, %v5139
    %v5142 = vshrl.u32 %v4998, 16
    %v5144 = vrot.slane %v5142, 2
    %v5145 = vshll.u32 %v4998, 16
    %v5147 = vrot.slane %v5145, 3
    %v5148 = vor.u32 %v5144, %v5147
    %v5150 = vshrl.u32 %v5004, 16
    %v5152 = vrot.slane %v5150, 2
    %v5153 = vshll.u32 %v5004, 16
    %v5155 = vrot.slane %v5153, 3
    %v5156 = vor.u32 %v5152, %v5155
    %v5157 = vsel %vm5123, %v5148, %v5156
    %v5159 = vshrl.u32 %v4999, 16
    %v5161 = vrot.slane %v5159, 2
    %v5162 = vshll.u32 %v4999, 16
    %v5164 = vrot.slane %v5162, 3
    %v5165 = vor.u32 %v5161, %v5164
    %v5167 = vshrl.u32 %v5005, 16
    %v5169 = vrot.slane %v5167, 2
    %v5170 = vshll.u32 %v5005, 16
    %v5172 = vrot.slane %v5170, 3
    %v5173 = vor.u32 %v5169, %v5172
    %v5174 = vsel %vm5123, %v5165, %v5173
    %v5176 = vshrl.u32 %v5000, 16
    %v5178 = vrot.slane %v5176, 2
    %v5179 = vshll.u32 %v5000, 16
    %v5181 = vrot.slane %v5179, 3
    %v5182 = vor.u32 %v5178, %v5181
    %v5184 = vshrl.u32 %v5006, 16
    %v5186 = vrot.slane %v5184, 2
    %v5187 = vshll.u32 %v5006, 16
    %v5189 = vrot.slane %v5187, 3
    %v5190 = vor.u32 %v5186, %v5189
    %v5191 = vsel %vm5123, %v5182, %v5190
    %v5193 = vshrl.u32 %v5001, 16
    %v5195 = vrot.slane %v5193, 2
    %v5196 = vshll.u32 %v5001, 16
    %v5198 = vrot.slane %v5196, 3
    %v5199 = vor.u32 %v5195, %v5198
    %v5201 = vshrl.u32 %v5007, 16
    %v5203 = vrot.slane %v5201, 2
    %v5204 = vshll.u32 %v5007, 16
    %v5206 = vrot.slane %v5204, 3
    %v5207 = vor.u32 %v5203, %v5206
    %v5208 = vsel %vm5123, %v5199, %v5207
    %v5210 = vshrl.u32 %v5002, 16
    %v5212 = vrot.slane %v5210, 2
    %v5213 = vshll.u32 %v5002, 16
    %v5215 = vrot.slane %v5213, 3
    %v5216 = vor.u32 %v5212, %v5215
    %v5218 = vshrl.u32 %v5008, 16
    %v5220 = vrot.slane %v5218, 2
    %v5221 = vshll.u32 %v5008, 16
    %v5223 = vrot.slane %v5221, 3
    %v5224 = vor.u32 %v5220, %v5223
    %v5225 = vsel %vm5123, %v5216, %v5224
    %v5227 = vshrl.u32 %v5009, 16
    %v5229 = vrot.slane %v5227, 2
    %v5230 = vshll.u32 %v5009, 16
    %v5232 = vrot.slane %v5230, 3
    %v5233 = vor.u32 %v5229, %v5232
    %v5234 = vsel %vm5123, %v5139, %v5233
    %v5236 = vshrl.u32 %v5010, 16
    %v5238 = vrot.slane %v5236, 2
    %v5239 = vshll.u32 %v5010, 16
    %v5241 = vrot.slane %v5239, 3
    %v5242 = vor.u32 %v5238, %v5241
    %v5243 = vsel %vm5123, %v5156, %v5242
    %v5245 = vshrl.u32 %v5011, 16
    %v5247 = vrot.slane %v5245, 2
    %v5248 = vshll.u32 %v5011, 16
    %v5250 = vrot.slane %v5248, 3
    %v5251 = vor.u32 %v5247, %v5250
    %v5252 = vsel %vm5123, %v5173, %v5251
    %v5254 = vshrl.u32 %v5012, 16
    %v5256 = vrot.slane %v5254, 2
    %v5257 = vshll.u32 %v5012, 16
    %v5259 = vrot.slane %v5257, 3
    %v5260 = vor.u32 %v5256, %v5259
    %v5261 = vsel %vm5123, %v5190, %v5260
    %v5263 = vshrl.u32 %v5013, 16
    %v5265 = vrot.slane %v5263, 2
    %v5266 = vshll.u32 %v5013, 16
    %v5268 = vrot.slane %v5266, 3
    %v5269 = vor.u32 %v5265, %v5268
    %v5270 = vsel %vm5123, %v5207, %v5269
    %v5272 = vshrl.u32 %v5014, 16
    %v5274 = vrot.slane %v5272, 2
    %v5275 = vshll.u32 %v5014, 16
    %v5277 = vrot.slane %v5275, 3
    %v5278 = vor.u32 %v5274, %v5277
    %v5279 = vsel %vm5123, %v5224, %v5278
    %v5281 = vshrl.u32 %v5015, 16
    %v5283 = vrot.slane %v5281, 2
    %v5284 = vshll.u32 %v5015, 16
    %v5286 = vrot.slane %v5284, 3
    %v5287 = vor.u32 %v5283, %v5286
    %v5288 = vsel %vm5123, %v5233, %v5287
    %v5290 = vshrl.u32 %v5016, 16
    %v5292 = vrot.slane %v5290, 2
    %v5293 = vshll.u32 %v5016, 16
    %v5295 = vrot.slane %v5293, 3
    %v5296 = vor.u32 %v5292, %v5295
    %v5297 = vsel %vm5123, %v5242, %v5296
    %v5299 = vshrl.u32 %v5017, 16
    %v5301 = vrot.slane %v5299, 2
    %v5302 = vshll.u32 %v5017, 16
    %v5304 = vrot.slane %v5302, 3
    %v5305 = vor.u32 %v5301, %v5304
    %v5306 = vsel %vm5123, %v5251, %v5305
    %v5308 = vshrl.u32 %v5018, 16
    %v5310 = vrot.slane %v5308, 2
    %v5311 = vshll.u32 %v5018, 16
    %v5313 = vrot.slane %v5311, 3
    %v5314 = vor.u32 %v5310, %v5313
    %v5315 = vsel %vm5123, %v5260, %v5314
    %v5317 = vshrl.u32 %v5019, 16
    %v5319 = vrot.slane %v5317, 2
    %v5320 = vshll.u32 %v5019, 16
    %v5322 = vrot.slane %v5320, 3
    %v5323 = vor.u32 %v5319, %v5322
    %v5324 = vsel %vm5123, %v5269, %v5323
    %v5326 = vshrl.u32 %v5020, 16
    %v5328 = vrot.slane %v5326, 2
    %v5329 = vshll.u32 %v5020, 16
    %v5331 = vrot.slane %v5329, 3
    %v5332 = vor.u32 %v5328, %v5331
    %v5333 = vsel %vm5123, %v5278, %v5332
    %v5335 = vshrl.u32 %v5021, 16
    %v5337 = vrot.slane %v5335, 2
    %v5338 = vshll.u32 %v5021, 16
    %v5340 = vrot.slane %v5338, 3
    %v5341 = vor.u32 %v5337, %v5340
    %v5342 = vsel %vm5123, %v5287, %v5341
    %v5344 = vshrl.u32 %v5022, 16
    %v5346 = vrot.slane %v5344, 2
    %v5347 = vshll.u32 %v5022, 16
    %v5349 = vrot.slane %v5347, 3
    %v5350 = vor.u32 %v5346, %v5349
    %v5351 = vsel %vm5123, %v5296, %v5350
    %v5353 = vshrl.u32 %v5023, 16
    %v5355 = vrot.slane %v5353, 2
    %v5356 = vshll.u32 %v5023, 16
    %v5358 = vrot.slane %v5356, 3
    %v5359 = vor.u32 %v5355, %v5358
    %v5360 = vsel %vm5123, %v5305, %v5359
    %v5362 = vshrl.u32 %v5024, 16
    %v5364 = vrot.slane %v5362, 2
    %v5365 = vshll.u32 %v5024, 16
    %v5367 = vrot.slane %v5365, 3
    %v5368 = vor.u32 %v5364, %v5367
    %v5369 = vsel %vm5123, %v5314, %v5368
    %v5371 = vshrl.u32 %v5025, 16
    %v5373 = vrot.slane %v5371, 2
    %v5374 = vshll.u32 %v5025, 16
    %v5376 = vrot.slane %v5374, 3
    %v5377 = vor.u32 %v5373, %v5376
    %v5378 = vsel %vm5123, %v5323, %v5377
    %v5380 = vshrl.u32 %v5026, 16
    %v5382 = vrot.slane %v5380, 2
    %v5383 = vshll.u32 %v5026, 16
    %v5385 = vrot.slane %v5383, 3
    %v5386 = vor.u32 %v5382, %v5385
    %v5387 = vsel %vm5123, %v5332, %v5386
    %v5514 = vunpack.c.l.b16 %v5027
    %v5515 = vunpack.c.h.b16 %v5027
    %v5516 = vunpack.c.l.b16 %v5028
    %v5517 = vunpack.c.h.b16 %v5028
    %v5518 = vunpack.c.l.b16 %v5029
    %v5519 = vunpack.c.h.b16 %v5029
    %v5520 = vunpack.c.l.b16 %v5030
    %v5521 = vunpack.c.h.b16 %v5030
    %v5522 = vunpack.c.l.b16 %v5031
    %v5523 = vunpack.c.h.b16 %v5031
    %v5524 = vunpack.c.l.b16 %v5032
    %v5525 = vunpack.c.h.b16 %v5032
    %v5526 = vunpack.c.l.b16 %v5033
    %v5527 = vunpack.c.h.b16 %v5033
    %v5528 = vunpack.c.l.b16 %v5034
    %v5529 = vunpack.c.h.b16 %v5034
    %v5530 = vunpack.c.l.b16 %v5035
    %v5531 = vunpack.c.h.b16 %v5035
    %v5532 = vunpack.c.l.b16 %v5036
    %v5533 = vunpack.c.h.b16 %v5036
    %v5534 = vunpack.c.l.b16 %v5037
    %v5535 = vunpack.c.h.b16 %v5037
    %v5536 = vunpack.c.l.b16 %v5038
    %v5537 = vunpack.c.h.b16 %v5038
    %v5538 = vunpack.c.l.b16 %v5039
    %v5539 = vunpack.c.h.b16 %v5039
    %v5540 = vunpack.c.l.b16 %v5040
    %v5541 = vunpack.c.h.b16 %v5040
    %v5542 = vunpack.c.l.b16 %v5041
    %v5543 = vunpack.c.h.b16 %v5041
    %v5544 = vunpack.c.l.b16 %v5042
    %v5545 = vunpack.c.h.b16 %v5042
    %v5546 = vunpack.c.l.b16 %v5043
    %v5547 = vunpack.c.h.b16 %v5043
    %v5548 = vunpack.c.l.b16 %v5044
    %v5549 = vunpack.c.h.b16 %v5044
    %v5550 = vunpack.c.l.b16 %v5045
    %v5551 = vunpack.c.h.b16 %v5045
    %v5552 = vunpack.c.l.b16 %v5046
    %v5553 = vunpack.c.h.b16 %v5046
    %v5554 = vunpack.c.l.b16 %v5047
    %v5555 = vunpack.c.h.b16 %v5047
    %v5556 = vunpack.c.l.b16 %v5048
    %v5557 = vunpack.c.h.b16 %v5048
    %v5558 = vunpack.c.l.b16 %v5049
    %v5559 = vunpack.c.h.b16 %v5049
    %v5560 = vunpack.c.l.b16 %v5050
    %v5561 = vunpack.c.h.b16 %v5050
    %v5562 = vunpack.c.l.b16 %v5051
    %v5563 = vunpack.c.h.b16 %v5051
    %v5564 = vunpack.c.l.b16 %v5052
    %v5565 = vunpack.c.h.b16 %v5052
    %v5566 = vunpack.c.l.b16 %v5053
    %v5567 = vunpack.c.h.b16 %v5053
    %v5568 = vunpack.c.l.b16 %v5054
    %v5569 = vunpack.c.h.b16 %v5054
    %v5570 = vunpack.c.l.b16 %v5055
    %v5571 = vunpack.c.h.b16 %v5055
    %v5572 = vunpack.c.l.b16 %v5056
    %v5573 = vunpack.c.h.b16 %v5056
    %v5574 = vunpack.c.l.b16 %v5057
    %v5575 = vunpack.c.h.b16 %v5057
    %v5576 = vunpack.c.l.b16 %v5058
    %v5577 = vunpack.c.h.b16 %v5058
    %v5578 = vunpack.c.l.b16 %v5059
    %v5579 = vunpack.c.h.b16 %v5059
    %v5580 = vunpack.c.l.b16 %v5060
    %v5581 = vunpack.c.h.b16 %v5060
    %v5582 = vunpack.c.l.b16 %v5061
    %v5583 = vunpack.c.h.b16 %v5061
    %v5584 = vunpack.c.l.b16 %v5062
    %v5585 = vunpack.c.h.b16 %v5062
    %v5586 = vunpack.c.l.b16 %v5063
    %v5587 = vunpack.c.h.b16 %v5063
    %v5588 = vunpack.c.l.b16 %v5064
    %v5589 = vunpack.c.h.b16 %v5064
    %v5590 = vunpack.c.l.b16 %v5065
    %v5591 = vunpack.c.h.b16 %v5065
    %v5592 = vunpack.c.l.b16 %v5066
    %v5593 = vunpack.c.h.b16 %v5066
    %v5594 = vunpack.c.l.b16 %v5067
    %v5595 = vunpack.c.h.b16 %v5067
    %v5596 = vunpack.c.l.b16 %v5068
    %v5597 = vunpack.c.h.b16 %v5068
    %v5598 = vunpack.c.l.b16 %v5069
    %v5599 = vunpack.c.h.b16 %v5069
    %v5600 = vunpack.c.l.b16 %v5070
    %v5601 = vunpack.c.h.b16 %v5070
    %v5602 = vunpack.c.l.b16 %v5071
    %v5603 = vunpack.c.h.b16 %v5071
    %v5604 = vunpack.c.l.b16 %v5072
    %v5605 = vunpack.c.h.b16 %v5072
    %v5606 = vunpack.c.l.b16 %v5073
    %v5607 = vunpack.c.h.b16 %v5073
    %v5608 = vunpack.c.l.b16 %v5074
    %v5609 = vunpack.c.h.b16 %v5074
    %v5610 = vunpack.c.l.b16 %v5075
    %v5611 = vunpack.c.h.b16 %v5075
    %v5612 = vunpack.c.l.b16 %v5076
    %v5613 = vunpack.c.h.b16 %v5076
    %v5614 = vunpack.c.l.b16 %v5077
    %v5615 = vunpack.c.h.b16 %v5077
    %v5616 = vunpack.c.l.b16 %v5078
    %v5617 = vunpack.c.h.b16 %v5078
    %v5618 = vunpack.c.l.b16 %v5079
    %v5619 = vunpack.c.h.b16 %v5079
    %v5620 = vunpack.c.l.b16 %v5080
    %v5621 = vunpack.c.h.b16 %v5080
    %v5622 = vunpack.c.l.b16 %v5081
    %v5623 = vunpack.c.h.b16 %v5081
    %v5624 = vunpack.c.l.b16 %v5082
    %v5625 = vunpack.c.h.b16 %v5082
    %v5626 = vunpack.c.l.b16 %v5083
    %v5627 = vunpack.c.h.b16 %v5083
    %v5628 = vunpack.c.l.b16 %v5084
    %v5629 = vunpack.c.h.b16 %v5084
    %v5630 = vunpack.c.l.b16 %v5085
    %v5631 = vunpack.c.h.b16 %v5085
    %v5632 = vunpack.c.l.b16 %v5086
    %v5633 = vunpack.c.h.b16 %v5086
    %v5634 = vunpack.c.l.b16 %v5087
    %v5635 = vunpack.c.h.b16 %v5087
    %v5636 = vunpack.c.l.b16 %v5088
    %v5637 = vunpack.c.h.b16 %v5088
    %v5638 = vunpack.c.l.b16 %v5089
    %v5639 = vunpack.c.h.b16 %v5089
    %v5640 = vunpack.c.l.b16 %v5090
    %v5641 = vunpack.c.h.b16 %v5090
    %v5642 = vunpack.c.l.b16 %v5091
    %v5643 = vunpack.c.h.b16 %v5091
    %v5644 = vunpack.c.l.b16 %v5092
    %v5645 = vunpack.c.h.b16 %v5092
    %v5646 = vunpack.c.l.b16 %v5093
    %v5647 = vunpack.c.h.b16 %v5093
    %v5648 = vunpack.c.l.b16 %v5094
    %v5649 = vunpack.c.h.b16 %v5094
    %v5650 = vunpack.c.l.b16 %v5095
    %v5651 = vunpack.c.h.b16 %v5095
    %v5652 = vunpack.c.l.b16 %v5096
    %v5653 = vunpack.c.h.b16 %v5096
    %v5654 = vunpack.c.l.b16 %v5097
    %v5655 = vunpack.c.h.b16 %v5097
    %v5656 = vunpack.c.l.b16 %v5098
    %v5657 = vunpack.c.h.b16 %v5098
    %v5658 = vunpack.c.l.b16 %v5099
    %v5659 = vunpack.c.h.b16 %v5099
    %v5660 = vunpack.c.l.b16 %v5100
    %v5661 = vunpack.c.h.b16 %v5100
    %v5662 = vunpack.c.l.b16 %v5101
    %v5663 = vunpack.c.h.b16 %v5101
    %v5664 = vunpack.c.l.b16 %v5102
    %v5665 = vunpack.c.h.b16 %v5102
    %v5666 = vunpack.c.l.b16 %v5103
    %v5667 = vunpack.c.h.b16 %v5103
    %v5668 = vunpack.c.l.b16 %v5104
    %v5669 = vunpack.c.h.b16 %v5104
    %v5670 = vunpack.c.l.b16 %v5105
    %v5671 = vunpack.c.h.b16 %v5105
    %v5672 = vunpack.c.l.b16 %v5106
    %v5673 = vunpack.c.h.b16 %v5106
    %v5674 = vunpack.c.l.b16 %v5107
    %v5675 = vunpack.c.h.b16 %v5107
    %v5676 = vunpack.c.l.b16 %v5108
    %v5677 = vunpack.c.h.b16 %v5108
    %v5678 = vunpack.c.l.b16 %v5109
    %v5679 = vunpack.c.h.b16 %v5109
    %v5680 = vunpack.c.l.b16 %v5110
    %v5681 = vunpack.c.h.b16 %v5110
    %v5682 = vunpack.c.l.b16 %v5111
    %v5683 = vunpack.c.h.b16 %v5111
    %v5684 = vunpack.c.l.b16 %v5112
    %v5685 = vunpack.c.h.b16 %v5112
    %v5686 = vunpack.c.l.b16 %v5113
    %v5687 = vunpack.c.h.b16 %v5113
    %v5688 = vunpack.c.l.b16 %v5114
    %v5689 = vunpack.c.h.b16 %v5114
    %v5690 = vunpack.c.l.b16 %v5115
    %v5691 = vunpack.c.h.b16 %v5115
    %v5692 = vunpack.c.l.b16 %v5116
    %v5693 = vunpack.c.h.b16 %v5116
    %v5694 = vunpack.c.l.b16 %v5117
    %v5695 = vunpack.c.h.b16 %v5117
    %v5696 = vunpack.c.l.b16 %v5118
    %v5697 = vunpack.c.h.b16 %v5118
    %v5698 = vunpack.c.l.b16 %v5119
    %v5699 = vunpack.c.h.b16 %v5119
    %v5700 = vunpack.c.l.b16 %v5120
    %v5701 = vunpack.c.h.b16 %v5120
    %v5702 = vunpack.c.l.b16 %v5121
    %v5703 = vunpack.c.h.b16 %v5121
    %v5704 = vunpack.c.l.b16 %v5122
    %v5705 = vunpack.c.h.b16 %v5122
    %v5706 = vpack.c.b16 %v5516, %v5514
    %v5707 = vpack.c.b16 %v5517, %v5515
    %v5708 = vpack.c.b16 %v5520, %v5518
    %v5709 = vpack.c.b16 %v5521, %v5519
    %v5710 = vpack.c.b16 %v5524, %v5522
    %v5711 = vpack.c.b16 %v5525, %v5523
    %v5712 = vpack.c.b16 %v5528, %v5526
    %v5713 = vpack.c.b16 %v5529, %v5527
    %v5714 = vpack.c.b16 %v5532, %v5530
    %v5715 = vpack.c.b16 %v5533, %v5531
    %v5716 = vpack.c.b16 %v5536, %v5534
    %v5717 = vpack.c.b16 %v5537, %v5535
    %v5718 = vpack.c.b16 %v5540, %v5538
    %v5719 = vpack.c.b16 %v5541, %v5539
    %v5720 = vpack.c.b16 %v5544, %v5542
    %v5721 = vpack.c.b16 %v5545, %v5543
    %v5722 = vpack.c.b16 %v5548, %v5546
    %v5723 = vpack.c.b16 %v5549, %v5547
    %v5724 = vpack.c.b16 %v5552, %v5550
    %v5725 = vpack.c.b16 %v5553, %v5551
    %v5726 = vpack.c.b16 %v5556, %v5554
    %v5727 = vpack.c.b16 %v5557, %v5555
    %v5728 = vpack.c.b16 %v5560, %v5558
    %v5729 = vpack.c.b16 %v5561, %v5559
    %v5730 = vpack.c.b16 %v5564, %v5562
    %v5731 = vpack.c.b16 %v5565, %v5563
    %v5732 = vpack.c.b16 %v5568, %v5566
    %v5733 = vpack.c.b16 %v5569, %v5567
    %v5734 = vpack.c.b16 %v5572, %v5570
    %v5735 = vpack.c.b16 %v5573, %v5571
    %v5736 = vpack.c.b16 %v5576, %v5574
    %v5737 = vpack.c.b16 %v5577, %v5575
    %v5738 = vpack.c.b16 %v5580, %v5578
    %v5739 = vpack.c.b16 %v5581, %v5579
    %v5740 = vpack.c.b16 %v5584, %v5582
    %v5741 = vpack.c.b16 %v5585, %v5583
    %v5742 = vpack.c.b16 %v5588, %v5586
    %v5743 = vpack.c.b16 %v5589, %v5587
    %v5744 = vpack.c.b16 %v5592, %v5590
    %v5745 = vpack.c.b16 %v5593, %v5591
    %v5746 = vpack.c.b16 %v5596, %v5594
    %v5747 = vpack.c.b16 %v5597, %v5595
    %v5748 = vpack.c.b16 %v5600, %v5598
    %v5749 = vpack.c.b16 %v5601, %v5599
    %v5750 = vpack.c.b16 %v5604, %v5602
    %v5751 = vpack.c.b16 %v5605, %v5603
    %v5752 = vpack.c.b16 %v5608, %v5606
    %v5753 = vpack.c.b16 %v5609, %v5607
    %v5754 = vpack.c.b16 %v5612, %v5610
    %v5755 = vpack.c.b16 %v5613, %v5611
    %v5756 = vpack.c.b16 %v5616, %v5614
    %v5757 = vpack.c.b16 %v5617, %v5615
    %v5758 = vpack.c.b16 %v5620, %v5618
    %v5759 = vpack.c.b16 %v5621, %v5619
    %v5760 = vpack.c.b16 %v5624, %v5622
    %v5761 = vpack.c.b16 %v5625, %v5623
    %v5762 = vpack.c.b16 %v5628, %v5626
    %v5763 = vpack.c.b16 %v5629, %v5627
    %v5764 = vpack.c.b16 %v5632, %v5630
    %v5765 = vpack.c.b16 %v5633, %v5631
    %v5766 = vpack.c.b16 %v5636, %v5634
    %v5767 = vpack.c.b16 %v5637, %v5635
    %v5768 = vpack.c.b16 %v5640, %v5638
    %v5769 = vpack.c.b16 %v5641, %v5639
    %v5770 = vpack.c.b16 %v5644, %v5642
    %v5771 = vpack.c.b16 %v5645, %v5643
    %v5772 = vpack.c.b16 %v5648, %v5646
    %v5773 = vpack.c.b16 %v5649, %v5647
    %v5774 = vpack.c.b16 %v5652, %v5650
    %v5775 = vpack.c.b16 %v5653, %v5651
    %v5776 = vpack.c.b16 %v5656, %v5654
    %v5777 = vpack.c.b16 %v5657, %v5655
    %v5778 = vpack.c.b16 %v5660, %v5658
    %v5779 = vpack.c.b16 %v5661, %v5659
    %v5780 = vpack.c.b16 %v5664, %v5662
    %v5781 = vpack.c.b16 %v5665, %v5663
    %v5782 = vpack.c.b16 %v5668, %v5666
    %v5783 = vpack.c.b16 %v5669, %v5667
    %v5784 = vpack.c.b16 %v5672, %v5670
    %v5785 = vpack.c.b16 %v5673, %v5671
    %v5786 = vpack.c.b16 %v5676, %v5674
    %v5787 = vpack.c.b16 %v5677, %v5675
    %v5788 = vpack.c.b16 %v5680, %v5678
    %v5789 = vpack.c.b16 %v5681, %v5679
    %v5790 = vpack.c.b16 %v5684, %v5682
    %v5791 = vpack.c.b16 %v5685, %v5683
    %v5792 = vpack.c.b16 %v5688, %v5686
    %v5793 = vpack.c.b16 %v5689, %v5687
    %v5794 = vpack.c.b16 %v5692, %v5690
    %v5795 = vpack.c.b16 %v5693, %v5691
    %v5796 = vpack.c.b16 %v5696, %v5694
    %v5797 = vpack.c.b16 %v5697, %v5695
    %v5798 = vpack.c.b16 %v5700, %v5698
    %v5799 = vpack.c.b16 %v5701, %v5699
    %v5800 = vpack.c.b16 %v5704, %v5702
    %v5801 = vpack.c.b16 %v5705, %v5703
    %5898 = vmatprep.subr.bf16.mxu0 %v5707
    %5899 = vmatpush1.bf16.msra.mxu0 %v5706
    %5900 = vmatprep.subr.bf16.mxu0 %v5709
    %5901 = vmatpush1.bf16.msra.mxu0 %v5708
    %5902 = vmatprep.subr.bf16.mxu0 %v5711
    %5903 = vmatpush1.bf16.msra.mxu0 %v5710
    %5904 = vmatprep.subr.bf16.mxu0 %v5713
    %5905 = vmatpush1.bf16.msra.mxu0 %v5712
    %5906 = vmatprep.subr.bf16.mxu0 %v5715
    %5907 = vmatpush1.bf16.msra.mxu0 %v5714
    %5908 = vmatprep.subr.bf16.mxu0 %v5717
    %5909 = vmatpush1.bf16.msra.mxu0 %v5716
    %5910 = vmatprep.subr.bf16.mxu0 %v5719
    %5911 = vmatpush1.bf16.msra.mxu0 %v5718
    %5912 = vmatprep.subr.bf16.mxu0 %v5721
    %5913 = vmatpush1.bf16.msra.mxu0 %v5720
    %5914 = vmatprep.subr.bf16.mxu0 %v5723
    %5915 = vmatpush1.bf16.msra.mxu0 %v5722
    %5916 = vmatprep.subr.bf16.mxu0 %v5725
    %5917 = vmatpush1.bf16.msra.mxu0 %v5724
    %5918 = vmatprep.subr.bf16.mxu0 %v5727
    %5919 = vmatpush1.bf16.msra.mxu0 %v5726
    %5920 = vmatprep.subr.bf16.mxu0 %v5729
    %5921 = vmatpush1.bf16.msra.mxu0 %v5728
    %5922 = vmatprep.subr.bf16.mxu0 %v5731
    %5923 = vmatpush1.bf16.msra.mxu0 %v5730
    %5924 = vmatprep.subr.bf16.mxu0 %v5733
    %5925 = vmatpush1.bf16.msra.mxu0 %v5732
    %5926 = vmatprep.subr.bf16.mxu0 %v5735
    %5927 = vmatpush1.bf16.msra.mxu0 %v5734
    %5928 = vmatprep.subr.bf16.mxu0 %v5737
    %5929 = vmatpush1.bf16.msra.mxu0 %v5736
    %5930 = vmatprep.mubr.bf16.mxu0 %v5157
    %5931 = vmatmul.mubr.bf16.gmra.mrb[0].mxu0 %v5140
    %v5932 = vpop.f32.mrb[0].mxu0
    %v5933 = vadd.f32 %v3378, %v5932
    %v5934 = vpop.f32.mrb[0].mxu0
    %v5935 = vadd.f32 %v3380, %v5934
    %v5936 = vpop.f32.mrb[0].mxu0
    %v5937 = vadd.f32 %v3382, %v5936
    %v5938 = vpop.f32.mrb[0].mxu0
    %v5939 = vadd.f32 %v3384, %v5938
    %5940 = vmatprep.mubr.bf16.mxu0 %v5243
    %5941 = vmatmul.mubr.bf16.gmra.mrb[0].mxu0 %v5234
    %v5942 = vpop.f32.mrb[0].mxu0
    %v5943 = vadd.f32 %v3388, %v5942
    %v5944 = vpop.f32.mrb[0].mxu0
    %v5945 = vadd.f32 %v3390, %v5944
    %v5946 = vpop.f32.mrb[0].mxu0
    %v5947 = vadd.f32 %v3392, %v5946
    %v5948 = vpop.f32.mrb[0].mxu0
    %v5949 = vadd.f32 %v3394, %v5948
    %5950 = vmatprep.mubr.bf16.mxu0 %v5297
    %5951 = vmatmul.mubr.bf16.gmra.mrb[0].mxu0 %v5288
    %v5952 = vpop.f32.mrb[0].mxu0
    %v5953 = vpop.f32.mrb[0].mxu0
    %v5954 = vpop.f32.mrb[0].mxu0
    %v5955 = vadd.f32 %v3400, %v5954
    %v5956 = vpop.f32.mrb[0].mxu0
    %v5957 = vadd.f32 %v3402, %v5956
    %5958 = vmatprep.mubr.bf16.mxu0 %v5351
    %5959 = vmatmul.mubr.bf16.gmra.mrb[0].mxu0 %v5342
    %v5960 = vpop.f32.mrb[0].mxu0
    %v5961 = vadd.f32 %v3406, %v5960
    %v5962 = vpop.f32.mrb[0].mxu0
    %v5963 = vadd.f32 %v3408, %v5962
    %v5964 = vpop.f32.mrb[0].mxu0
    %v5965 = vadd.f32 %v3410, %v5964
    %v5966 = vpop.f32.mrb[0].mxu0
    %v5967 = vadd.f32 %v3412, %v5966
    %5968 = vmatprep.mubr.bf16.mxu0 %v5350
    %5969 = vmatmul.mubr.bf16.gmra.mrb[0].mxu0 %v5341
    %v5970 = vpop.f32.mrb[0].mxu0
    %v5971 = vadd.f32 %v3416, %v5970
    %v5972 = vpop.f32.mrb[0].mxu0
    %v5973 = vadd.f32 %v3418, %v5972
    %v5974 = vpop.f32.mrb[0].mxu0
    %v5975 = vpop.f32.mrb[0].mxu0
    %5976 = vdwg.mxu0
    %5977 = vmatprep.subr.bf16.mxu0 %v5739
    %5978 = vmatpush1.bf16.msra.mxu0 %v5738
    %5979 = vmatprep.subr.bf16.mxu0 %v5741
    %5980 = vmatpush1.bf16.msra.mxu0 %v5740
    %5981 = vmatprep.subr.bf16.mxu0 %v5743
    %5982 = vmatpush1.bf16.msra.mxu0 %v5742
    %5983 = vmatprep.subr.bf16.mxu0 %v5745
    %5984 = vmatpush1.bf16.msra.mxu0 %v5744
    %5985 = vmatprep.subr.bf16.mxu0 %v5747
    %5986 = vmatpush1.bf16.msra.mxu0 %v5746
    %5987 = vmatprep.subr.bf16.mxu0 %v5749
    %5988 = vmatpush1.bf16.msra.mxu0 %v5748
    %5989 = vmatprep.subr.bf16.mxu0 %v5751
    %5990 = vmatpush1.bf16.msra.mxu0 %v5750
    %5991 = vmatprep.subr.bf16.mxu0 %v5753
    %5992 = vmatpush1.bf16.msra.mxu0 %v5752
    %5993 = vmatprep.subr.bf16.mxu0 %v5755
    %5994 = vmatpush1.bf16.msra.mxu0 %v5754
    %5995 = vmatprep.subr.bf16.mxu0 %v5757
    %5996 = vmatpush1.bf16.msra.mxu0 %v5756
    %5997 = vmatprep.subr.bf16.mxu0 %v5759
    %5998 = vmatpush1.bf16.msra.mxu0 %v5758
    %5999 = vmatprep.subr.bf16.mxu0 %v5761
    %6000 = vmatpush1.bf16.msra.mxu0 %v5760
    %6001 = vmatprep.subr.bf16.mxu0 %v5763
    %6002 = vmatpush1.bf16.msra.mxu0 %v5762
    %6003 = vmatprep.subr.bf16.mxu0 %v5765
    %6004 = vmatpush1.bf16.msra.mxu0 %v5764
    %6005 = vmatprep.subr.bf16.mxu0 %v5767
    %6006 = vmatpush1.bf16.msra.mxu0 %v5766
    %6007 = vmatprep.subr.bf16.mxu0 %v5769
    %6008 = vmatpush1.bf16.msra.mxu0 %v5768
    %6009 = vmatprep.mubr.bf16.mxu0 %v5191
    %6010 = vmatmul.mubr.bf16.gmra.mrb[0].mxu0 %v5174
    %v6011 = vpop.f32.mrb[0].mxu0
    %v6012 = vadd.f32 %v5933, %v6011
    %v6013 = vpop.f32.mrb[0].mxu0
    %v6014 = vadd.f32 %v5935, %v6013
    %v6015 = vpop.f32.mrb[0].mxu0
    %v6016 = vadd.f32 %v5937, %v6015
    %v6017 = vpop.f32.mrb[0].mxu0
    %v6018 = vadd.f32 %v5939, %v6017
    %6019 = vmatprep.mubr.bf16.mxu0 %v5261
    %6020 = vmatmul.mubr.bf16.gmra.mrb[0].mxu0 %v5252
    %v6021 = vpop.f32.mrb[0].mxu0
    %v6022 = vadd.f32 %v5943, %v6021
    %v6023 = vpop.f32.mrb[0].mxu0
    %v6024 = vadd.f32 %v5945, %v6023
    %v6025 = vpop.f32.mrb[0].mxu0
    %v6026 = vadd.f32 %v5947, %v6025
    %v6027 = vpop.f32.mrb[0].mxu0
    %v6028 = vadd.f32 %v5949, %v6027
    %6029 = vmatprep.mubr.bf16.mxu0 %v5315
    %6030 = vmatmul.mubr.bf16.gmra.mrb[0].mxu0 %v5306
    %v6031 = vpop.f32.mrb[0].mxu0
    %v6032 = vpop.f32.mrb[0].mxu0
    %v6033 = vpop.f32.mrb[0].mxu0
    %v6034 = vadd.f32 %v5955, %v6033
    %v6035 = vpop.f32.mrb[0].mxu0
    %v6036 = vadd.f32 %v5957, %v6035
    %6037 = vmatprep.mubr.bf16.mxu0 %v5369
    %6038 = vmatmul.mubr.bf16.gmra.mrb[0].mxu0 %v5360
    %v6039 = vpop.f32.mrb[0].mxu0
    %v6040 = vadd.f32 %v5961, %v6039
    %v6041 = vpop.f32.mrb[0].mxu0
    %v6042 = vadd.f32 %v5963, %v6041
    %v6043 = vpop.f32.mrb[0].mxu0
    %v6044 = vadd.f32 %v5965, %v6043
    %v6045 = vpop.f32.mrb[0].mxu0
    %v6046 = vadd.f32 %v5967, %v6045
    %6047 = vmatprep.mubr.bf16.mxu0 %v5368
    %6048 = vmatmul.mubr.bf16.gmra.mrb[0].mxu0 %v5359
    %v6049 = vpop.f32.mrb[0].mxu0
    %v6050 = vadd.f32 %v5971, %v6049
    %v6051 = vpop.f32.mrb[0].mxu0
    %v6052 = vadd.f32 %v5973, %v6051
    %v6053 = vpop.f32.mrb[0].mxu0
    %v6054 = vpop.f32.mrb[0].mxu0
    %6055 = vdwg.mxu0
    %6056 = vmatprep.subr.bf16.mxu0 %v5771
    %6057 = vmatpush1.bf16.msra.mxu0 %v5770
    %6058 = vmatprep.subr.bf16.mxu0 %v5773
    %6059 = vmatpush1.bf16.msra.mxu0 %v5772
    %6060 = vmatprep.subr.bf16.mxu0 %v5775
    %6061 = vmatpush1.bf16.msra.mxu0 %v5774
    %6062 = vmatprep.subr.bf16.mxu0 %v5777
    %6063 = vmatpush1.bf16.msra.mxu0 %v5776
    %6064 = vmatprep.subr.bf16.mxu0 %v5779
    %6065 = vmatpush1.bf16.msra.mxu0 %v5778
    %6066 = vmatprep.subr.bf16.mxu0 %v5781
    %6067 = vmatpush1.bf16.msra.mxu0 %v5780
    %6068 = vmatprep.subr.bf16.mxu0 %v5783
    %6069 = vmatpush1.bf16.msra.mxu0 %v5782
    %6070 = vmatprep.subr.bf16.mxu0 %v5785
    %6071 = vmatpush1.bf16.msra.mxu0 %v5784
    %6072 = vmatprep.subr.bf16.mxu0 %v5787
    %6073 = vmatpush1.bf16.msra.mxu0 %v5786
    %6074 = vmatprep.subr.bf16.mxu0 %v5789
    %6075 = vmatpush1.bf16.msra.mxu0 %v5788
    %6076 = vmatprep.subr.bf16.mxu0 %v5791
    %6077 = vmatpush1.bf16.msra.mxu0 %v5790
    %6078 = vmatprep.subr.bf16.mxu0 %v5793
    %6079 = vmatpush1.bf16.msra.mxu0 %v5792
    %6080 = vmatprep.subr.bf16.mxu0 %v5795
    %6081 = vmatpush1.bf16.msra.mxu0 %v5794
    %6082 = vmatprep.subr.bf16.mxu0 %v5797
    %6083 = vmatpush1.bf16.msra.mxu0 %v5796
    %6084 = vmatprep.subr.bf16.mxu0 %v5799
    %6085 = vmatpush1.bf16.msra.mxu0 %v5798
    %6086 = vmatprep.subr.bf16.mxu0 %v5801
    %6087 = vmatpush1.bf16.msra.mxu0 %v5800
    %6088 = vmatprep.mubr.bf16.mxu0 %v5225
    %6089 = vmatmul.mubr.bf16.gmra.mrb[0].mxu0 %v5208
    %v6090 = vpop.f32.mrb[0].mxu0
    %v6091 = vadd.f32 %v6012, %v6090
    %v6092 = vpop.f32.mrb[0].mxu0
    %v6093 = vadd.f32 %v6014, %v6092
    %v6094 = vpop.f32.mrb[0].mxu0
    %v6095 = vadd.f32 %v6016, %v6094
    %v6096 = vpop.f32.mrb[0].mxu0
    %v6097 = vadd.f32 %v6018, %v6096
    %6098 = vmatprep.mubr.bf16.mxu0 %v5279
    %6099 = vmatmul.mubr.bf16.gmra.mrb[0].mxu0 %v5270
    %v6100 = vpop.f32.mrb[0].mxu0
    %v6101 = vadd.f32 %v6022, %v6100
    %v6102 = vpop.f32.mrb[0].mxu0
    %v6103 = vadd.f32 %v6024, %v6102
    %v6104 = vpop.f32.mrb[0].mxu0
    %v6105 = vadd.f32 %v6026, %v6104
    %v6106 = vpop.f32.mrb[0].mxu0
    %v6107 = vadd.f32 %v6028, %v6106
    %6108 = vmatprep.mubr.bf16.mxu0 %v5333
    %6109 = vmatmul.mubr.bf16.gmra.mrb[0].mxu0 %v5324
    %v6110 = vpop.f32.mrb[0].mxu0
    %v6111 = vpop.f32.mrb[0].mxu0
    %v6112 = vpop.f32.mrb[0].mxu0
    %v6113 = vadd.f32 %v6034, %v6112
    %v6114 = vpop.f32.mrb[0].mxu0
    %v6115 = vadd.f32 %v6036, %v6114
    %6116 = vmatprep.mubr.bf16.mxu0 %v5387
    %6117 = vmatmul.mubr.bf16.gmra.mrb[0].mxu0 %v5378
    %v6118 = vpop.f32.mrb[0].mxu0
    %v6119 = vadd.f32 %v6040, %v6118
    %v6120 = vpop.f32.mrb[0].mxu0
    %v6121 = vadd.f32 %v6042, %v6120
    %v6122 = vpop.f32.mrb[0].mxu0
    %v6123 = vadd.f32 %v6044, %v6122
    %v6124 = vpop.f32.mrb[0].mxu0
    %v6125 = vadd.f32 %v6046, %v6124
    %6126 = vmatprep.mubr.bf16.mxu0 %v5386
    %6127 = vmatmul.mubr.bf16.gmra.mrb[0].mxu0 %v5377
    %v6128 = vpop.f32.mrb[0].mxu0
    %v6129 = vadd.f32 %v6050, %v6128
    %v6130 = vpop.f32.mrb[0].mxu0
    %v6131 = vadd.f32 %v6052, %v6130
    %v6132 = vpop.f32.mrb[0].mxu0
    %v6133 = vpop.f32.mrb[0].mxu0
    %6134 = vdwg.mxu0
    %v6135 = vld [vmem:[%s14] sm:$0x3]
    %v6137 = vlaneseq
    %v6138 = vshrl.u32 %v6137, 7
    %v6139 = vsub.s32 0, %v6138
    %v6140 = vrot.slane %v6135, %v6139
    %v6141 = vlaneseq
    %v6142 = vshrl.u32 %v6141, 7
    %v6143 = vsub.s32 1, %v6142
    %v6144 = vrot.slane %v6135, %v6143
    %v6147 = vadd.f32 %v6091, %v6140
    %v6148 = vadd.f32 %v6093, %v6144
    %v6149 = vadd.f32 %v6095, %v6140
    %v6150 = vadd.f32 %v6097, %v6144
    %v6151 = vadd.f32 %v6101, %v6140
    %v6152 = vadd.f32 %v6103, %v6144
    %v6153 = vadd.f32 %v6105, %v6140
    %v6154 = vadd.f32 %v6107, %v6144
    %v6155 = vadd.f32 %v6113, %v6140
    %v6156 = vadd.f32 %v6115, %v6144
    %v6157 = vadd.f32 %v6119, %v6140
    %v6158 = vadd.f32 %v6121, %v6144
    %v6159 = vadd.f32 %v6123, %v6140
    %v6160 = vadd.f32 %v6125, %v6144
    %v6161 = vadd.f32 %v6129, %v6140
    %v6162 = vadd.f32 %v6131, %v6144
    %6163 = vst [vmem:[#allocation13] sm:$0xff] %v6147
    %6164 = vst [vmem:[#allocation13 + $0x8] sm:$0xff] %v6148
    %6165 = vst [vmem:[#allocation13 + $0x10] sm:$0xff] %v6149
    %6166 = vst [vmem:[#allocation13 + $0x18] sm:$0xff] %v6150
    %6167 = vst [vmem:[#allocation13 + $0x20] sm:$0xff] %v6151
    %6168 = vst [vmem:[#allocation13 + $0x28] sm:$0xff] %v6152
    %6169 = vst [vmem:[#allocation13 + $0x30] sm:$0xff] %v6153
    %6170 = vst [vmem:[#allocation13 + $0x38] sm:$0xff] %v6154
    %s6171 = scalar_lea.vmem [#allocation13], 64
    %6172 = vst [vmem:[%s6171] sm:$0xff] %v6155
    %6173 = vst [vmem:[%s6171 + $0x8] sm:$0xff] %v6156
    %6174 = vst [vmem:[%s6171 + $0x10] sm:$0xff] %v6157
    %6175 = vst [vmem:[%s6171 + $0x18] sm:$0xff] %v6158
    %6176 = vst [vmem:[%s6171 + $0x20] sm:$0xff] %v6159
    %6177 = vst [vmem:[%s6171 + $0x28] sm:$0xff] %v6160
    %6178 = vst [vmem:[%s6171 + $0x30] sm:$0xff] %v6161
    %6179 = vst [vmem:[%s6171 + $0x38] sm:$0xff] %v6162
    // Predicated region
    $region82: #{tpu_custom_call.1} parent=1 // pred_check
      _
    $region83: #{tpu_custom_call.1} parent=1 // pred_check_branch
      %6181 = sbr.rel (0) target = $region85
    $region84: #{tpu_custom_call.1} parent=1 // pred_region
      %s6183 = ssub.s32 2048, 2048
      %6184 = vsyncadd [#allocation6], %s6183
      %s6185 = sshll.u32 [#allocation13], 4
      %s6186 = int_to_ptr.vmem [resolvable:$true] %s6185
      %6191 = dma.vmem_to_hbm [thread:$0]  %s6186, 2048, %s15, [#allocation6], 256, 256, 16
    $region85: #{tpu_custom_call.1} parent=1 // pred_fallthru
      _
    // Predicated region
    $region86: #{tpu_custom_call.1} parent=1 // pred_check
      _
    $region87: #{tpu_custom_call.1} parent=1 // pred_check_branch
      %6193 = sbr.rel (0) target = $region89
    $region88: #{tpu_custom_call.1} parent=1 // pred_region
      %6194 = dma.done [#allocation6], 2048
    $region89: #{tpu_custom_call.1} parent=1 // pred_fallthru
      _
    %6195 = vsyncpa [#allocation5], 1
    %6196 = vsyncpa [#allocation8], 1
    %6197 = vsyncpa [#allocation11], 1
    %6198 = vsyncpa [#allocation6], 1

// kernel: tpu_custom_call.1
$region0: #{tpu_custom_call.1}
  #allocation0 [shape = 'u32[]', space=smem, size = 0x4, offset = 0x4, fixed_abs, tag = 'smem constant byte address 0x4 - core index']
  #allocation1 [shape = 'u32[144,128]{1,0:T(1,128)}', space=vmem, size = 0x12000, scoped, tag = 'internal scratch']
  #allocation2 [shape = 'f32[88,256]{1,0:T(8,128)}', space=vmem, size = 0x16000, scoped, tag = 'scratch operand']
  #allocation3 [shape = 'f32[88,256]{1,0:T(8,128)}', space=vmem, size = 0x16000, scoped, tag = 'scratch operand']
  %s0 = inlined_call_operand.vmem [shape: f32[2,16,128], index: 0, kind: input, shape index: {}]
  %s1 = inlined_call_operand.vmem [shape: bf16[72,32], index: 1, kind: input, shape index: {}]
  %s2 = inlined_call_operand.hbm [shape: bf16[128,256], index: 2, kind: input, shape index: {}]
  %s3 = inlined_call_operand.vmem [shape: f32[1,256], index: 3, kind: input, shape index: {}]
  %s4 = inlined_call_operand.vmem [shape: f32[1,256], index: 4, kind: input, shape index: {}]
  %s5 = inlined_call_operand.hbm [shape: bf16[768,256], index: 5, kind: input, shape index: {}]
  %s6 = inlined_call_operand.vmem [shape: f32[1,256], index: 6, kind: input, shape index: {}]
  %s7 = inlined_call_operand.vmem [shape: f32[1,256], index: 7, kind: input, shape index: {}]
  %s8 = inlined_call_operand.vmem [shape: f32[1,256], index: 8, kind: input, shape index: {}]
  %s9 = inlined_call_operand.hbm [shape: bf16[768,256], index: 9, kind: input, shape index: {}]
  %s10 = inlined_call_operand.vmem [shape: f32[1,256], index: 10, kind: input, shape index: {}]
  %s11 = inlined_call_operand.vmem [shape: f32[1,256], index: 11, kind: input, shape index: {}]
  %s12 = inlined_call_operand.hbm [shape: bf16[768,256], index: 12, kind: input, shape index: {}]
  %s13 = inlined_call_operand.hbm [shape: bf16[768,256], index: 13, kind: input, shape index: {}]
  %s14 = inlined_call_operand.vmem [shape: f32[1,256], index: 14, kind: input, shape index: {}]
  %s15 = inlined_call_operand.hbm [shape: f32[2,32,256], index: 15, kind: output, shape index: {}]
  %s16 = sld [smem:[#allocation0]]
  $region90: #{tpu_custom_call.1} parent=0
    _
  %s18 = ssub.s32 1, %s16
  %s19 = scalar_select 0, %s18, %s16
  $region1: #{tpu_custom_call.1} parent=0
    #allocation4 [shape = 'u8[65536]{0}', space=vmem, size = 0x10000, scoped, tag = 'input window, operand 2, single buffered']
    #allocation5 [shape = 's32[1]{0}', space=sflag, size = 0x4, scoped, tag = 'scoped memory for tpu_custom_call.1']
    #allocation6 [shape = 's32[1]{0}', space=sflag, size = 0x4, scoped, tag = 'scoped memory for tpu_custom_call.1']
    #allocation7 [shape = 'u8[393216]{0}', space=vmem, size = 0x60000, scoped, tag = 'input window, operand 5, single buffered']
    #allocation8 [shape = 's32[1]{0}', space=sflag, size = 0x4, scoped, tag = 'scoped memory for tpu_custom_call.1']
    #allocation9 [shape = 'u8[393216]{0}', space=vmem, size = 0x60000, scoped, tag = 'input window, operand 9, single buffered']
    #allocation10 [shape = 'u8[393216]{0}', space=vmem, size = 0x60000, scoped, tag = 'input window, operand 12, single buffered']
    #allocation11 [shape = 's32[1]{0}', space=sflag, size = 0x4, scoped, tag = 'scoped memory for tpu_custom_call.1']
    #allocation12 [shape = 'u8[393216]{0}', space=vmem, size = 0x60000, scoped, tag = 'input window, operand 13, single buffered']
    #allocation13 [shape = 'u8[65536]{0}', space=vmem, size = 0x10000, scoped, tag = 'output window, operand 0, single buffered']
    %20 = vsyncpa [#allocation5], 0
    %21 = vsyncpa [#allocation8], 0
    %22 = vsyncpa [#allocation11], 0
    %23 = vsyncpa [#allocation6], 0
    // Predicated region
    $region2: #{tpu_custom_call.1} parent=1 // pred_check
      _
    $region3: #{tpu_custom_call.1} parent=1 // pred_check_branch
      %25 = sbr.rel (0) target = $region5
    $region4: #{tpu_custom_call.1} parent=1 // pred_region
      _
    $region5: #{tpu_custom_call.1} parent=1 // pred_fallthru
      _
    // Predicated region
    $region6: #{tpu_custom_call.1} parent=1 // pred_check
      _
    $region7: #{tpu_custom_call.1} parent=1 // pred_check_branch
      %27 = sbr.rel (0) target = $region9
    $region8: #{tpu_custom_call.1} parent=1 // pred_region
      _
    $region9: #{tpu_custom_call.1} parent=1 // pred_fallthru
      _
    // Predicated region
    $region10: #{tpu_custom_call.1} parent=1 // pred_check
      _
    $region11: #{tpu_custom_call.1} parent=1 // pred_check_branch
      %29 = sbr.rel (0) target = $region13
    $region12: #{tpu_custom_call.1} parent=1 // pred_region
      %s31 = ssub.s32 2048, 2048
      %32 = vsyncadd [#allocation5], %s31
      %s33 = sshll.u32 [#allocation4], 4
      %s34 = int_to_ptr.vmem [resolvable:$true] %s33
      %39 = dma.hbm_to_vmem [thread:$0]  %s2, 2048, %s34, [#allocation5], 128, 128, 8
    $region13: #{tpu_custom_call.1} parent=1 // pred_fallthru
      _
    // Predicated region
    $region14: #{tpu_custom_call.1} parent=1 // pred_check
      _
    $region15: #{tpu_custom_call.1} parent=1 // pred_check_branch
      %41 = sbr.rel (0) target = $region17
    $region16: #{tpu_custom_call.1} parent=1 // pred_region
      _
    $region17: #{tpu_custom_call.1} parent=1 // pred_fallthru
      _
    // Predicated region
    $region18: #{tpu_custom_call.1} parent=1 // pred_check
      _
    $region19: #{tpu_custom_call.1} parent=1 // pred_check_branch
      %43 = sbr.rel (0) target = $region21
    $region20: #{tpu_custom_call.1} parent=1 // pred_region
      _
    $region21: #{tpu_custom_call.1} parent=1 // pred_fallthru
      _
    // Predicated region
    $region22: #{tpu_custom_call.1} parent=1 // pred_check
      _
    $region23: #{tpu_custom_call.1} parent=1 // pred_check_branch
      %45 = sbr.rel (0) target = $region25
    $region24: #{tpu_custom_call.1} parent=1 // pred_region
      %s47 = ssub.s32 12288, 12288
      %48 = vsyncadd [#allocation8], %s47
      %s49 = sshll.u32 [#allocation7], 4
      %s50 = int_to_ptr.vmem [resolvable:$true] %s49
      %55 = dma.hbm_to_vmem [thread:$0]  %s5, 12288, %s50, [#allocation8], 128, 128, 8
    $region25: #{tpu_custom_call.1} parent=1 // pred_fallthru
      _
    // Predicated region
    $region26: #{tpu_custom_call.1} parent=1 // pred_check
      _
    $region27: #{tpu_custom_call.1} parent=1 // pred_check_branch
      %57 = sbr.rel (0) target = $region29
    $region28: #{tpu_custom_call.1} parent=1 // pred_region
      _
    $region29: #{tpu_custom_call.1} parent=1 // pred_fallthru
      _
    // Predicated region
    $region30: #{tpu_custom_call.1} parent=1 // pred_check
      _
    $region31: #{tpu_custom_call.1} parent=1 // pred_check_branch
      %59 = sbr.rel (0) target = $region33
    $region32: #{tpu_custom_call.1} parent=1 // pred_region
      _
    $region33: #{tpu_custom_call.1} parent=1 // pred_fallthru
      _
    // Predicated region
    $region34: #{tpu_custom_call.1} parent=1 // pred_check
      _
    $region35: #{tpu_custom_call.1} parent=1 // pred_check_branch
      %61 = sbr.rel (0) target = $region37
    $region36: #{tpu_custom_call.1} parent=1 // pred_region
      _
    $region37: #{tpu_custom_call.1} parent=1 // pred_fallthru
      _
    // Predicated region
    $region38: #{tpu_custom_call.1} parent=1 // pred_check
      _
    $region39: #{tpu_custom_call.1} parent=1 // pred_check_branch
      %63 = sbr.rel (0) target = $region41
    $region40: #{tpu_custom_call.1} parent=1 // pred_region
      %s65 = ssub.s32 12288, 12288
      %66 = vsyncadd [#allocation8], %s65
      %s67 = sshll.u32 [#allocation9], 4
      %s68 = int_to_ptr.vmem [resolvable:$true] %s67
      %73 = dma.hbm_to_vmem [thread:$0]  %s9, 12288, %s68, [#allocation8], 128, 128, 8
    $region41: #{tpu_custom_call.1} parent=1 // pred_fallthru
      _
    // Predicated region
    $region42: #{tpu_custom_call.1} parent=1 // pred_check
      _
    $region43: #{tpu_custom_call.1} parent=1 // pred_check_branch
      %75 = sbr.rel (0) target = $region45
    $region44: #{tpu_custom_call.1} parent=1 // pred_region
      _
    $region45: #{tpu_custom_call.1} parent=1 // pred_fallthru
      _
    // Predicated region
    $region46: #{tpu_custom_call.1} parent=1 // pred_check
      _
    $region47: #{tpu_custom_call.1} parent=1 // pred_check_branch
      %77 = sbr.rel (0) target = $region49
    $region48: #{tpu_custom_call.1} parent=1 // pred_region
      _
    $region49: #{tpu_custom_call.1} parent=1 // pred_fallthru
      _
    // Predicated region
    $region50: #{tpu_custom_call.1} parent=1 // pred_check
      _
    $region51: #{tpu_custom_call.1} parent=1 // pred_check_branch
      %79 = sbr.rel (0) target = $region53
    $region52: #{tpu_custom_call.1} parent=1 // pred_region
      %s81 = ssub.s32 12288, 12288
      %82 = vsyncadd [#allocation11], %s81
      %s83 = sshll.u32 [#allocation10], 4
      %s84 = int_to_ptr.vmem [resolvable:$true] %s83
      %89 = dma.hbm_to_vmem [thread:$0]  %s12, 12288, %s84, [#allocation11], 128, 128, 8
    $region53: #{tpu_custom_call.1} parent=1 // pred_fallthru
      _
    // Predicated region
    $region54: #{tpu_custom_call.1} parent=1 // pred_check
      _
    $region55: #{tpu_custom_call.1} parent=1 // pred_check_branch
      %91 = sbr.rel (0) target = $region57
    $region56: #{tpu_custom_call.1} parent=1 // pred_region
      %s93 = ssub.s32 12288, 12288
      %94 = vsyncadd [#allocation11], %s93
      %s95 = sshll.u32 [#allocation12], 4
      %s96 = int_to_ptr.vmem [resolvable:$true] %s95
      %101 = dma.hbm_to_vmem [thread:$0]  %s13, 12288, %s96, [#allocation11], 128, 128, 8
    $region57: #{tpu_custom_call.1} parent=1 // pred_fallthru
      _
    // Predicated region
    $region58: #{tpu_custom_call.1} parent=1 // pred_check
      _
    $region59: #{tpu_custom_call.1} parent=1 // pred_check_branch
      %103 = sbr.rel (0) target = $region61
    $region60: #{tpu_custom_call.1} parent=1 // pred_region
      _
    $region61: #{tpu_custom_call.1} parent=1 // pred_fallthru
      _
    // Predicated region
    $region62: #{tpu_custom_call.1} parent=1 // pred_check
      _
    $region63: #{tpu_custom_call.1} parent=1 // pred_check_branch
      %105 = sbr.rel (0) target = $region65
    $region64: #{tpu_custom_call.1} parent=1 // pred_region
      %106 = dma.done [#allocation5], 2048
    $region65: #{tpu_custom_call.1} parent=1 // pred_fallthru
      _
    // Predicated region
    $region66: #{tpu_custom_call.1} parent=1 // pred_check
      _
    $region67: #{tpu_custom_call.1} parent=1 // pred_check_branch
      %108 = sbr.rel (0) target = $region69
    $region68: #{tpu_custom_call.1} parent=1 // pred_region
      %109 = dma.done [#allocation8], 12288
    $region69: #{tpu_custom_call.1} parent=1 // pred_fallthru
      _
    // Predicated region
    $region70: #{tpu_custom_call.1} parent=1 // pred_check
      _
    $region71: #{tpu_custom_call.1} parent=1 // pred_check_branch
      %111 = sbr.rel (0) target = $region73
    $region72: #{tpu_custom_call.1} parent=1 // pred_region
      %112 = dma.done [#allocation8], 12288
    $region73: #{tpu_custom_call.1} parent=1 // pred_fallthru
      _
    // Predicated region
    $region74: #{tpu_custom_call.1} parent=1 // pred_check
      _
    $region75: #{tpu_custom_call.1} parent=1 // pred_check_branch
      %114 = sbr.rel (0) target = $region77
    $region76: #{tpu_custom_call.1} parent=1 // pred_region
      %115 = dma.done [#allocation11], 12288
    $region77: #{tpu_custom_call.1} parent=1 // pred_fallthru
      _
    // Predicated region
    $region78: #{tpu_custom_call.1} parent=1 // pred_check
      _
    $region79: #{tpu_custom_call.1} parent=1 // pred_check_branch
      %117 = sbr.rel (0) target = $region81
    $region80: #{tpu_custom_call.1} parent=1 // pred_region
      %118 = dma.done [#allocation11], 12288
    $region81: #{tpu_custom_call.1} parent=1 // pred_fallthru
      _
    %120 = vst [vmem:[#allocation2] sm:$0xff] 0.0
    %121 = vst [vmem:[#allocation2 + $0x8] sm:$0xff] 0.0
    %122 = vst [vmem:[#allocation2 + $0xa0] sm:$0xff] 0.0
    %123 = vst [vmem:[#allocation2 + $0xa8] sm:$0xff] 0.0
    %124 = vst [vmem:[#allocation3] sm:$0xff] 0.0
    %125 = vst [vmem:[#allocation3 + $0x8] sm:$0xff] 0.0
    %126 = vst [vmem:[#allocation3 + $0xa0] sm:$0xff] 0.0
    %127 = vst [vmem:[#allocation3 + $0xa8] sm:$0xff] 0.0
    %v128 = vlaneseq
    %v129 = vshrl.u32 %v128, 7
    %v130 = vadd.s32 %v129, 8
    %v131 = vadd.s32 %v129, 16
    %v132 = vadd.s32 %v129, 24
    %v133 = vadd.s32 %v129, 32
    %v134 = vadd.s32 %v129, 40
    %v135 = vadd.s32 %v129, 48
    %v136 = vadd.s32 %v129, 56
    %v137 = vadd.s32 %v129, 64
    %vm138 = vcmp.lt.s32.totalorder %v129, 0
    %v139 = vsub.s32 0, %v129
    %v140 = vsel %vm138, %v139, %v129
    %v141 = vmul.u32.u64.compose %v140, 3435973837
    %v142 = vextract.low.u32 %v141
    %v143 = vextract.high.u32 %v141
    %v144 = vshrl.u32 %v143, 5
    %v145 = vmul.u32 %v144, 40
    %v146 = vsub.s32 %v140, %v145
    %v147 = vsub.s32 0, %v146
    %v148 = vsel %vm138, %v147, %v146
    %vm149 = vcmp.lt.s32.totalorder %v130, 0
    %v150 = vsub.s32 0, %v130
    %v151 = vsel %vm149, %v150, %v130
    %v152 = vmul.u32.u64.compose %v151, 3435973837
    %v153 = vextract.low.u32 %v152
    %v154 = vextract.high.u32 %v152
    %v155 = vshrl.u32 %v154, 5
    %v156 = vmul.u32 %v155, 40
    %v157 = vsub.s32 %v151, %v156
    %v158 = vsub.s32 0, %v157
    %v159 = vsel %vm149, %v158, %v157
    %vm160 = vcmp.lt.s32.totalorder %v131, 0
    %v161 = vsub.s32 0, %v131
    %v162 = vsel %vm160, %v161, %v131
    %v163 = vmul.u32.u64.compose %v162, 3435973837
    %v164 = vextract.low.u32 %v163
    %v165 = vextract.high.u32 %v163
    %v166 = vshrl.u32 %v165, 5
    %v167 = vmul.u32 %v166, 40
    %v168 = vsub.s32 %v162, %v167
    %v169 = vsub.s32 0, %v168
    %v170 = vsel %vm160, %v169, %v168
    %vm171 = vcmp.lt.s32.totalorder %v132, 0
    %v172 = vsub.s32 0, %v132
    %v173 = vsel %vm171, %v172, %v132
    %v174 = vmul.u32.u64.compose %v173, 3435973837
    %v175 = vextract.low.u32 %v174
    %v176 = vextract.high.u32 %v174
    %v177 = vshrl.u32 %v176, 5
    %v178 = vmul.u32 %v177, 40
    %v179 = vsub.s32 %v173, %v178
    %v180 = vsub.s32 0, %v179
    %v181 = vsel %vm171, %v180, %v179
    %vm182 = vcmp.lt.s32.totalorder %v133, 0
    %v183 = vsub.s32 0, %v133
    %v184 = vsel %vm182, %v183, %v133
    %v185 = vmul.u32.u64.compose %v184, 3435973837
    %v186 = vextract.low.u32 %v185
    %v187 = vextract.high.u32 %v185
    %v188 = vshrl.u32 %v187, 5
    %v189 = vmul.u32 %v188, 40
    %v190 = vsub.s32 %v184, %v189
    %v191 = vsub.s32 0, %v190
    %v192 = vsel %vm182, %v191, %v190
    %vm193 = vcmp.lt.s32.totalorder %v134, 0
    %v194 = vsub.s32 0, %v134
    %v195 = vsel %vm193, %v194, %v134
    %v196 = vmul.u32.u64.compose %v195, 3435973837
    %v197 = vextract.low.u32 %v196
    %v198 = vextract.high.u32 %v196
    %v199 = vshrl.u32 %v198, 5
    %v200 = vmul.u32 %v199, 40
    %v201 = vsub.s32 %v195, %v200
    %v202 = vsub.s32 0, %v201
    %v203 = vsel %vm193, %v202, %v201
    %vm204 = vcmp.lt.s32.totalorder %v135, 0
    %v205 = vsub.s32 0, %v135
    %v206 = vsel %vm204, %v205, %v135
    %v207 = vmul.u32.u64.compose %v206, 3435973837
    %v208 = vextract.low.u32 %v207
    %v209 = vextract.high.u32 %v207
    %v210 = vshrl.u32 %v209, 5
    %v211 = vmul.u32 %v210, 40
    %v212 = vsub.s32 %v206, %v211
    %v213 = vsub.s32 0, %v212
    %v214 = vsel %vm204, %v213, %v212
    %vm215 = vcmp.lt.s32.totalorder %v136, 0
    %v216 = vsub.s32 0, %v136
    %v217 = vsel %vm215, %v216, %v136
    %v218 = vmul.u32.u64.compose %v217, 3435973837
    %v219 = vextract.low.u32 %v218
    %v220 = vextract.high.u32 %v218
    %v221 = vshrl.u32 %v220, 5
    %v222 = vmul.u32 %v221, 40
    %v223 = vsub.s32 %v217, %v222
    %v224 = vsub.s32 0, %v223
    %v225 = vsel %vm215, %v224, %v223
    %vm226 = vcmp.lt.s32.totalorder %v137, 0
    %v227 = vsub.s32 0, %v137
    %v228 = vsel %vm226, %v227, %v137
    %v229 = vmul.u32.u64.compose %v228, 3435973837
    %v230 = vextract.low.u32 %v229
    %v231 = vextract.high.u32 %v229
    %v232 = vshrl.u32 %v231, 5
    %v233 = vmul.u32 %v232, 40
    %v234 = vsub.s32 %v228, %v233
    %v235 = vsub.s32 0, %v234
    %v236 = vsel %vm226, %v235, %v234
    %vm237 = vcmp.ne.s32.totalorder %v148, 0
    %vm238 = vcmp.ne.s32.totalorder %v159, 0
    %vm239 = vcmp.ne.s32.totalorder %v170, 0
    %vm240 = vcmp.ne.s32.totalorder %v181, 0
    %vm241 = vcmp.ne.s32.totalorder %v192, 0
    %vm242 = vcmp.ne.s32.totalorder %v203, 0
    %vm243 = vcmp.ne.s32.totalorder %v214, 0
    %vm244 = vcmp.ne.s32.totalorder %v225, 0
    %vm245 = vcmp.ne.s32.totalorder %v236, 0
    %vm246 = vcmp.lt.s32.totalorder %v148, 0
    %vm247 = vcmp.lt.s32.totalorder %v159, 0
    %vm248 = vcmp.lt.s32.totalorder %v170, 0
    %vm249 = vcmp.lt.s32.totalorder %v181, 0
    %vm250 = vcmp.lt.s32.totalorder %v192, 0
    %vm251 = vcmp.lt.s32.totalorder %v203, 0
    %vm252 = vcmp.lt.s32.totalorder %v214, 0
    %vm253 = vcmp.lt.s32.totalorder %v225, 0
    %vm254 = vcmp.lt.s32.totalorder %v236, 0
    %vm255 = vmand %vm246, %vm237
    %vm256 = vmand %vm247, %vm238
    %vm257 = vmand %vm248, %vm239
    %vm258 = vmand %vm249, %vm240
    %vm259 = vmand %vm250, %vm241
    %vm260 = vmand %vm251, %vm242
    %vm261 = vmand %vm252, %vm243
    %vm262 = vmand %vm253, %vm244
    %vm263 = vmand %vm254, %vm245
    %v264 = vadd.s32 %v148, 40
    %v265 = vadd.s32 %v159, 40
    %v266 = vadd.s32 %v170, 40
    %v267 = vadd.s32 %v181, 40
    %v268 = vadd.s32 %v192, 40
    %v269 = vadd.s32 %v203, 40
    %v270 = vadd.s32 %v214, 40
    %v271 = vadd.s32 %v225, 40
    %v272 = vadd.s32 %v236, 40
    %v273 = vsel %vm255, %v264, %v148
    %v274 = vsel %vm256, %v265, %v159
    %v275 = vsel %vm257, %v266, %v170
    %v276 = vsel %vm258, %v267, %v181
    %v277 = vsel %vm259, %v268, %v192
    %v278 = vsel %vm260, %v269, %v203
    %v279 = vsel %vm261, %v270, %v214
    %v280 = vsel %vm262, %v271, %v225
    %v281 = vsel %vm263, %v272, %v236
    %vm282 = vcmp.lt.s32.totalorder %v273, 32
    %vm283 = vcmp.lt.s32.totalorder %v274, 32
    %vm284 = vcmp.lt.s32.totalorder %v275, 32
    %vm285 = vcmp.lt.s32.totalorder %v276, 32
    %vm286 = vcmp.lt.s32.totalorder %v277, 32
    %vm287 = vcmp.lt.s32.totalorder %v278, 32
    %vm288 = vcmp.lt.s32.totalorder %v279, 32
    %vm289 = vcmp.lt.s32.totalorder %v280, 32
    %vm290 = vcmp.lt.s32.totalorder %v281, 32
    %v291 = vsel %vm282, 1, 0
    %v292 = vsel %vm283, 1, 0
    %v293 = vsel %vm284, 1, 0
    %v294 = vsel %vm285, 1, 0
    %v295 = vsel %vm286, 1, 0
    %v296 = vsel %vm287, 1, 0
    %v297 = vsel %vm288, 1, 0
    %v298 = vsel %vm289, 1, 0
    %v299 = vsel %vm290, 1, 0
    %v300 = vcvt.s32.f32 %v291
    %v301 = vcvt.s32.f32 %v292
    %v302 = vcvt.s32.f32 %v293
    %v303 = vcvt.s32.f32 %v294
    %v304 = vcvt.s32.f32 %v295
    %v305 = vcvt.s32.f32 %v296
    %v306 = vcvt.s32.f32 %v297
    %v307 = vcvt.s32.f32 %v298
    %v308 = vcvt.s32.f32 %v299
    %v309 = vld [vmem:[%s0] sm:$0xff]
    %v310 = vld [vmem:[%s0 + $0x8] sm:$0xff]
    %v311 = vld [vmem:[%s0 + $0x10] sm:$0xff]
    %v312 = vld [vmem:[%s0 + $0x18] sm:$0xff]
    %v313 = vpack.c.bf16 %v310, %v309
    %v314 = vpack.c.bf16 %v312, %v311
    %v315 = vld [vmem:[#allocation4] sm:$0xff]
    %v316 = vld [vmem:[#allocation4 + $0x8] sm:$0xff]
    %v317 = vld [vmem:[#allocation4 + $0x10] sm:$0xff]
    %v318 = vld [vmem:[#allocation4 + $0x18] sm:$0xff]
    %v319 = vld [vmem:[#allocation4 + $0x20] sm:$0xff]
    %v320 = vld [vmem:[#allocation4 + $0x28] sm:$0xff]
    %v321 = vld [vmem:[#allocation4 + $0x30] sm:$0xff]
    %v322 = vld [vmem:[#allocation4 + $0x38] sm:$0xff]
    %v323 = vld [vmem:[#allocation4 + $0x40] sm:$0xff]
    %v324 = vld [vmem:[#allocation4 + $0x48] sm:$0xff]
    %v325 = vld [vmem:[#allocation4 + $0x50] sm:$0xff]
    %v326 = vld [vmem:[#allocation4 + $0x58] sm:$0xff]
    %v327 = vld [vmem:[#allocation4 + $0x60] sm:$0xff]
    %v328 = vld [vmem:[#allocation4 + $0x68] sm:$0xff]
    %v329 = vld [vmem:[#allocation4 + $0x70] sm:$0xff]
    %v330 = vld [vmem:[#allocation4 + $0x78] sm:$0xff]
    %v347 = vunpack.c.l.b16 %v315
    %v348 = vunpack.c.h.b16 %v315
    %v349 = vunpack.c.l.b16 %v316
    %v350 = vunpack.c.h.b16 %v316
    %v351 = vunpack.c.l.b16 %v317
    %v352 = vunpack.c.h.b16 %v317
    %v353 = vunpack.c.l.b16 %v318
    %v354 = vunpack.c.h.b16 %v318
    %v355 = vunpack.c.l.b16 %v319
    %v356 = vunpack.c.h.b16 %v319
    %v357 = vunpack.c.l.b16 %v320
    %v358 = vunpack.c.h.b16 %v320
    %v359 = vunpack.c.l.b16 %v321
    %v360 = vunpack.c.h.b16 %v321
    %v361 = vunpack.c.l.b16 %v322
    %v362 = vunpack.c.h.b16 %v322
    %v363 = vunpack.c.l.b16 %v323
    %v364 = vunpack.c.h.b16 %v323
    %v365 = vunpack.c.l.b16 %v324
    %v366 = vunpack.c.h.b16 %v324
    %v367 = vunpack.c.l.b16 %v325
    %v368 = vunpack.c.h.b16 %v325
    %v369 = vunpack.c.l.b16 %v326
    %v370 = vunpack.c.h.b16 %v326
    %v371 = vunpack.c.l.b16 %v327
    %v372 = vunpack.c.h.b16 %v327
    %v373 = vunpack.c.l.b16 %v328
    %v374 = vunpack.c.h.b16 %v328
    %v375 = vunpack.c.l.b16 %v329
    %v376 = vunpack.c.h.b16 %v329
    %v377 = vunpack.c.l.b16 %v330
    %v378 = vunpack.c.h.b16 %v330
    %v379 = vpack.c.b16 %v349, %v347
    %v380 = vpack.c.b16 %v350, %v348
    %v381 = vpack.c.b16 %v353, %v351
    %v382 = vpack.c.b16 %v354, %v352
    %v383 = vpack.c.b16 %v357, %v355
    %v384 = vpack.c.b16 %v358, %v356
    %v385 = vpack.c.b16 %v361, %v359
    %v386 = vpack.c.b16 %v362, %v360
    %v387 = vpack.c.b16 %v365, %v363
    %v388 = vpack.c.b16 %v366, %v364
    %v389 = vpack.c.b16 %v369, %v367
    %v390 = vpack.c.b16 %v370, %v368
    %v391 = vpack.c.b16 %v373, %v371
    %v392 = vpack.c.b16 %v374, %v372
    %v393 = vpack.c.b16 %v377, %v375
    %v394 = vpack.c.b16 %v378, %v376
    %411 = vmatprep.subr.bf16.mxu0 %v380
    %412 = vmatpush1.bf16.msra.mxu0 %v379
    %413 = vmatprep.subr.bf16.mxu0 %v382
    %414 = vmatpush1.bf16.msra.mxu0 %v381
    %415 = vmatprep.subr.bf16.mxu0 %v384
    %416 = vmatpush1.bf16.msra.mxu0 %v383
    %417 = vmatprep.subr.bf16.mxu0 %v386
    %418 = vmatpush1.bf16.msra.mxu0 %v385
    %419 = vmatprep.subr.bf16.mxu0 %v388
    %420 = vmatpush1.bf16.msra.mxu0 %v387
    %421 = vmatprep.subr.bf16.mxu0 %v390
    %422 = vmatpush1.bf16.msra.mxu0 %v389
    %423 = vmatprep.subr.bf16.mxu0 %v392
    %424 = vmatpush1.bf16.msra.mxu0 %v391
    %425 = vmatprep.subr.bf16.mxu0 %v394
    %426 = vmatpush1.bf16.msra.mxu0 %v393
    %427 = vmatprep.subr.bf16.mxu0 0
    %428 = vmatpush1.bf16.msra.mxu0 0
    %429 = vmatprep.subr.bf16.mxu0 0
    %430 = vmatpush1.bf16.msra.mxu0 0
    %431 = vmatprep.subr.bf16.mxu0 0
    %432 = vmatpush1.bf16.msra.mxu0 0
    %433 = vmatprep.subr.bf16.mxu0 0
    %434 = vmatpush1.bf16.msra.mxu0 0
    %435 = vmatprep.subr.bf16.mxu0 0
    %436 = vmatpush1.bf16.msra.mxu0 0
    %437 = vmatprep.subr.bf16.mxu0 0
    %438 = vmatpush1.bf16.msra.mxu0 0
    %439 = vmatprep.subr.bf16.mxu0 0
    %440 = vmatpush1.bf16.msra.mxu0 0
    %441 = vmatprep.subr.bf16.mxu0 0
    %442 = vmatpush1.bf16.msra.mxu0 0
    %443 = vmatprep.mubr.bf16.mxu0 0
    %444 = vmatmul.mubr.bf16.gmra.mrb[0].mxu0 %v313
    %v445 = vpop.f32.mrb[0].mxu0
    %v446 = vadd.f32 0.0, %v445
    %v447 = vpop.f32.mrb[0].mxu0
    %v448 = vadd.f32 0.0, %v447
    %v449 = vpop.f32.mrb[0].mxu0
    %v450 = vadd.f32 0.0, %v449
    %v451 = vpop.f32.mrb[0].mxu0
    %v452 = vadd.f32 0.0, %v451
    %453 = vmatprep.mubr.bf16.mxu0 0
    %454 = vmatmul.mubr.bf16.gmra.mrb[0].mxu0 %v314
    %v455 = vpop.f32.mrb[0].mxu0
    %v456 = vadd.f32 0.0, %v455
    %v457 = vpop.f32.mrb[0].mxu0
    %v458 = vadd.f32 0.0, %v457
    %v459 = vpop.f32.mrb[0].mxu0
    %v460 = vadd.f32 0.0, %v459
    %v461 = vpop.f32.mrb[0].mxu0
    %v462 = vadd.f32 0.0, %v461
    %463 = vdwg.mxu0
    %v464 = vld [vmem:[%s1] sm:$0xf]
    %v465 = vld [vmem:[%s1 + $0x4] sm:$0xf]
    %v466 = vld [vmem:[%s1 + $0x8] sm:$0xf]
    %v467 = vld [vmem:[%s1 + $0xc] sm:$0xf]
    %v468 = vld [vmem:[%s1 + $0x10] sm:$0xf]
    %v469 = vld [vmem:[%s1 + $0x14] sm:$0xf]
    %v470 = vld [vmem:[%s1 + $0x18] sm:$0xf]
    %v471 = vld [vmem:[%s1 + $0x1c] sm:$0xf]
    %v472 = vld [vmem:[%s1 + $0x20] sm:$0xf]
    %v473 = vpack.c.bf16 %v450, %v446
    %v474 = vpack.c.bf16 %v452, %v448
    %v475 = vpack.c.bf16 %v460, %v456
    %v476 = vpack.c.bf16 %v462, %v458
    %v486 = vunpack.c.l.b16 %v464
    %v487 = vunpack.c.l.b16 %v465
    %v488 = vunpack.c.l.b16 %v466
    %v489 = vunpack.c.l.b16 %v467
    %v490 = vunpack.c.l.b16 %v468
    %v491 = vunpack.c.l.b16 %v469
    %v492 = vunpack.c.l.b16 %v470
    %v493 = vunpack.c.l.b16 %v471
    %v494 = vunpack.c.l.b16 %v472
    %v495 = vpack.c.b16 %v487, %v486
    %v496 = vpack.c.b16 %v489, %v488
    %v497 = vpack.c.b16 %v491, %v490
    %v498 = vpack.c.b16 %v493, %v492
    %v499 = vpack.c.b16 %v494, %v494
    %vm500 = vcmask 261120
    %v502 = vsel %vm500, %v495, 0
    %v505 = vsel %vm500, %v496, 0
    %v508 = vsel %vm500, %v497, 0
    %v511 = vsel %vm500, %v498, 0
    %v514 = vsel %vm500, %v499, 0
    %516 = vmatprep.subr.bf16.mxu0 %v474
    %517 = vmatpush1.bf16.msra.mxu0 %v473
    %518 = vmatprep.subr.bf16.mxu0 %v476
    %519 = vmatpush1.bf16.msra.mxu0 %v475
    %520 = vmatprep.subr.bf16.mxu0 0
    %521 = vmatpush1.bf16.msra.mxu0 0
    %522 = vmatprep.subr.bf16.mxu0 0
    %523 = vmatpush1.bf16.msra.mxu0 0
    %524 = vmatprep.subr.bf16.mxu0 0
    %525 = vmatpush1.bf16.msra.mxu0 0
    %526 = vmatprep.subr.bf16.mxu0 0
    %527 = vmatpush1.bf16.msra.mxu0 0
    %528 = vmatprep.subr.bf16.mxu0 0
    %529 = vmatpush1.bf16.msra.mxu0 0
    %530 = vmatprep.subr.bf16.mxu0 0
    %531 = vmatpush1.bf16.msra.mxu0 0
    %532 = vmatprep.subr.bf16.mxu0 0
    %533 = vmatpush1.bf16.msra.mxu0 0
    %534 = vmatprep.subr.bf16.mxu0 0
    %535 = vmatpush1.bf16.msra.mxu0 0
    %536 = vmatprep.subr.bf16.mxu0 0
    %537 = vmatpush1.bf16.msra.mxu0 0
    %538 = vmatprep.subr.bf16.mxu0 0
    %539 = vmatpush1.bf16.msra.mxu0 0
    %540 = vmatprep.subr.bf16.mxu0 0
    %541 = vmatpush1.bf16.msra.mxu0 0
    %542 = vmatprep.subr.bf16.mxu0 0
    %543 = vmatpush1.bf16.msra.mxu0 0
    %544 = vmatprep.subr.bf16.mxu0 0
    %545 = vmatpush1.bf16.msra.mxu0 0
    %546 = vmatprep.subr.bf16.mxu0 0
    %547 = vmatpush1.bf16.msra.mxu0 0
    %548 = vmatprep.mubr.bf16.mxu0 0
    %549 = vmatmul.mubr.bf16.gmra.mrb[0].mxu0 %v502
    %v550 = vpop.f32.mrb[0].mxu0
    %v551 = vadd.f32 0.0, %v550
    %v552 = vpop.f32.mrb[0].mxu0
    %v553 = vadd.f32 0.0, %v552
    %v554 = vpop.f32.mrb[0].mxu0
    %v555 = vadd.f32 0.0, %v554
    %v556 = vpop.f32.mrb[0].mxu0
    %v557 = vadd.f32 0.0, %v556
    %558 = vmatprep.mubr.bf16.mxu0 0
    %559 = vmatmul.mubr.bf16.gmra.mrb[0].mxu0 %v505
    %v560 = vpop.f32.mrb[0].mxu0
    %v561 = vadd.f32 0.0, %v560
    %v562 = vpop.f32.mrb[0].mxu0
    %v563 = vadd.f32 0.0, %v562
    %v564 = vpop.f32.mrb[0].mxu0
    %v565 = vadd.f32 0.0, %v564
    %v566 = vpop.f32.mrb[0].mxu0
    %v567 = vadd.f32 0.0, %v566
    %568 = vmatprep.mubr.bf16.mxu0 0
    %569 = vmatmul.mubr.bf16.gmra.mrb[0].mxu0 %v508
    %v570 = vpop.f32.mrb[0].mxu0
    %v571 = vadd.f32 0.0, %v570
    %v572 = vpop.f32.mrb[0].mxu0
    %v573 = vadd.f32 0.0, %v572
    %v574 = vpop.f32.mrb[0].mxu0
    %v575 = vadd.f32 0.0, %v574
    %v576 = vpop.f32.mrb[0].mxu0
    %v577 = vadd.f32 0.0, %v576
    %578 = vmatprep.mubr.bf16.mxu0 0
    %579 = vmatmul.mubr.bf16.gmra.mrb[0].mxu0 %v511
    %v580 = vpop.f32.mrb[0].mxu0
    %v581 = vadd.f32 0.0, %v580
    %v582 = vpop.f32.mrb[0].mxu0
    %v583 = vadd.f32 0.0, %v582
    %v584 = vpop.f32.mrb[0].mxu0
    %v585 = vadd.f32 0.0, %v584
    %v586 = vpop.f32.mrb[0].mxu0
    %v587 = vadd.f32 0.0, %v586
    %588 = vmatprep.mubr.bf16.mxu0 0
    %589 = vmatmul.mubr.bf16.gmra.mrb[0].mxu0 %v514
    %v590 = vpop.f32.mrb[0].mxu0
    %v591 = vadd.f32 0.0, %v590
    %v592 = vpop.f32.mrb[0].mxu0
    %v593 = vadd.f32 0.0, %v592
    %v594 = vpop.f32.mrb[0].mxu0
    %v595 = vpop.f32.mrb[0].mxu0
    %596 = vdwg.mxu0
    %v597 = vld [vmem:[%s3] sm:$0x3]
    %v599 = vlaneseq
    %v600 = vshrl.u32 %v599, 7
    %v601 = vsub.s32 0, %v600
    %v602 = vrot.slane %v597, %v601
    %v603 = vlaneseq
    %v604 = vshrl.u32 %v603, 7
    %v605 = vsub.s32 1, %v604
    %v606 = vrot.slane %v597, %v605
    %v609 = vmul.f32 %v551, %v602
    %v610 = vmul.f32 %v553, %v606
    %v611 = vmul.f32 %v555, %v602
    %v612 = vmul.f32 %v557, %v606
    %v613 = vmul.f32 %v561, %v602
    %v614 = vmul.f32 %v563, %v606
    %v615 = vmul.f32 %v565, %v602
    %v616 = vmul.f32 %v567, %v606
    %v617 = vmul.f32 %v571, %v602
    %v618 = vmul.f32 %v573, %v606
    %v619 = vmul.f32 %v575, %v602
    %v620 = vmul.f32 %v577, %v606
    %v621 = vmul.f32 %v581, %v602
    %v622 = vmul.f32 %v583, %v606
    %v623 = vmul.f32 %v585, %v602
    %v624 = vmul.f32 %v587, %v606
    %v625 = vmul.f32 %v591, %v602
    %v626 = vmul.f32 %v593, %v606
    %v627 = vld [vmem:[%s4] sm:$0x3]
    %v629 = vlaneseq
    %v630 = vshrl.u32 %v629, 7
    %v631 = vsub.s32 0, %v630
    %v632 = vrot.slane %v627, %v631
    %v633 = vlaneseq
    %v634 = vshrl.u32 %v633, 7
    %v635 = vsub.s32 1, %v634
    %v636 = vrot.slane %v627, %v635
    %v639 = vadd.f32 %v609, %v632
    %v640 = vadd.f32 %v610, %v636
    %v641 = vadd.f32 %v611, %v632
    %v642 = vadd.f32 %v612, %v636
    %v643 = vadd.f32 %v613, %v632
    %v644 = vadd.f32 %v614, %v636
    %v645 = vadd.f32 %v615, %v632
    %v646 = vadd.f32 %v616, %v636
    %v647 = vadd.f32 %v617, %v632
    %v648 = vadd.f32 %v618, %v636
    %v649 = vadd.f32 %v619, %v632
    %v650 = vadd.f32 %v620, %v636
    %v651 = vadd.f32 %v621, %v632
    %v652 = vadd.f32 %v622, %v636
    %v653 = vadd.f32 %v623, %v632
    %v654 = vadd.f32 %v624, %v636
    %v655 = vadd.f32 %v625, %v632
    %v656 = vadd.f32 %v626, %v636
    %v657 = vmax.f32 %v639, 0.0
    %v658 = vmax.f32 %v640, 0.0
    %v659 = vmax.f32 %v641, 0.0
    %v660 = vmax.f32 %v642, 0.0
    %v661 = vmax.f32 %v643, 0.0
    %v662 = vmax.f32 %v644, 0.0
    %v663 = vmax.f32 %v645, 0.0
    %v664 = vmax.f32 %v646, 0.0
    %v665 = vmax.f32 %v647, 0.0
    %v666 = vmax.f32 %v648, 0.0
    %v667 = vmax.f32 %v649, 0.0
    %v668 = vmax.f32 %v650, 0.0
    %v669 = vmax.f32 %v651, 0.0
    %v670 = vmax.f32 %v652, 0.0
    %v671 = vmax.f32 %v653, 0.0
    %v672 = vmax.f32 %v654, 0.0
    %v673 = vmax.f32 %v655, 0.0
    %v674 = vmax.f32 %v656, 0.0
    %v675 = vmul.f32 %v657, %v300
    %v676 = vmul.f32 %v658, %v300
    %v677 = vmul.f32 %v659, %v301
    %v678 = vmul.f32 %v660, %v301
    %v679 = vmul.f32 %v661, %v302
    %v680 = vmul.f32 %v662, %v302
    %v681 = vmul.f32 %v663, %v303
    %v682 = vmul.f32 %v664, %v303
    %v683 = vmul.f32 %v665, %v304
    %v684 = vmul.f32 %v666, %v304
    %v685 = vmul.f32 %v667, %v305
    %v686 = vmul.f32 %v668, %v305
    %v687 = vmul.f32 %v669, %v306
    %v688 = vmul.f32 %v670, %v306
    %v689 = vmul.f32 %v671, %v307
    %v690 = vmul.f32 %v672, %v307
    %v691 = vmul.f32 %v673, %v308
    %v692 = vmul.f32 %v674, %v308
    %693 = vst [vmem:[#allocation2 + $0x10] sm:$0xff] %v675
    %694 = vst [vmem:[#allocation2 + $0x18] sm:$0xff] %v676
    %695 = vst [vmem:[#allocation2 + $0x20] sm:$0xff] %v677
    %696 = vst [vmem:[#allocation2 + $0x28] sm:$0xff] %v678
    %697 = vst [vmem:[#allocation2 + $0x30] sm:$0xff] %v679
    %698 = vst [vmem:[#allocation2 + $0x38] sm:$0xff] %v680
    %699 = vst [vmem:[#allocation2 + $0x40] sm:$0xff] %v681
    %700 = vst [vmem:[#allocation2 + $0x48] sm:$0xff] %v682
    %701 = vst [vmem:[#allocation2 + $0x50] sm:$0xff] %v683
    %702 = vst [vmem:[#allocation2 + $0x58] sm:$0xff] %v684
    %703 = vst [vmem:[#allocation2 + $0x60] sm:$0xff] %v685
    %704 = vst [vmem:[#allocation2 + $0x68] sm:$0xff] %v686
    %705 = vst [vmem:[#allocation2 + $0x70] sm:$0xff] %v687
    %706 = vst [vmem:[#allocation2 + $0x78] sm:$0xff] %v688
    %707 = vst [vmem:[#allocation2 + $0x80] sm:$0xff] %v689
    %708 = vst [vmem:[#allocation2 + $0x88] sm:$0xff] %v690
    %709 = vst [vmem:[#allocation2 + $0x90] sm:$0xff] %v691
    %710 = vst [vmem:[#allocation2 + $0x98] sm:$0xff] %v692
    %v711 = vld [vmem:[#allocation2] sm:$0x80]
    %v712 = vld [vmem:[#allocation2 + $0x8] sm:$0x80]
    %v713 = vld [vmem:[#allocation2 + $0x10] sm:$0xff]
    %v714 = vld [vmem:[#allocation2 + $0x18] sm:$0xff]
    %v715 = vld [vmem:[#allocation2 + $0x20] sm:$0xff]
    %v716 = vld [vmem:[#allocation2 + $0x28] sm:$0xff]
    %v717 = vld [vmem:[#allocation2 + $0x30] sm:$0xff]
    %v718 = vld [vmem:[#allocation2 + $0x38] sm:$0xff]
    %v719 = vld [vmem:[#allocation2 + $0x40] sm:$0xff]
    %v720 = vld [vmem:[#allocation2 + $0x48] sm:$0xff]
    %v721 = vld [vmem:[#allocation2 + $0x50] sm:$0xff]
    %v722 = vld [vmem:[#allocation2 + $0x58] sm:$0xff]
    %v723 = vld [vmem:[#allocation2 + $0x60] sm:$0xff]
    %v724 = vld [vmem:[#allocation2 + $0x68] sm:$0xff]
    %v725 = vld [vmem:[#allocation2 + $0x70] sm:$0xff]
    %v726 = vld [vmem:[#allocation2 + $0x78] sm:$0xff]
    %v727 = vld [vmem:[#allocation2 + $0x80] sm:$0xff]
    %v728 = vld [vmem:[#allocation2 + $0x88] sm:$0xff]
    %v729 = vld [vmem:[#allocation2 + $0x90] sm:$0x7f]
    %v730 = vld [vmem:[#allocation2 + $0x98] sm:$0x7f]
    %v731 = vld [vmem:[#allocation2 + $0x10] sm:$0xfe]
    %v732 = vld [vmem:[#allocation2 + $0x18] sm:$0xfe]
    %v733 = vld [vmem:[#allocation2 + $0x20] sm:$0xff]
    %v734 = vld [vmem:[#allocation2 + $0x28] sm:$0xff]
    %v735 = vld [vmem:[#allocation2 + $0x30] sm:$0xff]
    %v736 = vld [vmem:[#allocation2 + $0x38] sm:$0xff]
    %v737 = vld [vmem:[#allocation2 + $0x40] sm:$0xff]
    %v738 = vld [vmem:[#allocation2 + $0x48] sm:$0xff]
    %v739 = vld [vmem:[#allocation2 + $0x50] sm:$0xff]
    %v740 = vld [vmem:[#allocation2 + $0x58] sm:$0xff]
    %v741 = vld [vmem:[#allocation2 + $0x60] sm:$0xff]
    %v742 = vld [vmem:[#allocation2 + $0x68] sm:$0xff]
    %v743 = vld [vmem:[#allocation2 + $0x70] sm:$0xff]
    %v744 = vld [vmem:[#allocation2 + $0x78] sm:$0xff]
    %v745 = vld [vmem:[#allocation2 + $0x80] sm:$0xff]
    %v746 = vld [vmem:[#allocation2 + $0x88] sm:$0xff]
    %v747 = vld [vmem:[#allocation2 + $0x90] sm:$0xff]
    %v748 = vld [vmem:[#allocation2 + $0x98] sm:$0xff]
    %v749 = vld [vmem:[#allocation2 + $0xa0] sm:$0x1]
    %v750 = vld [vmem:[#allocation2 + $0xa8] sm:$0x1]
    %vm769 = vcmask 1046528
    %v770 = vrot.slane %v675, 1
    %v771 = vrot.slane %v676, 1
    %v772 = vrot.slane %v677, 1
    %v773 = vsel %vm769, %v770, %v772
    %v774 = vrot.slane %v678, 1
    %v775 = vsel %vm769, %v771, %v774
    %v776 = vrot.slane %v679, 1
    %v777 = vsel %vm769, %v772, %v776
    %v778 = vrot.slane %v680, 1
    %v779 = vsel %vm769, %v774, %v778
    %v780 = vrot.slane %v681, 1
    %v781 = vsel %vm769, %v776, %v780
    %v782 = vrot.slane %v682, 1
    %v783 = vsel %vm769, %v778, %v782
    %v784 = vrot.slane %v683, 1
    %v785 = vsel %vm769, %v780, %v784
    %v786 = vrot.slane %v684, 1
    %v787 = vsel %vm769, %v782, %v786
    %v788 = vrot.slane %v685, 1
    %v789 = vsel %vm769, %v784, %v788
    %v790 = vrot.slane %v686, 1
    %v791 = vsel %vm769, %v786, %v790
    %v792 = vrot.slane %v687, 1
    %v793 = vsel %vm769, %v788, %v792
    %v794 = vrot.slane %v688, 1
    %v795 = vsel %vm769, %v790, %v794
    %v796 = vrot.slane %v689, 1
    %v797 = vsel %vm769, %v792, %v796
    %v798 = vrot.slane %v690, 1
    %v799 = vsel %vm769, %v794, %v798
    %v800 = vrot.slane %v691, 1
    %v801 = vsel %vm769, %v796, %v800
    %v802 = vrot.slane %v692, 1
    %v803 = vsel %vm769, %v798, %v802
    %vm844 = vcmask 1045504
    %v845 = vrot.slane %v731, 2
    %v846 = vrot.slane %v732, 2
    %v847 = vrot.slane %v733, 2
    %v848 = vsel %vm844, %v845, %v847
    %v849 = vrot.slane %v734, 2
    %v850 = vsel %vm844, %v846, %v849
    %v851 = vrot.slane %v735, 2
    %v852 = vsel %vm844, %v847, %v851
    %v853 = vrot.slane %v736, 2
    %v854 = vsel %vm844, %v849, %v853
    %v855 = vrot.slane %v737, 2
    %v856 = vsel %vm844, %v851, %v855
    %v857 = vrot.slane %v738, 2
    %v858 = vsel %vm844, %v853, %v857
    %v859 = vrot.slane %v739, 2
    %v860 = vsel %vm844, %v855, %v859
    %v861 = vrot.slane %v740, 2
    %v862 = vsel %vm844, %v857, %v861
    %v863 = vrot.slane %v741, 2
    %v864 = vsel %vm844, %v859, %v863
    %v865 = vrot.slane %v742, 2
    %v866 = vsel %vm844, %v861, %v865
    %v867 = vrot.slane %v743, 2
    %v868 = vsel %vm844, %v863, %v867
    %v869 = vrot.slane %v744, 2
    %v870 = vsel %vm844, %v865, %v869
    %v871 = vrot.slane %v745, 2
    %v872 = vsel %vm844, %v867, %v871
    %v873 = vrot.slane %v746, 2
    %v874 = vsel %vm844, %v869, %v873
    %v875 = vrot.slane %v747, 2
    %v876 = vsel %vm844, %v871, %v875
    %v877 = vrot.slane %v748, 2
    %v878 = vsel %vm844, %v873, %v877
    %v879 = vrot.slane %v749, 2
    %v880 = vsel %vm844, %v875, %v879
    %v881 = vrot.slane %v750, 2
    %v882 = vsel %vm844, %v877, %v881
    %v903 = vpack.c.bf16 %v713, %v711
    %v904 = vpack.c.bf16 %v714, %v712
    %v905 = vpack.c.bf16 %v773, %v770
    %v906 = vpack.c.bf16 %v775, %v771
    %v907 = vpack.c.bf16 %v848, %v845
    %v908 = vpack.c.bf16 %v850, %v846
    %v909 = vpack.c.bf16 %v717, %v715
    %v910 = vpack.c.bf16 %v718, %v716
    %v911 = vpack.c.bf16 %v781, %v777
    %v912 = vpack.c.bf16 %v783, %v779
    %v913 = vpack.c.bf16 %v856, %v852
    %v914 = vpack.c.bf16 %v858, %v854
    %v915 = vpack.c.bf16 %v721, %v719
    %v916 = vpack.c.bf16 %v722, %v720
    %v917 = vpack.c.bf16 %v789, %v785
    %v918 = vpack.c.bf16 %v791, %v787
    %v919 = vpack.c.bf16 %v864, %v860
    %v920 = vpack.c.bf16 %v866, %v862
    %v921 = vpack.c.bf16 %v725, %v723
    %v922 = vpack.c.bf16 %v726, %v724
    %v923 = vpack.c.bf16 %v797, %v793
    %v924 = vpack.c.bf16 %v799, %v795
    %v925 = vpack.c.bf16 %v872, %v868
    %v926 = vpack.c.bf16 %v874, %v870
    %v927 = vpack.c.bf16 %v729, %v727
    %v928 = vpack.c.bf16 %v730, %v728
    %v929 = vpack.c.bf16 %v800, %v801
    %v930 = vpack.c.bf16 %v802, %v803
    %v931 = vpack.c.bf16 %v880, %v876
    %v932 = vpack.c.bf16 %v882, %v878
    %v933 = vld [vmem:[#allocation7] sm:$0xff]
    %v934 = vld [vmem:[#allocation7 + $0x8] sm:$0xff]
    %v935 = vld [vmem:[#allocation7 + $0x10] sm:$0xff]
    %v936 = vld [vmem:[#allocation7 + $0x18] sm:$0xff]
    %v937 = vld [vmem:[#allocation7 + $0x20] sm:$0xff]
    %v938 = vld [vmem:[#allocation7 + $0x28] sm:$0xff]
    %v939 = vld [vmem:[#allocation7 + $0x30] sm:$0xff]
    %v940 = vld [vmem:[#allocation7 + $0x38] sm:$0xff]
    %v941 = vld [vmem:[#allocation7 + $0x40] sm:$0xff]
    %v942 = vld [vmem:[#allocation7 + $0x48] sm:$0xff]
    %v943 = vld [vmem:[#allocation7 + $0x50] sm:$0xff]
    %v944 = vld [vmem:[#allocation7 + $0x58] sm:$0xff]
    %v945 = vld [vmem:[#allocation7 + $0x60] sm:$0xff]
    %v946 = vld [vmem:[#allocation7 + $0x68] sm:$0xff]
    %v947 = vld [vmem:[#allocation7 + $0x70] sm:$0xff]
    %v948 = vld [vmem:[#allocation7 + $0x78] sm:$0xff]
    %v949 = vld [vmem:[#allocation7 + $0x80] sm:$0xff]
    %v950 = vld [vmem:[#allocation7 + $0x88] sm:$0xff]
    %v951 = vld [vmem:[#allocation7 + $0x90] sm:$0xff]
    %v952 = vld [vmem:[#allocation7 + $0x98] sm:$0xff]
    %v953 = vld [vmem:[#allocation7 + $0xa0] sm:$0xff]
    %v954 = vld [vmem:[#allocation7 + $0xa8] sm:$0xff]
    %v955 = vld [vmem:[#allocation7 + $0xb0] sm:$0xff]
    %v956 = vld [vmem:[#allocation7 + $0xb8] sm:$0xff]
    %v957 = vld [vmem:[#allocation7 + $0xc0] sm:$0xff]
    %v958 = vld [vmem:[#allocation7 + $0xc8] sm:$0xff]
    %v959 = vld [vmem:[#allocation7 + $0xd0] sm:$0xff]
    %v960 = vld [vmem:[#allocation7 + $0xd8] sm:$0xff]
    %v961 = vld [vmem:[#allocation7 + $0xe0] sm:$0xff]
    %v962 = vld [vmem:[#allocation7 + $0xe8] sm:$0xff]
    %v963 = vld [vmem:[#allocation7 + $0xf0] sm:$0xff]
    %v964 = vld [vmem:[#allocation7 + $0xf8] sm:$0xff]
    %v965 = vld [vmem:[#allocation7 + $0x100] sm:$0xff]
    %v966 = vld [vmem:[#allocation7 + $0x108] sm:$0xff]
    %v967 = vld [vmem:[#allocation7 + $0x110] sm:$0xff]
    %v968 = vld [vmem:[#allocation7 + $0x118] sm:$0xff]
    %v969 = vld [vmem:[#allocation7 + $0x120] sm:$0xff]
    %v970 = vld [vmem:[#allocation7 + $0x128] sm:$0xff]
    %v971 = vld [vmem:[#allocation7 + $0x130] sm:$0xff]
    %v972 = vld [vmem:[#allocation7 + $0x138] sm:$0xff]
    %v973 = vld [vmem:[#allocation7 + $0x140] sm:$0xff]
    %v974 = vld [vmem:[#allocation7 + $0x148] sm:$0xff]
    %v975 = vld [vmem:[#allocation7 + $0x150] sm:$0xff]
    %v976 = vld [vmem:[#allocation7 + $0x158] sm:$0xff]
    %v977 = vld [vmem:[#allocation7 + $0x160] sm:$0xff]
    %v978 = vld [vmem:[#allocation7 + $0x168] sm:$0xff]
    %v979 = vld [vmem:[#allocation7 + $0x170] sm:$0xff]
    %v980 = vld [vmem:[#allocation7 + $0x178] sm:$0xff]
    %v981 = vld [vmem:[#allocation7 + $0x180] sm:$0xff]
    %v982 = vld [vmem:[#allocation7 + $0x188] sm:$0xff]
    %v983 = vld [vmem:[#allocation7 + $0x190] sm:$0xff]
    %v984 = vld [vmem:[#allocation7 + $0x198] sm:$0xff]
    %v985 = vld [vmem:[#allocation7 + $0x1a0] sm:$0xff]
    %v986 = vld [vmem:[#allocation7 + $0x1a8] sm:$0xff]
    %v987 = vld [vmem:[#allocation7 + $0x1b0] sm:$0xff]
    %v988 = vld [vmem:[#allocation7 + $0x1b8] sm:$0xff]
    %v989 = vld [vmem:[#allocation7 + $0x1c0] sm:$0xff]
    %v990 = vld [vmem:[#allocation7 + $0x1c8] sm:$0xff]
    %v991 = vld [vmem:[#allocation7 + $0x1d0] sm:$0xff]
    %v992 = vld [vmem:[#allocation7 + $0x1d8] sm:$0xff]
    %v993 = vld [vmem:[#allocation7 + $0x1e0] sm:$0xff]
    %v994 = vld [vmem:[#allocation7 + $0x1e8] sm:$0xff]
    %v995 = vld [vmem:[#allocation7 + $0x1f0] sm:$0xff]
    %v996 = vld [vmem:[#allocation7 + $0x1f8] sm:$0xff]
    %v997 = vld [vmem:[#allocation7 + $0x200] sm:$0xff]
    %v998 = vld [vmem:[#allocation7 + $0x208] sm:$0xff]
    %v999 = vld [vmem:[#allocation7 + $0x210] sm:$0xff]
    %v1000 = vld [vmem:[#allocation7 + $0x218] sm:$0xff]
    %v1001 = vld [vmem:[#allocation7 + $0x220] sm:$0xff]
    %v1002 = vld [vmem:[#allocation7 + $0x228] sm:$0xff]
    %v1003 = vld [vmem:[#allocation7 + $0x230] sm:$0xff]
    %v1004 = vld [vmem:[#allocation7 + $0x238] sm:$0xff]
    %v1005 = vld [vmem:[#allocation7 + $0x240] sm:$0xff]
    %v1006 = vld [vmem:[#allocation7 + $0x248] sm:$0xff]
    %v1007 = vld [vmem:[#allocation7 + $0x250] sm:$0xff]
    %v1008 = vld [vmem:[#allocation7 + $0x258] sm:$0xff]
    %v1009 = vld [vmem:[#allocation7 + $0x260] sm:$0xff]
    %v1010 = vld [vmem:[#allocation7 + $0x268] sm:$0xff]
    %v1011 = vld [vmem:[#allocation7 + $0x270] sm:$0xff]
    %v1012 = vld [vmem:[#allocation7 + $0x278] sm:$0xff]
    %v1013 = vld [vmem:[#allocation7 + $0x280] sm:$0xff]
    %v1014 = vld [vmem:[#allocation7 + $0x288] sm:$0xff]
    %v1015 = vld [vmem:[#allocation7 + $0x290] sm:$0xff]
    %v1016 = vld [vmem:[#allocation7 + $0x298] sm:$0xff]
    %v1017 = vld [vmem:[#allocation7 + $0x2a0] sm:$0xff]
    %v1018 = vld [vmem:[#allocation7 + $0x2a8] sm:$0xff]
    %v1019 = vld [vmem:[#allocation7 + $0x2b0] sm:$0xff]
    %v1020 = vld [vmem:[#allocation7 + $0x2b8] sm:$0xff]
    %v1021 = vld [vmem:[#allocation7 + $0x2c0] sm:$0xff]
    %v1022 = vld [vmem:[#allocation7 + $0x2c8] sm:$0xff]
    %v1023 = vld [vmem:[#allocation7 + $0x2d0] sm:$0xff]
    %v1024 = vld [vmem:[#allocation7 + $0x2d8] sm:$0xff]
    %v1025 = vld [vmem:[#allocation7 + $0x2e0] sm:$0xff]
    %v1026 = vld [vmem:[#allocation7 + $0x2e8] sm:$0xff]
    %v1027 = vld [vmem:[#allocation7 + $0x2f0] sm:$0xff]
    %v1028 = vld [vmem:[#allocation7 + $0x2f8] sm:$0xff]
    %v1029 = vld [vmem:[%s6] sm:$0x3]
    %v1031 = vlaneseq
    %v1032 = vshrl.u32 %v1031, 7
    %v1033 = vsub.s32 0, %v1032
    %v1034 = vrot.slane %v1029, %v1033
    %v1035 = vlaneseq
    %v1036 = vshrl.u32 %v1035, 7
    %v1037 = vsub.s32 1, %v1036
    %v1038 = vrot.slane %v1029, %v1037
    %vm1041 = vsmask.f32 4352
    %v1043 = vshrl.u32 %v903, 16
    %v1045 = vrot.slane %v1043, 3
    %v1046 = vshll.u32 %v903, 16
    %v1048 = vrot.slane %v1046, 4
    %v1049 = vor.u32 %v1045, %v1048
    %v1051 = vshrl.u32 %v909, 16
    %v1053 = vrot.slane %v1051, 3
    %v1054 = vshll.u32 %v909, 16
    %v1056 = vrot.slane %v1054, 4
    %v1057 = vor.u32 %v1053, %v1056
    %v1058 = vsel %vm1041, %v1049, %v1057
    %v1060 = vshrl.u32 %v904, 16
    %v1062 = vrot.slane %v1060, 3
    %v1063 = vshll.u32 %v904, 16
    %v1065 = vrot.slane %v1063, 4
    %v1066 = vor.u32 %v1062, %v1065
    %v1068 = vshrl.u32 %v910, 16
    %v1070 = vrot.slane %v1068, 3
    %v1071 = vshll.u32 %v910, 16
    %v1073 = vrot.slane %v1071, 4
    %v1074 = vor.u32 %v1070, %v1073
    %v1075 = vsel %vm1041, %v1066, %v1074
    %v1077 = vshrl.u32 %v905, 16
    %v1079 = vrot.slane %v1077, 3
    %v1080 = vshll.u32 %v905, 16
    %v1082 = vrot.slane %v1080, 4
    %v1083 = vor.u32 %v1079, %v1082
    %v1085 = vshrl.u32 %v911, 16
    %v1087 = vrot.slane %v1085, 3
    %v1088 = vshll.u32 %v911, 16
    %v1090 = vrot.slane %v1088, 4
    %v1091 = vor.u32 %v1087, %v1090
    %v1092 = vsel %vm1041, %v1083, %v1091
    %v1094 = vshrl.u32 %v906, 16
    %v1096 = vrot.slane %v1094, 3
    %v1097 = vshll.u32 %v906, 16
    %v1099 = vrot.slane %v1097, 4
    %v1100 = vor.u32 %v1096, %v1099
    %v1102 = vshrl.u32 %v912, 16
    %v1104 = vrot.slane %v1102, 3
    %v1105 = vshll.u32 %v912, 16
    %v1107 = vrot.slane %v1105, 4
    %v1108 = vor.u32 %v1104, %v1107
    %v1109 = vsel %vm1041, %v1100, %v1108
    %v1111 = vshrl.u32 %v907, 16
    %v1113 = vrot.slane %v1111, 3
    %v1114 = vshll.u32 %v907, 16
    %v1116 = vrot.slane %v1114, 4
    %v1117 = vor.u32 %v1113, %v1116
    %v1119 = vshrl.u32 %v913, 16
    %v1121 = vrot.slane %v1119, 3
    %v1122 = vshll.u32 %v913, 16
    %v1124 = vrot.slane %v1122, 4
    %v1125 = vor.u32 %v1121, %v1124
    %v1126 = vsel %vm1041, %v1117, %v1125
    %v1128 = vshrl.u32 %v908, 16
    %v1130 = vrot.slane %v1128, 3
    %v1131 = vshll.u32 %v908, 16
    %v1133 = vrot.slane %v1131, 4
    %v1134 = vor.u32 %v1130, %v1133
    %v1136 = vshrl.u32 %v914, 16
    %v1138 = vrot.slane %v1136, 3
    %v1139 = vshll.u32 %v914, 16
    %v1141 = vrot.slane %v1139, 4
    %v1142 = vor.u32 %v1138, %v1141
    %v1143 = vsel %vm1041, %v1134, %v1142
    %v1145 = vshrl.u32 %v915, 16
    %v1147 = vrot.slane %v1145, 3
    %v1148 = vshll.u32 %v915, 16
    %v1150 = vrot.slane %v1148, 4
    %v1151 = vor.u32 %v1147, %v1150
    %v1152 = vsel %vm1041, %v1057, %v1151
    %v1154 = vshrl.u32 %v916, 16
    %v1156 = vrot.slane %v1154, 3
    %v1157 = vshll.u32 %v916, 16
    %v1159 = vrot.slane %v1157, 4
    %v1160 = vor.u32 %v1156, %v1159
    %v1161 = vsel %vm1041, %v1074, %v1160
    %v1163 = vshrl.u32 %v917, 16
    %v1165 = vrot.slane %v1163, 3
    %v1166 = vshll.u32 %v917, 16
    %v1168 = vrot.slane %v1166, 4
    %v1169 = vor.u32 %v1165, %v1168
    %v1170 = vsel %vm1041, %v1091, %v1169
    %v1172 = vshrl.u32 %v918, 16
    %v1174 = vrot.slane %v1172, 3
    %v1175 = vshll.u32 %v918, 16
    %v1177 = vrot.slane %v1175, 4
    %v1178 = vor.u32 %v1174, %v1177
    %v1179 = vsel %vm1041, %v1108, %v1178
    %v1181 = vshrl.u32 %v919, 16
    %v1183 = vrot.slane %v1181, 3
    %v1184 = vshll.u32 %v919, 16
    %v1186 = vrot.slane %v1184, 4
    %v1187 = vor.u32 %v1183, %v1186
    %v1188 = vsel %vm1041, %v1125, %v1187
    %v1190 = vshrl.u32 %v920, 16
    %v1192 = vrot.slane %v1190, 3
    %v1193 = vshll.u32 %v920, 16
    %v1195 = vrot.slane %v1193, 4
    %v1196 = vor.u32 %v1192, %v1195
    %v1197 = vsel %vm1041, %v1142, %v1196
    %v1199 = vshrl.u32 %v921, 16
    %v1201 = vrot.slane %v1199, 3
    %v1202 = vshll.u32 %v921, 16
    %v1204 = vrot.slane %v1202, 4
    %v1205 = vor.u32 %v1201, %v1204
    %v1206 = vsel %vm1041, %v1151, %v1205
    %v1208 = vshrl.u32 %v922, 16
    %v1210 = vrot.slane %v1208, 3
    %v1211 = vshll.u32 %v922, 16
    %v1213 = vrot.slane %v1211, 4
    %v1214 = vor.u32 %v1210, %v1213
    %v1215 = vsel %vm1041, %v1160, %v1214
    %v1217 = vshrl.u32 %v923, 16
    %v1219 = vrot.slane %v1217, 3
    %v1220 = vshll.u32 %v923, 16
    %v1222 = vrot.slane %v1220, 4
    %v1223 = vor.u32 %v1219, %v1222
    %v1224 = vsel %vm1041, %v1169, %v1223
    %v1226 = vshrl.u32 %v924, 16
    %v1228 = vrot.slane %v1226, 3
    %v1229 = vshll.u32 %v924, 16
    %v1231 = vrot.slane %v1229, 4
    %v1232 = vor.u32 %v1228, %v1231
    %v1233 = vsel %vm1041, %v1178, %v1232
    %v1235 = vshrl.u32 %v925, 16
    %v1237 = vrot.slane %v1235, 3
    %v1238 = vshll.u32 %v925, 16
    %v1240 = vrot.slane %v1238, 4
    %v1241 = vor.u32 %v1237, %v1240
    %v1242 = vsel %vm1041, %v1187, %v1241
    %v1244 = vshrl.u32 %v926, 16
    %v1246 = vrot.slane %v1244, 3
    %v1247 = vshll.u32 %v926, 16
    %v1249 = vrot.slane %v1247, 4
    %v1250 = vor.u32 %v1246, %v1249
    %v1251 = vsel %vm1041, %v1196, %v1250
    %v1253 = vshrl.u32 %v927, 16
    %v1255 = vrot.slane %v1253, 3
    %v1256 = vshll.u32 %v927, 16
    %v1258 = vrot.slane %v1256, 4
    %v1259 = vor.u32 %v1255, %v1258
    %v1260 = vsel %vm1041, %v1205, %v1259
    %v1262 = vshrl.u32 %v928, 16
    %v1264 = vrot.slane %v1262, 3
    %v1265 = vshll.u32 %v928, 16
    %v1267 = vrot.slane %v1265, 4
    %v1268 = vor.u32 %v1264, %v1267
    %v1269 = vsel %vm1041, %v1214, %v1268
    %v1271 = vshrl.u32 %v929, 16
    %v1273 = vrot.slane %v1271, 3
    %v1274 = vshll.u32 %v929, 16
    %v1276 = vrot.slane %v1274, 4
    %v1277 = vor.u32 %v1273, %v1276
    %v1278 = vsel %vm1041, %v1223, %v1277
    %v1280 = vshrl.u32 %v930, 16
    %v1282 = vrot.slane %v1280, 3
    %v1283 = vshll.u32 %v930, 16
    %v1285 = vrot.slane %v1283, 4
    %v1286 = vor.u32 %v1282, %v1285
    %v1287 = vsel %vm1041, %v1232, %v1286
    %v1289 = vshrl.u32 %v931, 16
    %v1291 = vrot.slane %v1289, 3
    %v1292 = vshll.u32 %v931, 16
    %v1294 = vrot.slane %v1292, 4
    %v1295 = vor.u32 %v1291, %v1294
    %v1296 = vsel %vm1041, %v1241, %v1295
    %v1298 = vshrl.u32 %v932, 16
    %v1300 = vrot.slane %v1298, 3
    %v1301 = vshll.u32 %v932, 16
    %v1303 = vrot.slane %v1301, 4
    %v1304 = vor.u32 %v1300, %v1303
    %v1305 = vsel %vm1041, %v1250, %v1304
    %v1432 = vunpack.c.l.b16 %v933
    %v1433 = vunpack.c.h.b16 %v933
    %v1434 = vunpack.c.l.b16 %v934
    %v1435 = vunpack.c.h.b16 %v934
    %v1436 = vunpack.c.l.b16 %v935
    %v1437 = vunpack.c.h.b16 %v935
    %v1438 = vunpack.c.l.b16 %v936
    %v1439 = vunpack.c.h.b16 %v936
    %v1440 = vunpack.c.l.b16 %v937
    %v1441 = vunpack.c.h.b16 %v937
    %v1442 = vunpack.c.l.b16 %v938
    %v1443 = vunpack.c.h.b16 %v938
    %v1444 = vunpack.c.l.b16 %v939
    %v1445 = vunpack.c.h.b16 %v939
    %v1446 = vunpack.c.l.b16 %v940
    %v1447 = vunpack.c.h.b16 %v940
    %v1448 = vunpack.c.l.b16 %v941
    %v1449 = vunpack.c.h.b16 %v941
    %v1450 = vunpack.c.l.b16 %v942
    %v1451 = vunpack.c.h.b16 %v942
    %v1452 = vunpack.c.l.b16 %v943
    %v1453 = vunpack.c.h.b16 %v943
    %v1454 = vunpack.c.l.b16 %v944
    %v1455 = vunpack.c.h.b16 %v944
    %v1456 = vunpack.c.l.b16 %v945
    %v1457 = vunpack.c.h.b16 %v945
    %v1458 = vunpack.c.l.b16 %v946
    %v1459 = vunpack.c.h.b16 %v946
    %v1460 = vunpack.c.l.b16 %v947
    %v1461 = vunpack.c.h.b16 %v947
    %v1462 = vunpack.c.l.b16 %v948
    %v1463 = vunpack.c.h.b16 %v948
    %v1464 = vunpack.c.l.b16 %v949
    %v1465 = vunpack.c.h.b16 %v949
    %v1466 = vunpack.c.l.b16 %v950
    %v1467 = vunpack.c.h.b16 %v950
    %v1468 = vunpack.c.l.b16 %v951
    %v1469 = vunpack.c.h.b16 %v951
    %v1470 = vunpack.c.l.b16 %v952
    %v1471 = vunpack.c.h.b16 %v952
    %v1472 = vunpack.c.l.b16 %v953
    %v1473 = vunpack.c.h.b16 %v953
    %v1474 = vunpack.c.l.b16 %v954
    %v1475 = vunpack.c.h.b16 %v954
    %v1476 = vunpack.c.l.b16 %v955
    %v1477 = vunpack.c.h.b16 %v955
    %v1478 = vunpack.c.l.b16 %v956
    %v1479 = vunpack.c.h.b16 %v956
    %v1480 = vunpack.c.l.b16 %v957
    %v1481 = vunpack.c.h.b16 %v957
    %v1482 = vunpack.c.l.b16 %v958
    %v1483 = vunpack.c.h.b16 %v958
    %v1484 = vunpack.c.l.b16 %v959
    %v1485 = vunpack.c.h.b16 %v959
    %v1486 = vunpack.c.l.b16 %v960
    %v1487 = vunpack.c.h.b16 %v960
    %v1488 = vunpack.c.l.b16 %v961
    %v1489 = vunpack.c.h.b16 %v961
    %v1490 = vunpack.c.l.b16 %v962
    %v1491 = vunpack.c.h.b16 %v962
    %v1492 = vunpack.c.l.b16 %v963
    %v1493 = vunpack.c.h.b16 %v963
    %v1494 = vunpack.c.l.b16 %v964
    %v1495 = vunpack.c.h.b16 %v964
    %v1496 = vunpack.c.l.b16 %v965
    %v1497 = vunpack.c.h.b16 %v965
    %v1498 = vunpack.c.l.b16 %v966
    %v1499 = vunpack.c.h.b16 %v966
    %v1500 = vunpack.c.l.b16 %v967
    %v1501 = vunpack.c.h.b16 %v967
    %v1502 = vunpack.c.l.b16 %v968
    %v1503 = vunpack.c.h.b16 %v968
    %v1504 = vunpack.c.l.b16 %v969
    %v1505 = vunpack.c.h.b16 %v969
    %v1506 = vunpack.c.l.b16 %v970
    %v1507 = vunpack.c.h.b16 %v970
    %v1508 = vunpack.c.l.b16 %v971
    %v1509 = vunpack.c.h.b16 %v971
    %v1510 = vunpack.c.l.b16 %v972
    %v1511 = vunpack.c.h.b16 %v972
    %v1512 = vunpack.c.l.b16 %v973
    %v1513 = vunpack.c.h.b16 %v973
    %v1514 = vunpack.c.l.b16 %v974
    %v1515 = vunpack.c.h.b16 %v974
    %v1516 = vunpack.c.l.b16 %v975
    %v1517 = vunpack.c.h.b16 %v975
    %v1518 = vunpack.c.l.b16 %v976
    %v1519 = vunpack.c.h.b16 %v976
    %v1520 = vunpack.c.l.b16 %v977
    %v1521 = vunpack.c.h.b16 %v977
    %v1522 = vunpack.c.l.b16 %v978
    %v1523 = vunpack.c.h.b16 %v978
    %v1524 = vunpack.c.l.b16 %v979
    %v1525 = vunpack.c.h.b16 %v979
    %v1526 = vunpack.c.l.b16 %v980
    %v1527 = vunpack.c.h.b16 %v980
    %v1528 = vunpack.c.l.b16 %v981
    %v1529 = vunpack.c.h.b16 %v981
    %v1530 = vunpack.c.l.b16 %v982
    %v1531 = vunpack.c.h.b16 %v982
    %v1532 = vunpack.c.l.b16 %v983
    %v1533 = vunpack.c.h.b16 %v983
    %v1534 = vunpack.c.l.b16 %v984
    %v1535 = vunpack.c.h.b16 %v984
    %v1536 = vunpack.c.l.b16 %v985
    %v1537 = vunpack.c.h.b16 %v985
    %v1538 = vunpack.c.l.b16 %v986
    %v1539 = vunpack.c.h.b16 %v986
    %v1540 = vunpack.c.l.b16 %v987
    %v1541 = vunpack.c.h.b16 %v987
    %v1542 = vunpack.c.l.b16 %v988
    %v1543 = vunpack.c.h.b16 %v988
    %v1544 = vunpack.c.l.b16 %v989
    %v1545 = vunpack.c.h.b16 %v989
    %v1546 = vunpack.c.l.b16 %v990
    %v1547 = vunpack.c.h.b16 %v990
    %v1548 = vunpack.c.l.b16 %v991
    %v1549 = vunpack.c.h.b16 %v991
    %v1550 = vunpack.c.l.b16 %v992
    %v1551 = vunpack.c.h.b16 %v992
    %v1552 = vunpack.c.l.b16 %v993
    %v1553 = vunpack.c.h.b16 %v993
    %v1554 = vunpack.c.l.b16 %v994
    %v1555 = vunpack.c.h.b16 %v994
    %v1556 = vunpack.c.l.b16 %v995
    %v1557 = vunpack.c.h.b16 %v995
    %v1558 = vunpack.c.l.b16 %v996
    %v1559 = vunpack.c.h.b16 %v996
    %v1560 = vunpack.c.l.b16 %v997
    %v1561 = vunpack.c.h.b16 %v997
    %v1562 = vunpack.c.l.b16 %v998
    %v1563 = vunpack.c.h.b16 %v998
    %v1564 = vunpack.c.l.b16 %v999
    %v1565 = vunpack.c.h.b16 %v999
    %v1566 = vunpack.c.l.b16 %v1000
    %v1567 = vunpack.c.h.b16 %v1000
    %v1568 = vunpack.c.l.b16 %v1001
    %v1569 = vunpack.c.h.b16 %v1001
    %v1570 = vunpack.c.l.b16 %v1002
    %v1571 = vunpack.c.h.b16 %v1002
    %v1572 = vunpack.c.l.b16 %v1003
    %v1573 = vunpack.c.h.b16 %v1003
    %v1574 = vunpack.c.l.b16 %v1004
    %v1575 = vunpack.c.h.b16 %v1004
    %v1576 = vunpack.c.l.b16 %v1005
    %v1577 = vunpack.c.h.b16 %v1005
    %v1578 = vunpack.c.l.b16 %v1006
    %v1579 = vunpack.c.h.b16 %v1006
    %v1580 = vunpack.c.l.b16 %v1007
    %v1581 = vunpack.c.h.b16 %v1007
    %v1582 = vunpack.c.l.b16 %v1008
    %v1583 = vunpack.c.h.b16 %v1008
    %v1584 = vunpack.c.l.b16 %v1009
    %v1585 = vunpack.c.h.b16 %v1009
    %v1586 = vunpack.c.l.b16 %v1010
    %v1587 = vunpack.c.h.b16 %v1010
    %v1588 = vunpack.c.l.b16 %v1011
    %v1589 = vunpack.c.h.b16 %v1011
    %v1590 = vunpack.c.l.b16 %v1012
    %v1591 = vunpack.c.h.b16 %v1012
    %v1592 = vunpack.c.l.b16 %v1013
    %v1593 = vunpack.c.h.b16 %v1013
    %v1594 = vunpack.c.l.b16 %v1014
    %v1595 = vunpack.c.h.b16 %v1014
    %v1596 = vunpack.c.l.b16 %v1015
    %v1597 = vunpack.c.h.b16 %v1015
    %v1598 = vunpack.c.l.b16 %v1016
    %v1599 = vunpack.c.h.b16 %v1016
    %v1600 = vunpack.c.l.b16 %v1017
    %v1601 = vunpack.c.h.b16 %v1017
    %v1602 = vunpack.c.l.b16 %v1018
    %v1603 = vunpack.c.h.b16 %v1018
    %v1604 = vunpack.c.l.b16 %v1019
    %v1605 = vunpack.c.h.b16 %v1019
    %v1606 = vunpack.c.l.b16 %v1020
    %v1607 = vunpack.c.h.b16 %v1020
    %v1608 = vunpack.c.l.b16 %v1021
    %v1609 = vunpack.c.h.b16 %v1021
    %v1610 = vunpack.c.l.b16 %v1022
    %v1611 = vunpack.c.h.b16 %v1022
    %v1612 = vunpack.c.l.b16 %v1023
    %v1613 = vunpack.c.h.b16 %v1023
    %v1614 = vunpack.c.l.b16 %v1024
    %v1615 = vunpack.c.h.b16 %v1024
    %v1616 = vunpack.c.l.b16 %v1025
    %v1617 = vunpack.c.h.b16 %v1025
    %v1618 = vunpack.c.l.b16 %v1026
    %v1619 = vunpack.c.h.b16 %v1026
    %v1620 = vunpack.c.l.b16 %v1027
    %v1621 = vunpack.c.h.b16 %v1027
    %v1622 = vunpack.c.l.b16 %v1028
    %v1623 = vunpack.c.h.b16 %v1028
    %v1624 = vpack.c.b16 %v1434, %v1432
    %v1625 = vpack.c.b16 %v1435, %v1433
    %v1626 = vpack.c.b16 %v1438, %v1436
    %v1627 = vpack.c.b16 %v1439, %v1437
    %v1628 = vpack.c.b16 %v1442, %v1440
    %v1629 = vpack.c.b16 %v1443, %v1441
    %v1630 = vpack.c.b16 %v1446, %v1444
    %v1631 = vpack.c.b16 %v1447, %v1445
    %v1632 = vpack.c.b16 %v1450, %v1448
    %v1633 = vpack.c.b16 %v1451, %v1449
    %v1634 = vpack.c.b16 %v1454, %v1452
    %v1635 = vpack.c.b16 %v1455, %v1453
    %v1636 = vpack.c.b16 %v1458, %v1456
    %v1637 = vpack.c.b16 %v1459, %v1457
    %v1638 = vpack.c.b16 %v1462, %v1460
    %v1639 = vpack.c.b16 %v1463, %v1461
    %v1640 = vpack.c.b16 %v1466, %v1464
    %v1641 = vpack.c.b16 %v1467, %v1465
    %v1642 = vpack.c.b16 %v1470, %v1468
    %v1643 = vpack.c.b16 %v1471, %v1469
    %v1644 = vpack.c.b16 %v1474, %v1472
    %v1645 = vpack.c.b16 %v1475, %v1473
    %v1646 = vpack.c.b16 %v1478, %v1476
    %v1647 = vpack.c.b16 %v1479, %v1477
    %v1648 = vpack.c.b16 %v1482, %v1480
    %v1649 = vpack.c.b16 %v1483, %v1481
    %v1650 = vpack.c.b16 %v1486, %v1484
    %v1651 = vpack.c.b16 %v1487, %v1485
    %v1652 = vpack.c.b16 %v1490, %v1488
    %v1653 = vpack.c.b16 %v1491, %v1489
    %v1654 = vpack.c.b16 %v1494, %v1492
    %v1655 = vpack.c.b16 %v1495, %v1493
    %v1656 = vpack.c.b16 %v1498, %v1496
    %v1657 = vpack.c.b16 %v1499, %v1497
    %v1658 = vpack.c.b16 %v1502, %v1500
    %v1659 = vpack.c.b16 %v1503, %v1501
    %v1660 = vpack.c.b16 %v1506, %v1504
    %v1661 = vpack.c.b16 %v1507, %v1505
    %v1662 = vpack.c.b16 %v1510, %v1508
    %v1663 = vpack.c.b16 %v1511, %v1509
    %v1664 = vpack.c.b16 %v1514, %v1512
    %v1665 = vpack.c.b16 %v1515, %v1513
    %v1666 = vpack.c.b16 %v1518, %v1516
    %v1667 = vpack.c.b16 %v1519, %v1517
    %v1668 = vpack.c.b16 %v1522, %v1520
    %v1669 = vpack.c.b16 %v1523, %v1521
    %v1670 = vpack.c.b16 %v1526, %v1524
    %v1671 = vpack.c.b16 %v1527, %v1525
    %v1672 = vpack.c.b16 %v1530, %v1528
    %v1673 = vpack.c.b16 %v1531, %v1529
    %v1674 = vpack.c.b16 %v1534, %v1532
    %v1675 = vpack.c.b16 %v1535, %v1533
    %v1676 = vpack.c.b16 %v1538, %v1536
    %v1677 = vpack.c.b16 %v1539, %v1537
    %v1678 = vpack.c.b16 %v1542, %v1540
    %v1679 = vpack.c.b16 %v1543, %v1541
    %v1680 = vpack.c.b16 %v1546, %v1544
    %v1681 = vpack.c.b16 %v1547, %v1545
    %v1682 = vpack.c.b16 %v1550, %v1548
    %v1683 = vpack.c.b16 %v1551, %v1549
    %v1684 = vpack.c.b16 %v1554, %v1552
    %v1685 = vpack.c.b16 %v1555, %v1553
    %v1686 = vpack.c.b16 %v1558, %v1556
    %v1687 = vpack.c.b16 %v1559, %v1557
    %v1688 = vpack.c.b16 %v1562, %v1560
    %v1689 = vpack.c.b16 %v1563, %v1561
    %v1690 = vpack.c.b16 %v1566, %v1564
    %v1691 = vpack.c.b16 %v1567, %v1565
    %v1692 = vpack.c.b16 %v1570, %v1568
    %v1693 = vpack.c.b16 %v1571, %v1569
    %v1694 = vpack.c.b16 %v1574, %v1572
    %v1695 = vpack.c.b16 %v1575, %v1573
    %v1696 = vpack.c.b16 %v1578, %v1576
    %v1697 = vpack.c.b16 %v1579, %v1577
    %v1698 = vpack.c.b16 %v1582, %v1580
    %v1699 = vpack.c.b16 %v1583, %v1581
    %v1700 = vpack.c.b16 %v1586, %v1584
    %v1701 = vpack.c.b16 %v1587, %v1585
    %v1702 = vpack.c.b16 %v1590, %v1588
    %v1703 = vpack.c.b16 %v1591, %v1589
    %v1704 = vpack.c.b16 %v1594, %v1592
    %v1705 = vpack.c.b16 %v1595, %v1593
    %v1706 = vpack.c.b16 %v1598, %v1596
    %v1707 = vpack.c.b16 %v1599, %v1597
    %v1708 = vpack.c.b16 %v1602, %v1600
    %v1709 = vpack.c.b16 %v1603, %v1601
    %v1710 = vpack.c.b16 %v1606, %v1604
    %v1711 = vpack.c.b16 %v1607, %v1605
    %v1712 = vpack.c.b16 %v1610, %v1608
    %v1713 = vpack.c.b16 %v1611, %v1609
    %v1714 = vpack.c.b16 %v1614, %v1612
    %v1715 = vpack.c.b16 %v1615, %v1613
    %v1716 = vpack.c.b16 %v1618, %v1616
    %v1717 = vpack.c.b16 %v1619, %v1617
    %v1718 = vpack.c.b16 %v1622, %v1620
    %v1719 = vpack.c.b16 %v1623, %v1621
    %1816 = vmatprep.subr.bf16.mxu0 %v1625
    %1817 = vmatpush1.bf16.msra.mxu0 %v1624
    %1818 = vmatprep.subr.bf16.mxu0 %v1627
    %1819 = vmatpush1.bf16.msra.mxu0 %v1626
    %1820 = vmatprep.subr.bf16.mxu0 %v1629
    %1821 = vmatpush1.bf16.msra.mxu0 %v1628
    %1822 = vmatprep.subr.bf16.mxu0 %v1631
    %1823 = vmatpush1.bf16.msra.mxu0 %v1630
    %1824 = vmatprep.subr.bf16.mxu0 %v1633
    %1825 = vmatpush1.bf16.msra.mxu0 %v1632
    %1826 = vmatprep.subr.bf16.mxu0 %v1635
    %1827 = vmatpush1.bf16.msra.mxu0 %v1634
    %1828 = vmatprep.subr.bf16.mxu0 %v1637
    %1829 = vmatpush1.bf16.msra.mxu0 %v1636
    %1830 = vmatprep.subr.bf16.mxu0 %v1639
    %1831 = vmatpush1.bf16.msra.mxu0 %v1638
    %1832 = vmatprep.subr.bf16.mxu0 %v1641
    %1833 = vmatpush1.bf16.msra.mxu0 %v1640
    %1834 = vmatprep.subr.bf16.mxu0 %v1643
    %1835 = vmatpush1.bf16.msra.mxu0 %v1642
    %1836 = vmatprep.subr.bf16.mxu0 %v1645
    %1837 = vmatpush1.bf16.msra.mxu0 %v1644
    %1838 = vmatprep.subr.bf16.mxu0 %v1647
    %1839 = vmatpush1.bf16.msra.mxu0 %v1646
    %1840 = vmatprep.subr.bf16.mxu0 %v1649
    %1841 = vmatpush1.bf16.msra.mxu0 %v1648
    %1842 = vmatprep.subr.bf16.mxu0 %v1651
    %1843 = vmatpush1.bf16.msra.mxu0 %v1650
    %1844 = vmatprep.subr.bf16.mxu0 %v1653
    %1845 = vmatpush1.bf16.msra.mxu0 %v1652
    %1846 = vmatprep.subr.bf16.mxu0 %v1655
    %1847 = vmatpush1.bf16.msra.mxu0 %v1654
    %1848 = vmatprep.mubr.bf16.mxu0 %v1075
    %1849 = vmatmul.mubr.bf16.gmra.mrb[0].mxu0 %v1058
    %v1850 = vpop.f32.mrb[0].mxu0
    %v1851 = vadd.f32 %v1034, %v1850
    %v1852 = vpop.f32.mrb[0].mxu0
    %v1853 = vadd.f32 %v1038, %v1852
    %v1854 = vpop.f32.mrb[0].mxu0
    %v1855 = vadd.f32 %v1034, %v1854
    %v1856 = vpop.f32.mrb[0].mxu0
    %v1857 = vadd.f32 %v1038, %v1856
    %1858 = vmatprep.mubr.bf16.mxu0 %v1161
    %1859 = vmatmul.mubr.bf16.gmra.mrb[0].mxu0 %v1152
    %v1860 = vpop.f32.mrb[0].mxu0
    %v1861 = vadd.f32 %v1034, %v1860
    %v1862 = vpop.f32.mrb[0].mxu0
    %v1863 = vadd.f32 %v1038, %v1862
    %v1864 = vpop.f32.mrb[0].mxu0
    %v1865 = vadd.f32 %v1034, %v1864
    %v1866 = vpop.f32.mrb[0].mxu0
    %v1867 = vadd.f32 %v1038, %v1866
    %1868 = vmatprep.mubr.bf16.mxu0 %v1215
    %1869 = vmatmul.mubr.bf16.gmra.mrb[0].mxu0 %v1206
    %v1870 = vpop.f32.mrb[0].mxu0
    %v1871 = vadd.f32 %v1034, %v1870
    %v1872 = vpop.f32.mrb[0].mxu0
    %v1873 = vadd.f32 %v1038, %v1872
    %v1874 = vpop.f32.mrb[0].mxu0
    %v1875 = vadd.f32 %v1034, %v1874
    %v1876 = vpop.f32.mrb[0].mxu0
    %v1877 = vadd.f32 %v1038, %v1876
    %1878 = vmatprep.mubr.bf16.mxu0 %v1269
    %1879 = vmatmul.mubr.bf16.gmra.mrb[0].mxu0 %v1260
    %v1880 = vpop.f32.mrb[0].mxu0
    %v1881 = vadd.f32 %v1034, %v1880
    %v1882 = vpop.f32.mrb[0].mxu0
    %v1883 = vadd.f32 %v1038, %v1882
    %v1884 = vpop.f32.mrb[0].mxu0
    %v1885 = vadd.f32 %v1034, %v1884
    %v1886 = vpop.f32.mrb[0].mxu0
    %v1887 = vadd.f32 %v1038, %v1886
    %1888 = vmatprep.mubr.bf16.mxu0 %v1268
    %1889 = vmatmul.mubr.bf16.gmra.mrb[0].mxu0 %v1259
    %v1890 = vpop.f32.mrb[0].mxu0
    %v1891 = vadd.f32 %v1034, %v1890
    %v1892 = vpop.f32.mrb[0].mxu0
    %v1893 = vadd.f32 %v1038, %v1892
    %v1894 = vpop.f32.mrb[0].mxu0
    %v1895 = vpop.f32.mrb[0].mxu0
    %1896 = vdwg.mxu0
    %1897 = vmatprep.subr.bf16.mxu0 %v1657
    %1898 = vmatpush1.bf16.msra.mxu0 %v1656
    %1899 = vmatprep.subr.bf16.mxu0 %v1659
    %1900 = vmatpush1.bf16.msra.mxu0 %v1658
    %1901 = vmatprep.subr.bf16.mxu0 %v1661
    %1902 = vmatpush1.bf16.msra.mxu0 %v1660
    %1903 = vmatprep.subr.bf16.mxu0 %v1663
    %1904 = vmatpush1.bf16.msra.mxu0 %v1662
    %1905 = vmatprep.subr.bf16.mxu0 %v1665
    %1906 = vmatpush1.bf16.msra.mxu0 %v1664
    %1907 = vmatprep.subr.bf16.mxu0 %v1667
    %1908 = vmatpush1.bf16.msra.mxu0 %v1666
    %1909 = vmatprep.subr.bf16.mxu0 %v1669
    %1910 = vmatpush1.bf16.msra.mxu0 %v1668
    %1911 = vmatprep.subr.bf16.mxu0 %v1671
    %1912 = vmatpush1.bf16.msra.mxu0 %v1670
    %1913 = vmatprep.subr.bf16.mxu0 %v1673
    %1914 = vmatpush1.bf16.msra.mxu0 %v1672
    %1915 = vmatprep.subr.bf16.mxu0 %v1675
    %1916 = vmatpush1.bf16.msra.mxu0 %v1674
    %1917 = vmatprep.subr.bf16.mxu0 %v1677
    %1918 = vmatpush1.bf16.msra.mxu0 %v1676
    %1919 = vmatprep.subr.bf16.mxu0 %v1679
    %1920 = vmatpush1.bf16.msra.mxu0 %v1678
    %1921 = vmatprep.subr.bf16.mxu0 %v1681
    %1922 = vmatpush1.bf16.msra.mxu0 %v1680
    %1923 = vmatprep.subr.bf16.mxu0 %v1683
    %1924 = vmatpush1.bf16.msra.mxu0 %v1682
    %1925 = vmatprep.subr.bf16.mxu0 %v1685
    %1926 = vmatpush1.bf16.msra.mxu0 %v1684
    %1927 = vmatprep.subr.bf16.mxu0 %v1687
    %1928 = vmatpush1.bf16.msra.mxu0 %v1686
    %1929 = vmatprep.mubr.bf16.mxu0 %v1109
    %1930 = vmatmul.mubr.bf16.gmra.mrb[0].mxu0 %v1092
    %v1931 = vpop.f32.mrb[0].mxu0
    %v1932 = vadd.f32 %v1851, %v1931
    %v1933 = vpop.f32.mrb[0].mxu0
    %v1934 = vadd.f32 %v1853, %v1933
    %v1935 = vpop.f32.mrb[0].mxu0
    %v1936 = vadd.f32 %v1855, %v1935
    %v1937 = vpop.f32.mrb[0].mxu0
    %v1938 = vadd.f32 %v1857, %v1937
    %1939 = vmatprep.mubr.bf16.mxu0 %v1179
    %1940 = vmatmul.mubr.bf16.gmra.mrb[0].mxu0 %v1170
    %v1941 = vpop.f32.mrb[0].mxu0
    %v1942 = vadd.f32 %v1861, %v1941
    %v1943 = vpop.f32.mrb[0].mxu0
    %v1944 = vadd.f32 %v1863, %v1943
    %v1945 = vpop.f32.mrb[0].mxu0
    %v1946 = vadd.f32 %v1865, %v1945
    %v1947 = vpop.f32.mrb[0].mxu0
    %v1948 = vadd.f32 %v1867, %v1947
    %1949 = vmatprep.mubr.bf16.mxu0 %v1233
    %1950 = vmatmul.mubr.bf16.gmra.mrb[0].mxu0 %v1224
    %v1951 = vpop.f32.mrb[0].mxu0
    %v1952 = vadd.f32 %v1871, %v1951
    %v1953 = vpop.f32.mrb[0].mxu0
    %v1954 = vadd.f32 %v1873, %v1953
    %v1955 = vpop.f32.mrb[0].mxu0
    %v1956 = vadd.f32 %v1875, %v1955
    %v1957 = vpop.f32.mrb[0].mxu0
    %v1958 = vadd.f32 %v1877, %v1957
    %1959 = vmatprep.mubr.bf16.mxu0 %v1287
    %1960 = vmatmul.mubr.bf16.gmra.mrb[0].mxu0 %v1278
    %v1961 = vpop.f32.mrb[0].mxu0
    %v1962 = vadd.f32 %v1881, %v1961
    %v1963 = vpop.f32.mrb[0].mxu0
    %v1964 = vadd.f32 %v1883, %v1963
    %v1965 = vpop.f32.mrb[0].mxu0
    %v1966 = vadd.f32 %v1885, %v1965
    %v1967 = vpop.f32.mrb[0].mxu0
    %v1968 = vadd.f32 %v1887, %v1967
    %1969 = vmatprep.mubr.bf16.mxu0 %v1286
    %1970 = vmatmul.mubr.bf16.gmra.mrb[0].mxu0 %v1277
    %v1971 = vpop.f32.mrb[0].mxu0
    %v1972 = vadd.f32 %v1891, %v1971
    %v1973 = vpop.f32.mrb[0].mxu0
    %v1974 = vadd.f32 %v1893, %v1973
    %v1975 = vpop.f32.mrb[0].mxu0
    %v1976 = vpop.f32.mrb[0].mxu0
    %1977 = vdwg.mxu0
    %1978 = vmatprep.subr.bf16.mxu0 %v1689
    %1979 = vmatpush1.bf16.msra.mxu0 %v1688
    %1980 = vmatprep.subr.bf16.mxu0 %v1691
    %1981 = vmatpush1.bf16.msra.mxu0 %v1690
    %1982 = vmatprep.subr.bf16.mxu0 %v1693
    %1983 = vmatpush1.bf16.msra.mxu0 %v1692
    %1984 = vmatprep.subr.bf16.mxu0 %v1695
    %1985 = vmatpush1.bf16.msra.mxu0 %v1694
    %1986 = vmatprep.subr.bf16.mxu0 %v1697
    %1987 = vmatpush1.bf16.msra.mxu0 %v1696
    %1988 = vmatprep.subr.bf16.mxu0 %v1699
    %1989 = vmatpush1.bf16.msra.mxu0 %v1698
    %1990 = vmatprep.subr.bf16.mxu0 %v1701
    %1991 = vmatpush1.bf16.msra.mxu0 %v1700
    %1992 = vmatprep.subr.bf16.mxu0 %v1703
    %1993 = vmatpush1.bf16.msra.mxu0 %v1702
    %1994 = vmatprep.subr.bf16.mxu0 %v1705
    %1995 = vmatpush1.bf16.msra.mxu0 %v1704
    %1996 = vmatprep.subr.bf16.mxu0 %v1707
    %1997 = vmatpush1.bf16.msra.mxu0 %v1706
    %1998 = vmatprep.subr.bf16.mxu0 %v1709
    %1999 = vmatpush1.bf16.msra.mxu0 %v1708
    %2000 = vmatprep.subr.bf16.mxu0 %v1711
    %2001 = vmatpush1.bf16.msra.mxu0 %v1710
    %2002 = vmatprep.subr.bf16.mxu0 %v1713
    %2003 = vmatpush1.bf16.msra.mxu0 %v1712
    %2004 = vmatprep.subr.bf16.mxu0 %v1715
    %2005 = vmatpush1.bf16.msra.mxu0 %v1714
    %2006 = vmatprep.subr.bf16.mxu0 %v1717
    %2007 = vmatpush1.bf16.msra.mxu0 %v1716
    %2008 = vmatprep.subr.bf16.mxu0 %v1719
    %2009 = vmatpush1.bf16.msra.mxu0 %v1718
    %2010 = vmatprep.mubr.bf16.mxu0 %v1143
    %2011 = vmatmul.mubr.bf16.gmra.mrb[0].mxu0 %v1126
    %v2012 = vpop.f32.mrb[0].mxu0
    %v2013 = vadd.f32 %v1932, %v2012
    %v2014 = vpop.f32.mrb[0].mxu0
    %v2015 = vadd.f32 %v1934, %v2014
    %v2016 = vpop.f32.mrb[0].mxu0
    %v2017 = vadd.f32 %v1936, %v2016
    %v2018 = vpop.f32.mrb[0].mxu0
    %v2019 = vadd.f32 %v1938, %v2018
    %2020 = vmatprep.mubr.bf16.mxu0 %v1197
    %2021 = vmatmul.mubr.bf16.gmra.mrb[0].mxu0 %v1188
    %v2022 = vpop.f32.mrb[0].mxu0
    %v2023 = vadd.f32 %v1942, %v2022
    %v2024 = vpop.f32.mrb[0].mxu0
    %v2025 = vadd.f32 %v1944, %v2024
    %v2026 = vpop.f32.mrb[0].mxu0
    %v2027 = vadd.f32 %v1946, %v2026
    %v2028 = vpop.f32.mrb[0].mxu0
    %v2029 = vadd.f32 %v1948, %v2028
    %2030 = vmatprep.mubr.bf16.mxu0 %v1251
    %2031 = vmatmul.mubr.bf16.gmra.mrb[0].mxu0 %v1242
    %v2032 = vpop.f32.mrb[0].mxu0
    %v2033 = vadd.f32 %v1952, %v2032
    %v2034 = vpop.f32.mrb[0].mxu0
    %v2035 = vadd.f32 %v1954, %v2034
    %v2036 = vpop.f32.mrb[0].mxu0
    %v2037 = vadd.f32 %v1956, %v2036
    %v2038 = vpop.f32.mrb[0].mxu0
    %v2039 = vadd.f32 %v1958, %v2038
    %2040 = vmatprep.mubr.bf16.mxu0 %v1305
    %2041 = vmatmul.mubr.bf16.gmra.mrb[0].mxu0 %v1296
    %v2042 = vpop.f32.mrb[0].mxu0
    %v2043 = vadd.f32 %v1962, %v2042
    %v2044 = vpop.f32.mrb[0].mxu0
    %v2045 = vadd.f32 %v1964, %v2044
    %v2046 = vpop.f32.mrb[0].mxu0
    %v2047 = vadd.f32 %v1966, %v2046
    %v2048 = vpop.f32.mrb[0].mxu0
    %v2049 = vadd.f32 %v1968, %v2048
    %2050 = vmatprep.mubr.bf16.mxu0 %v1304
    %2051 = vmatmul.mubr.bf16.gmra.mrb[0].mxu0 %v1295
    %v2052 = vpop.f32.mrb[0].mxu0
    %v2053 = vadd.f32 %v1972, %v2052
    %v2054 = vpop.f32.mrb[0].mxu0
    %v2055 = vadd.f32 %v1974, %v2054
    %v2056 = vpop.f32.mrb[0].mxu0
    %v2057 = vpop.f32.mrb[0].mxu0
    %2058 = vdwg.mxu0
    %v2059 = vmul.f32 %v2013, %v300
    %v2060 = vmul.f32 %v2015, %v300
    %v2061 = vmul.f32 %v2017, %v301
    %v2062 = vmul.f32 %v2019, %v301
    %v2063 = vmul.f32 %v2023, %v302
    %v2064 = vmul.f32 %v2025, %v302
    %v2065 = vmul.f32 %v2027, %v303
    %v2066 = vmul.f32 %v2029, %v303
    %v2067 = vmul.f32 %v2033, %v304
    %v2068 = vmul.f32 %v2035, %v304
    %v2069 = vmul.f32 %v2037, %v305
    %v2070 = vmul.f32 %v2039, %v305
    %v2071 = vmul.f32 %v2043, %v306
    %v2072 = vmul.f32 %v2045, %v306
    %v2073 = vmul.f32 %v2047, %v307
    %v2074 = vmul.f32 %v2049, %v307
    %v2075 = vmul.f32 %v2053, %v308
    %v2076 = vmul.f32 %v2055, %v308
    %2077 = vst [vmem:[#allocation2 + $0x10] sm:$0xff] %v2059
    %2078 = vst [vmem:[#allocation2 + $0x18] sm:$0xff] %v2060
    %2079 = vst [vmem:[#allocation2 + $0x20] sm:$0xff] %v2061
    %2080 = vst [vmem:[#allocation2 + $0x28] sm:$0xff] %v2062
    %2081 = vst [vmem:[#allocation2 + $0x30] sm:$0xff] %v2063
    %2082 = vst [vmem:[#allocation2 + $0x38] sm:$0xff] %v2064
    %2083 = vst [vmem:[#allocation2 + $0x40] sm:$0xff] %v2065
    %2084 = vst [vmem:[#allocation2 + $0x48] sm:$0xff] %v2066
    %2085 = vst [vmem:[#allocation2 + $0x50] sm:$0xff] %v2067
    %2086 = vst [vmem:[#allocation2 + $0x58] sm:$0xff] %v2068
    %2087 = vst [vmem:[#allocation2 + $0x60] sm:$0xff] %v2069
    %2088 = vst [vmem:[#allocation2 + $0x68] sm:$0xff] %v2070
    %2089 = vst [vmem:[#allocation2 + $0x70] sm:$0xff] %v2071
    %2090 = vst [vmem:[#allocation2 + $0x78] sm:$0xff] %v2072
    %2091 = vst [vmem:[#allocation2 + $0x80] sm:$0xff] %v2073
    %2092 = vst [vmem:[#allocation2 + $0x88] sm:$0xff] %v2074
    %2093 = vst [vmem:[#allocation2 + $0x90] sm:$0xff] %v2075
    %2094 = vst [vmem:[#allocation2 + $0x98] sm:$0xff] %v2076
    %v2095 = vld [vmem:[#allocation2] sm:$0x80]
    %v2096 = vld [vmem:[#allocation2 + $0x8] sm:$0x80]
    %v2097 = vld [vmem:[#allocation2 + $0x10] sm:$0xff]
    %v2098 = vld [vmem:[#allocation2 + $0x18] sm:$0xff]
    %v2099 = vld [vmem:[#allocation2 + $0x20] sm:$0xff]
    %v2100 = vld [vmem:[#allocation2 + $0x28] sm:$0xff]
    %v2101 = vld [vmem:[#allocation2 + $0x30] sm:$0xff]
    %v2102 = vld [vmem:[#allocation2 + $0x38] sm:$0xff]
    %v2103 = vld [vmem:[#allocation2 + $0x40] sm:$0xff]
    %v2104 = vld [vmem:[#allocation2 + $0x48] sm:$0xff]
    %v2105 = vld [vmem:[#allocation2 + $0x50] sm:$0xff]
    %v2106 = vld [vmem:[#allocation2 + $0x58] sm:$0xff]
    %v2107 = vld [vmem:[#allocation2 + $0x60] sm:$0xff]
    %v2108 = vld [vmem:[#allocation2 + $0x68] sm:$0xff]
    %v2109 = vld [vmem:[#allocation2 + $0x70] sm:$0xff]
    %v2110 = vld [vmem:[#allocation2 + $0x78] sm:$0xff]
    %v2111 = vld [vmem:[#allocation2 + $0x80] sm:$0xff]
    %v2112 = vld [vmem:[#allocation2 + $0x88] sm:$0xff]
    %v2113 = vld [vmem:[#allocation2 + $0x90] sm:$0x7f]
    %v2114 = vld [vmem:[#allocation2 + $0x98] sm:$0x7f]
    %v2115 = vld [vmem:[#allocation2 + $0x10] sm:$0xfe]
    %v2116 = vld [vmem:[#allocation2 + $0x18] sm:$0xfe]
    %v2117 = vld [vmem:[#allocation2 + $0x20] sm:$0xff]
    %v2118 = vld [vmem:[#allocation2 + $0x28] sm:$0xff]
    %v2119 = vld [vmem:[#allocation2 + $0x30] sm:$0xff]
    %v2120 = vld [vmem:[#allocation2 + $0x38] sm:$0xff]
    %v2121 = vld [vmem:[#allocation2 + $0x40] sm:$0xff]
    %v2122 = vld [vmem:[#allocation2 + $0x48] sm:$0xff]
    %v2123 = vld [vmem:[#allocation2 + $0x50] sm:$0xff]
    %v2124 = vld [vmem:[#allocation2 + $0x58] sm:$0xff]
    %v2125 = vld [vmem:[#allocation2 + $0x60] sm:$0xff]
    %v2126 = vld [vmem:[#allocation2 + $0x68] sm:$0xff]
    %v2127 = vld [vmem:[#allocation2 + $0x70] sm:$0xff]
    %v2128 = vld [vmem:[#allocation2 + $0x78] sm:$0xff]
    %v2129 = vld [vmem:[#allocation2 + $0x80] sm:$0xff]
    %v2130 = vld [vmem:[#allocation2 + $0x88] sm:$0xff]
    %v2131 = vld [vmem:[#allocation2 + $0x90] sm:$0xff]
    %v2132 = vld [vmem:[#allocation2 + $0x98] sm:$0xff]
    %v2133 = vld [vmem:[#allocation2 + $0xa0] sm:$0x1]
    %v2134 = vld [vmem:[#allocation2 + $0xa8] sm:$0x1]
    %v2153 = vrot.slane %v2059, 1
    %v2154 = vrot.slane %v2060, 1
    %v2155 = vrot.slane %v2061, 1
    %v2156 = vsel %vm769, %v2153, %v2155
    %v2157 = vrot.slane %v2062, 1
    %v2158 = vsel %vm769, %v2154, %v2157
    %v2159 = vrot.slane %v2063, 1
    %v2160 = vsel %vm769, %v2155, %v2159
    %v2161 = vrot.slane %v2064, 1
    %v2162 = vsel %vm769, %v2157, %v2161
    %v2163 = vrot.slane %v2065, 1
    %v2164 = vsel %vm769, %v2159, %v2163
    %v2165 = vrot.slane %v2066, 1
    %v2166 = vsel %vm769, %v2161, %v2165
    %v2167 = vrot.slane %v2067, 1
    %v2168 = vsel %vm769, %v2163, %v2167
    %v2169 = vrot.slane %v2068, 1
    %v2170 = vsel %vm769, %v2165, %v2169
    %v2171 = vrot.slane %v2069, 1
    %v2172 = vsel %vm769, %v2167, %v2171
    %v2173 = vrot.slane %v2070, 1
    %v2174 = vsel %vm769, %v2169, %v2173
    %v2175 = vrot.slane %v2071, 1
    %v2176 = vsel %vm769, %v2171, %v2175
    %v2177 = vrot.slane %v2072, 1
    %v2178 = vsel %vm769, %v2173, %v2177
    %v2179 = vrot.slane %v2073, 1
    %v2180 = vsel %vm769, %v2175, %v2179
    %v2181 = vrot.slane %v2074, 1
    %v2182 = vsel %vm769, %v2177, %v2181
    %v2183 = vrot.slane %v2075, 1
    %v2184 = vsel %vm769, %v2179, %v2183
    %v2185 = vrot.slane %v2076, 1
    %v2186 = vsel %vm769, %v2181, %v2185
    %v2227 = vrot.slane %v2115, 2
    %v2228 = vrot.slane %v2116, 2
    %v2229 = vrot.slane %v2117, 2
    %v2230 = vsel %vm844, %v2227, %v2229
    %v2231 = vrot.slane %v2118, 2
    %v2232 = vsel %vm844, %v2228, %v2231
    %v2233 = vrot.slane %v2119, 2
    %v2234 = vsel %vm844, %v2229, %v2233
    %v2235 = vrot.slane %v2120, 2
    %v2236 = vsel %vm844, %v2231, %v2235
    %v2237 = vrot.slane %v2121, 2
    %v2238 = vsel %vm844, %v2233, %v2237
    %v2239 = vrot.slane %v2122, 2
    %v2240 = vsel %vm844, %v2235, %v2239
    %v2241 = vrot.slane %v2123, 2
    %v2242 = vsel %vm844, %v2237, %v2241
    %v2243 = vrot.slane %v2124, 2
    %v2244 = vsel %vm844, %v2239, %v2243
    %v2245 = vrot.slane %v2125, 2
    %v2246 = vsel %vm844, %v2241, %v2245
    %v2247 = vrot.slane %v2126, 2
    %v2248 = vsel %vm844, %v2243, %v2247
    %v2249 = vrot.slane %v2127, 2
    %v2250 = vsel %vm844, %v2245, %v2249
    %v2251 = vrot.slane %v2128, 2
    %v2252 = vsel %vm844, %v2247, %v2251
    %v2253 = vrot.slane %v2129, 2
    %v2254 = vsel %vm844, %v2249, %v2253
    %v2255 = vrot.slane %v2130, 2
    %v2256 = vsel %vm844, %v2251, %v2255
    %v2257 = vrot.slane %v2131, 2
    %v2258 = vsel %vm844, %v2253, %v2257
    %v2259 = vrot.slane %v2132, 2
    %v2260 = vsel %vm844, %v2255, %v2259
    %v2261 = vrot.slane %v2133, 2
    %v2262 = vsel %vm844, %v2257, %v2261
    %v2263 = vrot.slane %v2134, 2
    %v2264 = vsel %vm844, %v2259, %v2263
    %v2285 = vpack.c.bf16 %v2097, %v2095
    %v2286 = vpack.c.bf16 %v2098, %v2096
    %v2287 = vpack.c.bf16 %v2156, %v2153
    %v2288 = vpack.c.bf16 %v2158, %v2154
    %v2289 = vpack.c.bf16 %v2230, %v2227
    %v2290 = vpack.c.bf16 %v2232, %v2228
    %v2291 = vpack.c.bf16 %v2101, %v2099
    %v2292 = vpack.c.bf16 %v2102, %v2100
    %v2293 = vpack.c.bf16 %v2164, %v2160
    %v2294 = vpack.c.bf16 %v2166, %v2162
    %v2295 = vpack.c.bf16 %v2238, %v2234
    %v2296 = vpack.c.bf16 %v2240, %v2236
    %v2297 = vpack.c.bf16 %v2105, %v2103
    %v2298 = vpack.c.bf16 %v2106, %v2104
    %v2299 = vpack.c.bf16 %v2172, %v2168
    %v2300 = vpack.c.bf16 %v2174, %v2170
    %v2301 = vpack.c.bf16 %v2246, %v2242
    %v2302 = vpack.c.bf16 %v2248, %v2244
    %v2303 = vpack.c.bf16 %v2109, %v2107
    %v2304 = vpack.c.bf16 %v2110, %v2108
    %v2305 = vpack.c.bf16 %v2180, %v2176
    %v2306 = vpack.c.bf16 %v2182, %v2178
    %v2307 = vpack.c.bf16 %v2254, %v2250
    %v2308 = vpack.c.bf16 %v2256, %v2252
    %v2309 = vpack.c.bf16 %v2113, %v2111
    %v2310 = vpack.c.bf16 %v2114, %v2112
    %v2311 = vpack.c.bf16 %v2183, %v2184
    %v2312 = vpack.c.bf16 %v2185, %v2186
    %v2313 = vpack.c.bf16 %v2262, %v2258
    %v2314 = vpack.c.bf16 %v2264, %v2260
    %v2315 = vld [vmem:[#allocation12] sm:$0xff]
    %v2316 = vld [vmem:[#allocation12 + $0x8] sm:$0xff]
    %v2317 = vld [vmem:[#allocation12 + $0x10] sm:$0xff]
    %v2318 = vld [vmem:[#allocation12 + $0x18] sm:$0xff]
    %v2319 = vld [vmem:[#allocation12 + $0x20] sm:$0xff]
    %v2320 = vld [vmem:[#allocation12 + $0x28] sm:$0xff]
    %v2321 = vld [vmem:[#allocation12 + $0x30] sm:$0xff]
    %v2322 = vld [vmem:[#allocation12 + $0x38] sm:$0xff]
    %v2323 = vld [vmem:[#allocation12 + $0x40] sm:$0xff]
    %v2324 = vld [vmem:[#allocation12 + $0x48] sm:$0xff]
    %v2325 = vld [vmem:[#allocation12 + $0x50] sm:$0xff]
    %v2326 = vld [vmem:[#allocation12 + $0x58] sm:$0xff]
    %v2327 = vld [vmem:[#allocation12 + $0x60] sm:$0xff]
    %v2328 = vld [vmem:[#allocation12 + $0x68] sm:$0xff]
    %v2329 = vld [vmem:[#allocation12 + $0x70] sm:$0xff]
    %v2330 = vld [vmem:[#allocation12 + $0x78] sm:$0xff]
    %v2331 = vld [vmem:[#allocation12 + $0x80] sm:$0xff]
    %v2332 = vld [vmem:[#allocation12 + $0x88] sm:$0xff]
    %v2333 = vld [vmem:[#allocation12 + $0x90] sm:$0xff]
    %v2334 = vld [vmem:[#allocation12 + $0x98] sm:$0xff]
    %v2335 = vld [vmem:[#allocation12 + $0xa0] sm:$0xff]
    %v2336 = vld [vmem:[#allocation12 + $0xa8] sm:$0xff]
    %v2337 = vld [vmem:[#allocation12 + $0xb0] sm:$0xff]
    %v2338 = vld [vmem:[#allocation12 + $0xb8] sm:$0xff]
    %v2339 = vld [vmem:[#allocation12 + $0xc0] sm:$0xff]
    %v2340 = vld [vmem:[#allocation12 + $0xc8] sm:$0xff]
    %v2341 = vld [vmem:[#allocation12 + $0xd0] sm:$0xff]
    %v2342 = vld [vmem:[#allocation12 + $0xd8] sm:$0xff]
    %v2343 = vld [vmem:[#allocation12 + $0xe0] sm:$0xff]
    %v2344 = vld [vmem:[#allocation12 + $0xe8] sm:$0xff]
    %v2345 = vld [vmem:[#allocation12 + $0xf0] sm:$0xff]
    %v2346 = vld [vmem:[#allocation12 + $0xf8] sm:$0xff]
    %v2347 = vld [vmem:[#allocation12 + $0x100] sm:$0xff]
    %v2348 = vld [vmem:[#allocation12 + $0x108] sm:$0xff]
    %v2349 = vld [vmem:[#allocation12 + $0x110] sm:$0xff]
    %v2350 = vld [vmem:[#allocation12 + $0x118] sm:$0xff]
    %v2351 = vld [vmem:[#allocation12 + $0x120] sm:$0xff]
    %v2352 = vld [vmem:[#allocation12 + $0x128] sm:$0xff]
    %v2353 = vld [vmem:[#allocation12 + $0x130] sm:$0xff]
    %v2354 = vld [vmem:[#allocation12 + $0x138] sm:$0xff]
    %v2355 = vld [vmem:[#allocation12 + $0x140] sm:$0xff]
    %v2356 = vld [vmem:[#allocation12 + $0x148] sm:$0xff]
    %v2357 = vld [vmem:[#allocation12 + $0x150] sm:$0xff]
    %v2358 = vld [vmem:[#allocation12 + $0x158] sm:$0xff]
    %v2359 = vld [vmem:[#allocation12 + $0x160] sm:$0xff]
    %v2360 = vld [vmem:[#allocation12 + $0x168] sm:$0xff]
    %v2361 = vld [vmem:[#allocation12 + $0x170] sm:$0xff]
    %v2362 = vld [vmem:[#allocation12 + $0x178] sm:$0xff]
    %v2363 = vld [vmem:[#allocation12 + $0x180] sm:$0xff]
    %v2364 = vld [vmem:[#allocation12 + $0x188] sm:$0xff]
    %v2365 = vld [vmem:[#allocation12 + $0x190] sm:$0xff]
    %v2366 = vld [vmem:[#allocation12 + $0x198] sm:$0xff]
    %v2367 = vld [vmem:[#allocation12 + $0x1a0] sm:$0xff]
    %v2368 = vld [vmem:[#allocation12 + $0x1a8] sm:$0xff]
    %v2369 = vld [vmem:[#allocation12 + $0x1b0] sm:$0xff]
    %v2370 = vld [vmem:[#allocation12 + $0x1b8] sm:$0xff]
    %v2371 = vld [vmem:[#allocation12 + $0x1c0] sm:$0xff]
    %v2372 = vld [vmem:[#allocation12 + $0x1c8] sm:$0xff]
    %v2373 = vld [vmem:[#allocation12 + $0x1d0] sm:$0xff]
    %v2374 = vld [vmem:[#allocation12 + $0x1d8] sm:$0xff]
    %v2375 = vld [vmem:[#allocation12 + $0x1e0] sm:$0xff]
    %v2376 = vld [vmem:[#allocation12 + $0x1e8] sm:$0xff]
    %v2377 = vld [vmem:[#allocation12 + $0x1f0] sm:$0xff]
    %v2378 = vld [vmem:[#allocation12 + $0x1f8] sm:$0xff]
    %v2379 = vld [vmem:[#allocation12 + $0x200] sm:$0xff]
    %v2380 = vld [vmem:[#allocation12 + $0x208] sm:$0xff]
    %v2381 = vld [vmem:[#allocation12 + $0x210] sm:$0xff]
    %v2382 = vld [vmem:[#allocation12 + $0x218] sm:$0xff]
    %v2383 = vld [vmem:[#allocation12 + $0x220] sm:$0xff]
    %v2384 = vld [vmem:[#allocation12 + $0x228] sm:$0xff]
    %v2385 = vld [vmem:[#allocation12 + $0x230] sm:$0xff]
    %v2386 = vld [vmem:[#allocation12 + $0x238] sm:$0xff]
    %v2387 = vld [vmem:[#allocation12 + $0x240] sm:$0xff]
    %v2388 = vld [vmem:[#allocation12 + $0x248] sm:$0xff]
    %v2389 = vld [vmem:[#allocation12 + $0x250] sm:$0xff]
    %v2390 = vld [vmem:[#allocation12 + $0x258] sm:$0xff]
    %v2391 = vld [vmem:[#allocation12 + $0x260] sm:$0xff]
    %v2392 = vld [vmem:[#allocation12 + $0x268] sm:$0xff]
    %v2393 = vld [vmem:[#allocation12 + $0x270] sm:$0xff]
    %v2394 = vld [vmem:[#allocation12 + $0x278] sm:$0xff]
    %v2395 = vld [vmem:[#allocation12 + $0x280] sm:$0xff]
    %v2396 = vld [vmem:[#allocation12 + $0x288] sm:$0xff]
    %v2397 = vld [vmem:[#allocation12 + $0x290] sm:$0xff]
    %v2398 = vld [vmem:[#allocation12 + $0x298] sm:$0xff]
    %v2399 = vld [vmem:[#allocation12 + $0x2a0] sm:$0xff]
    %v2400 = vld [vmem:[#allocation12 + $0x2a8] sm:$0xff]
    %v2401 = vld [vmem:[#allocation12 + $0x2b0] sm:$0xff]
    %v2402 = vld [vmem:[#allocation12 + $0x2b8] sm:$0xff]
    %v2403 = vld [vmem:[#allocation12 + $0x2c0] sm:$0xff]
    %v2404 = vld [vmem:[#allocation12 + $0x2c8] sm:$0xff]
    %v2405 = vld [vmem:[#allocation12 + $0x2d0] sm:$0xff]
    %v2406 = vld [vmem:[#allocation12 + $0x2d8] sm:$0xff]
    %v2407 = vld [vmem:[#allocation12 + $0x2e0] sm:$0xff]
    %v2408 = vld [vmem:[#allocation12 + $0x2e8] sm:$0xff]
    %v2409 = vld [vmem:[#allocation12 + $0x2f0] sm:$0xff]
    %v2410 = vld [vmem:[#allocation12 + $0x2f8] sm:$0xff]
    %v2412 = vshrl.u32 %v2285, 16
    %v2414 = vrot.slane %v2412, 3
    %v2415 = vshll.u32 %v2285, 16
    %v2417 = vrot.slane %v2415, 4
    %v2418 = vor.u32 %v2414, %v2417
    %v2420 = vshrl.u32 %v2291, 16
    %v2422 = vrot.slane %v2420, 3
    %v2423 = vshll.u32 %v2291, 16
    %v2425 = vrot.slane %v2423, 4
    %v2426 = vor.u32 %v2422, %v2425
    %v2427 = vsel %vm1041, %v2418, %v2426
    %v2429 = vshrl.u32 %v2286, 16
    %v2431 = vrot.slane %v2429, 3
    %v2432 = vshll.u32 %v2286, 16
    %v2434 = vrot.slane %v2432, 4
    %v2435 = vor.u32 %v2431, %v2434
    %v2437 = vshrl.u32 %v2292, 16
    %v2439 = vrot.slane %v2437, 3
    %v2440 = vshll.u32 %v2292, 16
    %v2442 = vrot.slane %v2440, 4
    %v2443 = vor.u32 %v2439, %v2442
    %v2444 = vsel %vm1041, %v2435, %v2443
    %v2446 = vshrl.u32 %v2287, 16
    %v2448 = vrot.slane %v2446, 3
    %v2449 = vshll.u32 %v2287, 16
    %v2451 = vrot.slane %v2449, 4
    %v2452 = vor.u32 %v2448, %v2451
    %v2454 = vshrl.u32 %v2293, 16
    %v2456 = vrot.slane %v2454, 3
    %v2457 = vshll.u32 %v2293, 16
    %v2459 = vrot.slane %v2457, 4
    %v2460 = vor.u32 %v2456, %v2459
    %v2461 = vsel %vm1041, %v2452, %v2460
    %v2463 = vshrl.u32 %v2288, 16
    %v2465 = vrot.slane %v2463, 3
    %v2466 = vshll.u32 %v2288, 16
    %v2468 = vrot.slane %v2466, 4
    %v2469 = vor.u32 %v2465, %v2468
    %v2471 = vshrl.u32 %v2294, 16
    %v2473 = vrot.slane %v2471, 3
    %v2474 = vshll.u32 %v2294, 16
    %v2476 = vrot.slane %v2474, 4
    %v2477 = vor.u32 %v2473, %v2476
    %v2478 = vsel %vm1041, %v2469, %v2477
    %v2480 = vshrl.u32 %v2289, 16
    %v2482 = vrot.slane %v2480, 3
    %v2483 = vshll.u32 %v2289, 16
    %v2485 = vrot.slane %v2483, 4
    %v2486 = vor.u32 %v2482, %v2485
    %v2488 = vshrl.u32 %v2295, 16
    %v2490 = vrot.slane %v2488, 3
    %v2491 = vshll.u32 %v2295, 16
    %v2493 = vrot.slane %v2491, 4
    %v2494 = vor.u32 %v2490, %v2493
    %v2495 = vsel %vm1041, %v2486, %v2494
    %v2497 = vshrl.u32 %v2290, 16
    %v2499 = vrot.slane %v2497, 3
    %v2500 = vshll.u32 %v2290, 16
    %v2502 = vrot.slane %v2500, 4
    %v2503 = vor.u32 %v2499, %v2502
    %v2505 = vshrl.u32 %v2296, 16
    %v2507 = vrot.slane %v2505, 3
    %v2508 = vshll.u32 %v2296, 16
    %v2510 = vrot.slane %v2508, 4
    %v2511 = vor.u32 %v2507, %v2510
    %v2512 = vsel %vm1041, %v2503, %v2511
    %v2514 = vshrl.u32 %v2297, 16
    %v2516 = vrot.slane %v2514, 3
    %v2517 = vshll.u32 %v2297, 16
    %v2519 = vrot.slane %v2517, 4
    %v2520 = vor.u32 %v2516, %v2519
    %v2521 = vsel %vm1041, %v2426, %v2520
    %v2523 = vshrl.u32 %v2298, 16
    %v2525 = vrot.slane %v2523, 3
    %v2526 = vshll.u32 %v2298, 16
    %v2528 = vrot.slane %v2526, 4
    %v2529 = vor.u32 %v2525, %v2528
    %v2530 = vsel %vm1041, %v2443, %v2529
    %v2532 = vshrl.u32 %v2299, 16
    %v2534 = vrot.slane %v2532, 3
    %v2535 = vshll.u32 %v2299, 16
    %v2537 = vrot.slane %v2535, 4
    %v2538 = vor.u32 %v2534, %v2537
    %v2539 = vsel %vm1041, %v2460, %v2538
    %v2541 = vshrl.u32 %v2300, 16
    %v2543 = vrot.slane %v2541, 3
    %v2544 = vshll.u32 %v2300, 16
    %v2546 = vrot.slane %v2544, 4
    %v2547 = vor.u32 %v2543, %v2546
    %v2548 = vsel %vm1041, %v2477, %v2547
    %v2550 = vshrl.u32 %v2301, 16
    %v2552 = vrot.slane %v2550, 3
    %v2553 = vshll.u32 %v2301, 16
    %v2555 = vrot.slane %v2553, 4
    %v2556 = vor.u32 %v2552, %v2555
    %v2557 = vsel %vm1041, %v2494, %v2556
    %v2559 = vshrl.u32 %v2302, 16
    %v2561 = vrot.slane %v2559, 3
    %v2562 = vshll.u32 %v2302, 16
    %v2564 = vrot.slane %v2562, 4
    %v2565 = vor.u32 %v2561, %v2564
    %v2566 = vsel %vm1041, %v2511, %v2565
    %v2568 = vshrl.u32 %v2303, 16
    %v2570 = vrot.slane %v2568, 3
    %v2571 = vshll.u32 %v2303, 16
    %v2573 = vrot.slane %v2571, 4
    %v2574 = vor.u32 %v2570, %v2573
    %v2575 = vsel %vm1041, %v2520, %v2574
    %v2577 = vshrl.u32 %v2304, 16
    %v2579 = vrot.slane %v2577, 3
    %v2580 = vshll.u32 %v2304, 16
    %v2582 = vrot.slane %v2580, 4
    %v2583 = vor.u32 %v2579, %v2582
    %v2584 = vsel %vm1041, %v2529, %v2583
    %v2586 = vshrl.u32 %v2305, 16
    %v2588 = vrot.slane %v2586, 3
    %v2589 = vshll.u32 %v2305, 16
    %v2591 = vrot.slane %v2589, 4
    %v2592 = vor.u32 %v2588, %v2591
    %v2593 = vsel %vm1041, %v2538, %v2592
    %v2595 = vshrl.u32 %v2306, 16
    %v2597 = vrot.slane %v2595, 3
    %v2598 = vshll.u32 %v2306, 16
    %v2600 = vrot.slane %v2598, 4
    %v2601 = vor.u32 %v2597, %v2600
    %v2602 = vsel %vm1041, %v2547, %v2601
    %v2604 = vshrl.u32 %v2307, 16
    %v2606 = vrot.slane %v2604, 3
    %v2607 = vshll.u32 %v2307, 16
    %v2609 = vrot.slane %v2607, 4
    %v2610 = vor.u32 %v2606, %v2609
    %v2611 = vsel %vm1041, %v2556, %v2610
    %v2613 = vshrl.u32 %v2308, 16
    %v2615 = vrot.slane %v2613, 3
    %v2616 = vshll.u32 %v2308, 16
    %v2618 = vrot.slane %v2616, 4
    %v2619 = vor.u32 %v2615, %v2618
    %v2620 = vsel %vm1041, %v2565, %v2619
    %v2622 = vshrl.u32 %v2309, 16
    %v2624 = vrot.slane %v2622, 3
    %v2625 = vshll.u32 %v2309, 16
    %v2627 = vrot.slane %v2625, 4
    %v2628 = vor.u32 %v2624, %v2627
    %v2629 = vsel %vm1041, %v2574, %v2628
    %v2631 = vshrl.u32 %v2310, 16
    %v2633 = vrot.slane %v2631, 3
    %v2634 = vshll.u32 %v2310, 16
    %v2636 = vrot.slane %v2634, 4
    %v2637 = vor.u32 %v2633, %v2636
    %v2638 = vsel %vm1041, %v2583, %v2637
    %v2640 = vshrl.u32 %v2311, 16
    %v2642 = vrot.slane %v2640, 3
    %v2643 = vshll.u32 %v2311, 16
    %v2645 = vrot.slane %v2643, 4
    %v2646 = vor.u32 %v2642, %v2645
    %v2647 = vsel %vm1041, %v2592, %v2646
    %v2649 = vshrl.u32 %v2312, 16
    %v2651 = vrot.slane %v2649, 3
    %v2652 = vshll.u32 %v2312, 16
    %v2654 = vrot.slane %v2652, 4
    %v2655 = vor.u32 %v2651, %v2654
    %v2656 = vsel %vm1041, %v2601, %v2655
    %v2658 = vshrl.u32 %v2313, 16
    %v2660 = vrot.slane %v2658, 3
    %v2661 = vshll.u32 %v2313, 16
    %v2663 = vrot.slane %v2661, 4
    %v2664 = vor.u32 %v2660, %v2663
    %v2665 = vsel %vm1041, %v2610, %v2664
    %v2667 = vshrl.u32 %v2314, 16
    %v2669 = vrot.slane %v2667, 3
    %v2670 = vshll.u32 %v2314, 16
    %v2672 = vrot.slane %v2670, 4
    %v2673 = vor.u32 %v2669, %v2672
    %v2674 = vsel %vm1041, %v2619, %v2673
    %v2801 = vunpack.c.l.b16 %v2315
    %v2802 = vunpack.c.h.b16 %v2315
    %v2803 = vunpack.c.l.b16 %v2316
    %v2804 = vunpack.c.h.b16 %v2316
    %v2805 = vunpack.c.l.b16 %v2317
    %v2806 = vunpack.c.h.b16 %v2317
    %v2807 = vunpack.c.l.b16 %v2318
    %v2808 = vunpack.c.h.b16 %v2318
    %v2809 = vunpack.c.l.b16 %v2319
    %v2810 = vunpack.c.h.b16 %v2319
    %v2811 = vunpack.c.l.b16 %v2320
    %v2812 = vunpack.c.h.b16 %v2320
    %v2813 = vunpack.c.l.b16 %v2321
    %v2814 = vunpack.c.h.b16 %v2321
    %v2815 = vunpack.c.l.b16 %v2322
    %v2816 = vunpack.c.h.b16 %v2322
    %v2817 = vunpack.c.l.b16 %v2323
    %v2818 = vunpack.c.h.b16 %v2323
    %v2819 = vunpack.c.l.b16 %v2324
    %v2820 = vunpack.c.h.b16 %v2324
    %v2821 = vunpack.c.l.b16 %v2325
    %v2822 = vunpack.c.h.b16 %v2325
    %v2823 = vunpack.c.l.b16 %v2326
    %v2824 = vunpack.c.h.b16 %v2326
    %v2825 = vunpack.c.l.b16 %v2327
    %v2826 = vunpack.c.h.b16 %v2327
    %v2827 = vunpack.c.l.b16 %v2328
    %v2828 = vunpack.c.h.b16 %v2328
    %v2829 = vunpack.c.l.b16 %v2329
    %v2830 = vunpack.c.h.b16 %v2329
    %v2831 = vunpack.c.l.b16 %v2330
    %v2832 = vunpack.c.h.b16 %v2330
    %v2833 = vunpack.c.l.b16 %v2331
    %v2834 = vunpack.c.h.b16 %v2331
    %v2835 = vunpack.c.l.b16 %v2332
    %v2836 = vunpack.c.h.b16 %v2332
    %v2837 = vunpack.c.l.b16 %v2333
    %v2838 = vunpack.c.h.b16 %v2333
    %v2839 = vunpack.c.l.b16 %v2334
    %v2840 = vunpack.c.h.b16 %v2334
    %v2841 = vunpack.c.l.b16 %v2335
    %v2842 = vunpack.c.h.b16 %v2335
    %v2843 = vunpack.c.l.b16 %v2336
    %v2844 = vunpack.c.h.b16 %v2336
    %v2845 = vunpack.c.l.b16 %v2337
    %v2846 = vunpack.c.h.b16 %v2337
    %v2847 = vunpack.c.l.b16 %v2338
    %v2848 = vunpack.c.h.b16 %v2338
    %v2849 = vunpack.c.l.b16 %v2339
    %v2850 = vunpack.c.h.b16 %v2339
    %v2851 = vunpack.c.l.b16 %v2340
    %v2852 = vunpack.c.h.b16 %v2340
    %v2853 = vunpack.c.l.b16 %v2341
    %v2854 = vunpack.c.h.b16 %v2341
    %v2855 = vunpack.c.l.b16 %v2342
    %v2856 = vunpack.c.h.b16 %v2342
    %v2857 = vunpack.c.l.b16 %v2343
    %v2858 = vunpack.c.h.b16 %v2343
    %v2859 = vunpack.c.l.b16 %v2344
    %v2860 = vunpack.c.h.b16 %v2344
    %v2861 = vunpack.c.l.b16 %v2345
    %v2862 = vunpack.c.h.b16 %v2345
    %v2863 = vunpack.c.l.b16 %v2346
    %v2864 = vunpack.c.h.b16 %v2346
    %v2865 = vunpack.c.l.b16 %v2347
    %v2866 = vunpack.c.h.b16 %v2347
    %v2867 = vunpack.c.l.b16 %v2348
    %v2868 = vunpack.c.h.b16 %v2348
    %v2869 = vunpack.c.l.b16 %v2349
    %v2870 = vunpack.c.h.b16 %v2349
    %v2871 = vunpack.c.l.b16 %v2350
    %v2872 = vunpack.c.h.b16 %v2350
    %v2873 = vunpack.c.l.b16 %v2351
    %v2874 = vunpack.c.h.b16 %v2351
    %v2875 = vunpack.c.l.b16 %v2352
    %v2876 = vunpack.c.h.b16 %v2352
    %v2877 = vunpack.c.l.b16 %v2353
    %v2878 = vunpack.c.h.b16 %v2353
    %v2879 = vunpack.c.l.b16 %v2354
    %v2880 = vunpack.c.h.b16 %v2354
    %v2881 = vunpack.c.l.b16 %v2355
    %v2882 = vunpack.c.h.b16 %v2355
    %v2883 = vunpack.c.l.b16 %v2356
    %v2884 = vunpack.c.h.b16 %v2356
    %v2885 = vunpack.c.l.b16 %v2357
    %v2886 = vunpack.c.h.b16 %v2357
    %v2887 = vunpack.c.l.b16 %v2358
    %v2888 = vunpack.c.h.b16 %v2358
    %v2889 = vunpack.c.l.b16 %v2359
    %v2890 = vunpack.c.h.b16 %v2359
    %v2891 = vunpack.c.l.b16 %v2360
    %v2892 = vunpack.c.h.b16 %v2360
    %v2893 = vunpack.c.l.b16 %v2361
    %v2894 = vunpack.c.h.b16 %v2361
    %v2895 = vunpack.c.l.b16 %v2362
    %v2896 = vunpack.c.h.b16 %v2362
    %v2897 = vunpack.c.l.b16 %v2363
    %v2898 = vunpack.c.h.b16 %v2363
    %v2899 = vunpack.c.l.b16 %v2364
    %v2900 = vunpack.c.h.b16 %v2364
    %v2901 = vunpack.c.l.b16 %v2365
    %v2902 = vunpack.c.h.b16 %v2365
    %v2903 = vunpack.c.l.b16 %v2366
    %v2904 = vunpack.c.h.b16 %v2366
    %v2905 = vunpack.c.l.b16 %v2367
    %v2906 = vunpack.c.h.b16 %v2367
    %v2907 = vunpack.c.l.b16 %v2368
    %v2908 = vunpack.c.h.b16 %v2368
    %v2909 = vunpack.c.l.b16 %v2369
    %v2910 = vunpack.c.h.b16 %v2369
    %v2911 = vunpack.c.l.b16 %v2370
    %v2912 = vunpack.c.h.b16 %v2370
    %v2913 = vunpack.c.l.b16 %v2371
    %v2914 = vunpack.c.h.b16 %v2371
    %v2915 = vunpack.c.l.b16 %v2372
    %v2916 = vunpack.c.h.b16 %v2372
    %v2917 = vunpack.c.l.b16 %v2373
    %v2918 = vunpack.c.h.b16 %v2373
    %v2919 = vunpack.c.l.b16 %v2374
    %v2920 = vunpack.c.h.b16 %v2374
    %v2921 = vunpack.c.l.b16 %v2375
    %v2922 = vunpack.c.h.b16 %v2375
    %v2923 = vunpack.c.l.b16 %v2376
    %v2924 = vunpack.c.h.b16 %v2376
    %v2925 = vunpack.c.l.b16 %v2377
    %v2926 = vunpack.c.h.b16 %v2377
    %v2927 = vunpack.c.l.b16 %v2378
    %v2928 = vunpack.c.h.b16 %v2378
    %v2929 = vunpack.c.l.b16 %v2379
    %v2930 = vunpack.c.h.b16 %v2379
    %v2931 = vunpack.c.l.b16 %v2380
    %v2932 = vunpack.c.h.b16 %v2380
    %v2933 = vunpack.c.l.b16 %v2381
    %v2934 = vunpack.c.h.b16 %v2381
    %v2935 = vunpack.c.l.b16 %v2382
    %v2936 = vunpack.c.h.b16 %v2382
    %v2937 = vunpack.c.l.b16 %v2383
    %v2938 = vunpack.c.h.b16 %v2383
    %v2939 = vunpack.c.l.b16 %v2384
    %v2940 = vunpack.c.h.b16 %v2384
    %v2941 = vunpack.c.l.b16 %v2385
    %v2942 = vunpack.c.h.b16 %v2385
    %v2943 = vunpack.c.l.b16 %v2386
    %v2944 = vunpack.c.h.b16 %v2386
    %v2945 = vunpack.c.l.b16 %v2387
    %v2946 = vunpack.c.h.b16 %v2387
    %v2947 = vunpack.c.l.b16 %v2388
    %v2948 = vunpack.c.h.b16 %v2388
    %v2949 = vunpack.c.l.b16 %v2389
    %v2950 = vunpack.c.h.b16 %v2389
    %v2951 = vunpack.c.l.b16 %v2390
    %v2952 = vunpack.c.h.b16 %v2390
    %v2953 = vunpack.c.l.b16 %v2391
    %v2954 = vunpack.c.h.b16 %v2391
    %v2955 = vunpack.c.l.b16 %v2392
    %v2956 = vunpack.c.h.b16 %v2392
    %v2957 = vunpack.c.l.b16 %v2393
    %v2958 = vunpack.c.h.b16 %v2393
    %v2959 = vunpack.c.l.b16 %v2394
    %v2960 = vunpack.c.h.b16 %v2394
    %v2961 = vunpack.c.l.b16 %v2395
    %v2962 = vunpack.c.h.b16 %v2395
    %v2963 = vunpack.c.l.b16 %v2396
    %v2964 = vunpack.c.h.b16 %v2396
    %v2965 = vunpack.c.l.b16 %v2397
    %v2966 = vunpack.c.h.b16 %v2397
    %v2967 = vunpack.c.l.b16 %v2398
    %v2968 = vunpack.c.h.b16 %v2398
    %v2969 = vunpack.c.l.b16 %v2399
    %v2970 = vunpack.c.h.b16 %v2399
    %v2971 = vunpack.c.l.b16 %v2400
    %v2972 = vunpack.c.h.b16 %v2400
    %v2973 = vunpack.c.l.b16 %v2401
    %v2974 = vunpack.c.h.b16 %v2401
    %v2975 = vunpack.c.l.b16 %v2402
    %v2976 = vunpack.c.h.b16 %v2402
    %v2977 = vunpack.c.l.b16 %v2403
    %v2978 = vunpack.c.h.b16 %v2403
    %v2979 = vunpack.c.l.b16 %v2404
    %v2980 = vunpack.c.h.b16 %v2404
    %v2981 = vunpack.c.l.b16 %v2405
    %v2982 = vunpack.c.h.b16 %v2405
    %v2983 = vunpack.c.l.b16 %v2406
    %v2984 = vunpack.c.h.b16 %v2406
    %v2985 = vunpack.c.l.b16 %v2407
    %v2986 = vunpack.c.h.b16 %v2407
    %v2987 = vunpack.c.l.b16 %v2408
    %v2988 = vunpack.c.h.b16 %v2408
    %v2989 = vunpack.c.l.b16 %v2409
    %v2990 = vunpack.c.h.b16 %v2409
    %v2991 = vunpack.c.l.b16 %v2410
    %v2992 = vunpack.c.h.b16 %v2410
    %v2993 = vpack.c.b16 %v2803, %v2801
    %v2994 = vpack.c.b16 %v2804, %v2802
    %v2995 = vpack.c.b16 %v2807, %v2805
    %v2996 = vpack.c.b16 %v2808, %v2806
    %v2997 = vpack.c.b16 %v2811, %v2809
    %v2998 = vpack.c.b16 %v2812, %v2810
    %v2999 = vpack.c.b16 %v2815, %v2813
    %v3000 = vpack.c.b16 %v2816, %v2814
    %v3001 = vpack.c.b16 %v2819, %v2817
    %v3002 = vpack.c.b16 %v2820, %v2818
    %v3003 = vpack.c.b16 %v2823, %v2821
    %v3004 = vpack.c.b16 %v2824, %v2822
    %v3005 = vpack.c.b16 %v2827, %v2825
    %v3006 = vpack.c.b16 %v2828, %v2826
    %v3007 = vpack.c.b16 %v2831, %v2829
    %v3008 = vpack.c.b16 %v2832, %v2830
    %v3009 = vpack.c.b16 %v2835, %v2833
    %v3010 = vpack.c.b16 %v2836, %v2834
    %v3011 = vpack.c.b16 %v2839, %v2837
    %v3012 = vpack.c.b16 %v2840, %v2838
    %v3013 = vpack.c.b16 %v2843, %v2841
    %v3014 = vpack.c.b16 %v2844, %v2842
    %v3015 = vpack.c.b16 %v2847, %v2845
    %v3016 = vpack.c.b16 %v2848, %v2846
    %v3017 = vpack.c.b16 %v2851, %v2849
    %v3018 = vpack.c.b16 %v2852, %v2850
    %v3019 = vpack.c.b16 %v2855, %v2853
    %v3020 = vpack.c.b16 %v2856, %v2854
    %v3021 = vpack.c.b16 %v2859, %v2857
    %v3022 = vpack.c.b16 %v2860, %v2858
    %v3023 = vpack.c.b16 %v2863, %v2861
    %v3024 = vpack.c.b16 %v2864, %v2862
    %v3025 = vpack.c.b16 %v2867, %v2865
    %v3026 = vpack.c.b16 %v2868, %v2866
    %v3027 = vpack.c.b16 %v2871, %v2869
    %v3028 = vpack.c.b16 %v2872, %v2870
    %v3029 = vpack.c.b16 %v2875, %v2873
    %v3030 = vpack.c.b16 %v2876, %v2874
    %v3031 = vpack.c.b16 %v2879, %v2877
    %v3032 = vpack.c.b16 %v2880, %v2878
    %v3033 = vpack.c.b16 %v2883, %v2881
    %v3034 = vpack.c.b16 %v2884, %v2882
    %v3035 = vpack.c.b16 %v2887, %v2885
    %v3036 = vpack.c.b16 %v2888, %v2886
    %v3037 = vpack.c.b16 %v2891, %v2889
    %v3038 = vpack.c.b16 %v2892, %v2890
    %v3039 = vpack.c.b16 %v2895, %v2893
    %v3040 = vpack.c.b16 %v2896, %v2894
    %v3041 = vpack.c.b16 %v2899, %v2897
    %v3042 = vpack.c.b16 %v2900, %v2898
    %v3043 = vpack.c.b16 %v2903, %v2901
    %v3044 = vpack.c.b16 %v2904, %v2902
    %v3045 = vpack.c.b16 %v2907, %v2905
    %v3046 = vpack.c.b16 %v2908, %v2906
    %v3047 = vpack.c.b16 %v2911, %v2909
    %v3048 = vpack.c.b16 %v2912, %v2910
    %v3049 = vpack.c.b16 %v2915, %v2913
    %v3050 = vpack.c.b16 %v2916, %v2914
    %v3051 = vpack.c.b16 %v2919, %v2917
    %v3052 = vpack.c.b16 %v2920, %v2918
    %v3053 = vpack.c.b16 %v2923, %v2921
    %v3054 = vpack.c.b16 %v2924, %v2922
    %v3055 = vpack.c.b16 %v2927, %v2925
    %v3056 = vpack.c.b16 %v2928, %v2926
    %v3057 = vpack.c.b16 %v2931, %v2929
    %v3058 = vpack.c.b16 %v2932, %v2930
    %v3059 = vpack.c.b16 %v2935, %v2933
    %v3060 = vpack.c.b16 %v2936, %v2934
    %v3061 = vpack.c.b16 %v2939, %v2937
    %v3062 = vpack.c.b16 %v2940, %v2938
    %v3063 = vpack.c.b16 %v2943, %v2941
    %v3064 = vpack.c.b16 %v2944, %v2942
    %v3065 = vpack.c.b16 %v2947, %v2945
    %v3066 = vpack.c.b16 %v2948, %v2946
    %v3067 = vpack.c.b16 %v2951, %v2949
    %v3068 = vpack.c.b16 %v2952, %v2950
    %v3069 = vpack.c.b16 %v2955, %v2953
    %v3070 = vpack.c.b16 %v2956, %v2954
    %v3071 = vpack.c.b16 %v2959, %v2957
    %v3072 = vpack.c.b16 %v2960, %v2958
    %v3073 = vpack.c.b16 %v2963, %v2961
    %v3074 = vpack.c.b16 %v2964, %v2962
    %v3075 = vpack.c.b16 %v2967, %v2965
    %v3076 = vpack.c.b16 %v2968, %v2966
    %v3077 = vpack.c.b16 %v2971, %v2969
    %v3078 = vpack.c.b16 %v2972, %v2970
    %v3079 = vpack.c.b16 %v2975, %v2973
    %v3080 = vpack.c.b16 %v2976, %v2974
    %v3081 = vpack.c.b16 %v2979, %v2977
    %v3082 = vpack.c.b16 %v2980, %v2978
    %v3083 = vpack.c.b16 %v2983, %v2981
    %v3084 = vpack.c.b16 %v2984, %v2982
    %v3085 = vpack.c.b16 %v2987, %v2985
    %v3086 = vpack.c.b16 %v2988, %v2986
    %v3087 = vpack.c.b16 %v2991, %v2989
    %v3088 = vpack.c.b16 %v2992, %v2990
    %3185 = vmatprep.subr.bf16.mxu0 %v2994
    %3186 = vmatpush1.bf16.msra.mxu0 %v2993
    %3187 = vmatprep.subr.bf16.mxu0 %v2996
    %3188 = vmatpush1.bf16.msra.mxu0 %v2995
    %3189 = vmatprep.subr.bf16.mxu0 %v2998
    %3190 = vmatpush1.bf16.msra.mxu0 %v2997
    %3191 = vmatprep.subr.bf16.mxu0 %v3000
    %3192 = vmatpush1.bf16.msra.mxu0 %v2999
    %3193 = vmatprep.subr.bf16.mxu0 %v3002
    %3194 = vmatpush1.bf16.msra.mxu0 %v3001
    %3195 = vmatprep.subr.bf16.mxu0 %v3004
    %3196 = vmatpush1.bf16.msra.mxu0 %v3003
    %3197 = vmatprep.subr.bf16.mxu0 %v3006
    %3198 = vmatpush1.bf16.msra.mxu0 %v3005
    %3199 = vmatprep.subr.bf16.mxu0 %v3008
    %3200 = vmatpush1.bf16.msra.mxu0 %v3007
    %3201 = vmatprep.subr.bf16.mxu0 %v3010
    %3202 = vmatpush1.bf16.msra.mxu0 %v3009
    %3203 = vmatprep.subr.bf16.mxu0 %v3012
    %3204 = vmatpush1.bf16.msra.mxu0 %v3011
    %3205 = vmatprep.subr.bf16.mxu0 %v3014
    %3206 = vmatpush1.bf16.msra.mxu0 %v3013
    %3207 = vmatprep.subr.bf16.mxu0 %v3016
    %3208 = vmatpush1.bf16.msra.mxu0 %v3015
    %3209 = vmatprep.subr.bf16.mxu0 %v3018
    %3210 = vmatpush1.bf16.msra.mxu0 %v3017
    %3211 = vmatprep.subr.bf16.mxu0 %v3020
    %3212 = vmatpush1.bf16.msra.mxu0 %v3019
    %3213 = vmatprep.subr.bf16.mxu0 %v3022
    %3214 = vmatpush1.bf16.msra.mxu0 %v3021
    %3215 = vmatprep.subr.bf16.mxu0 %v3024
    %3216 = vmatpush1.bf16.msra.mxu0 %v3023
    %3217 = vmatprep.mubr.bf16.mxu0 %v2444
    %3218 = vmatmul.mubr.bf16.gmra.mrb[0].mxu0 %v2427
    %v3219 = vpop.f32.mrb[0].mxu0
    %v3220 = vadd.f32 0.0, %v3219
    %v3221 = vpop.f32.mrb[0].mxu0
    %v3222 = vadd.f32 0.0, %v3221
    %v3223 = vpop.f32.mrb[0].mxu0
    %v3224 = vadd.f32 0.0, %v3223
    %v3225 = vpop.f32.mrb[0].mxu0
    %v3226 = vadd.f32 0.0, %v3225
    %3227 = vmatprep.mubr.bf16.mxu0 %v2530
    %3228 = vmatmul.mubr.bf16.gmra.mrb[0].mxu0 %v2521
    %v3229 = vpop.f32.mrb[0].mxu0
    %v3230 = vadd.f32 0.0, %v3229
    %v3231 = vpop.f32.mrb[0].mxu0
    %v3232 = vadd.f32 0.0, %v3231
    %v3233 = vpop.f32.mrb[0].mxu0
    %v3234 = vadd.f32 0.0, %v3233
    %v3235 = vpop.f32.mrb[0].mxu0
    %v3236 = vadd.f32 0.0, %v3235
    %3237 = vmatprep.mubr.bf16.mxu0 %v2584
    %3238 = vmatmul.mubr.bf16.gmra.mrb[0].mxu0 %v2575
    %v3239 = vpop.f32.mrb[0].mxu0
    %v3240 = vpop.f32.mrb[0].mxu0
    %v3241 = vpop.f32.mrb[0].mxu0
    %v3242 = vadd.f32 0.0, %v3241
    %v3243 = vpop.f32.mrb[0].mxu0
    %v3244 = vadd.f32 0.0, %v3243
    %3245 = vmatprep.mubr.bf16.mxu0 %v2638
    %3246 = vmatmul.mubr.bf16.gmra.mrb[0].mxu0 %v2629
    %v3247 = vpop.f32.mrb[0].mxu0
    %v3248 = vadd.f32 0.0, %v3247
    %v3249 = vpop.f32.mrb[0].mxu0
    %v3250 = vadd.f32 0.0, %v3249
    %v3251 = vpop.f32.mrb[0].mxu0
    %v3252 = vadd.f32 0.0, %v3251
    %v3253 = vpop.f32.mrb[0].mxu0
    %v3254 = vadd.f32 0.0, %v3253
    %3255 = vmatprep.mubr.bf16.mxu0 %v2637
    %3256 = vmatmul.mubr.bf16.gmra.mrb[0].mxu0 %v2628
    %v3257 = vpop.f32.mrb[0].mxu0
    %v3258 = vadd.f32 0.0, %v3257
    %v3259 = vpop.f32.mrb[0].mxu0
    %v3260 = vadd.f32 0.0, %v3259
    %v3261 = vpop.f32.mrb[0].mxu0
    %v3262 = vpop.f32.mrb[0].mxu0
    %3263 = vdwg.mxu0
    %3264 = vmatprep.subr.bf16.mxu0 %v3026
    %3265 = vmatpush1.bf16.msra.mxu0 %v3025
    %3266 = vmatprep.subr.bf16.mxu0 %v3028
    %3267 = vmatpush1.bf16.msra.mxu0 %v3027
    %3268 = vmatprep.subr.bf16.mxu0 %v3030
    %3269 = vmatpush1.bf16.msra.mxu0 %v3029
    %3270 = vmatprep.subr.bf16.mxu0 %v3032
    %3271 = vmatpush1.bf16.msra.mxu0 %v3031
    %3272 = vmatprep.subr.bf16.mxu0 %v3034
    %3273 = vmatpush1.bf16.msra.mxu0 %v3033
    %3274 = vmatprep.subr.bf16.mxu0 %v3036
    %3275 = vmatpush1.bf16.msra.mxu0 %v3035
    %3276 = vmatprep.subr.bf16.mxu0 %v3038
    %3277 = vmatpush1.bf16.msra.mxu0 %v3037
    %3278 = vmatprep.subr.bf16.mxu0 %v3040
    %3279 = vmatpush1.bf16.msra.mxu0 %v3039
    %3280 = vmatprep.subr.bf16.mxu0 %v3042
    %3281 = vmatpush1.bf16.msra.mxu0 %v3041
    %3282 = vmatprep.subr.bf16.mxu0 %v3044
    %3283 = vmatpush1.bf16.msra.mxu0 %v3043
    %3284 = vmatprep.subr.bf16.mxu0 %v3046
    %3285 = vmatpush1.bf16.msra.mxu0 %v3045
    %3286 = vmatprep.subr.bf16.mxu0 %v3048
    %3287 = vmatpush1.bf16.msra.mxu0 %v3047
    %3288 = vmatprep.subr.bf16.mxu0 %v3050
    %3289 = vmatpush1.bf16.msra.mxu0 %v3049
    %3290 = vmatprep.subr.bf16.mxu0 %v3052
    %3291 = vmatpush1.bf16.msra.mxu0 %v3051
    %3292 = vmatprep.subr.bf16.mxu0 %v3054
    %3293 = vmatpush1.bf16.msra.mxu0 %v3053
    %3294 = vmatprep.subr.bf16.mxu0 %v3056
    %3295 = vmatpush1.bf16.msra.mxu0 %v3055
    %3296 = vmatprep.mubr.bf16.mxu0 %v2478
    %3297 = vmatmul.mubr.bf16.gmra.mrb[0].mxu0 %v2461
    %v3298 = vpop.f32.mrb[0].mxu0
    %v3299 = vadd.f32 %v3220, %v3298
    %v3300 = vpop.f32.mrb[0].mxu0
    %v3301 = vadd.f32 %v3222, %v3300
    %v3302 = vpop.f32.mrb[0].mxu0
    %v3303 = vadd.f32 %v3224, %v3302
    %v3304 = vpop.f32.mrb[0].mxu0
    %v3305 = vadd.f32 %v3226, %v3304
    %3306 = vmatprep.mubr.bf16.mxu0 %v2548
    %3307 = vmatmul.mubr.bf16.gmra.mrb[0].mxu0 %v2539
    %v3308 = vpop.f32.mrb[0].mxu0
    %v3309 = vadd.f32 %v3230, %v3308
    %v3310 = vpop.f32.mrb[0].mxu0
    %v3311 = vadd.f32 %v3232, %v3310
    %v3312 = vpop.f32.mrb[0].mxu0
    %v3313 = vadd.f32 %v3234, %v3312
    %v3314 = vpop.f32.mrb[0].mxu0
    %v3315 = vadd.f32 %v3236, %v3314
    %3316 = vmatprep.mubr.bf16.mxu0 %v2602
    %3317 = vmatmul.mubr.bf16.gmra.mrb[0].mxu0 %v2593
    %v3318 = vpop.f32.mrb[0].mxu0
    %v3319 = vpop.f32.mrb[0].mxu0
    %v3320 = vpop.f32.mrb[0].mxu0
    %v3321 = vadd.f32 %v3242, %v3320
    %v3322 = vpop.f32.mrb[0].mxu0
    %v3323 = vadd.f32 %v3244, %v3322
    %3324 = vmatprep.mubr.bf16.mxu0 %v2656
    %3325 = vmatmul.mubr.bf16.gmra.mrb[0].mxu0 %v2647
    %v3326 = vpop.f32.mrb[0].mxu0
    %v3327 = vadd.f32 %v3248, %v3326
    %v3328 = vpop.f32.mrb[0].mxu0
    %v3329 = vadd.f32 %v3250, %v3328
    %v3330 = vpop.f32.mrb[0].mxu0
    %v3331 = vadd.f32 %v3252, %v3330
    %v3332 = vpop.f32.mrb[0].mxu0
    %v3333 = vadd.f32 %v3254, %v3332
    %3334 = vmatprep.mubr.bf16.mxu0 %v2655
    %3335 = vmatmul.mubr.bf16.gmra.mrb[0].mxu0 %v2646
    %v3336 = vpop.f32.mrb[0].mxu0
    %v3337 = vadd.f32 %v3258, %v3336
    %v3338 = vpop.f32.mrb[0].mxu0
    %v3339 = vadd.f32 %v3260, %v3338
    %v3340 = vpop.f32.mrb[0].mxu0
    %v3341 = vpop.f32.mrb[0].mxu0
    %3342 = vdwg.mxu0
    %3343 = vmatprep.subr.bf16.mxu0 %v3058
    %3344 = vmatpush1.bf16.msra.mxu0 %v3057
    %3345 = vmatprep.subr.bf16.mxu0 %v3060
    %3346 = vmatpush1.bf16.msra.mxu0 %v3059
    %3347 = vmatprep.subr.bf16.mxu0 %v3062
    %3348 = vmatpush1.bf16.msra.mxu0 %v3061
    %3349 = vmatprep.subr.bf16.mxu0 %v3064
    %3350 = vmatpush1.bf16.msra.mxu0 %v3063
    %3351 = vmatprep.subr.bf16.mxu0 %v3066
    %3352 = vmatpush1.bf16.msra.mxu0 %v3065
    %3353 = vmatprep.subr.bf16.mxu0 %v3068
    %3354 = vmatpush1.bf16.msra.mxu0 %v3067
    %3355 = vmatprep.subr.bf16.mxu0 %v3070
    %3356 = vmatpush1.bf16.msra.mxu0 %v3069
    %3357 = vmatprep.subr.bf16.mxu0 %v3072
    %3358 = vmatpush1.bf16.msra.mxu0 %v3071
    %3359 = vmatprep.subr.bf16.mxu0 %v3074
    %3360 = vmatpush1.bf16.msra.mxu0 %v3073
    %3361 = vmatprep.subr.bf16.mxu0 %v3076
    %3362 = vmatpush1.bf16.msra.mxu0 %v3075
    %3363 = vmatprep.subr.bf16.mxu0 %v3078
    %3364 = vmatpush1.bf16.msra.mxu0 %v3077
    %3365 = vmatprep.subr.bf16.mxu0 %v3080
    %3366 = vmatpush1.bf16.msra.mxu0 %v3079
    %3367 = vmatprep.subr.bf16.mxu0 %v3082
    %3368 = vmatpush1.bf16.msra.mxu0 %v3081
    %3369 = vmatprep.subr.bf16.mxu0 %v3084
    %3370 = vmatpush1.bf16.msra.mxu0 %v3083
    %3371 = vmatprep.subr.bf16.mxu0 %v3086
    %3372 = vmatpush1.bf16.msra.mxu0 %v3085
    %3373 = vmatprep.subr.bf16.mxu0 %v3088
    %3374 = vmatpush1.bf16.msra.mxu0 %v3087
    %3375 = vmatprep.mubr.bf16.mxu0 %v2512
    %3376 = vmatmul.mubr.bf16.gmra.mrb[0].mxu0 %v2495
    %v3377 = vpop.f32.mrb[0].mxu0
    %v3378 = vadd.f32 %v3299, %v3377
    %v3379 = vpop.f32.mrb[0].mxu0
    %v3380 = vadd.f32 %v3301, %v3379
    %v3381 = vpop.f32.mrb[0].mxu0
    %v3382 = vadd.f32 %v3303, %v3381
    %v3383 = vpop.f32.mrb[0].mxu0
    %v3384 = vadd.f32 %v3305, %v3383
    %3385 = vmatprep.mubr.bf16.mxu0 %v2566
    %3386 = vmatmul.mubr.bf16.gmra.mrb[0].mxu0 %v2557
    %v3387 = vpop.f32.mrb[0].mxu0
    %v3388 = vadd.f32 %v3309, %v3387
    %v3389 = vpop.f32.mrb[0].mxu0
    %v3390 = vadd.f32 %v3311, %v3389
    %v3391 = vpop.f32.mrb[0].mxu0
    %v3392 = vadd.f32 %v3313, %v3391
    %v3393 = vpop.f32.mrb[0].mxu0
    %v3394 = vadd.f32 %v3315, %v3393
    %3395 = vmatprep.mubr.bf16.mxu0 %v2620
    %3396 = vmatmul.mubr.bf16.gmra.mrb[0].mxu0 %v2611
    %v3397 = vpop.f32.mrb[0].mxu0
    %v3398 = vpop.f32.mrb[0].mxu0
    %v3399 = vpop.f32.mrb[0].mxu0
    %v3400 = vadd.f32 %v3321, %v3399
    %v3401 = vpop.f32.mrb[0].mxu0
    %v3402 = vadd.f32 %v3323, %v3401
    %3403 = vmatprep.mubr.bf16.mxu0 %v2674
    %3404 = vmatmul.mubr.bf16.gmra.mrb[0].mxu0 %v2665
    %v3405 = vpop.f32.mrb[0].mxu0
    %v3406 = vadd.f32 %v3327, %v3405
    %v3407 = vpop.f32.mrb[0].mxu0
    %v3408 = vadd.f32 %v3329, %v3407
    %v3409 = vpop.f32.mrb[0].mxu0
    %v3410 = vadd.f32 %v3331, %v3409
    %v3411 = vpop.f32.mrb[0].mxu0
    %v3412 = vadd.f32 %v3333, %v3411
    %3413 = vmatprep.mubr.bf16.mxu0 %v2673
    %3414 = vmatmul.mubr.bf16.gmra.mrb[0].mxu0 %v2664
    %v3415 = vpop.f32.mrb[0].mxu0
    %v3416 = vadd.f32 %v3337, %v3415
    %v3417 = vpop.f32.mrb[0].mxu0
    %v3418 = vadd.f32 %v3339, %v3417
    %v3419 = vpop.f32.mrb[0].mxu0
    %v3420 = vpop.f32.mrb[0].mxu0
    %3421 = vdwg.mxu0
    %v3422 = vld [vmem:[%s7] sm:$0x3]
    %v3424 = vlaneseq
    %v3425 = vshrl.u32 %v3424, 7
    %v3426 = vsub.s32 0, %v3425
    %v3427 = vrot.slane %v3422, %v3426
    %v3428 = vlaneseq
    %v3429 = vshrl.u32 %v3428, 7
    %v3430 = vsub.s32 1, %v3429
    %v3431 = vrot.slane %v3422, %v3430
    %v3434 = vmul.f32 %v2013, %v3427
    %v3435 = vmul.f32 %v2015, %v3431
    %v3436 = vmul.f32 %v2017, %v3427
    %v3437 = vmul.f32 %v2019, %v3431
    %v3438 = vmul.f32 %v2023, %v3427
    %v3439 = vmul.f32 %v2025, %v3431
    %v3440 = vmul.f32 %v2027, %v3427
    %v3441 = vmul.f32 %v2029, %v3431
    %v3442 = vmul.f32 %v2033, %v3427
    %v3443 = vmul.f32 %v2035, %v3431
    %v3444 = vmul.f32 %v2037, %v3427
    %v3445 = vmul.f32 %v2039, %v3431
    %v3446 = vmul.f32 %v2043, %v3427
    %v3447 = vmul.f32 %v2045, %v3431
    %v3448 = vmul.f32 %v2047, %v3427
    %v3449 = vmul.f32 %v2049, %v3431
    %v3450 = vmul.f32 %v2053, %v3427
    %v3451 = vmul.f32 %v2055, %v3431
    %v3452 = vld [vmem:[%s8] sm:$0x3]
    %v3454 = vlaneseq
    %v3455 = vshrl.u32 %v3454, 7
    %v3456 = vsub.s32 0, %v3455
    %v3457 = vrot.slane %v3452, %v3456
    %v3458 = vlaneseq
    %v3459 = vshrl.u32 %v3458, 7
    %v3460 = vsub.s32 1, %v3459
    %v3461 = vrot.slane %v3452, %v3460
    %v3464 = vadd.f32 %v3434, %v3457
    %v3465 = vadd.f32 %v3435, %v3461
    %v3466 = vadd.f32 %v3436, %v3457
    %v3467 = vadd.f32 %v3437, %v3461
    %v3468 = vadd.f32 %v3438, %v3457
    %v3469 = vadd.f32 %v3439, %v3461
    %v3470 = vadd.f32 %v3440, %v3457
    %v3471 = vadd.f32 %v3441, %v3461
    %v3472 = vadd.f32 %v3442, %v3457
    %v3473 = vadd.f32 %v3443, %v3461
    %v3474 = vadd.f32 %v3444, %v3457
    %v3475 = vadd.f32 %v3445, %v3461
    %v3476 = vadd.f32 %v3446, %v3457
    %v3477 = vadd.f32 %v3447, %v3461
    %v3478 = vadd.f32 %v3448, %v3457
    %v3479 = vadd.f32 %v3449, %v3461
    %v3480 = vadd.f32 %v3450, %v3457
    %v3481 = vadd.f32 %v3451, %v3461
    %v3482 = vmax.f32 %v3464, 0.0
    %v3483 = vmax.f32 %v3465, 0.0
    %v3484 = vmax.f32 %v3466, 0.0
    %v3485 = vmax.f32 %v3467, 0.0
    %v3486 = vmax.f32 %v3468, 0.0
    %v3487 = vmax.f32 %v3469, 0.0
    %v3488 = vmax.f32 %v3470, 0.0
    %v3489 = vmax.f32 %v3471, 0.0
    %v3490 = vmax.f32 %v3472, 0.0
    %v3491 = vmax.f32 %v3473, 0.0
    %v3492 = vmax.f32 %v3474, 0.0
    %v3493 = vmax.f32 %v3475, 0.0
    %v3494 = vmax.f32 %v3476, 0.0
    %v3495 = vmax.f32 %v3477, 0.0
    %v3496 = vmax.f32 %v3478, 0.0
    %v3497 = vmax.f32 %v3479, 0.0
    %v3498 = vmax.f32 %v3480, 0.0
    %v3499 = vmax.f32 %v3481, 0.0
    %v3500 = vmul.f32 %v3482, %v300
    %v3501 = vmul.f32 %v3483, %v300
    %v3502 = vmul.f32 %v3484, %v301
    %v3503 = vmul.f32 %v3485, %v301
    %v3504 = vmul.f32 %v3486, %v302
    %v3505 = vmul.f32 %v3487, %v302
    %v3506 = vmul.f32 %v3488, %v303
    %v3507 = vmul.f32 %v3489, %v303
    %v3508 = vmul.f32 %v3490, %v304
    %v3509 = vmul.f32 %v3491, %v304
    %v3510 = vmul.f32 %v3492, %v305
    %v3511 = vmul.f32 %v3493, %v305
    %v3512 = vmul.f32 %v3494, %v306
    %v3513 = vmul.f32 %v3495, %v306
    %v3514 = vmul.f32 %v3496, %v307
    %v3515 = vmul.f32 %v3497, %v307
    %v3516 = vmul.f32 %v3498, %v308
    %v3517 = vmul.f32 %v3499, %v308
    %3518 = vst [vmem:[#allocation2 + $0x10] sm:$0xff] %v3500
    %3519 = vst [vmem:[#allocation2 + $0x18] sm:$0xff] %v3501
    %3520 = vst [vmem:[#allocation2 + $0x20] sm:$0xff] %v3502
    %3521 = vst [vmem:[#allocation2 + $0x28] sm:$0xff] %v3503
    %3522 = vst [vmem:[#allocation2 + $0x30] sm:$0xff] %v3504
    %3523 = vst [vmem:[#allocation2 + $0x38] sm:$0xff] %v3505
    %3524 = vst [vmem:[#allocation2 + $0x40] sm:$0xff] %v3506
    %3525 = vst [vmem:[#allocation2 + $0x48] sm:$0xff] %v3507
    %3526 = vst [vmem:[#allocation2 + $0x50] sm:$0xff] %v3508
    %3527 = vst [vmem:[#allocation2 + $0x58] sm:$0xff] %v3509
    %3528 = vst [vmem:[#allocation2 + $0x60] sm:$0xff] %v3510
    %3529 = vst [vmem:[#allocation2 + $0x68] sm:$0xff] %v3511
    %3530 = vst [vmem:[#allocation2 + $0x70] sm:$0xff] %v3512
    %3531 = vst [vmem:[#allocation2 + $0x78] sm:$0xff] %v3513
    %3532 = vst [vmem:[#allocation2 + $0x80] sm:$0xff] %v3514
    %3533 = vst [vmem:[#allocation2 + $0x88] sm:$0xff] %v3515
    %3534 = vst [vmem:[#allocation2 + $0x90] sm:$0xff] %v3516
    %3535 = vst [vmem:[#allocation2 + $0x98] sm:$0xff] %v3517
    %v3536 = vld [vmem:[#allocation2] sm:$0xc0]
    %v3537 = vld [vmem:[#allocation2 + $0x8] sm:$0xc0]
    %v3538 = vld [vmem:[#allocation2 + $0x10] sm:$0xff]
    %v3539 = vld [vmem:[#allocation2 + $0x18] sm:$0xff]
    %v3540 = vld [vmem:[#allocation2 + $0x20] sm:$0xff]
    %v3541 = vld [vmem:[#allocation2 + $0x28] sm:$0xff]
    %v3542 = vld [vmem:[#allocation2 + $0x30] sm:$0xff]
    %v3543 = vld [vmem:[#allocation2 + $0x38] sm:$0xff]
    %v3544 = vld [vmem:[#allocation2 + $0x40] sm:$0xff]
    %v3545 = vld [vmem:[#allocation2 + $0x48] sm:$0xff]
    %v3546 = vld [vmem:[#allocation2 + $0x50] sm:$0xff]
    %v3547 = vld [vmem:[#allocation2 + $0x58] sm:$0xff]
    %v3548 = vld [vmem:[#allocation2 + $0x60] sm:$0xff]
    %v3549 = vld [vmem:[#allocation2 + $0x68] sm:$0xff]
    %v3550 = vld [vmem:[#allocation2 + $0x70] sm:$0xff]
    %v3551 = vld [vmem:[#allocation2 + $0x78] sm:$0xff]
    %v3552 = vld [vmem:[#allocation2 + $0x80] sm:$0xff]
    %v3553 = vld [vmem:[#allocation2 + $0x88] sm:$0xff]
    %v3554 = vld [vmem:[#allocation2 + $0x90] sm:$0x3f]
    %v3555 = vld [vmem:[#allocation2 + $0x98] sm:$0x3f]
    %v3556 = vld [vmem:[#allocation2 + $0x10] sm:$0xfc]
    %v3557 = vld [vmem:[#allocation2 + $0x18] sm:$0xfc]
    %v3558 = vld [vmem:[#allocation2 + $0x20] sm:$0xff]
    %v3559 = vld [vmem:[#allocation2 + $0x28] sm:$0xff]
    %v3560 = vld [vmem:[#allocation2 + $0x30] sm:$0xff]
    %v3561 = vld [vmem:[#allocation2 + $0x38] sm:$0xff]
    %v3562 = vld [vmem:[#allocation2 + $0x40] sm:$0xff]
    %v3563 = vld [vmem:[#allocation2 + $0x48] sm:$0xff]
    %v3564 = vld [vmem:[#allocation2 + $0x50] sm:$0xff]
    %v3565 = vld [vmem:[#allocation2 + $0x58] sm:$0xff]
    %v3566 = vld [vmem:[#allocation2 + $0x60] sm:$0xff]
    %v3567 = vld [vmem:[#allocation2 + $0x68] sm:$0xff]
    %v3568 = vld [vmem:[#allocation2 + $0x70] sm:$0xff]
    %v3569 = vld [vmem:[#allocation2 + $0x78] sm:$0xff]
    %v3570 = vld [vmem:[#allocation2 + $0x80] sm:$0xff]
    %v3571 = vld [vmem:[#allocation2 + $0x88] sm:$0xff]
    %v3572 = vld [vmem:[#allocation2 + $0x90] sm:$0xff]
    %v3573 = vld [vmem:[#allocation2 + $0x98] sm:$0xff]
    %v3574 = vld [vmem:[#allocation2 + $0xa0] sm:$0x3]
    %v3575 = vld [vmem:[#allocation2 + $0xa8] sm:$0x3]
    %v3594 = vrot.slane %v3500, 2
    %v3595 = vrot.slane %v3501, 2
    %v3596 = vrot.slane %v3502, 2
    %v3597 = vsel %vm844, %v3594, %v3596
    %v3598 = vrot.slane %v3503, 2
    %v3599 = vsel %vm844, %v3595, %v3598
    %v3600 = vrot.slane %v3504, 2
    %v3601 = vsel %vm844, %v3596, %v3600
    %v3602 = vrot.slane %v3505, 2
    %v3603 = vsel %vm844, %v3598, %v3602
    %v3604 = vrot.slane %v3506, 2
    %v3605 = vsel %vm844, %v3600, %v3604
    %v3606 = vrot.slane %v3507, 2
    %v3607 = vsel %vm844, %v3602, %v3606
    %v3608 = vrot.slane %v3508, 2
    %v3609 = vsel %vm844, %v3604, %v3608
    %v3610 = vrot.slane %v3509, 2
    %v3611 = vsel %vm844, %v3606, %v3610
    %v3612 = vrot.slane %v3510, 2
    %v3613 = vsel %vm844, %v3608, %v3612
    %v3614 = vrot.slane %v3511, 2
    %v3615 = vsel %vm844, %v3610, %v3614
    %v3616 = vrot.slane %v3512, 2
    %v3617 = vsel %vm844, %v3612, %v3616
    %v3618 = vrot.slane %v3513, 2
    %v3619 = vsel %vm844, %v3614, %v3618
    %v3620 = vrot.slane %v3514, 2
    %v3621 = vsel %vm844, %v3616, %v3620
    %v3622 = vrot.slane %v3515, 2
    %v3623 = vsel %vm844, %v3618, %v3622
    %v3624 = vrot.slane %v3516, 2
    %v3625 = vsel %vm844, %v3620, %v3624
    %v3626 = vrot.slane %v3517, 2
    %v3627 = vsel %vm844, %v3622, %v3626
    %vm3668 = vcmask 1043456
    %v3669 = vrot.slane %v3556, 4
    %v3670 = vrot.slane %v3557, 4
    %v3671 = vrot.slane %v3558, 4
    %v3672 = vsel %vm3668, %v3669, %v3671
    %v3673 = vrot.slane %v3559, 4
    %v3674 = vsel %vm3668, %v3670, %v3673
    %v3675 = vrot.slane %v3560, 4
    %v3676 = vsel %vm3668, %v3671, %v3675
    %v3677 = vrot.slane %v3561, 4
    %v3678 = vsel %vm3668, %v3673, %v3677
    %v3679 = vrot.slane %v3562, 4
    %v3680 = vsel %vm3668, %v3675, %v3679
    %v3681 = vrot.slane %v3563, 4
    %v3682 = vsel %vm3668, %v3677, %v3681
    %v3683 = vrot.slane %v3564, 4
    %v3684 = vsel %vm3668, %v3679, %v3683
    %v3685 = vrot.slane %v3565, 4
    %v3686 = vsel %vm3668, %v3681, %v3685
    %v3687 = vrot.slane %v3566, 4
    %v3688 = vsel %vm3668, %v3683, %v3687
    %v3689 = vrot.slane %v3567, 4
    %v3690 = vsel %vm3668, %v3685, %v3689
    %v3691 = vrot.slane %v3568, 4
    %v3692 = vsel %vm3668, %v3687, %v3691
    %v3693 = vrot.slane %v3569, 4
    %v3694 = vsel %vm3668, %v3689, %v3693
    %v3695 = vrot.slane %v3570, 4
    %v3696 = vsel %vm3668, %v3691, %v3695
    %v3697 = vrot.slane %v3571, 4
    %v3698 = vsel %vm3668, %v3693, %v3697
    %v3699 = vrot.slane %v3572, 4
    %v3700 = vsel %vm3668, %v3695, %v3699
    %v3701 = vrot.slane %v3573, 4
    %v3702 = vsel %vm3668, %v3697, %v3701
    %v3703 = vrot.slane %v3574, 4
    %v3704 = vsel %vm3668, %v3699, %v3703
    %v3705 = vrot.slane %v3575, 4
    %v3706 = vsel %vm3668, %v3701, %v3705
    %v3727 = vpack.c.bf16 %v3538, %v3536
    %v3728 = vpack.c.bf16 %v3539, %v3537
    %v3729 = vpack.c.bf16 %v3597, %v3594
    %v3730 = vpack.c.bf16 %v3599, %v3595
    %v3731 = vpack.c.bf16 %v3672, %v3669
    %v3732 = vpack.c.bf16 %v3674, %v3670
    %v3733 = vpack.c.bf16 %v3542, %v3540
    %v3734 = vpack.c.bf16 %v3543, %v3541
    %v3735 = vpack.c.bf16 %v3605, %v3601
    %v3736 = vpack.c.bf16 %v3607, %v3603
    %v3737 = vpack.c.bf16 %v3680, %v3676
    %v3738 = vpack.c.bf16 %v3682, %v3678
    %v3739 = vpack.c.bf16 %v3546, %v3544
    %v3740 = vpack.c.bf16 %v3547, %v3545
    %v3741 = vpack.c.bf16 %v3613, %v3609
    %v3742 = vpack.c.bf16 %v3615, %v3611
    %v3743 = vpack.c.bf16 %v3688, %v3684
    %v3744 = vpack.c.bf16 %v3690, %v3686
    %v3745 = vpack.c.bf16 %v3550, %v3548
    %v3746 = vpack.c.bf16 %v3551, %v3549
    %v3747 = vpack.c.bf16 %v3621, %v3617
    %v3748 = vpack.c.bf16 %v3623, %v3619
    %v3749 = vpack.c.bf16 %v3696, %v3692
    %v3750 = vpack.c.bf16 %v3698, %v3694
    %v3751 = vpack.c.bf16 %v3554, %v3552
    %v3752 = vpack.c.bf16 %v3555, %v3553
    %v3753 = vpack.c.bf16 %v3624, %v3625
    %v3754 = vpack.c.bf16 %v3626, %v3627
    %v3755 = vpack.c.bf16 %v3704, %v3700
    %v3756 = vpack.c.bf16 %v3706, %v3702
    %v3757 = vld [vmem:[#allocation9] sm:$0xff]
    %v3758 = vld [vmem:[#allocation9 + $0x8] sm:$0xff]
    %v3759 = vld [vmem:[#allocation9 + $0x10] sm:$0xff]
    %v3760 = vld [vmem:[#allocation9 + $0x18] sm:$0xff]
    %v3761 = vld [vmem:[#allocation9 + $0x20] sm:$0xff]
    %v3762 = vld [vmem:[#allocation9 + $0x28] sm:$0xff]
    %v3763 = vld [vmem:[#allocation9 + $0x30] sm:$0xff]
    %v3764 = vld [vmem:[#allocation9 + $0x38] sm:$0xff]
    %v3765 = vld [vmem:[#allocation9 + $0x40] sm:$0xff]
    %v3766 = vld [vmem:[#allocation9 + $0x48] sm:$0xff]
    %v3767 = vld [vmem:[#allocation9 + $0x50] sm:$0xff]
    %v3768 = vld [vmem:[#allocation9 + $0x58] sm:$0xff]
    %v3769 = vld [vmem:[#allocation9 + $0x60] sm:$0xff]
    %v3770 = vld [vmem:[#allocation9 + $0x68] sm:$0xff]
    %v3771 = vld [vmem:[#allocation9 + $0x70] sm:$0xff]
    %v3772 = vld [vmem:[#allocation9 + $0x78] sm:$0xff]
    %v3773 = vld [vmem:[#allocation9 + $0x80] sm:$0xff]
    %v3774 = vld [vmem:[#allocation9 + $0x88] sm:$0xff]
    %v3775 = vld [vmem:[#allocation9 + $0x90] sm:$0xff]
    %v3776 = vld [vmem:[#allocation9 + $0x98] sm:$0xff]
    %v3777 = vld [vmem:[#allocation9 + $0xa0] sm:$0xff]
    %v3778 = vld [vmem:[#allocation9 + $0xa8] sm:$0xff]
    %v3779 = vld [vmem:[#allocation9 + $0xb0] sm:$0xff]
    %v3780 = vld [vmem:[#allocation9 + $0xb8] sm:$0xff]
    %v3781 = vld [vmem:[#allocation9 + $0xc0] sm:$0xff]
    %v3782 = vld [vmem:[#allocation9 + $0xc8] sm:$0xff]
    %v3783 = vld [vmem:[#allocation9 + $0xd0] sm:$0xff]
    %v3784 = vld [vmem:[#allocation9 + $0xd8] sm:$0xff]
    %v3785 = vld [vmem:[#allocation9 + $0xe0] sm:$0xff]
    %v3786 = vld [vmem:[#allocation9 + $0xe8] sm:$0xff]
    %v3787 = vld [vmem:[#allocation9 + $0xf0] sm:$0xff]
    %v3788 = vld [vmem:[#allocation9 + $0xf8] sm:$0xff]
    %v3789 = vld [vmem:[#allocation9 + $0x100] sm:$0xff]
    %v3790 = vld [vmem:[#allocation9 + $0x108] sm:$0xff]
    %v3791 = vld [vmem:[#allocation9 + $0x110] sm:$0xff]
    %v3792 = vld [vmem:[#allocation9 + $0x118] sm:$0xff]
    %v3793 = vld [vmem:[#allocation9 + $0x120] sm:$0xff]
    %v3794 = vld [vmem:[#allocation9 + $0x128] sm:$0xff]
    %v3795 = vld [vmem:[#allocation9 + $0x130] sm:$0xff]
    %v3796 = vld [vmem:[#allocation9 + $0x138] sm:$0xff]
    %v3797 = vld [vmem:[#allocation9 + $0x140] sm:$0xff]
    %v3798 = vld [vmem:[#allocation9 + $0x148] sm:$0xff]
    %v3799 = vld [vmem:[#allocation9 + $0x150] sm:$0xff]
    %v3800 = vld [vmem:[#allocation9 + $0x158] sm:$0xff]
    %v3801 = vld [vmem:[#allocation9 + $0x160] sm:$0xff]
    %v3802 = vld [vmem:[#allocation9 + $0x168] sm:$0xff]
    %v3803 = vld [vmem:[#allocation9 + $0x170] sm:$0xff]
    %v3804 = vld [vmem:[#allocation9 + $0x178] sm:$0xff]
    %v3805 = vld [vmem:[#allocation9 + $0x180] sm:$0xff]
    %v3806 = vld [vmem:[#allocation9 + $0x188] sm:$0xff]
    %v3807 = vld [vmem:[#allocation9 + $0x190] sm:$0xff]
    %v3808 = vld [vmem:[#allocation9 + $0x198] sm:$0xff]
    %v3809 = vld [vmem:[#allocation9 + $0x1a0] sm:$0xff]
    %v3810 = vld [vmem:[#allocation9 + $0x1a8] sm:$0xff]
    %v3811 = vld [vmem:[#allocation9 + $0x1b0] sm:$0xff]
    %v3812 = vld [vmem:[#allocation9 + $0x1b8] sm:$0xff]
    %v3813 = vld [vmem:[#allocation9 + $0x1c0] sm:$0xff]
    %v3814 = vld [vmem:[#allocation9 + $0x1c8] sm:$0xff]
    %v3815 = vld [vmem:[#allocation9 + $0x1d0] sm:$0xff]
    %v3816 = vld [vmem:[#allocation9 + $0x1d8] sm:$0xff]
    %v3817 = vld [vmem:[#allocation9 + $0x1e0] sm:$0xff]
    %v3818 = vld [vmem:[#allocation9 + $0x1e8] sm:$0xff]
    %v3819 = vld [vmem:[#allocation9 + $0x1f0] sm:$0xff]
    %v3820 = vld [vmem:[#allocation9 + $0x1f8] sm:$0xff]
    %v3821 = vld [vmem:[#allocation9 + $0x200] sm:$0xff]
    %v3822 = vld [vmem:[#allocation9 + $0x208] sm:$0xff]
    %v3823 = vld [vmem:[#allocation9 + $0x210] sm:$0xff]
    %v3824 = vld [vmem:[#allocation9 + $0x218] sm:$0xff]
    %v3825 = vld [vmem:[#allocation9 + $0x220] sm:$0xff]
    %v3826 = vld [vmem:[#allocation9 + $0x228] sm:$0xff]
    %v3827 = vld [vmem:[#allocation9 + $0x230] sm:$0xff]
    %v3828 = vld [vmem:[#allocation9 + $0x238] sm:$0xff]
    %v3829 = vld [vmem:[#allocation9 + $0x240] sm:$0xff]
    %v3830 = vld [vmem:[#allocation9 + $0x248] sm:$0xff]
    %v3831 = vld [vmem:[#allocation9 + $0x250] sm:$0xff]
    %v3832 = vld [vmem:[#allocation9 + $0x258] sm:$0xff]
    %v3833 = vld [vmem:[#allocation9 + $0x260] sm:$0xff]
    %v3834 = vld [vmem:[#allocation9 + $0x268] sm:$0xff]
    %v3835 = vld [vmem:[#allocation9 + $0x270] sm:$0xff]
    %v3836 = vld [vmem:[#allocation9 + $0x278] sm:$0xff]
    %v3837 = vld [vmem:[#allocation9 + $0x280] sm:$0xff]
    %v3838 = vld [vmem:[#allocation9 + $0x288] sm:$0xff]
    %v3839 = vld [vmem:[#allocation9 + $0x290] sm:$0xff]
    %v3840 = vld [vmem:[#allocation9 + $0x298] sm:$0xff]
    %v3841 = vld [vmem:[#allocation9 + $0x2a0] sm:$0xff]
    %v3842 = vld [vmem:[#allocation9 + $0x2a8] sm:$0xff]
    %v3843 = vld [vmem:[#allocation9 + $0x2b0] sm:$0xff]
    %v3844 = vld [vmem:[#allocation9 + $0x2b8] sm:$0xff]
    %v3845 = vld [vmem:[#allocation9 + $0x2c0] sm:$0xff]
    %v3846 = vld [vmem:[#allocation9 + $0x2c8] sm:$0xff]
    %v3847 = vld [vmem:[#allocation9 + $0x2d0] sm:$0xff]
    %v3848 = vld [vmem:[#allocation9 + $0x2d8] sm:$0xff]
    %v3849 = vld [vmem:[#allocation9 + $0x2e0] sm:$0xff]
    %v3850 = vld [vmem:[#allocation9 + $0x2e8] sm:$0xff]
    %v3851 = vld [vmem:[#allocation9 + $0x2f0] sm:$0xff]
    %v3852 = vld [vmem:[#allocation9 + $0x2f8] sm:$0xff]
    %vm3883 = vcmask 1044480
    %v3884 = vrot.slane %v3727, 3
    %v3885 = vrot.slane %v3733, 3
    %v3886 = vsel %vm3883, %v3884, %v3885
    %v3887 = vrot.slane %v3728, 3
    %v3888 = vrot.slane %v3734, 3
    %v3889 = vsel %vm3883, %v3887, %v3888
    %v3890 = vrot.slane %v3729, 3
    %v3891 = vrot.slane %v3735, 3
    %v3892 = vsel %vm3883, %v3890, %v3891
    %v3893 = vrot.slane %v3730, 3
    %v3894 = vrot.slane %v3736, 3
    %v3895 = vsel %vm3883, %v3893, %v3894
    %v3896 = vrot.slane %v3731, 3
    %v3897 = vrot.slane %v3737, 3
    %v3898 = vsel %vm3883, %v3896, %v3897
    %v3899 = vrot.slane %v3732, 3
    %v3900 = vrot.slane %v3738, 3
    %v3901 = vsel %vm3883, %v3899, %v3900
    %v3902 = vrot.slane %v3739, 3
    %v3903 = vsel %vm3883, %v3885, %v3902
    %v3904 = vrot.slane %v3740, 3
    %v3905 = vsel %vm3883, %v3888, %v3904
    %v3906 = vrot.slane %v3741, 3
    %v3907 = vsel %vm3883, %v3891, %v3906
    %v3908 = vrot.slane %v3742, 3
    %v3909 = vsel %vm3883, %v3894, %v3908
    %v3910 = vrot.slane %v3743, 3
    %v3911 = vsel %vm3883, %v3897, %v3910
    %v3912 = vrot.slane %v3744, 3
    %v3913 = vsel %vm3883, %v3900, %v3912
    %v3914 = vrot.slane %v3745, 3
    %v3915 = vsel %vm3883, %v3902, %v3914
    %v3916 = vrot.slane %v3746, 3
    %v3917 = vsel %vm3883, %v3904, %v3916
    %v3918 = vrot.slane %v3747, 3
    %v3919 = vsel %vm3883, %v3906, %v3918
    %v3920 = vrot.slane %v3748, 3
    %v3921 = vsel %vm3883, %v3908, %v3920
    %v3922 = vrot.slane %v3749, 3
    %v3923 = vsel %vm3883, %v3910, %v3922
    %v3924 = vrot.slane %v3750, 3
    %v3925 = vsel %vm3883, %v3912, %v3924
    %v3926 = vrot.slane %v3751, 3
    %v3927 = vsel %vm3883, %v3914, %v3926
    %v3928 = vrot.slane %v3752, 3
    %v3929 = vsel %vm3883, %v3916, %v3928
    %v3930 = vrot.slane %v3753, 3
    %v3931 = vsel %vm3883, %v3918, %v3930
    %v3932 = vrot.slane %v3754, 3
    %v3933 = vsel %vm3883, %v3920, %v3932
    %v3934 = vrot.slane %v3755, 3
    %v3935 = vsel %vm3883, %v3922, %v3934
    %v3936 = vrot.slane %v3756, 3
    %v3937 = vsel %vm3883, %v3924, %v3936
    %v4064 = vunpack.c.l.b16 %v3757
    %v4065 = vunpack.c.h.b16 %v3757
    %v4066 = vunpack.c.l.b16 %v3758
    %v4067 = vunpack.c.h.b16 %v3758
    %v4068 = vunpack.c.l.b16 %v3759
    %v4069 = vunpack.c.h.b16 %v3759
    %v4070 = vunpack.c.l.b16 %v3760
    %v4071 = vunpack.c.h.b16 %v3760
    %v4072 = vunpack.c.l.b16 %v3761
    %v4073 = vunpack.c.h.b16 %v3761
    %v4074 = vunpack.c.l.b16 %v3762
    %v4075 = vunpack.c.h.b16 %v3762
    %v4076 = vunpack.c.l.b16 %v3763
    %v4077 = vunpack.c.h.b16 %v3763
    %v4078 = vunpack.c.l.b16 %v3764
    %v4079 = vunpack.c.h.b16 %v3764
    %v4080 = vunpack.c.l.b16 %v3765
    %v4081 = vunpack.c.h.b16 %v3765
    %v4082 = vunpack.c.l.b16 %v3766
    %v4083 = vunpack.c.h.b16 %v3766
    %v4084 = vunpack.c.l.b16 %v3767
    %v4085 = vunpack.c.h.b16 %v3767
    %v4086 = vunpack.c.l.b16 %v3768
    %v4087 = vunpack.c.h.b16 %v3768
    %v4088 = vunpack.c.l.b16 %v3769
    %v4089 = vunpack.c.h.b16 %v3769
    %v4090 = vunpack.c.l.b16 %v3770
    %v4091 = vunpack.c.h.b16 %v3770
    %v4092 = vunpack.c.l.b16 %v3771
    %v4093 = vunpack.c.h.b16 %v3771
    %v4094 = vunpack.c.l.b16 %v3772
    %v4095 = vunpack.c.h.b16 %v3772
    %v4096 = vunpack.c.l.b16 %v3773
    %v4097 = vunpack.c.h.b16 %v3773
    %v4098 = vunpack.c.l.b16 %v3774
    %v4099 = vunpack.c.h.b16 %v3774
    %v4100 = vunpack.c.l.b16 %v3775
    %v4101 = vunpack.c.h.b16 %v3775
    %v4102 = vunpack.c.l.b16 %v3776
    %v4103 = vunpack.c.h.b16 %v3776
    %v4104 = vunpack.c.l.b16 %v3777
    %v4105 = vunpack.c.h.b16 %v3777
    %v4106 = vunpack.c.l.b16 %v3778
    %v4107 = vunpack.c.h.b16 %v3778
    %v4108 = vunpack.c.l.b16 %v3779
    %v4109 = vunpack.c.h.b16 %v3779
    %v4110 = vunpack.c.l.b16 %v3780
    %v4111 = vunpack.c.h.b16 %v3780
    %v4112 = vunpack.c.l.b16 %v3781
    %v4113 = vunpack.c.h.b16 %v3781
    %v4114 = vunpack.c.l.b16 %v3782
    %v4115 = vunpack.c.h.b16 %v3782
    %v4116 = vunpack.c.l.b16 %v3783
    %v4117 = vunpack.c.h.b16 %v3783
    %v4118 = vunpack.c.l.b16 %v3784
    %v4119 = vunpack.c.h.b16 %v3784
    %v4120 = vunpack.c.l.b16 %v3785
    %v4121 = vunpack.c.h.b16 %v3785
    %v4122 = vunpack.c.l.b16 %v3786
    %v4123 = vunpack.c.h.b16 %v3786
    %v4124 = vunpack.c.l.b16 %v3787
    %v4125 = vunpack.c.h.b16 %v3787
    %v4126 = vunpack.c.l.b16 %v3788
    %v4127 = vunpack.c.h.b16 %v3788
    %v4128 = vunpack.c.l.b16 %v3789
    %v4129 = vunpack.c.h.b16 %v3789
    %v4130 = vunpack.c.l.b16 %v3790
    %v4131 = vunpack.c.h.b16 %v3790
    %v4132 = vunpack.c.l.b16 %v3791
    %v4133 = vunpack.c.h.b16 %v3791
    %v4134 = vunpack.c.l.b16 %v3792
    %v4135 = vunpack.c.h.b16 %v3792
    %v4136 = vunpack.c.l.b16 %v3793
    %v4137 = vunpack.c.h.b16 %v3793
    %v4138 = vunpack.c.l.b16 %v3794
    %v4139 = vunpack.c.h.b16 %v3794
    %v4140 = vunpack.c.l.b16 %v3795
    %v4141 = vunpack.c.h.b16 %v3795
    %v4142 = vunpack.c.l.b16 %v3796
    %v4143 = vunpack.c.h.b16 %v3796
    %v4144 = vunpack.c.l.b16 %v3797
    %v4145 = vunpack.c.h.b16 %v3797
    %v4146 = vunpack.c.l.b16 %v3798
    %v4147 = vunpack.c.h.b16 %v3798
    %v4148 = vunpack.c.l.b16 %v3799
    %v4149 = vunpack.c.h.b16 %v3799
    %v4150 = vunpack.c.l.b16 %v3800
    %v4151 = vunpack.c.h.b16 %v3800
    %v4152 = vunpack.c.l.b16 %v3801
    %v4153 = vunpack.c.h.b16 %v3801
    %v4154 = vunpack.c.l.b16 %v3802
    %v4155 = vunpack.c.h.b16 %v3802
    %v4156 = vunpack.c.l.b16 %v3803
    %v4157 = vunpack.c.h.b16 %v3803
    %v4158 = vunpack.c.l.b16 %v3804
    %v4159 = vunpack.c.h.b16 %v3804
    %v4160 = vunpack.c.l.b16 %v3805
    %v4161 = vunpack.c.h.b16 %v3805
    %v4162 = vunpack.c.l.b16 %v3806
    %v4163 = vunpack.c.h.b16 %v3806
    %v4164 = vunpack.c.l.b16 %v3807
    %v4165 = vunpack.c.h.b16 %v3807
    %v4166 = vunpack.c.l.b16 %v3808
    %v4167 = vunpack.c.h.b16 %v3808
    %v4168 = vunpack.c.l.b16 %v3809
    %v4169 = vunpack.c.h.b16 %v3809
    %v4170 = vunpack.c.l.b16 %v3810
    %v4171 = vunpack.c.h.b16 %v3810
    %v4172 = vunpack.c.l.b16 %v3811
    %v4173 = vunpack.c.h.b16 %v3811
    %v4174 = vunpack.c.l.b16 %v3812
    %v4175 = vunpack.c.h.b16 %v3812
    %v4176 = vunpack.c.l.b16 %v3813
    %v4177 = vunpack.c.h.b16 %v3813
    %v4178 = vunpack.c.l.b16 %v3814
    %v4179 = vunpack.c.h.b16 %v3814
    %v4180 = vunpack.c.l.b16 %v3815
    %v4181 = vunpack.c.h.b16 %v3815
    %v4182 = vunpack.c.l.b16 %v3816
    %v4183 = vunpack.c.h.b16 %v3816
    %v4184 = vunpack.c.l.b16 %v3817
    %v4185 = vunpack.c.h.b16 %v3817
    %v4186 = vunpack.c.l.b16 %v3818
    %v4187 = vunpack.c.h.b16 %v3818
    %v4188 = vunpack.c.l.b16 %v3819
    %v4189 = vunpack.c.h.b16 %v3819
    %v4190 = vunpack.c.l.b16 %v3820
    %v4191 = vunpack.c.h.b16 %v3820
    %v4192 = vunpack.c.l.b16 %v3821
    %v4193 = vunpack.c.h.b16 %v3821
    %v4194 = vunpack.c.l.b16 %v3822
    %v4195 = vunpack.c.h.b16 %v3822
    %v4196 = vunpack.c.l.b16 %v3823
    %v4197 = vunpack.c.h.b16 %v3823
    %v4198 = vunpack.c.l.b16 %v3824
    %v4199 = vunpack.c.h.b16 %v3824
    %v4200 = vunpack.c.l.b16 %v3825
    %v4201 = vunpack.c.h.b16 %v3825
    %v4202 = vunpack.c.l.b16 %v3826
    %v4203 = vunpack.c.h.b16 %v3826
    %v4204 = vunpack.c.l.b16 %v3827
    %v4205 = vunpack.c.h.b16 %v3827
    %v4206 = vunpack.c.l.b16 %v3828
    %v4207 = vunpack.c.h.b16 %v3828
    %v4208 = vunpack.c.l.b16 %v3829
    %v4209 = vunpack.c.h.b16 %v3829
    %v4210 = vunpack.c.l.b16 %v3830
    %v4211 = vunpack.c.h.b16 %v3830
    %v4212 = vunpack.c.l.b16 %v3831
    %v4213 = vunpack.c.h.b16 %v3831
    %v4214 = vunpack.c.l.b16 %v3832
    %v4215 = vunpack.c.h.b16 %v3832
    %v4216 = vunpack.c.l.b16 %v3833
    %v4217 = vunpack.c.h.b16 %v3833
    %v4218 = vunpack.c.l.b16 %v3834
    %v4219 = vunpack.c.h.b16 %v3834
    %v4220 = vunpack.c.l.b16 %v3835
    %v4221 = vunpack.c.h.b16 %v3835
    %v4222 = vunpack.c.l.b16 %v3836
    %v4223 = vunpack.c.h.b16 %v3836
    %v4224 = vunpack.c.l.b16 %v3837
    %v4225 = vunpack.c.h.b16 %v3837
    %v4226 = vunpack.c.l.b16 %v3838
    %v4227 = vunpack.c.h.b16 %v3838
    %v4228 = vunpack.c.l.b16 %v3839
    %v4229 = vunpack.c.h.b16 %v3839
    %v4230 = vunpack.c.l.b16 %v3840
    %v4231 = vunpack.c.h.b16 %v3840
    %v4232 = vunpack.c.l.b16 %v3841
    %v4233 = vunpack.c.h.b16 %v3841
    %v4234 = vunpack.c.l.b16 %v3842
    %v4235 = vunpack.c.h.b16 %v3842
    %v4236 = vunpack.c.l.b16 %v3843
    %v4237 = vunpack.c.h.b16 %v3843
    %v4238 = vunpack.c.l.b16 %v3844
    %v4239 = vunpack.c.h.b16 %v3844
    %v4240 = vunpack.c.l.b16 %v3845
    %v4241 = vunpack.c.h.b16 %v3845
    %v4242 = vunpack.c.l.b16 %v3846
    %v4243 = vunpack.c.h.b16 %v3846
    %v4244 = vunpack.c.l.b16 %v3847
    %v4245 = vunpack.c.h.b16 %v3847
    %v4246 = vunpack.c.l.b16 %v3848
    %v4247 = vunpack.c.h.b16 %v3848
    %v4248 = vunpack.c.l.b16 %v3849
    %v4249 = vunpack.c.h.b16 %v3849
    %v4250 = vunpack.c.l.b16 %v3850
    %v4251 = vunpack.c.h.b16 %v3850
    %v4252 = vunpack.c.l.b16 %v3851
    %v4253 = vunpack.c.h.b16 %v3851
    %v4254 = vunpack.c.l.b16 %v3852
    %v4255 = vunpack.c.h.b16 %v3852
    %v4256 = vpack.c.b16 %v4066, %v4064
    %v4257 = vpack.c.b16 %v4067, %v4065
    %v4258 = vpack.c.b16 %v4070, %v4068
    %v4259 = vpack.c.b16 %v4071, %v4069
    %v4260 = vpack.c.b16 %v4074, %v4072
    %v4261 = vpack.c.b16 %v4075, %v4073
    %v4262 = vpack.c.b16 %v4078, %v4076
    %v4263 = vpack.c.b16 %v4079, %v4077
    %v4264 = vpack.c.b16 %v4082, %v4080
    %v4265 = vpack.c.b16 %v4083, %v4081
    %v4266 = vpack.c.b16 %v4086, %v4084
    %v4267 = vpack.c.b16 %v4087, %v4085
    %v4268 = vpack.c.b16 %v4090, %v4088
    %v4269 = vpack.c.b16 %v4091, %v4089
    %v4270 = vpack.c.b16 %v4094, %v4092
    %v4271 = vpack.c.b16 %v4095, %v4093
    %v4272 = vpack.c.b16 %v4098, %v4096
    %v4273 = vpack.c.b16 %v4099, %v4097
    %v4274 = vpack.c.b16 %v4102, %v4100
    %v4275 = vpack.c.b16 %v4103, %v4101
    %v4276 = vpack.c.b16 %v4106, %v4104
    %v4277 = vpack.c.b16 %v4107, %v4105
    %v4278 = vpack.c.b16 %v4110, %v4108
    %v4279 = vpack.c.b16 %v4111, %v4109
    %v4280 = vpack.c.b16 %v4114, %v4112
    %v4281 = vpack.c.b16 %v4115, %v4113
    %v4282 = vpack.c.b16 %v4118, %v4116
    %v4283 = vpack.c.b16 %v4119, %v4117
    %v4284 = vpack.c.b16 %v4122, %v4120
    %v4285 = vpack.c.b16 %v4123, %v4121
    %v4286 = vpack.c.b16 %v4126, %v4124
    %v4287 = vpack.c.b16 %v4127, %v4125
    %v4288 = vpack.c.b16 %v4130, %v4128
    %v4289 = vpack.c.b16 %v4131, %v4129
    %v4290 = vpack.c.b16 %v4134, %v4132
    %v4291 = vpack.c.b16 %v4135, %v4133
    %v4292 = vpack.c.b16 %v4138, %v4136
    %v4293 = vpack.c.b16 %v4139, %v4137
    %v4294 = vpack.c.b16 %v4142, %v4140
    %v4295 = vpack.c.b16 %v4143, %v4141
    %v4296 = vpack.c.b16 %v4146, %v4144
    %v4297 = vpack.c.b16 %v4147, %v4145
    %v4298 = vpack.c.b16 %v4150, %v4148
    %v4299 = vpack.c.b16 %v4151, %v4149
    %v4300 = vpack.c.b16 %v4154, %v4152
    %v4301 = vpack.c.b16 %v4155, %v4153
    %v4302 = vpack.c.b16 %v4158, %v4156
    %v4303 = vpack.c.b16 %v4159, %v4157
    %v4304 = vpack.c.b16 %v4162, %v4160
    %v4305 = vpack.c.b16 %v4163, %v4161
    %v4306 = vpack.c.b16 %v4166, %v4164
    %v4307 = vpack.c.b16 %v4167, %v4165
    %v4308 = vpack.c.b16 %v4170, %v4168
    %v4309 = vpack.c.b16 %v4171, %v4169
    %v4310 = vpack.c.b16 %v4174, %v4172
    %v4311 = vpack.c.b16 %v4175, %v4173
    %v4312 = vpack.c.b16 %v4178, %v4176
    %v4313 = vpack.c.b16 %v4179, %v4177
    %v4314 = vpack.c.b16 %v4182, %v4180
    %v4315 = vpack.c.b16 %v4183, %v4181
    %v4316 = vpack.c.b16 %v4186, %v4184
    %v4317 = vpack.c.b16 %v4187, %v4185
    %v4318 = vpack.c.b16 %v4190, %v4188
    %v4319 = vpack.c.b16 %v4191, %v4189
    %v4320 = vpack.c.b16 %v4194, %v4192
    %v4321 = vpack.c.b16 %v4195, %v4193
    %v4322 = vpack.c.b16 %v4198, %v4196
    %v4323 = vpack.c.b16 %v4199, %v4197
    %v4324 = vpack.c.b16 %v4202, %v4200
    %v4325 = vpack.c.b16 %v4203, %v4201
    %v4326 = vpack.c.b16 %v4206, %v4204
    %v4327 = vpack.c.b16 %v4207, %v4205
    %v4328 = vpack.c.b16 %v4210, %v4208
    %v4329 = vpack.c.b16 %v4211, %v4209
    %v4330 = vpack.c.b16 %v4214, %v4212
    %v4331 = vpack.c.b16 %v4215, %v4213
    %v4332 = vpack.c.b16 %v4218, %v4216
    %v4333 = vpack.c.b16 %v4219, %v4217
    %v4334 = vpack.c.b16 %v4222, %v4220
    %v4335 = vpack.c.b16 %v4223, %v4221
    %v4336 = vpack.c.b16 %v4226, %v4224
    %v4337 = vpack.c.b16 %v4227, %v4225
    %v4338 = vpack.c.b16 %v4230, %v4228
    %v4339 = vpack.c.b16 %v4231, %v4229
    %v4340 = vpack.c.b16 %v4234, %v4232
    %v4341 = vpack.c.b16 %v4235, %v4233
    %v4342 = vpack.c.b16 %v4238, %v4236
    %v4343 = vpack.c.b16 %v4239, %v4237
    %v4344 = vpack.c.b16 %v4242, %v4240
    %v4345 = vpack.c.b16 %v4243, %v4241
    %v4346 = vpack.c.b16 %v4246, %v4244
    %v4347 = vpack.c.b16 %v4247, %v4245
    %v4348 = vpack.c.b16 %v4250, %v4248
    %v4349 = vpack.c.b16 %v4251, %v4249
    %v4350 = vpack.c.b16 %v4254, %v4252
    %v4351 = vpack.c.b16 %v4255, %v4253
    %4448 = vmatprep.subr.bf16.mxu0 %v4257
    %4449 = vmatpush1.bf16.msra.mxu0 %v4256
    %4450 = vmatprep.subr.bf16.mxu0 %v4259
    %4451 = vmatpush1.bf16.msra.mxu0 %v4258
    %4452 = vmatprep.subr.bf16.mxu0 %v4261
    %4453 = vmatpush1.bf16.msra.mxu0 %v4260
    %4454 = vmatprep.subr.bf16.mxu0 %v4263
    %4455 = vmatpush1.bf16.msra.mxu0 %v4262
    %4456 = vmatprep.subr.bf16.mxu0 %v4265
    %4457 = vmatpush1.bf16.msra.mxu0 %v4264
    %4458 = vmatprep.subr.bf16.mxu0 %v4267
    %4459 = vmatpush1.bf16.msra.mxu0 %v4266
    %4460 = vmatprep.subr.bf16.mxu0 %v4269
    %4461 = vmatpush1.bf16.msra.mxu0 %v4268
    %4462 = vmatprep.subr.bf16.mxu0 %v4271
    %4463 = vmatpush1.bf16.msra.mxu0 %v4270
    %4464 = vmatprep.subr.bf16.mxu0 %v4273
    %4465 = vmatpush1.bf16.msra.mxu0 %v4272
    %4466 = vmatprep.subr.bf16.mxu0 %v4275
    %4467 = vmatpush1.bf16.msra.mxu0 %v4274
    %4468 = vmatprep.subr.bf16.mxu0 %v4277
    %4469 = vmatpush1.bf16.msra.mxu0 %v4276
    %4470 = vmatprep.subr.bf16.mxu0 %v4279
    %4471 = vmatpush1.bf16.msra.mxu0 %v4278
    %4472 = vmatprep.subr.bf16.mxu0 %v4281
    %4473 = vmatpush1.bf16.msra.mxu0 %v4280
    %4474 = vmatprep.subr.bf16.mxu0 %v4283
    %4475 = vmatpush1.bf16.msra.mxu0 %v4282
    %4476 = vmatprep.subr.bf16.mxu0 %v4285
    %4477 = vmatpush1.bf16.msra.mxu0 %v4284
    %4478 = vmatprep.subr.bf16.mxu0 %v4287
    %4479 = vmatpush1.bf16.msra.mxu0 %v4286
    %4480 = vmatprep.mubr.bf16.mxu0 %v3889
    %4481 = vmatmul.mubr.bf16.gmra.mrb[0].mxu0 %v3886
    %v4482 = vpop.f32.mrb[0].mxu0
    %v4483 = vadd.f32 0.0, %v4482
    %v4484 = vpop.f32.mrb[0].mxu0
    %v4485 = vadd.f32 0.0, %v4484
    %v4486 = vpop.f32.mrb[0].mxu0
    %v4487 = vadd.f32 0.0, %v4486
    %v4488 = vpop.f32.mrb[0].mxu0
    %v4489 = vadd.f32 0.0, %v4488
    %4490 = vmatprep.mubr.bf16.mxu0 %v3905
    %4491 = vmatmul.mubr.bf16.gmra.mrb[0].mxu0 %v3903
    %v4492 = vpop.f32.mrb[0].mxu0
    %v4493 = vadd.f32 0.0, %v4492
    %v4494 = vpop.f32.mrb[0].mxu0
    %v4495 = vadd.f32 0.0, %v4494
    %v4496 = vpop.f32.mrb[0].mxu0
    %v4497 = vadd.f32 0.0, %v4496
    %v4498 = vpop.f32.mrb[0].mxu0
    %v4499 = vadd.f32 0.0, %v4498
    %4500 = vmatprep.mubr.bf16.mxu0 %v3917
    %4501 = vmatmul.mubr.bf16.gmra.mrb[0].mxu0 %v3915
    %v4502 = vpop.f32.mrb[0].mxu0
    %v4503 = vadd.f32 0.0, %v4502
    %v4504 = vpop.f32.mrb[0].mxu0
    %v4505 = vadd.f32 0.0, %v4504
    %v4506 = vpop.f32.mrb[0].mxu0
    %v4507 = vadd.f32 0.0, %v4506
    %v4508 = vpop.f32.mrb[0].mxu0
    %v4509 = vadd.f32 0.0, %v4508
    %4510 = vmatprep.mubr.bf16.mxu0 %v3929
    %4511 = vmatmul.mubr.bf16.gmra.mrb[0].mxu0 %v3927
    %v4512 = vpop.f32.mrb[0].mxu0
    %v4513 = vadd.f32 0.0, %v4512
    %v4514 = vpop.f32.mrb[0].mxu0
    %v4515 = vadd.f32 0.0, %v4514
    %v4516 = vpop.f32.mrb[0].mxu0
    %v4517 = vadd.f32 0.0, %v4516
    %v4518 = vpop.f32.mrb[0].mxu0
    %v4519 = vadd.f32 0.0, %v4518
    %4520 = vmatprep.mubr.bf16.mxu0 %v3928
    %4521 = vmatmul.mubr.bf16.gmra.mrb[0].mxu0 %v3926
    %v4522 = vpop.f32.mrb[0].mxu0
    %v4523 = vadd.f32 0.0, %v4522
    %v4524 = vpop.f32.mrb[0].mxu0
    %v4525 = vadd.f32 0.0, %v4524
    %v4526 = vpop.f32.mrb[0].mxu0
    %v4527 = vpop.f32.mrb[0].mxu0
    %4528 = vdwg.mxu0
    %4529 = vmatprep.subr.bf16.mxu0 %v4289
    %4530 = vmatpush1.bf16.msra.mxu0 %v4288
    %4531 = vmatprep.subr.bf16.mxu0 %v4291
    %4532 = vmatpush1.bf16.msra.mxu0 %v4290
    %4533 = vmatprep.subr.bf16.mxu0 %v4293
    %4534 = vmatpush1.bf16.msra.mxu0 %v4292
    %4535 = vmatprep.subr.bf16.mxu0 %v4295
    %4536 = vmatpush1.bf16.msra.mxu0 %v4294
    %4537 = vmatprep.subr.bf16.mxu0 %v4297
    %4538 = vmatpush1.bf16.msra.mxu0 %v4296
    %4539 = vmatprep.subr.bf16.mxu0 %v4299
    %4540 = vmatpush1.bf16.msra.mxu0 %v4298
    %4541 = vmatprep.subr.bf16.mxu0 %v4301
    %4542 = vmatpush1.bf16.msra.mxu0 %v4300
    %4543 = vmatprep.subr.bf16.mxu0 %v4303
    %4544 = vmatpush1.bf16.msra.mxu0 %v4302
    %4545 = vmatprep.subr.bf16.mxu0 %v4305
    %4546 = vmatpush1.bf16.msra.mxu0 %v4304
    %4547 = vmatprep.subr.bf16.mxu0 %v4307
    %4548 = vmatpush1.bf16.msra.mxu0 %v4306
    %4549 = vmatprep.subr.bf16.mxu0 %v4309
    %4550 = vmatpush1.bf16.msra.mxu0 %v4308
    %4551 = vmatprep.subr.bf16.mxu0 %v4311
    %4552 = vmatpush1.bf16.msra.mxu0 %v4310
    %4553 = vmatprep.subr.bf16.mxu0 %v4313
    %4554 = vmatpush1.bf16.msra.mxu0 %v4312
    %4555 = vmatprep.subr.bf16.mxu0 %v4315
    %4556 = vmatpush1.bf16.msra.mxu0 %v4314
    %4557 = vmatprep.subr.bf16.mxu0 %v4317
    %4558 = vmatpush1.bf16.msra.mxu0 %v4316
    %4559 = vmatprep.subr.bf16.mxu0 %v4319
    %4560 = vmatpush1.bf16.msra.mxu0 %v4318
    %4561 = vmatprep.mubr.bf16.mxu0 %v3895
    %4562 = vmatmul.mubr.bf16.gmra.mrb[0].mxu0 %v3892
    %v4563 = vpop.f32.mrb[0].mxu0
    %v4564 = vadd.f32 %v4483, %v4563
    %v4565 = vpop.f32.mrb[0].mxu0
    %v4566 = vadd.f32 %v4485, %v4565
    %v4567 = vpop.f32.mrb[0].mxu0
    %v4568 = vadd.f32 %v4487, %v4567
    %v4569 = vpop.f32.mrb[0].mxu0
    %v4570 = vadd.f32 %v4489, %v4569
    %4571 = vmatprep.mubr.bf16.mxu0 %v3909
    %4572 = vmatmul.mubr.bf16.gmra.mrb[0].mxu0 %v3907
    %v4573 = vpop.f32.mrb[0].mxu0
    %v4574 = vadd.f32 %v4493, %v4573
    %v4575 = vpop.f32.mrb[0].mxu0
    %v4576 = vadd.f32 %v4495, %v4575
    %v4577 = vpop.f32.mrb[0].mxu0
    %v4578 = vadd.f32 %v4497, %v4577
    %v4579 = vpop.f32.mrb[0].mxu0
    %v4580 = vadd.f32 %v4499, %v4579
    %4581 = vmatprep.mubr.bf16.mxu0 %v3921
    %4582 = vmatmul.mubr.bf16.gmra.mrb[0].mxu0 %v3919
    %v4583 = vpop.f32.mrb[0].mxu0
    %v4584 = vadd.f32 %v4503, %v4583
    %v4585 = vpop.f32.mrb[0].mxu0
    %v4586 = vadd.f32 %v4505, %v4585
    %v4587 = vpop.f32.mrb[0].mxu0
    %v4588 = vadd.f32 %v4507, %v4587
    %v4589 = vpop.f32.mrb[0].mxu0
    %v4590 = vadd.f32 %v4509, %v4589
    %4591 = vmatprep.mubr.bf16.mxu0 %v3933
    %4592 = vmatmul.mubr.bf16.gmra.mrb[0].mxu0 %v3931
    %v4593 = vpop.f32.mrb[0].mxu0
    %v4594 = vadd.f32 %v4513, %v4593
    %v4595 = vpop.f32.mrb[0].mxu0
    %v4596 = vadd.f32 %v4515, %v4595
    %v4597 = vpop.f32.mrb[0].mxu0
    %v4598 = vadd.f32 %v4517, %v4597
    %v4599 = vpop.f32.mrb[0].mxu0
    %v4600 = vadd.f32 %v4519, %v4599
    %4601 = vmatprep.mubr.bf16.mxu0 %v3932
    %4602 = vmatmul.mubr.bf16.gmra.mrb[0].mxu0 %v3930
    %v4603 = vpop.f32.mrb[0].mxu0
    %v4604 = vadd.f32 %v4523, %v4603
    %v4605 = vpop.f32.mrb[0].mxu0
    %v4606 = vadd.f32 %v4525, %v4605
    %v4607 = vpop.f32.mrb[0].mxu0
    %v4608 = vpop.f32.mrb[0].mxu0
    %4609 = vdwg.mxu0
    %4610 = vmatprep.subr.bf16.mxu0 %v4321
    %4611 = vmatpush1.bf16.msra.mxu0 %v4320
    %4612 = vmatprep.subr.bf16.mxu0 %v4323
    %4613 = vmatpush1.bf16.msra.mxu0 %v4322
    %4614 = vmatprep.subr.bf16.mxu0 %v4325
    %4615 = vmatpush1.bf16.msra.mxu0 %v4324
    %4616 = vmatprep.subr.bf16.mxu0 %v4327
    %4617 = vmatpush1.bf16.msra.mxu0 %v4326
    %4618 = vmatprep.subr.bf16.mxu0 %v4329
    %4619 = vmatpush1.bf16.msra.mxu0 %v4328
    %4620 = vmatprep.subr.bf16.mxu0 %v4331
    %4621 = vmatpush1.bf16.msra.mxu0 %v4330
    %4622 = vmatprep.subr.bf16.mxu0 %v4333
    %4623 = vmatpush1.bf16.msra.mxu0 %v4332
    %4624 = vmatprep.subr.bf16.mxu0 %v4335
    %4625 = vmatpush1.bf16.msra.mxu0 %v4334
    %4626 = vmatprep.subr.bf16.mxu0 %v4337
    %4627 = vmatpush1.bf16.msra.mxu0 %v4336
    %4628 = vmatprep.subr.bf16.mxu0 %v4339
    %4629 = vmatpush1.bf16.msra.mxu0 %v4338
    %4630 = vmatprep.subr.bf16.mxu0 %v4341
    %4631 = vmatpush1.bf16.msra.mxu0 %v4340
    %4632 = vmatprep.subr.bf16.mxu0 %v4343
    %4633 = vmatpush1.bf16.msra.mxu0 %v4342
    %4634 = vmatprep.subr.bf16.mxu0 %v4345
    %4635 = vmatpush1.bf16.msra.mxu0 %v4344
    %4636 = vmatprep.subr.bf16.mxu0 %v4347
    %4637 = vmatpush1.bf16.msra.mxu0 %v4346
    %4638 = vmatprep.subr.bf16.mxu0 %v4349
    %4639 = vmatpush1.bf16.msra.mxu0 %v4348
    %4640 = vmatprep.subr.bf16.mxu0 %v4351
    %4641 = vmatpush1.bf16.msra.mxu0 %v4350
    %4642 = vmatprep.mubr.bf16.mxu0 %v3901
    %4643 = vmatmul.mubr.bf16.gmra.mrb[0].mxu0 %v3898
    %v4644 = vpop.f32.mrb[0].mxu0
    %v4645 = vadd.f32 %v4564, %v4644
    %v4646 = vpop.f32.mrb[0].mxu0
    %v4647 = vadd.f32 %v4566, %v4646
    %v4648 = vpop.f32.mrb[0].mxu0
    %v4649 = vadd.f32 %v4568, %v4648
    %v4650 = vpop.f32.mrb[0].mxu0
    %v4651 = vadd.f32 %v4570, %v4650
    %4652 = vmatprep.mubr.bf16.mxu0 %v3913
    %4653 = vmatmul.mubr.bf16.gmra.mrb[0].mxu0 %v3911
    %v4654 = vpop.f32.mrb[0].mxu0
    %v4655 = vadd.f32 %v4574, %v4654
    %v4656 = vpop.f32.mrb[0].mxu0
    %v4657 = vadd.f32 %v4576, %v4656
    %v4658 = vpop.f32.mrb[0].mxu0
    %v4659 = vadd.f32 %v4578, %v4658
    %v4660 = vpop.f32.mrb[0].mxu0
    %v4661 = vadd.f32 %v4580, %v4660
    %4662 = vmatprep.mubr.bf16.mxu0 %v3925
    %4663 = vmatmul.mubr.bf16.gmra.mrb[0].mxu0 %v3923
    %v4664 = vpop.f32.mrb[0].mxu0
    %v4665 = vadd.f32 %v4584, %v4664
    %v4666 = vpop.f32.mrb[0].mxu0
    %v4667 = vadd.f32 %v4586, %v4666
    %v4668 = vpop.f32.mrb[0].mxu0
    %v4669 = vadd.f32 %v4588, %v4668
    %v4670 = vpop.f32.mrb[0].mxu0
    %v4671 = vadd.f32 %v4590, %v4670
    %4672 = vmatprep.mubr.bf16.mxu0 %v3937
    %4673 = vmatmul.mubr.bf16.gmra.mrb[0].mxu0 %v3935
    %v4674 = vpop.f32.mrb[0].mxu0
    %v4675 = vadd.f32 %v4594, %v4674
    %v4676 = vpop.f32.mrb[0].mxu0
    %v4677 = vadd.f32 %v4596, %v4676
    %v4678 = vpop.f32.mrb[0].mxu0
    %v4679 = vadd.f32 %v4598, %v4678
    %v4680 = vpop.f32.mrb[0].mxu0
    %v4681 = vadd.f32 %v4600, %v4680
    %4682 = vmatprep.mubr.bf16.mxu0 %v3936
    %4683 = vmatmul.mubr.bf16.gmra.mrb[0].mxu0 %v3934
    %v4684 = vpop.f32.mrb[0].mxu0
    %v4685 = vadd.f32 %v4604, %v4684
    %v4686 = vpop.f32.mrb[0].mxu0
    %v4687 = vadd.f32 %v4606, %v4686
    %v4688 = vpop.f32.mrb[0].mxu0
    %v4689 = vpop.f32.mrb[0].mxu0
    %4690 = vdwg.mxu0
    %v4691 = vld [vmem:[%s10] sm:$0x3]
    %v4693 = vlaneseq
    %v4694 = vshrl.u32 %v4693, 7
    %v4695 = vsub.s32 0, %v4694
    %v4696 = vrot.slane %v4691, %v4695
    %v4697 = vlaneseq
    %v4698 = vshrl.u32 %v4697, 7
    %v4699 = vsub.s32 1, %v4698
    %v4700 = vrot.slane %v4691, %v4699
    %v4703 = vmul.f32 %v4645, %v4696
    %v4704 = vmul.f32 %v4647, %v4700
    %v4705 = vmul.f32 %v4649, %v4696
    %v4706 = vmul.f32 %v4651, %v4700
    %v4707 = vmul.f32 %v4655, %v4696
    %v4708 = vmul.f32 %v4657, %v4700
    %v4709 = vmul.f32 %v4659, %v4696
    %v4710 = vmul.f32 %v4661, %v4700
    %v4711 = vmul.f32 %v4665, %v4696
    %v4712 = vmul.f32 %v4667, %v4700
    %v4713 = vmul.f32 %v4669, %v4696
    %v4714 = vmul.f32 %v4671, %v4700
    %v4715 = vmul.f32 %v4675, %v4696
    %v4716 = vmul.f32 %v4677, %v4700
    %v4717 = vmul.f32 %v4679, %v4696
    %v4718 = vmul.f32 %v4681, %v4700
    %v4719 = vmul.f32 %v4685, %v4696
    %v4720 = vmul.f32 %v4687, %v4700
    %v4721 = vld [vmem:[%s11] sm:$0x3]
    %v4723 = vlaneseq
    %v4724 = vshrl.u32 %v4723, 7
    %v4725 = vsub.s32 0, %v4724
    %v4726 = vrot.slane %v4721, %v4725
    %v4727 = vlaneseq
    %v4728 = vshrl.u32 %v4727, 7
    %v4729 = vsub.s32 1, %v4728
    %v4730 = vrot.slane %v4721, %v4729
    %v4733 = vadd.f32 %v4703, %v4726
    %v4734 = vadd.f32 %v4704, %v4730
    %v4735 = vadd.f32 %v4705, %v4726
    %v4736 = vadd.f32 %v4706, %v4730
    %v4737 = vadd.f32 %v4707, %v4726
    %v4738 = vadd.f32 %v4708, %v4730
    %v4739 = vadd.f32 %v4709, %v4726
    %v4740 = vadd.f32 %v4710, %v4730
    %v4741 = vadd.f32 %v4711, %v4726
    %v4742 = vadd.f32 %v4712, %v4730
    %v4743 = vadd.f32 %v4713, %v4726
    %v4744 = vadd.f32 %v4714, %v4730
    %v4745 = vadd.f32 %v4715, %v4726
    %v4746 = vadd.f32 %v4716, %v4730
    %v4747 = vadd.f32 %v4717, %v4726
    %v4748 = vadd.f32 %v4718, %v4730
    %v4749 = vadd.f32 %v4719, %v4726
    %v4750 = vadd.f32 %v4720, %v4730
    %v4751 = vmax.f32 %v4733, 0.0
    %v4752 = vmax.f32 %v4734, 0.0
    %v4753 = vmax.f32 %v4735, 0.0
    %v4754 = vmax.f32 %v4736, 0.0
    %v4755 = vmax.f32 %v4737, 0.0
    %v4756 = vmax.f32 %v4738, 0.0
    %v4757 = vmax.f32 %v4739, 0.0
    %v4758 = vmax.f32 %v4740, 0.0
    %v4759 = vmax.f32 %v4741, 0.0
    %v4760 = vmax.f32 %v4742, 0.0
    %v4761 = vmax.f32 %v4743, 0.0
    %v4762 = vmax.f32 %v4744, 0.0
    %v4763 = vmax.f32 %v4745, 0.0
    %v4764 = vmax.f32 %v4746, 0.0
    %v4765 = vmax.f32 %v4747, 0.0
    %v4766 = vmax.f32 %v4748, 0.0
    %v4767 = vmax.f32 %v4749, 0.0
    %v4768 = vmax.f32 %v4750, 0.0
    %v4769 = vmul.f32 %v4751, %v300
    %v4770 = vmul.f32 %v4752, %v300
    %v4771 = vmul.f32 %v4753, %v301
    %v4772 = vmul.f32 %v4754, %v301
    %v4773 = vmul.f32 %v4755, %v302
    %v4774 = vmul.f32 %v4756, %v302
    %v4775 = vmul.f32 %v4757, %v303
    %v4776 = vmul.f32 %v4758, %v303
    %v4777 = vmul.f32 %v4759, %v304
    %v4778 = vmul.f32 %v4760, %v304
    %v4779 = vmul.f32 %v4761, %v305
    %v4780 = vmul.f32 %v4762, %v305
    %v4781 = vmul.f32 %v4763, %v306
    %v4782 = vmul.f32 %v4764, %v306
    %v4783 = vmul.f32 %v4765, %v307
    %v4784 = vmul.f32 %v4766, %v307
    %v4785 = vmul.f32 %v4767, %v308
    %v4786 = vmul.f32 %v4768, %v308
    %4787 = vst [vmem:[#allocation3 + $0x10] sm:$0xff] %v4769
    %4788 = vst [vmem:[#allocation3 + $0x18] sm:$0xff] %v4770
    %4789 = vst [vmem:[#allocation3 + $0x20] sm:$0xff] %v4771
    %4790 = vst [vmem:[#allocation3 + $0x28] sm:$0xff] %v4772
    %4791 = vst [vmem:[#allocation3 + $0x30] sm:$0xff] %v4773
    %4792 = vst [vmem:[#allocation3 + $0x38] sm:$0xff] %v4774
    %4793 = vst [vmem:[#allocation3 + $0x40] sm:$0xff] %v4775
    %4794 = vst [vmem:[#allocation3 + $0x48] sm:$0xff] %v4776
    %4795 = vst [vmem:[#allocation3 + $0x50] sm:$0xff] %v4777
    %4796 = vst [vmem:[#allocation3 + $0x58] sm:$0xff] %v4778
    %4797 = vst [vmem:[#allocation3 + $0x60] sm:$0xff] %v4779
    %4798 = vst [vmem:[#allocation3 + $0x68] sm:$0xff] %v4780
    %4799 = vst [vmem:[#allocation3 + $0x70] sm:$0xff] %v4781
    %4800 = vst [vmem:[#allocation3 + $0x78] sm:$0xff] %v4782
    %4801 = vst [vmem:[#allocation3 + $0x80] sm:$0xff] %v4783
    %4802 = vst [vmem:[#allocation3 + $0x88] sm:$0xff] %v4784
    %4803 = vst [vmem:[#allocation3 + $0x90] sm:$0xff] %v4785
    %4804 = vst [vmem:[#allocation3 + $0x98] sm:$0xff] %v4786
    %v4805 = vld [vmem:[#allocation3] sm:$0xe0]
    %v4806 = vld [vmem:[#allocation3 + $0x8] sm:$0xe0]
    %v4807 = vld [vmem:[#allocation3 + $0x10] sm:$0xff]
    %v4808 = vld [vmem:[#allocation3 + $0x18] sm:$0xff]
    %v4809 = vld [vmem:[#allocation3 + $0x20] sm:$0xff]
    %v4810 = vld [vmem:[#allocation3 + $0x28] sm:$0xff]
    %v4811 = vld [vmem:[#allocation3 + $0x30] sm:$0xff]
    %v4812 = vld [vmem:[#allocation3 + $0x38] sm:$0xff]
    %v4813 = vld [vmem:[#allocation3 + $0x40] sm:$0xff]
    %v4814 = vld [vmem:[#allocation3 + $0x48] sm:$0xff]
    %v4815 = vld [vmem:[#allocation3 + $0x50] sm:$0xff]
    %v4816 = vld [vmem:[#allocation3 + $0x58] sm:$0xff]
    %v4817 = vld [vmem:[#allocation3 + $0x60] sm:$0xff]
    %v4818 = vld [vmem:[#allocation3 + $0x68] sm:$0xff]
    %v4819 = vld [vmem:[#allocation3 + $0x70] sm:$0xff]
    %v4820 = vld [vmem:[#allocation3 + $0x78] sm:$0xff]
    %v4821 = vld [vmem:[#allocation3 + $0x80] sm:$0xff]
    %v4822 = vld [vmem:[#allocation3 + $0x88] sm:$0xff]
    %v4823 = vld [vmem:[#allocation3 + $0x90] sm:$0x1f]
    %v4824 = vld [vmem:[#allocation3 + $0x98] sm:$0x1f]
    %v4825 = vld [vmem:[#allocation3 + $0x10] sm:$0xf8]
    %v4826 = vld [vmem:[#allocation3 + $0x18] sm:$0xf8]
    %v4827 = vld [vmem:[#allocation3 + $0x20] sm:$0xff]
    %v4828 = vld [vmem:[#allocation3 + $0x28] sm:$0xff]
    %v4829 = vld [vmem:[#allocation3 + $0x30] sm:$0xff]
    %v4830 = vld [vmem:[#allocation3 + $0x38] sm:$0xff]
    %v4831 = vld [vmem:[#allocation3 + $0x40] sm:$0xff]
    %v4832 = vld [vmem:[#allocation3 + $0x48] sm:$0xff]
    %v4833 = vld [vmem:[#allocation3 + $0x50] sm:$0xff]
    %v4834 = vld [vmem:[#allocation3 + $0x58] sm:$0xff]
    %v4835 = vld [vmem:[#allocation3 + $0x60] sm:$0xff]
    %v4836 = vld [vmem:[#allocation3 + $0x68] sm:$0xff]
    %v4837 = vld [vmem:[#allocation3 + $0x70] sm:$0xff]
    %v4838 = vld [vmem:[#allocation3 + $0x78] sm:$0xff]
    %v4839 = vld [vmem:[#allocation3 + $0x80] sm:$0xff]
    %v4840 = vld [vmem:[#allocation3 + $0x88] sm:$0xff]
    %v4841 = vld [vmem:[#allocation3 + $0x90] sm:$0xff]
    %v4842 = vld [vmem:[#allocation3 + $0x98] sm:$0xff]
    %v4843 = vld [vmem:[#allocation3 + $0xa0] sm:$0x7]
    %v4844 = vld [vmem:[#allocation3 + $0xa8] sm:$0x7]
    %vm4863 = vcmask 1044480
    %v4864 = vrot.slane %v4769, 3
    %v4865 = vrot.slane %v4770, 3
    %v4866 = vrot.slane %v4771, 3
    %v4867 = vsel %vm4863, %v4864, %v4866
    %v4868 = vrot.slane %v4772, 3
    %v4869 = vsel %vm4863, %v4865, %v4868
    %v4870 = vrot.slane %v4773, 3
    %v4871 = vsel %vm4863, %v4866, %v4870
    %v4872 = vrot.slane %v4774, 3
    %v4873 = vsel %vm4863, %v4868, %v4872
    %v4874 = vrot.slane %v4775, 3
    %v4875 = vsel %vm4863, %v4870, %v4874
    %v4876 = vrot.slane %v4776, 3
    %v4877 = vsel %vm4863, %v4872, %v4876
    %v4878 = vrot.slane %v4777, 3
    %v4879 = vsel %vm4863, %v4874, %v4878
    %v4880 = vrot.slane %v4778, 3
    %v4881 = vsel %vm4863, %v4876, %v4880
    %v4882 = vrot.slane %v4779, 3
    %v4883 = vsel %vm4863, %v4878, %v4882
    %v4884 = vrot.slane %v4780, 3
    %v4885 = vsel %vm4863, %v4880, %v4884
    %v4886 = vrot.slane %v4781, 3
    %v4887 = vsel %vm4863, %v4882, %v4886
    %v4888 = vrot.slane %v4782, 3
    %v4889 = vsel %vm4863, %v4884, %v4888
    %v4890 = vrot.slane %v4783, 3
    %v4891 = vsel %vm4863, %v4886, %v4890
    %v4892 = vrot.slane %v4784, 3
    %v4893 = vsel %vm4863, %v4888, %v4892
    %v4894 = vrot.slane %v4785, 3
    %v4895 = vsel %vm4863, %v4890, %v4894
    %v4896 = vrot.slane %v4786, 3
    %v4897 = vsel %vm4863, %v4892, %v4896
    %vm4938 = vcmask 1041408
    %v4939 = vrot.slane %v4825, 6
    %v4940 = vrot.slane %v4826, 6
    %v4941 = vrot.slane %v4827, 6
    %v4942 = vsel %vm4938, %v4939, %v4941
    %v4943 = vrot.slane %v4828, 6
    %v4944 = vsel %vm4938, %v4940, %v4943
    %v4945 = vrot.slane %v4829, 6
    %v4946 = vsel %vm4938, %v4941, %v4945
    %v4947 = vrot.slane %v4830, 6
    %v4948 = vsel %vm4938, %v4943, %v4947
    %v4949 = vrot.slane %v4831, 6
    %v4950 = vsel %vm4938, %v4945, %v4949
    %v4951 = vrot.slane %v4832, 6
    %v4952 = vsel %vm4938, %v4947, %v4951
    %v4953 = vrot.slane %v4833, 6
    %v4954 = vsel %vm4938, %v4949, %v4953
    %v4955 = vrot.slane %v4834, 6
    %v4956 = vsel %vm4938, %v4951, %v4955
    %v4957 = vrot.slane %v4835, 6
    %v4958 = vsel %vm4938, %v4953, %v4957
    %v4959 = vrot.slane %v4836, 6
    %v4960 = vsel %vm4938, %v4955, %v4959
    %v4961 = vrot.slane %v4837, 6
    %v4962 = vsel %vm4938, %v4957, %v4961
    %v4963 = vrot.slane %v4838, 6
    %v4964 = vsel %vm4938, %v4959, %v4963
    %v4965 = vrot.slane %v4839, 6
    %v4966 = vsel %vm4938, %v4961, %v4965
    %v4967 = vrot.slane %v4840, 6
    %v4968 = vsel %vm4938, %v4963, %v4967
    %v4969 = vrot.slane %v4841, 6
    %v4970 = vsel %vm4938, %v4965, %v4969
    %v4971 = vrot.slane %v4842, 6
    %v4972 = vsel %vm4938, %v4967, %v4971
    %v4973 = vrot.slane %v4843, 6
    %v4974 = vsel %vm4938, %v4969, %v4973
    %v4975 = vrot.slane %v4844, 6
    %v4976 = vsel %vm4938, %v4971, %v4975
    %v4997 = vpack.c.bf16 %v4807, %v4805
    %v4998 = vpack.c.bf16 %v4808, %v4806
    %v4999 = vpack.c.bf16 %v4867, %v4864
    %v5000 = vpack.c.bf16 %v4869, %v4865
    %v5001 = vpack.c.bf16 %v4942, %v4939
    %v5002 = vpack.c.bf16 %v4944, %v4940
    %v5003 = vpack.c.bf16 %v4811, %v4809
    %v5004 = vpack.c.bf16 %v4812, %v4810
    %v5005 = vpack.c.bf16 %v4875, %v4871
    %v5006 = vpack.c.bf16 %v4877, %v4873
    %v5007 = vpack.c.bf16 %v4950, %v4946
    %v5008 = vpack.c.bf16 %v4952, %v4948
    %v5009 = vpack.c.bf16 %v4815, %v4813
    %v5010 = vpack.c.bf16 %v4816, %v4814
    %v5011 = vpack.c.bf16 %v4883, %v4879
    %v5012 = vpack.c.bf16 %v4885, %v4881
    %v5013 = vpack.c.bf16 %v4958, %v4954
    %v5014 = vpack.c.bf16 %v4960, %v4956
    %v5015 = vpack.c.bf16 %v4819, %v4817
    %v5016 = vpack.c.bf16 %v4820, %v4818
    %v5017 = vpack.c.bf16 %v4891, %v4887
    %v5018 = vpack.c.bf16 %v4893, %v4889
    %v5019 = vpack.c.bf16 %v4966, %v4962
    %v5020 = vpack.c.bf16 %v4968, %v4964
    %v5021 = vpack.c.bf16 %v4823, %v4821
    %v5022 = vpack.c.bf16 %v4824, %v4822
    %v5023 = vpack.c.bf16 %v4894, %v4895
    %v5024 = vpack.c.bf16 %v4896, %v4897
    %v5025 = vpack.c.bf16 %v4974, %v4970
    %v5026 = vpack.c.bf16 %v4976, %v4972
    %v5027 = vld [vmem:[#allocation10] sm:$0xff]
    %v5028 = vld [vmem:[#allocation10 + $0x8] sm:$0xff]
    %v5029 = vld [vmem:[#allocation10 + $0x10] sm:$0xff]
    %v5030 = vld [vmem:[#allocation10 + $0x18] sm:$0xff]
    %v5031 = vld [vmem:[#allocation10 + $0x20] sm:$0xff]
    %v5032 = vld [vmem:[#allocation10 + $0x28] sm:$0xff]
    %v5033 = vld [vmem:[#allocation10 + $0x30] sm:$0xff]
    %v5034 = vld [vmem:[#allocation10 + $0x38] sm:$0xff]
    %v5035 = vld [vmem:[#allocation10 + $0x40] sm:$0xff]
    %v5036 = vld [vmem:[#allocation10 + $0x48] sm:$0xff]
    %v5037 = vld [vmem:[#allocation10 + $0x50] sm:$0xff]
    %v5038 = vld [vmem:[#allocation10 + $0x58] sm:$0xff]
    %v5039 = vld [vmem:[#allocation10 + $0x60] sm:$0xff]
    %v5040 = vld [vmem:[#allocation10 + $0x68] sm:$0xff]
    %v5041 = vld [vmem:[#allocation10 + $0x70] sm:$0xff]
    %v5042 = vld [vmem:[#allocation10 + $0x78] sm:$0xff]
    %v5043 = vld [vmem:[#allocation10 + $0x80] sm:$0xff]
    %v5044 = vld [vmem:[#allocation10 + $0x88] sm:$0xff]
    %v5045 = vld [vmem:[#allocation10 + $0x90] sm:$0xff]
    %v5046 = vld [vmem:[#allocation10 + $0x98] sm:$0xff]
    %v5047 = vld [vmem:[#allocation10 + $0xa0] sm:$0xff]
    %v5048 = vld [vmem:[#allocation10 + $0xa8] sm:$0xff]
    %v5049 = vld [vmem:[#allocation10 + $0xb0] sm:$0xff]
    %v5050 = vld [vmem:[#allocation10 + $0xb8] sm:$0xff]
    %v5051 = vld [vmem:[#allocation10 + $0xc0] sm:$0xff]
    %v5052 = vld [vmem:[#allocation10 + $0xc8] sm:$0xff]
    %v5053 = vld [vmem:[#allocation10 + $0xd0] sm:$0xff]
    %v5054 = vld [vmem:[#allocation10 + $0xd8] sm:$0xff]
    %v5055 = vld [vmem:[#allocation10 + $0xe0] sm:$0xff]
    %v5056 = vld [vmem:[#allocation10 + $0xe8] sm:$0xff]
    %v5057 = vld [vmem:[#allocation10 + $0xf0] sm:$0xff]
    %v5058 = vld [vmem:[#allocation10 + $0xf8] sm:$0xff]
    %v5059 = vld [vmem:[#allocation10 + $0x100] sm:$0xff]
    %v5060 = vld [vmem:[#allocation10 + $0x108] sm:$0xff]
    %v5061 = vld [vmem:[#allocation10 + $0x110] sm:$0xff]
    %v5062 = vld [vmem:[#allocation10 + $0x118] sm:$0xff]
    %v5063 = vld [vmem:[#allocation10 + $0x120] sm:$0xff]
    %v5064 = vld [vmem:[#allocation10 + $0x128] sm:$0xff]
    %v5065 = vld [vmem:[#allocation10 + $0x130] sm:$0xff]
    %v5066 = vld [vmem:[#allocation10 + $0x138] sm:$0xff]
    %v5067 = vld [vmem:[#allocation10 + $0x140] sm:$0xff]
    %v5068 = vld [vmem:[#allocation10 + $0x148] sm:$0xff]
    %v5069 = vld [vmem:[#allocation10 + $0x150] sm:$0xff]
    %v5070 = vld [vmem:[#allocation10 + $0x158] sm:$0xff]
    %v5071 = vld [vmem:[#allocation10 + $0x160] sm:$0xff]
    %v5072 = vld [vmem:[#allocation10 + $0x168] sm:$0xff]
    %v5073 = vld [vmem:[#allocation10 + $0x170] sm:$0xff]
    %v5074 = vld [vmem:[#allocation10 + $0x178] sm:$0xff]
    %v5075 = vld [vmem:[#allocation10 + $0x180] sm:$0xff]
    %v5076 = vld [vmem:[#allocation10 + $0x188] sm:$0xff]
    %v5077 = vld [vmem:[#allocation10 + $0x190] sm:$0xff]
    %v5078 = vld [vmem:[#allocation10 + $0x198] sm:$0xff]
    %v5079 = vld [vmem:[#allocation10 + $0x1a0] sm:$0xff]
    %v5080 = vld [vmem:[#allocation10 + $0x1a8] sm:$0xff]
    %v5081 = vld [vmem:[#allocation10 + $0x1b0] sm:$0xff]
    %v5082 = vld [vmem:[#allocation10 + $0x1b8] sm:$0xff]
    %v5083 = vld [vmem:[#allocation10 + $0x1c0] sm:$0xff]
    %v5084 = vld [vmem:[#allocation10 + $0x1c8] sm:$0xff]
    %v5085 = vld [vmem:[#allocation10 + $0x1d0] sm:$0xff]
    %v5086 = vld [vmem:[#allocation10 + $0x1d8] sm:$0xff]
    %v5087 = vld [vmem:[#allocation10 + $0x1e0] sm:$0xff]
    %v5088 = vld [vmem:[#allocation10 + $0x1e8] sm:$0xff]
    %v5089 = vld [vmem:[#allocation10 + $0x1f0] sm:$0xff]
    %v5090 = vld [vmem:[#allocation10 + $0x1f8] sm:$0xff]
    %v5091 = vld [vmem:[#allocation10 + $0x200] sm:$0xff]
    %v5092 = vld [vmem:[#allocation10 + $0x208] sm:$0xff]
    %v5093 = vld [vmem:[#allocation10 + $0x210] sm:$0xff]
    %v5094 = vld [vmem:[#allocation10 + $0x218] sm:$0xff]
    %v5095 = vld [vmem:[#allocation10 + $0x220] sm:$0xff]
    %v5096 = vld [vmem:[#allocation10 + $0x228] sm:$0xff]
    %v5097 = vld [vmem:[#allocation10 + $0x230] sm:$0xff]
    %v5098 = vld [vmem:[#allocation10 + $0x238] sm:$0xff]
    %v5099 = vld [vmem:[#allocation10 + $0x240] sm:$0xff]
    %v5100 = vld [vmem:[#allocation10 + $0x248] sm:$0xff]
    %v5101 = vld [vmem:[#allocation10 + $0x250] sm:$0xff]
    %v5102 = vld [vmem:[#allocation10 + $0x258] sm:$0xff]
    %v5103 = vld [vmem:[#allocation10 + $0x260] sm:$0xff]
    %v5104 = vld [vmem:[#allocation10 + $0x268] sm:$0xff]
    %v5105 = vld [vmem:[#allocation10 + $0x270] sm:$0xff]
    %v5106 = vld [vmem:[#allocation10 + $0x278] sm:$0xff]
    %v5107 = vld [vmem:[#allocation10 + $0x280] sm:$0xff]
    %v5108 = vld [vmem:[#allocation10 + $0x288] sm:$0xff]
    %v5109 = vld [vmem:[#allocation10 + $0x290] sm:$0xff]
    %v5110 = vld [vmem:[#allocation10 + $0x298] sm:$0xff]
    %v5111 = vld [vmem:[#allocation10 + $0x2a0] sm:$0xff]
    %v5112 = vld [vmem:[#allocation10 + $0x2a8] sm:$0xff]
    %v5113 = vld [vmem:[#allocation10 + $0x2b0] sm:$0xff]
    %v5114 = vld [vmem:[#allocation10 + $0x2b8] sm:$0xff]
    %v5115 = vld [vmem:[#allocation10 + $0x2c0] sm:$0xff]
    %v5116 = vld [vmem:[#allocation10 + $0x2c8] sm:$0xff]
    %v5117 = vld [vmem:[#allocation10 + $0x2d0] sm:$0xff]
    %v5118 = vld [vmem:[#allocation10 + $0x2d8] sm:$0xff]
    %v5119 = vld [vmem:[#allocation10 + $0x2e0] sm:$0xff]
    %v5120 = vld [vmem:[#allocation10 + $0x2e8] sm:$0xff]
    %v5121 = vld [vmem:[#allocation10 + $0x2f0] sm:$0xff]
    %v5122 = vld [vmem:[#allocation10 + $0x2f8] sm:$0xff]
    %vm5123 = vsmask.f32 5376
    %v5125 = vshrl.u32 %v4997, 16
    %v5127 = vrot.slane %v5125, 2
    %v5128 = vshll.u32 %v4997, 16
    %v5130 = vrot.slane %v5128, 3
    %v5131 = vor.u32 %v5127, %v5130
    %v5133 = vshrl.u32 %v5003, 16
    %v5135 = vrot.slane %v5133, 2
    %v5136 = vshll.u32 %v5003, 16
    %v5138 = vrot.slane %v5136, 3
    %v5139 = vor.u32 %v5135, %v5138
    %v5140 = vsel %vm5123, %v5131, %v5139
    %v5142 = vshrl.u32 %v4998, 16
    %v5144 = vrot.slane %v5142, 2
    %v5145 = vshll.u32 %v4998, 16
    %v5147 = vrot.slane %v5145, 3
    %v5148 = vor.u32 %v5144, %v5147
    %v5150 = vshrl.u32 %v5004, 16
    %v5152 = vrot.slane %v5150, 2
    %v5153 = vshll.u32 %v5004, 16
    %v5155 = vrot.slane %v5153, 3
    %v5156 = vor.u32 %v5152, %v5155
    %v5157 = vsel %vm5123, %v5148, %v5156
    %v5159 = vshrl.u32 %v4999, 16
    %v5161 = vrot.slane %v5159, 2
    %v5162 = vshll.u32 %v4999, 16
    %v5164 = vrot.slane %v5162, 3
    %v5165 = vor.u32 %v5161, %v5164
    %v5167 = vshrl.u32 %v5005, 16
    %v5169 = vrot.slane %v5167, 2
    %v5170 = vshll.u32 %v5005, 16
    %v5172 = vrot.slane %v5170, 3
    %v5173 = vor.u32 %v5169, %v5172
    %v5174 = vsel %vm5123, %v5165, %v5173
    %v5176 = vshrl.u32 %v5000, 16
    %v5178 = vrot.slane %v5176, 2
    %v5179 = vshll.u32 %v5000, 16
    %v5181 = vrot.slane %v5179, 3
    %v5182 = vor.u32 %v5178, %v5181
    %v5184 = vshrl.u32 %v5006, 16
    %v5186 = vrot.slane %v5184, 2
    %v5187 = vshll.u32 %v5006, 16
    %v5189 = vrot.slane %v5187, 3
    %v5190 = vor.u32 %v5186, %v5189
    %v5191 = vsel %vm5123, %v5182, %v5190
    %v5193 = vshrl.u32 %v5001, 16
    %v5195 = vrot.slane %v5193, 2
    %v5196 = vshll.u32 %v5001, 16
    %v5198 = vrot.slane %v5196, 3
    %v5199 = vor.u32 %v5195, %v5198
    %v5201 = vshrl.u32 %v5007, 16
    %v5203 = vrot.slane %v5201, 2
    %v5204 = vshll.u32 %v5007, 16
    %v5206 = vrot.slane %v5204, 3
    %v5207 = vor.u32 %v5203, %v5206
    %v5208 = vsel %vm5123, %v5199, %v5207
    %v5210 = vshrl.u32 %v5002, 16
    %v5212 = vrot.slane %v5210, 2
    %v5213 = vshll.u32 %v5002, 16
    %v5215 = vrot.slane %v5213, 3
    %v5216 = vor.u32 %v5212, %v5215
    %v5218 = vshrl.u32 %v5008, 16
    %v5220 = vrot.slane %v5218, 2
    %v5221 = vshll.u32 %v5008, 16
    %v5223 = vrot.slane %v5221, 3
    %v5224 = vor.u32 %v5220, %v5223
    %v5225 = vsel %vm5123, %v5216, %v5224
    %v5227 = vshrl.u32 %v5009, 16
    %v5229 = vrot.slane %v5227, 2
    %v5230 = vshll.u32 %v5009, 16
    %v5232 = vrot.slane %v5230, 3
    %v5233 = vor.u32 %v5229, %v5232
    %v5234 = vsel %vm5123, %v5139, %v5233
    %v5236 = vshrl.u32 %v5010, 16
    %v5238 = vrot.slane %v5236, 2
    %v5239 = vshll.u32 %v5010, 16
    %v5241 = vrot.slane %v5239, 3
    %v5242 = vor.u32 %v5238, %v5241
    %v5243 = vsel %vm5123, %v5156, %v5242
    %v5245 = vshrl.u32 %v5011, 16
    %v5247 = vrot.slane %v5245, 2
    %v5248 = vshll.u32 %v5011, 16
    %v5250 = vrot.slane %v5248, 3
    %v5251 = vor.u32 %v5247, %v5250
    %v5252 = vsel %vm5123, %v5173, %v5251
    %v5254 = vshrl.u32 %v5012, 16
    %v5256 = vrot.slane %v5254, 2
    %v5257 = vshll.u32 %v5012, 16
    %v5259 = vrot.slane %v5257, 3
    %v5260 = vor.u32 %v5256, %v5259
    %v5261 = vsel %vm5123, %v5190, %v5260
    %v5263 = vshrl.u32 %v5013, 16
    %v5265 = vrot.slane %v5263, 2
    %v5266 = vshll.u32 %v5013, 16
    %v5268 = vrot.slane %v5266, 3
    %v5269 = vor.u32 %v5265, %v5268
    %v5270 = vsel %vm5123, %v5207, %v5269
    %v5272 = vshrl.u32 %v5014, 16
    %v5274 = vrot.slane %v5272, 2
    %v5275 = vshll.u32 %v5014, 16
    %v5277 = vrot.slane %v5275, 3
    %v5278 = vor.u32 %v5274, %v5277
    %v5279 = vsel %vm5123, %v5224, %v5278
    %v5281 = vshrl.u32 %v5015, 16
    %v5283 = vrot.slane %v5281, 2
    %v5284 = vshll.u32 %v5015, 16
    %v5286 = vrot.slane %v5284, 3
    %v5287 = vor.u32 %v5283, %v5286
    %v5288 = vsel %vm5123, %v5233, %v5287
    %v5290 = vshrl.u32 %v5016, 16
    %v5292 = vrot.slane %v5290, 2
    %v5293 = vshll.u32 %v5016, 16
    %v5295 = vrot.slane %v5293, 3
    %v5296 = vor.u32 %v5292, %v5295
    %v5297 = vsel %vm5123, %v5242, %v5296
    %v5299 = vshrl.u32 %v5017, 16
    %v5301 = vrot.slane %v5299, 2
    %v5302 = vshll.u32 %v5017, 16
    %v5304 = vrot.slane %v5302, 3
    %v5305 = vor.u32 %v5301, %v5304
    %v5306 = vsel %vm5123, %v5251, %v5305
    %v5308 = vshrl.u32 %v5018, 16
    %v5310 = vrot.slane %v5308, 2
    %v5311 = vshll.u32 %v5018, 16
    %v5313 = vrot.slane %v5311, 3
    %v5314 = vor.u32 %v5310, %v5313
    %v5315 = vsel %vm5123, %v5260, %v5314
    %v5317 = vshrl.u32 %v5019, 16
    %v5319 = vrot.slane %v5317, 2
    %v5320 = vshll.u32 %v5019, 16
    %v5322 = vrot.slane %v5320, 3
    %v5323 = vor.u32 %v5319, %v5322
    %v5324 = vsel %vm5123, %v5269, %v5323
    %v5326 = vshrl.u32 %v5020, 16
    %v5328 = vrot.slane %v5326, 2
    %v5329 = vshll.u32 %v5020, 16
    %v5331 = vrot.slane %v5329, 3
    %v5332 = vor.u32 %v5328, %v5331
    %v5333 = vsel %vm5123, %v5278, %v5332
    %v5335 = vshrl.u32 %v5021, 16
    %v5337 = vrot.slane %v5335, 2
    %v5338 = vshll.u32 %v5021, 16
    %v5340 = vrot.slane %v5338, 3
    %v5341 = vor.u32 %v5337, %v5340
    %v5342 = vsel %vm5123, %v5287, %v5341
    %v5344 = vshrl.u32 %v5022, 16
    %v5346 = vrot.slane %v5344, 2
    %v5347 = vshll.u32 %v5022, 16
    %v5349 = vrot.slane %v5347, 3
    %v5350 = vor.u32 %v5346, %v5349
    %v5351 = vsel %vm5123, %v5296, %v5350
    %v5353 = vshrl.u32 %v5023, 16
    %v5355 = vrot.slane %v5353, 2
    %v5356 = vshll.u32 %v5023, 16
    %v5358 = vrot.slane %v5356, 3
    %v5359 = vor.u32 %v5355, %v5358
    %v5360 = vsel %vm5123, %v5305, %v5359
    %v5362 = vshrl.u32 %v5024, 16
    %v5364 = vrot.slane %v5362, 2
    %v5365 = vshll.u32 %v5024, 16
    %v5367 = vrot.slane %v5365, 3
    %v5368 = vor.u32 %v5364, %v5367
    %v5369 = vsel %vm5123, %v5314, %v5368
    %v5371 = vshrl.u32 %v5025, 16
    %v5373 = vrot.slane %v5371, 2
    %v5374 = vshll.u32 %v5025, 16
    %v5376 = vrot.slane %v5374, 3
    %v5377 = vor.u32 %v5373, %v5376
    %v5378 = vsel %vm5123, %v5323, %v5377
    %v5380 = vshrl.u32 %v5026, 16
    %v5382 = vrot.slane %v5380, 2
    %v5383 = vshll.u32 %v5026, 16
    %v5385 = vrot.slane %v5383, 3
    %v5386 = vor.u32 %v5382, %v5385
    %v5387 = vsel %vm5123, %v5332, %v5386
    %v5514 = vunpack.c.l.b16 %v5027
    %v5515 = vunpack.c.h.b16 %v5027
    %v5516 = vunpack.c.l.b16 %v5028
    %v5517 = vunpack.c.h.b16 %v5028
    %v5518 = vunpack.c.l.b16 %v5029
    %v5519 = vunpack.c.h.b16 %v5029
    %v5520 = vunpack.c.l.b16 %v5030
    %v5521 = vunpack.c.h.b16 %v5030
    %v5522 = vunpack.c.l.b16 %v5031
    %v5523 = vunpack.c.h.b16 %v5031
    %v5524 = vunpack.c.l.b16 %v5032
    %v5525 = vunpack.c.h.b16 %v5032
    %v5526 = vunpack.c.l.b16 %v5033
    %v5527 = vunpack.c.h.b16 %v5033
    %v5528 = vunpack.c.l.b16 %v5034
    %v5529 = vunpack.c.h.b16 %v5034
    %v5530 = vunpack.c.l.b16 %v5035
    %v5531 = vunpack.c.h.b16 %v5035
    %v5532 = vunpack.c.l.b16 %v5036
    %v5533 = vunpack.c.h.b16 %v5036
    %v5534 = vunpack.c.l.b16 %v5037
    %v5535 = vunpack.c.h.b16 %v5037
    %v5536 = vunpack.c.l.b16 %v5038
    %v5537 = vunpack.c.h.b16 %v5038
    %v5538 = vunpack.c.l.b16 %v5039
    %v5539 = vunpack.c.h.b16 %v5039
    %v5540 = vunpack.c.l.b16 %v5040
    %v5541 = vunpack.c.h.b16 %v5040
    %v5542 = vunpack.c.l.b16 %v5041
    %v5543 = vunpack.c.h.b16 %v5041
    %v5544 = vunpack.c.l.b16 %v5042
    %v5545 = vunpack.c.h.b16 %v5042
    %v5546 = vunpack.c.l.b16 %v5043
    %v5547 = vunpack.c.h.b16 %v5043
    %v5548 = vunpack.c.l.b16 %v5044
    %v5549 = vunpack.c.h.b16 %v5044
    %v5550 = vunpack.c.l.b16 %v5045
    %v5551 = vunpack.c.h.b16 %v5045
    %v5552 = vunpack.c.l.b16 %v5046
    %v5553 = vunpack.c.h.b16 %v5046
    %v5554 = vunpack.c.l.b16 %v5047
    %v5555 = vunpack.c.h.b16 %v5047
    %v5556 = vunpack.c.l.b16 %v5048
    %v5557 = vunpack.c.h.b16 %v5048
    %v5558 = vunpack.c.l.b16 %v5049
    %v5559 = vunpack.c.h.b16 %v5049
    %v5560 = vunpack.c.l.b16 %v5050
    %v5561 = vunpack.c.h.b16 %v5050
    %v5562 = vunpack.c.l.b16 %v5051
    %v5563 = vunpack.c.h.b16 %v5051
    %v5564 = vunpack.c.l.b16 %v5052
    %v5565 = vunpack.c.h.b16 %v5052
    %v5566 = vunpack.c.l.b16 %v5053
    %v5567 = vunpack.c.h.b16 %v5053
    %v5568 = vunpack.c.l.b16 %v5054
    %v5569 = vunpack.c.h.b16 %v5054
    %v5570 = vunpack.c.l.b16 %v5055
    %v5571 = vunpack.c.h.b16 %v5055
    %v5572 = vunpack.c.l.b16 %v5056
    %v5573 = vunpack.c.h.b16 %v5056
    %v5574 = vunpack.c.l.b16 %v5057
    %v5575 = vunpack.c.h.b16 %v5057
    %v5576 = vunpack.c.l.b16 %v5058
    %v5577 = vunpack.c.h.b16 %v5058
    %v5578 = vunpack.c.l.b16 %v5059
    %v5579 = vunpack.c.h.b16 %v5059
    %v5580 = vunpack.c.l.b16 %v5060
    %v5581 = vunpack.c.h.b16 %v5060
    %v5582 = vunpack.c.l.b16 %v5061
    %v5583 = vunpack.c.h.b16 %v5061
    %v5584 = vunpack.c.l.b16 %v5062
    %v5585 = vunpack.c.h.b16 %v5062
    %v5586 = vunpack.c.l.b16 %v5063
    %v5587 = vunpack.c.h.b16 %v5063
    %v5588 = vunpack.c.l.b16 %v5064
    %v5589 = vunpack.c.h.b16 %v5064
    %v5590 = vunpack.c.l.b16 %v5065
    %v5591 = vunpack.c.h.b16 %v5065
    %v5592 = vunpack.c.l.b16 %v5066
    %v5593 = vunpack.c.h.b16 %v5066
    %v5594 = vunpack.c.l.b16 %v5067
    %v5595 = vunpack.c.h.b16 %v5067
    %v5596 = vunpack.c.l.b16 %v5068
    %v5597 = vunpack.c.h.b16 %v5068
    %v5598 = vunpack.c.l.b16 %v5069
    %v5599 = vunpack.c.h.b16 %v5069
    %v5600 = vunpack.c.l.b16 %v5070
    %v5601 = vunpack.c.h.b16 %v5070
    %v5602 = vunpack.c.l.b16 %v5071
    %v5603 = vunpack.c.h.b16 %v5071
    %v5604 = vunpack.c.l.b16 %v5072
    %v5605 = vunpack.c.h.b16 %v5072
    %v5606 = vunpack.c.l.b16 %v5073
    %v5607 = vunpack.c.h.b16 %v5073
    %v5608 = vunpack.c.l.b16 %v5074
    %v5609 = vunpack.c.h.b16 %v5074
    %v5610 = vunpack.c.l.b16 %v5075
    %v5611 = vunpack.c.h.b16 %v5075
    %v5612 = vunpack.c.l.b16 %v5076
    %v5613 = vunpack.c.h.b16 %v5076
    %v5614 = vunpack.c.l.b16 %v5077
    %v5615 = vunpack.c.h.b16 %v5077
    %v5616 = vunpack.c.l.b16 %v5078
    %v5617 = vunpack.c.h.b16 %v5078
    %v5618 = vunpack.c.l.b16 %v5079
    %v5619 = vunpack.c.h.b16 %v5079
    %v5620 = vunpack.c.l.b16 %v5080
    %v5621 = vunpack.c.h.b16 %v5080
    %v5622 = vunpack.c.l.b16 %v5081
    %v5623 = vunpack.c.h.b16 %v5081
    %v5624 = vunpack.c.l.b16 %v5082
    %v5625 = vunpack.c.h.b16 %v5082
    %v5626 = vunpack.c.l.b16 %v5083
    %v5627 = vunpack.c.h.b16 %v5083
    %v5628 = vunpack.c.l.b16 %v5084
    %v5629 = vunpack.c.h.b16 %v5084
    %v5630 = vunpack.c.l.b16 %v5085
    %v5631 = vunpack.c.h.b16 %v5085
    %v5632 = vunpack.c.l.b16 %v5086
    %v5633 = vunpack.c.h.b16 %v5086
    %v5634 = vunpack.c.l.b16 %v5087
    %v5635 = vunpack.c.h.b16 %v5087
    %v5636 = vunpack.c.l.b16 %v5088
    %v5637 = vunpack.c.h.b16 %v5088
    %v5638 = vunpack.c.l.b16 %v5089
    %v5639 = vunpack.c.h.b16 %v5089
    %v5640 = vunpack.c.l.b16 %v5090
    %v5641 = vunpack.c.h.b16 %v5090
    %v5642 = vunpack.c.l.b16 %v5091
    %v5643 = vunpack.c.h.b16 %v5091
    %v5644 = vunpack.c.l.b16 %v5092
    %v5645 = vunpack.c.h.b16 %v5092
    %v5646 = vunpack.c.l.b16 %v5093
    %v5647 = vunpack.c.h.b16 %v5093
    %v5648 = vunpack.c.l.b16 %v5094
    %v5649 = vunpack.c.h.b16 %v5094
    %v5650 = vunpack.c.l.b16 %v5095
    %v5651 = vunpack.c.h.b16 %v5095
    %v5652 = vunpack.c.l.b16 %v5096
    %v5653 = vunpack.c.h.b16 %v5096
    %v5654 = vunpack.c.l.b16 %v5097
    %v5655 = vunpack.c.h.b16 %v5097
    %v5656 = vunpack.c.l.b16 %v5098
    %v5657 = vunpack.c.h.b16 %v5098
    %v5658 = vunpack.c.l.b16 %v5099
    %v5659 = vunpack.c.h.b16 %v5099
    %v5660 = vunpack.c.l.b16 %v5100
    %v5661 = vunpack.c.h.b16 %v5100
    %v5662 = vunpack.c.l.b16 %v5101
    %v5663 = vunpack.c.h.b16 %v5101
    %v5664 = vunpack.c.l.b16 %v5102
    %v5665 = vunpack.c.h.b16 %v5102
    %v5666 = vunpack.c.l.b16 %v5103
    %v5667 = vunpack.c.h.b16 %v5103
    %v5668 = vunpack.c.l.b16 %v5104
    %v5669 = vunpack.c.h.b16 %v5104
    %v5670 = vunpack.c.l.b16 %v5105
    %v5671 = vunpack.c.h.b16 %v5105
    %v5672 = vunpack.c.l.b16 %v5106
    %v5673 = vunpack.c.h.b16 %v5106
    %v5674 = vunpack.c.l.b16 %v5107
    %v5675 = vunpack.c.h.b16 %v5107
    %v5676 = vunpack.c.l.b16 %v5108
    %v5677 = vunpack.c.h.b16 %v5108
    %v5678 = vunpack.c.l.b16 %v5109
    %v5679 = vunpack.c.h.b16 %v5109
    %v5680 = vunpack.c.l.b16 %v5110
    %v5681 = vunpack.c.h.b16 %v5110
    %v5682 = vunpack.c.l.b16 %v5111
    %v5683 = vunpack.c.h.b16 %v5111
    %v5684 = vunpack.c.l.b16 %v5112
    %v5685 = vunpack.c.h.b16 %v5112
    %v5686 = vunpack.c.l.b16 %v5113
    %v5687 = vunpack.c.h.b16 %v5113
    %v5688 = vunpack.c.l.b16 %v5114
    %v5689 = vunpack.c.h.b16 %v5114
    %v5690 = vunpack.c.l.b16 %v5115
    %v5691 = vunpack.c.h.b16 %v5115
    %v5692 = vunpack.c.l.b16 %v5116
    %v5693 = vunpack.c.h.b16 %v5116
    %v5694 = vunpack.c.l.b16 %v5117
    %v5695 = vunpack.c.h.b16 %v5117
    %v5696 = vunpack.c.l.b16 %v5118
    %v5697 = vunpack.c.h.b16 %v5118
    %v5698 = vunpack.c.l.b16 %v5119
    %v5699 = vunpack.c.h.b16 %v5119
    %v5700 = vunpack.c.l.b16 %v5120
    %v5701 = vunpack.c.h.b16 %v5120
    %v5702 = vunpack.c.l.b16 %v5121
    %v5703 = vunpack.c.h.b16 %v5121
    %v5704 = vunpack.c.l.b16 %v5122
    %v5705 = vunpack.c.h.b16 %v5122
    %v5706 = vpack.c.b16 %v5516, %v5514
    %v5707 = vpack.c.b16 %v5517, %v5515
    %v5708 = vpack.c.b16 %v5520, %v5518
    %v5709 = vpack.c.b16 %v5521, %v5519
    %v5710 = vpack.c.b16 %v5524, %v5522
    %v5711 = vpack.c.b16 %v5525, %v5523
    %v5712 = vpack.c.b16 %v5528, %v5526
    %v5713 = vpack.c.b16 %v5529, %v5527
    %v5714 = vpack.c.b16 %v5532, %v5530
    %v5715 = vpack.c.b16 %v5533, %v5531
    %v5716 = vpack.c.b16 %v5536, %v5534
    %v5717 = vpack.c.b16 %v5537, %v5535
    %v5718 = vpack.c.b16 %v5540, %v5538
    %v5719 = vpack.c.b16 %v5541, %v5539
    %v5720 = vpack.c.b16 %v5544, %v5542
    %v5721 = vpack.c.b16 %v5545, %v5543
    %v5722 = vpack.c.b16 %v5548, %v5546
    %v5723 = vpack.c.b16 %v5549, %v5547
    %v5724 = vpack.c.b16 %v5552, %v5550
    %v5725 = vpack.c.b16 %v5553, %v5551
    %v5726 = vpack.c.b16 %v5556, %v5554
    %v5727 = vpack.c.b16 %v5557, %v5555
    %v5728 = vpack.c.b16 %v5560, %v5558
    %v5729 = vpack.c.b16 %v5561, %v5559
    %v5730 = vpack.c.b16 %v5564, %v5562
    %v5731 = vpack.c.b16 %v5565, %v5563
    %v5732 = vpack.c.b16 %v5568, %v5566
    %v5733 = vpack.c.b16 %v5569, %v5567
    %v5734 = vpack.c.b16 %v5572, %v5570
    %v5735 = vpack.c.b16 %v5573, %v5571
    %v5736 = vpack.c.b16 %v5576, %v5574
    %v5737 = vpack.c.b16 %v5577, %v5575
    %v5738 = vpack.c.b16 %v5580, %v5578
    %v5739 = vpack.c.b16 %v5581, %v5579
    %v5740 = vpack.c.b16 %v5584, %v5582
    %v5741 = vpack.c.b16 %v5585, %v5583
    %v5742 = vpack.c.b16 %v5588, %v5586
    %v5743 = vpack.c.b16 %v5589, %v5587
    %v5744 = vpack.c.b16 %v5592, %v5590
    %v5745 = vpack.c.b16 %v5593, %v5591
    %v5746 = vpack.c.b16 %v5596, %v5594
    %v5747 = vpack.c.b16 %v5597, %v5595
    %v5748 = vpack.c.b16 %v5600, %v5598
    %v5749 = vpack.c.b16 %v5601, %v5599
    %v5750 = vpack.c.b16 %v5604, %v5602
    %v5751 = vpack.c.b16 %v5605, %v5603
    %v5752 = vpack.c.b16 %v5608, %v5606
    %v5753 = vpack.c.b16 %v5609, %v5607
    %v5754 = vpack.c.b16 %v5612, %v5610
    %v5755 = vpack.c.b16 %v5613, %v5611
    %v5756 = vpack.c.b16 %v5616, %v5614
    %v5757 = vpack.c.b16 %v5617, %v5615
    %v5758 = vpack.c.b16 %v5620, %v5618
    %v5759 = vpack.c.b16 %v5621, %v5619
    %v5760 = vpack.c.b16 %v5624, %v5622
    %v5761 = vpack.c.b16 %v5625, %v5623
    %v5762 = vpack.c.b16 %v5628, %v5626
    %v5763 = vpack.c.b16 %v5629, %v5627
    %v5764 = vpack.c.b16 %v5632, %v5630
    %v5765 = vpack.c.b16 %v5633, %v5631
    %v5766 = vpack.c.b16 %v5636, %v5634
    %v5767 = vpack.c.b16 %v5637, %v5635
    %v5768 = vpack.c.b16 %v5640, %v5638
    %v5769 = vpack.c.b16 %v5641, %v5639
    %v5770 = vpack.c.b16 %v5644, %v5642
    %v5771 = vpack.c.b16 %v5645, %v5643
    %v5772 = vpack.c.b16 %v5648, %v5646
    %v5773 = vpack.c.b16 %v5649, %v5647
    %v5774 = vpack.c.b16 %v5652, %v5650
    %v5775 = vpack.c.b16 %v5653, %v5651
    %v5776 = vpack.c.b16 %v5656, %v5654
    %v5777 = vpack.c.b16 %v5657, %v5655
    %v5778 = vpack.c.b16 %v5660, %v5658
    %v5779 = vpack.c.b16 %v5661, %v5659
    %v5780 = vpack.c.b16 %v5664, %v5662
    %v5781 = vpack.c.b16 %v5665, %v5663
    %v5782 = vpack.c.b16 %v5668, %v5666
    %v5783 = vpack.c.b16 %v5669, %v5667
    %v5784 = vpack.c.b16 %v5672, %v5670
    %v5785 = vpack.c.b16 %v5673, %v5671
    %v5786 = vpack.c.b16 %v5676, %v5674
    %v5787 = vpack.c.b16 %v5677, %v5675
    %v5788 = vpack.c.b16 %v5680, %v5678
    %v5789 = vpack.c.b16 %v5681, %v5679
    %v5790 = vpack.c.b16 %v5684, %v5682
    %v5791 = vpack.c.b16 %v5685, %v5683
    %v5792 = vpack.c.b16 %v5688, %v5686
    %v5793 = vpack.c.b16 %v5689, %v5687
    %v5794 = vpack.c.b16 %v5692, %v5690
    %v5795 = vpack.c.b16 %v5693, %v5691
    %v5796 = vpack.c.b16 %v5696, %v5694
    %v5797 = vpack.c.b16 %v5697, %v5695
    %v5798 = vpack.c.b16 %v5700, %v5698
    %v5799 = vpack.c.b16 %v5701, %v5699
    %v5800 = vpack.c.b16 %v5704, %v5702
    %v5801 = vpack.c.b16 %v5705, %v5703
    %5898 = vmatprep.subr.bf16.mxu0 %v5707
    %5899 = vmatpush1.bf16.msra.mxu0 %v5706
    %5900 = vmatprep.subr.bf16.mxu0 %v5709
    %5901 = vmatpush1.bf16.msra.mxu0 %v5708
    %5902 = vmatprep.subr.bf16.mxu0 %v5711
    %5903 = vmatpush1.bf16.msra.mxu0 %v5710
    %5904 = vmatprep.subr.bf16.mxu0 %v5713
    %5905 = vmatpush1.bf16.msra.mxu0 %v5712
    %5906 = vmatprep.subr.bf16.mxu0 %v5715
    %5907 = vmatpush1.bf16.msra.mxu0 %v5714
    %5908 = vmatprep.subr.bf16.mxu0 %v5717
    %5909 = vmatpush1.bf16.msra.mxu0 %v5716
    %5910 = vmatprep.subr.bf16.mxu0 %v5719
    %5911 = vmatpush1.bf16.msra.mxu0 %v5718
    %5912 = vmatprep.subr.bf16.mxu0 %v5721
    %5913 = vmatpush1.bf16.msra.mxu0 %v5720
    %5914 = vmatprep.subr.bf16.mxu0 %v5723
    %5915 = vmatpush1.bf16.msra.mxu0 %v5722
    %5916 = vmatprep.subr.bf16.mxu0 %v5725
    %5917 = vmatpush1.bf16.msra.mxu0 %v5724
    %5918 = vmatprep.subr.bf16.mxu0 %v5727
    %5919 = vmatpush1.bf16.msra.mxu0 %v5726
    %5920 = vmatprep.subr.bf16.mxu0 %v5729
    %5921 = vmatpush1.bf16.msra.mxu0 %v5728
    %5922 = vmatprep.subr.bf16.mxu0 %v5731
    %5923 = vmatpush1.bf16.msra.mxu0 %v5730
    %5924 = vmatprep.subr.bf16.mxu0 %v5733
    %5925 = vmatpush1.bf16.msra.mxu0 %v5732
    %5926 = vmatprep.subr.bf16.mxu0 %v5735
    %5927 = vmatpush1.bf16.msra.mxu0 %v5734
    %5928 = vmatprep.subr.bf16.mxu0 %v5737
    %5929 = vmatpush1.bf16.msra.mxu0 %v5736
    %5930 = vmatprep.mubr.bf16.mxu0 %v5157
    %5931 = vmatmul.mubr.bf16.gmra.mrb[0].mxu0 %v5140
    %v5932 = vpop.f32.mrb[0].mxu0
    %v5933 = vadd.f32 %v3378, %v5932
    %v5934 = vpop.f32.mrb[0].mxu0
    %v5935 = vadd.f32 %v3380, %v5934
    %v5936 = vpop.f32.mrb[0].mxu0
    %v5937 = vadd.f32 %v3382, %v5936
    %v5938 = vpop.f32.mrb[0].mxu0
    %v5939 = vadd.f32 %v3384, %v5938
    %5940 = vmatprep.mubr.bf16.mxu0 %v5243
    %5941 = vmatmul.mubr.bf16.gmra.mrb[0].mxu0 %v5234
    %v5942 = vpop.f32.mrb[0].mxu0
    %v5943 = vadd.f32 %v3388, %v5942
    %v5944 = vpop.f32.mrb[0].mxu0
    %v5945 = vadd.f32 %v3390, %v5944
    %v5946 = vpop.f32.mrb[0].mxu0
    %v5947 = vadd.f32 %v3392, %v5946
    %v5948 = vpop.f32.mrb[0].mxu0
    %v5949 = vadd.f32 %v3394, %v5948
    %5950 = vmatprep.mubr.bf16.mxu0 %v5297
    %5951 = vmatmul.mubr.bf16.gmra.mrb[0].mxu0 %v5288
    %v5952 = vpop.f32.mrb[0].mxu0
    %v5953 = vpop.f32.mrb[0].mxu0
    %v5954 = vpop.f32.mrb[0].mxu0
    %v5955 = vadd.f32 %v3400, %v5954
    %v5956 = vpop.f32.mrb[0].mxu0
    %v5957 = vadd.f32 %v3402, %v5956
    %5958 = vmatprep.mubr.bf16.mxu0 %v5351
    %5959 = vmatmul.mubr.bf16.gmra.mrb[0].mxu0 %v5342
    %v5960 = vpop.f32.mrb[0].mxu0
    %v5961 = vadd.f32 %v3406, %v5960
    %v5962 = vpop.f32.mrb[0].mxu0
    %v5963 = vadd.f32 %v3408, %v5962
    %v5964 = vpop.f32.mrb[0].mxu0
    %v5965 = vadd.f32 %v3410, %v5964
    %v5966 = vpop.f32.mrb[0].mxu0
    %v5967 = vadd.f32 %v3412, %v5966
    %5968 = vmatprep.mubr.bf16.mxu0 %v5350
    %5969 = vmatmul.mubr.bf16.gmra.mrb[0].mxu0 %v5341
    %v5970 = vpop.f32.mrb[0].mxu0
    %v5971 = vadd.f32 %v3416, %v5970
    %v5972 = vpop.f32.mrb[0].mxu0
    %v5973 = vadd.f32 %v3418, %v5972
    %v5974 = vpop.f32.mrb[0].mxu0
    %v5975 = vpop.f32.mrb[0].mxu0
    %5976 = vdwg.mxu0
    %5977 = vmatprep.subr.bf16.mxu0 %v5739
    %5978 = vmatpush1.bf16.msra.mxu0 %v5738
    %5979 = vmatprep.subr.bf16.mxu0 %v5741
    %5980 = vmatpush1.bf16.msra.mxu0 %v5740
    %5981 = vmatprep.subr.bf16.mxu0 %v5743
    %5982 = vmatpush1.bf16.msra.mxu0 %v5742
    %5983 = vmatprep.subr.bf16.mxu0 %v5745
    %5984 = vmatpush1.bf16.msra.mxu0 %v5744
    %5985 = vmatprep.subr.bf16.mxu0 %v5747
    %5986 = vmatpush1.bf16.msra.mxu0 %v5746
    %5987 = vmatprep.subr.bf16.mxu0 %v5749
    %5988 = vmatpush1.bf16.msra.mxu0 %v5748
    %5989 = vmatprep.subr.bf16.mxu0 %v5751
    %5990 = vmatpush1.bf16.msra.mxu0 %v5750
    %5991 = vmatprep.subr.bf16.mxu0 %v5753
    %5992 = vmatpush1.bf16.msra.mxu0 %v5752
    %5993 = vmatprep.subr.bf16.mxu0 %v5755
    %5994 = vmatpush1.bf16.msra.mxu0 %v5754
    %5995 = vmatprep.subr.bf16.mxu0 %v5757
    %5996 = vmatpush1.bf16.msra.mxu0 %v5756
    %5997 = vmatprep.subr.bf16.mxu0 %v5759
    %5998 = vmatpush1.bf16.msra.mxu0 %v5758
    %5999 = vmatprep.subr.bf16.mxu0 %v5761
    %6000 = vmatpush1.bf16.msra.mxu0 %v5760
    %6001 = vmatprep.subr.bf16.mxu0 %v5763
    %6002 = vmatpush1.bf16.msra.mxu0 %v5762
    %6003 = vmatprep.subr.bf16.mxu0 %v5765
    %6004 = vmatpush1.bf16.msra.mxu0 %v5764
    %6005 = vmatprep.subr.bf16.mxu0 %v5767
    %6006 = vmatpush1.bf16.msra.mxu0 %v5766
    %6007 = vmatprep.subr.bf16.mxu0 %v5769
    %6008 = vmatpush1.bf16.msra.mxu0 %v5768
    %6009 = vmatprep.mubr.bf16.mxu0 %v5191
    %6010 = vmatmul.mubr.bf16.gmra.mrb[0].mxu0 %v5174
    %v6011 = vpop.f32.mrb[0].mxu0
    %v6012 = vadd.f32 %v5933, %v6011
    %v6013 = vpop.f32.mrb[0].mxu0
    %v6014 = vadd.f32 %v5935, %v6013
    %v6015 = vpop.f32.mrb[0].mxu0
    %v6016 = vadd.f32 %v5937, %v6015
    %v6017 = vpop.f32.mrb[0].mxu0
    %v6018 = vadd.f32 %v5939, %v6017
    %6019 = vmatprep.mubr.bf16.mxu0 %v5261
    %6020 = vmatmul.mubr.bf16.gmra.mrb[0].mxu0 %v5252
    %v6021 = vpop.f32.mrb[0].mxu0
    %v6022 = vadd.f32 %v5943, %v6021
    %v6023 = vpop.f32.mrb[0].mxu0
    %v6024 = vadd.f32 %v5945, %v6023
    %v6025 = vpop.f32.mrb[0].mxu0
    %v6026 = vadd.f32 %v5947, %v6025
    %v6027 = vpop.f32.mrb[0].mxu0
    %v6028 = vadd.f32 %v5949, %v6027
    %6029 = vmatprep.mubr.bf16.mxu0 %v5315
    %6030 = vmatmul.mubr.bf16.gmra.mrb[0].mxu0 %v5306
    %v6031 = vpop.f32.mrb[0].mxu0
    %v6032 = vpop.f32.mrb[0].mxu0
    %v6033 = vpop.f32.mrb[0].mxu0
    %v6034 = vadd.f32 %v5955, %v6033
    %v6035 = vpop.f32.mrb[0].mxu0
    %v6036 = vadd.f32 %v5957, %v6035
    %6037 = vmatprep.mubr.bf16.mxu0 %v5369
    %6038 = vmatmul.mubr.bf16.gmra.mrb[0].mxu0 %v5360
    %v6039 = vpop.f32.mrb[0].mxu0
    %v6040 = vadd.f32 %v5961, %v6039
    %v6041 = vpop.f32.mrb[0].mxu0
    %v6042 = vadd.f32 %v5963, %v6041
    %v6043 = vpop.f32.mrb[0].mxu0
    %v6044 = vadd.f32 %v5965, %v6043
    %v6045 = vpop.f32.mrb[0].mxu0
    %v6046 = vadd.f32 %v5967, %v6045
    %6047 = vmatprep.mubr.bf16.mxu0 %v5368
    %6048 = vmatmul.mubr.bf16.gmra.mrb[0].mxu0 %v5359
    %v6049 = vpop.f32.mrb[0].mxu0
    %v6050 = vadd.f32 %v5971, %v6049
    %v6051 = vpop.f32.mrb[0].mxu0
    %v6052 = vadd.f32 %v5973, %v6051
    %v6053 = vpop.f32.mrb[0].mxu0
    %v6054 = vpop.f32.mrb[0].mxu0
    %6055 = vdwg.mxu0
    %6056 = vmatprep.subr.bf16.mxu0 %v5771
    %6057 = vmatpush1.bf16.msra.mxu0 %v5770
    %6058 = vmatprep.subr.bf16.mxu0 %v5773
    %6059 = vmatpush1.bf16.msra.mxu0 %v5772
    %6060 = vmatprep.subr.bf16.mxu0 %v5775
    %6061 = vmatpush1.bf16.msra.mxu0 %v5774
    %6062 = vmatprep.subr.bf16.mxu0 %v5777
    %6063 = vmatpush1.bf16.msra.mxu0 %v5776
    %6064 = vmatprep.subr.bf16.mxu0 %v5779
    %6065 = vmatpush1.bf16.msra.mxu0 %v5778
    %6066 = vmatprep.subr.bf16.mxu0 %v5781
    %6067 = vmatpush1.bf16.msra.mxu0 %v5780
    %6068 = vmatprep.subr.bf16.mxu0 %v5783
    %6069 = vmatpush1.bf16.msra.mxu0 %v5782
    %6070 = vmatprep.subr.bf16.mxu0 %v5785
    %6071 = vmatpush1.bf16.msra.mxu0 %v5784
    %6072 = vmatprep.subr.bf16.mxu0 %v5787
    %6073 = vmatpush1.bf16.msra.mxu0 %v5786
    %6074 = vmatprep.subr.bf16.mxu0 %v5789
    %6075 = vmatpush1.bf16.msra.mxu0 %v5788
    %6076 = vmatprep.subr.bf16.mxu0 %v5791
    %6077 = vmatpush1.bf16.msra.mxu0 %v5790
    %6078 = vmatprep.subr.bf16.mxu0 %v5793
    %6079 = vmatpush1.bf16.msra.mxu0 %v5792
    %6080 = vmatprep.subr.bf16.mxu0 %v5795
    %6081 = vmatpush1.bf16.msra.mxu0 %v5794
    %6082 = vmatprep.subr.bf16.mxu0 %v5797
    %6083 = vmatpush1.bf16.msra.mxu0 %v5796
    %6084 = vmatprep.subr.bf16.mxu0 %v5799
    %6085 = vmatpush1.bf16.msra.mxu0 %v5798
    %6086 = vmatprep.subr.bf16.mxu0 %v5801
    %6087 = vmatpush1.bf16.msra.mxu0 %v5800
    %6088 = vmatprep.mubr.bf16.mxu0 %v5225
    %6089 = vmatmul.mubr.bf16.gmra.mrb[0].mxu0 %v5208
    %v6090 = vpop.f32.mrb[0].mxu0
    %v6091 = vadd.f32 %v6012, %v6090
    %v6092 = vpop.f32.mrb[0].mxu0
    %v6093 = vadd.f32 %v6014, %v6092
    %v6094 = vpop.f32.mrb[0].mxu0
    %v6095 = vadd.f32 %v6016, %v6094
    %v6096 = vpop.f32.mrb[0].mxu0
    %v6097 = vadd.f32 %v6018, %v6096
    %6098 = vmatprep.mubr.bf16.mxu0 %v5279
    %6099 = vmatmul.mubr.bf16.gmra.mrb[0].mxu0 %v5270
    %v6100 = vpop.f32.mrb[0].mxu0
    %v6101 = vadd.f32 %v6022, %v6100
    %v6102 = vpop.f32.mrb[0].mxu0
    %v6103 = vadd.f32 %v6024, %v6102
    %v6104 = vpop.f32.mrb[0].mxu0
    %v6105 = vadd.f32 %v6026, %v6104
    %v6106 = vpop.f32.mrb[0].mxu0
    %v6107 = vadd.f32 %v6028, %v6106
    %6108 = vmatprep.mubr.bf16.mxu0 %v5333
    %6109 = vmatmul.mubr.bf16.gmra.mrb[0].mxu0 %v5324
    %v6110 = vpop.f32.mrb[0].mxu0
    %v6111 = vpop.f32.mrb[0].mxu0
    %v6112 = vpop.f32.mrb[0].mxu0
    %v6113 = vadd.f32 %v6034, %v6112
    %v6114 = vpop.f32.mrb[0].mxu0
    %v6115 = vadd.f32 %v6036, %v6114
    %6116 = vmatprep.mubr.bf16.mxu0 %v5387
    %6117 = vmatmul.mubr.bf16.gmra.mrb[0].mxu0 %v5378
    %v6118 = vpop.f32.mrb[0].mxu0
    %v6119 = vadd.f32 %v6040, %v6118
    %v6120 = vpop.f32.mrb[0].mxu0
    %v6121 = vadd.f32 %v6042, %v6120
    %v6122 = vpop.f32.mrb[0].mxu0
    %v6123 = vadd.f32 %v6044, %v6122
    %v6124 = vpop.f32.mrb[0].mxu0
    %v6125 = vadd.f32 %v6046, %v6124
    %6126 = vmatprep.mubr.bf16.mxu0 %v5386
    %6127 = vmatmul.mubr.bf16.gmra.mrb[0].mxu0 %v5377
    %v6128 = vpop.f32.mrb[0].mxu0
    %v6129 = vadd.f32 %v6050, %v6128
    %v6130 = vpop.f32.mrb[0].mxu0
    %v6131 = vadd.f32 %v6052, %v6130
    %v6132 = vpop.f32.mrb[0].mxu0
    %v6133 = vpop.f32.mrb[0].mxu0
    %6134 = vdwg.mxu0
    %v6135 = vld [vmem:[%s14] sm:$0x3]
    %v6137 = vlaneseq
    %v6138 = vshrl.u32 %v6137, 7
    %v6139 = vsub.s32 0, %v6138
    %v6140 = vrot.slane %v6135, %v6139
    %v6141 = vlaneseq
    %v6142 = vshrl.u32 %v6141, 7
    %v6143 = vsub.s32 1, %v6142
    %v6144 = vrot.slane %v6135, %v6143
    %v6147 = vadd.f32 %v6091, %v6140
    %v6148 = vadd.f32 %v6093, %v6144
    %v6149 = vadd.f32 %v6095, %v6140
    %v6150 = vadd.f32 %v6097, %v6144
    %v6151 = vadd.f32 %v6101, %v6140
    %v6152 = vadd.f32 %v6103, %v6144
    %v6153 = vadd.f32 %v6105, %v6140
    %v6154 = vadd.f32 %v6107, %v6144
    %v6155 = vadd.f32 %v6113, %v6140
    %v6156 = vadd.f32 %v6115, %v6144
    %v6157 = vadd.f32 %v6119, %v6140
    %v6158 = vadd.f32 %v6121, %v6144
    %v6159 = vadd.f32 %v6123, %v6140
    %v6160 = vadd.f32 %v6125, %v6144
    %v6161 = vadd.f32 %v6129, %v6140
    %v6162 = vadd.f32 %v6131, %v6144
    %6163 = vst [vmem:[#allocation13] sm:$0xff] %v6147
    %6164 = vst [vmem:[#allocation13 + $0x8] sm:$0xff] %v6148
    %6165 = vst [vmem:[#allocation13 + $0x10] sm:$0xff] %v6149
    %6166 = vst [vmem:[#allocation13 + $0x18] sm:$0xff] %v6150
    %6167 = vst [vmem:[#allocation13 + $0x20] sm:$0xff] %v6151
    %6168 = vst [vmem:[#allocation13 + $0x28] sm:$0xff] %v6152
    %6169 = vst [vmem:[#allocation13 + $0x30] sm:$0xff] %v6153
    %6170 = vst [vmem:[#allocation13 + $0x38] sm:$0xff] %v6154
    %s6171 = scalar_lea.vmem [#allocation13], 64
    %6172 = vst [vmem:[%s6171] sm:$0xff] %v6155
    %6173 = vst [vmem:[%s6171 + $0x8] sm:$0xff] %v6156
    %6174 = vst [vmem:[%s6171 + $0x10] sm:$0xff] %v6157
    %6175 = vst [vmem:[%s6171 + $0x18] sm:$0xff] %v6158
    %6176 = vst [vmem:[%s6171 + $0x20] sm:$0xff] %v6159
    %6177 = vst [vmem:[%s6171 + $0x28] sm:$0xff] %v6160
    %6178 = vst [vmem:[%s6171 + $0x30] sm:$0xff] %v6161
    %6179 = vst [vmem:[%s6171 + $0x38] sm:$0xff] %v6162
    // Predicated region
    $region82: #{tpu_custom_call.1} parent=1 // pred_check
      _
    $region83: #{tpu_custom_call.1} parent=1 // pred_check_branch
      %6181 = sbr.rel (0) target = $region85
    $region84: #{tpu_custom_call.1} parent=1 // pred_region
      %s6183 = ssub.s32 2048, 2048
      %6184 = vsyncadd [#allocation6], %s6183
      %s6185 = sshll.u32 [#allocation13], 4
      %s6186 = int_to_ptr.vmem [resolvable:$true] %s6185
      %6191 = dma.vmem_to_hbm [thread:$0]  %s6186, 2048, %s15, [#allocation6], 256, 256, 16
    $region85: #{tpu_custom_call.1} parent=1 // pred_fallthru
      _
    // Predicated region
    $region86: #{tpu_custom_call.1} parent=1 // pred_check
      _
    $region87: #{tpu_custom_call.1} parent=1 // pred_check_branch
      %6193 = sbr.rel (0) target = $region89
    $region88: #{tpu_custom_call.1} parent=1 // pred_region
      %6194 = dma.done [#allocation6], 2048
    $region89: #{tpu_custom_call.1} parent=1 // pred_fallthru
      _
    %6195 = vsyncpa [#allocation5], 1
    %6196 = vsyncpa [#allocation8], 1
    %6197 = vsyncpa [#allocation11], 1
    %6198 = vsyncpa [#allocation6], 1

</llo_original>
